<compile_context>
chip_gen: v7x
topology: tpu7x:2x2x1
jax: 0.10.0
libtpu: 0.0.40
codegen_flags: <defaults>
</compile_context>

<pallas_src>
import math

import jax
import jax.numpy as jnp
import numpy as np
from jax import lax
from jax.experimental import pallas as pl
from jax.experimental.pallas import tpu as pltpu


def _vmem_spec():
    return pl.BlockSpec(memory_space=pltpu.MemorySpace.VMEM)


# ---------------------------------------------------------------------------
# In-kernel helpers (all static lane shifts / slices / concats: no gathers,
# no strided loads, no risky reshapes).
# ---------------------------------------------------------------------------
def _shift_lanes(v, off):
    """out[:, j] = v[:, j + off] for j < W - off (wrapped tail is never read)."""
    if off == 0:
        return v
    return jnp.concatenate([v[:, off:], v[:, :off]], axis=1)


def _conv_taps(v, y_off, x_off):
    """Stack the 25 tap-shifted copies of v along rows, row order (dy, dx, ci)."""
    return jnp.concatenate(
        [_shift_lanes(v, y_off * dy + x_off * dx)
         for dy in range(5) for dx in range(5)], axis=0)


def _pool2x2(v, y_off, x_off):
    """2x2 max pool in the flat lane space (valid at even-grid base lanes)."""
    m = v
    for a in range(2):
        for b in range(2):
            if a == 0 and b == 0:
                continue
            m = jnp.maximum(m, _shift_lanes(v, y_off * a + x_off * b))
    return m


# ---------------------------------------------------------------------------
# The fused whole-network kernel.
#   x_ref:   (3, N*784)   input, lane index = n*784 + y*28 + x
#   w1/b1:   (6, 75)/(6, 1)    conv1 weight cols ordered (dy, dx, ci)
#   w2/b2:   (16, 150)/(16, 1) conv2 weight cols ordered (dy, dx, ci)
#   sel:     (N*784, N*16) 0/1 gather of the valid pooled conv2 lanes
#   wf*/bf*: fc weights, hidden widths zero-padded to 128 lanes
#   o_ref:   (N, 10) logits
# ---------------------------------------------------------------------------
def _net_kernel(x_ref, w1_ref, b1_ref, w2_ref, b2_ref, sel_ref,
                wf1_ref, bf1_ref, wf2_ref, bf2_ref, wf3_ref, bf3_ref, o_ref):
    n_batch = o_ref.shape[0]
    x = x_ref[...]                                             # (3, N*784)

    # conv1 + bias + relu + 2x2 maxpool.  conv1 output at (n, oy, ox) lives at
    # lane n*784 + 28*oy + ox; pooled values at lanes n*784 + 56*yp + 2*xp.
    r1 = _conv_taps(x, 28, 1)                                  # (75, N*784)
    c1 = jnp.dot(w1_ref[...], r1, preferred_element_type=jnp.float32)
    a1 = jnp.maximum(_pool2x2(c1, 28, 1) + b1_ref[...], 0.0)   # (6, N*784)

    # conv2 + bias + relu + maxpool; its input grid has lane stride 2, so taps
    # are shifts of 56*dy + 2*dx and pooled values land at n*784+112*yq+4*xq.
    r2 = _conv_taps(a1, 56, 2)                                 # (150, N*784)
    c2 = jnp.dot(w2_ref[...], r2, preferred_element_type=jnp.float32)
    a2 = jnp.maximum(_pool2x2(c2, 56, 2) + b2_ref[...], 0.0)   # (16, N*784)

    # Gather the N*4*4 valid pooled lanes with a constant selection matmul:
    # (16, N*784) @ (N*784, N*16) -> (16, N*16), col = n*16 + yq*4 + xq.
    a2s = jnp.dot(a2, sel_ref[...], preferred_element_type=jnp.float32)

    # Flatten to (N, 256) in PyTorch (channel, y, x) feature order using only
    # static lane slices + concats (no cross-lane relayout primitives needed).
    rows = []
    for n in range(n_batch):
        rows.append(jnp.concatenate(
            [a2s[c:c + 1, n * 16:(n + 1) * 16] for c in range(16)], axis=1))
    h = jnp.concatenate(rows, axis=0)                          # (N, 256)

    # fc1+relu -> fc2+relu -> fc3 (hidden lanes padded to 128 at init).
    h = jnp.maximum(
        jnp.dot(h, wf1_ref[...], preferred_element_type=jnp.float32)
        + bf1_ref[...], 0.0)
    h = jnp.maximum(
        jnp.dot(h, wf2_ref[...], preferred_element_type=jnp.float32)
        + bf2_ref[...], 0.0)
    o_ref[...] = (jnp.dot(h, wf3_ref[...], preferred_element_type=jnp.float32)
                  + bf3_ref[...])


# ---------------------------------------------------------------------------
# Wrapper: one pallas_call for the whole forward pass.
# ---------------------------------------------------------------------------
def forward(kparams, x):
    N = x.shape[0]
    W = N * 28 * 28
    # Only wrapper glue: NCHW (N,3,28,28) -> flat (3, N*784).
    x2d = jnp.transpose(x, (1, 0, 2, 3)).reshape(3, W)

    # Constant 0/1 matrix selecting the valid pooled-conv2 lanes and laying
    # them out as n*16 + yq*4 + xq (trace-time numpy constant, built once).
    sel = np.zeros((W, N * 16), np.float32)
    for n in range(N):
        for yq in range(4):
            for xq in range(4):
                sel[784 * n + 112 * yq + 4 * xq, n * 16 + 4 * yq + xq] = 1.0
    sel = jnp.asarray(sel)

    flops = (2 * W * (6 * 75 + 16 * 150 + 16 * N * 16)
             + 2 * N * (256 * 128 + 128 * 128 + 128 * 10))
    bytes_accessed = 4 * (3 * W + W * N * 16
                          + 6 * 75 + 6 + 16 * 150 + 16
                          + 256 * 128 + 128 + 128 * 128 + 128 + 128 * 10 + 10
                          + N * 10)

    return pl.pallas_call(
        _net_kernel,
        out_shape=jax.ShapeDtypeStruct((N, 10), jnp.float32),
        in_specs=[_vmem_spec()] * 12,
        out_specs=_vmem_spec(),
        cost_estimate=pl.CostEstimate(flops=flops, transcendentals=0,
                                      bytes_accessed=bytes_accessed),
    )(x2d, kparams["conv1_w"], kparams["conv1_b"],
      kparams["conv2_w"], kparams["conv2_b"], sel,
      kparams["fc1_w"], kparams["fc1_b"],
      kparams["fc2_w"], kparams["fc2_b"],
      kparams["fc3_w"], kparams["fc3_b"])


# ---------------------------------------------------------------------------
# Parameters: canonical (PyTorch-style) shapes for the reference, packed once
# at init into kernel-friendly layouts.
# ---------------------------------------------------------------------------
def _uniform(key, shape, fan_in):
    bound = 1.0 / math.sqrt(fan_in)
    return jax.random.uniform(key, shape, jnp.float32, -bound, bound)


def init_params(key):
    ks = jax.random.split(key, 10)
    return {
        "conv1_w": _uniform(ks[0], (6, 3, 5, 5), 3 * 5 * 5),
        "conv1_b": _uniform(ks[1], (6,), 3 * 5 * 5),
        "conv2_w": _uniform(ks[2], (16, 6, 5, 5), 6 * 5 * 5),
        "conv2_b": _uniform(ks[3], (16,), 6 * 5 * 5),
        "fc1_w": _uniform(ks[4], (16 * 4 * 4, 120), 16 * 4 * 4),
        "fc1_b": _uniform(ks[5], (120,), 16 * 4 * 4),
        "fc2_w": _uniform(ks[6], (120, 84), 120),
        "fc2_b": _uniform(ks[7], (84,), 120),
        "fc3_w": _uniform(ks[8], (84, 10), 84),
        "fc3_b": _uniform(ks[9], (10,), 84),
    }


def pack_params(p):
    kp = {}
    # conv weights: columns ordered (dy, dx, ci) to match the in-kernel tap
    # stacking; biases as (C_out, 1) lane-broadcast columns.
    kp["conv1_w"] = jnp.transpose(p["conv1_w"], (0, 2, 3, 1)).reshape(6, 75)
    kp["conv1_b"] = p["conv1_b"].reshape(6, 1)
    kp["conv2_w"] = jnp.transpose(p["conv2_w"], (0, 2, 3, 1)).reshape(16, 150)
    kp["conv2_b"] = p["conv2_b"].reshape(16, 1)
    # fc weights as (in, out) with hidden widths zero-padded to 128 lanes.
    kp["fc1_w"] = jnp.pad(p["fc1_w"], ((0, 0), (0, 8)))          # (256, 128)
    kp["fc1_b"] = jnp.pad(p["fc1_b"], (0, 8)).reshape(1, 128)
    kp["fc2_w"] = jnp.pad(p["fc2_w"], ((0, 8), (0, 44)))         # (128, 128)
    kp["fc2_b"] = jnp.pad(p["fc2_b"], (0, 44)).reshape(1, 128)
    kp["fc3_w"] = jnp.pad(p["fc3_w"], ((0, 44), (0, 0)))         # (128, 10)
    kp["fc3_b"] = p["fc3_b"].reshape(1, 10)
    return kp


# ---------------------------------------------------------------------------
# Pure-JAX reference for a numerical sanity check.
# ---------------------------------------------------------------------------
def reference_forward(p, x):
    dn = ("NCHW", "OIHW", "NCHW")
    h = lax.conv_general_dilated(x, p["conv1_w"], (1, 1), "VALID",
                                 dimension_numbers=dn,
                                 precision=lax.Precision.HIGHEST)
    h = jnp.maximum(h + p["conv1_b"].reshape(1, 6, 1, 1), 0.0)
    h = lax.reduce_window(h, -jnp.inf, lax.max, (1, 1, 2, 2), (1, 1, 2, 2),
                          "VALID")
    h = lax.conv_general_dilated(h, p["conv2_w"], (1, 1), "VALID",
                                 dimension_numbers=dn,
                                 precision=lax.Precision.HIGHEST)
    h = jnp.maximum(h + p["conv2_b"].reshape(1, 16, 1, 1), 0.0)
    h = lax.reduce_window(h, -jnp.inf, lax.max, (1, 1, 2, 2), (1, 1, 2, 2),
                          "VALID")
    h = h.reshape(h.shape[0], -1)
    h = jnp.maximum(h @ p["fc1_w"] + p["fc1_b"], 0.0)
    h = jnp.maximum(h @ p["fc2_w"] + p["fc2_b"], 0.0)
    return h @ p["fc3_w"] + p["fc3_b"]


if __name__ == "__main__":
    key = jax.random.PRNGKey(0)
    k_x, k_p = jax.random.split(key)
    # Input shape fixed by the fc1 16*4*4 flatten: (N, 3, 28, 28).
    x = jax.random.normal(k_x, (2, 3, 28, 28), jnp.float32)
    params = init_params(k_p)
    kparams = pack_params(params)

    out = jax.block_until_ready(jax.jit(forward)(kparams, x))
    assert out.shape == (2, 10), out.shape
    assert bool(jnp.all(jnp.isfinite(out)))

    ref = jax.block_until_ready(jax.jit(reference_forward)(params, x))
    np.testing.assert_allclose(np.asarray(out), np.asarray(ref),
                               rtol=5e-2, atol=5e-2)
    print("KERNEL_OK")
</pallas_src>

<mosaic_0001>
module attributes {stable_mosaic.version = 11 : i64} {
  func.func @_net_kernel(%arg0: memref<3x1568xf32, #tpu.memory_space<vmem>>, %arg1: memref<6x75xf32, #tpu.memory_space<vmem>>, %arg2: memref<6x1xf32, #tpu.memory_space<vmem>>, %arg3: memref<16x150xf32, #tpu.memory_space<vmem>>, %arg4: memref<16x1xf32, #tpu.memory_space<vmem>>, %arg5: memref<1568x32xf32, #tpu.memory_space<vmem>>, %arg6: memref<256x128xf32, #tpu.memory_space<vmem>>, %arg7: memref<1x128xf32, #tpu.memory_space<vmem>>, %arg8: memref<128x128xf32, #tpu.memory_space<vmem>>, %arg9: memref<1x128xf32, #tpu.memory_space<vmem>>, %arg10: memref<128x10xf32, #tpu.memory_space<vmem>>, %arg11: memref<1x10xf32, #tpu.memory_space<vmem>>, %arg12: memref<2x10xf32, #tpu.memory_space<vmem>>) attributes {dimension_semantics = [], scalar_prefetch = 0 : i64, scratch_operands = 0 : i64, tpu.core_type = #tpu.core_type<tc>} {
    %c0 = arith.constant 0 : index
    %c0_0 = arith.constant 0 : index
    %0 = vector.load %arg0[%c0, %c0_0] : memref<3x1568xf32, #tpu.memory_space<vmem>>, vector<3x1568xf32>
    %1 = vector.extract_strided_slice %0 {offsets = [0, 1], sizes = [3, 1567], strides = [1, 1]} : vector<3x1568xf32> to vector<3x1567xf32>
    %2 = vector.extract_strided_slice %0 {offsets = [0, 0], sizes = [3, 1], strides = [1, 1]} : vector<3x1568xf32> to vector<3x1xf32>
    %3 = tpu.concatenate %1, %2 in 1 : vector<3x1567xf32>, vector<3x1xf32> -> vector<3x1568xf32>
    %4 = vector.extract_strided_slice %0 {offsets = [0, 2], sizes = [3, 1566], strides = [1, 1]} : vector<3x1568xf32> to vector<3x1566xf32>
    %5 = vector.extract_strided_slice %0 {offsets = [0, 0], sizes = [3, 2], strides = [1, 1]} : vector<3x1568xf32> to vector<3x2xf32>
    %6 = tpu.concatenate %4, %5 in 1 : vector<3x1566xf32>, vector<3x2xf32> -> vector<3x1568xf32>
    %7 = vector.extract_strided_slice %0 {offsets = [0, 3], sizes = [3, 1565], strides = [1, 1]} : vector<3x1568xf32> to vector<3x1565xf32>
    %8 = vector.extract_strided_slice %0 {offsets = [0, 0], sizes = [3, 3], strides = [1, 1]} : vector<3x1568xf32> to vector<3x3xf32>
    %9 = tpu.concatenate %7, %8 in 1 : vector<3x1565xf32>, vector<3x3xf32> -> vector<3x1568xf32>
    %10 = vector.extract_strided_slice %0 {offsets = [0, 4], sizes = [3, 1564], strides = [1, 1]} : vector<3x1568xf32> to vector<3x1564xf32>
    %11 = vector.extract_strided_slice %0 {offsets = [0, 0], sizes = [3, 4], strides = [1, 1]} : vector<3x1568xf32> to vector<3x4xf32>
    %12 = tpu.concatenate %10, %11 in 1 : vector<3x1564xf32>, vector<3x4xf32> -> vector<3x1568xf32>
    %13 = vector.extract_strided_slice %0 {offsets = [0, 28], sizes = [3, 1540], strides = [1, 1]} : vector<3x1568xf32> to vector<3x1540xf32>
    %14 = vector.extract_strided_slice %0 {offsets = [0, 0], sizes = [3, 28], strides = [1, 1]} : vector<3x1568xf32> to vector<3x28xf32>
    %15 = tpu.concatenate %13, %14 in 1 : vector<3x1540xf32>, vector<3x28xf32> -> vector<3x1568xf32>
    %16 = vector.extract_strided_slice %0 {offsets = [0, 29], sizes = [3, 1539], strides = [1, 1]} : vector<3x1568xf32> to vector<3x1539xf32>
    %17 = vector.extract_strided_slice %0 {offsets = [0, 0], sizes = [3, 29], strides = [1, 1]} : vector<3x1568xf32> to vector<3x29xf32>
    %18 = tpu.concatenate %16, %17 in 1 : vector<3x1539xf32>, vector<3x29xf32> -> vector<3x1568xf32>
    %19 = vector.extract_strided_slice %0 {offsets = [0, 30], sizes = [3, 1538], strides = [1, 1]} : vector<3x1568xf32> to vector<3x1538xf32>
    %20 = vector.extract_strided_slice %0 {offsets = [0, 0], sizes = [3, 30], strides = [1, 1]} : vector<3x1568xf32> to vector<3x30xf32>
    %21 = tpu.concatenate %19, %20 in 1 : vector<3x1538xf32>, vector<3x30xf32> -> vector<3x1568xf32>
    %22 = vector.extract_strided_slice %0 {offsets = [0, 31], sizes = [3, 1537], strides = [1, 1]} : vector<3x1568xf32> to vector<3x1537xf32>
    %23 = vector.extract_strided_slice %0 {offsets = [0, 0], sizes = [3, 31], strides = [1, 1]} : vector<3x1568xf32> to vector<3x31xf32>
    %24 = tpu.concatenate %22, %23 in 1 : vector<3x1537xf32>, vector<3x31xf32> -> vector<3x1568xf32>
    %25 = vector.extract_strided_slice %0 {offsets = [0, 32], sizes = [3, 1536], strides = [1, 1]} : vector<3x1568xf32> to vector<3x1536xf32>
    %26 = vector.extract_strided_slice %0 {offsets = [0, 0], sizes = [3, 32], strides = [1, 1]} : vector<3x1568xf32> to vector<3x32xf32>
    %27 = tpu.concatenate %25, %26 in 1 : vector<3x1536xf32>, vector<3x32xf32> -> vector<3x1568xf32>
    %28 = vector.extract_strided_slice %0 {offsets = [0, 56], sizes = [3, 1512], strides = [1, 1]} : vector<3x1568xf32> to vector<3x1512xf32>
    %29 = vector.extract_strided_slice %0 {offsets = [0, 0], sizes = [3, 56], strides = [1, 1]} : vector<3x1568xf32> to vector<3x56xf32>
    %30 = tpu.concatenate %28, %29 in 1 : vector<3x1512xf32>, vector<3x56xf32> -> vector<3x1568xf32>
    %31 = vector.extract_strided_slice %0 {offsets = [0, 57], sizes = [3, 1511], strides = [1, 1]} : vector<3x1568xf32> to vector<3x1511xf32>
    %32 = vector.extract_strided_slice %0 {offsets = [0, 0], sizes = [3, 57], strides = [1, 1]} : vector<3x1568xf32> to vector<3x57xf32>
    %33 = tpu.concatenate %31, %32 in 1 : vector<3x1511xf32>, vector<3x57xf32> -> vector<3x1568xf32>
    %34 = vector.extract_strided_slice %0 {offsets = [0, 58], sizes = [3, 1510], strides = [1, 1]} : vector<3x1568xf32> to vector<3x1510xf32>
    %35 = vector.extract_strided_slice %0 {offsets = [0, 0], sizes = [3, 58], strides = [1, 1]} : vector<3x1568xf32> to vector<3x58xf32>
    %36 = tpu.concatenate %34, %35 in 1 : vector<3x1510xf32>, vector<3x58xf32> -> vector<3x1568xf32>
    %37 = vector.extract_strided_slice %0 {offsets = [0, 59], sizes = [3, 1509], strides = [1, 1]} : vector<3x1568xf32> to vector<3x1509xf32>
    %38 = vector.extract_strided_slice %0 {offsets = [0, 0], sizes = [3, 59], strides = [1, 1]} : vector<3x1568xf32> to vector<3x59xf32>
    %39 = tpu.concatenate %37, %38 in 1 : vector<3x1509xf32>, vector<3x59xf32> -> vector<3x1568xf32>
    %40 = vector.extract_strided_slice %0 {offsets = [0, 60], sizes = [3, 1508], strides = [1, 1]} : vector<3x1568xf32> to vector<3x1508xf32>
    %41 = vector.extract_strided_slice %0 {offsets = [0, 0], sizes = [3, 60], strides = [1, 1]} : vector<3x1568xf32> to vector<3x60xf32>
    %42 = tpu.concatenate %40, %41 in 1 : vector<3x1508xf32>, vector<3x60xf32> -> vector<3x1568xf32>
    %43 = vector.extract_strided_slice %0 {offsets = [0, 84], sizes = [3, 1484], strides = [1, 1]} : vector<3x1568xf32> to vector<3x1484xf32>
    %44 = vector.extract_strided_slice %0 {offsets = [0, 0], sizes = [3, 84], strides = [1, 1]} : vector<3x1568xf32> to vector<3x84xf32>
    %45 = tpu.concatenate %43, %44 in 1 : vector<3x1484xf32>, vector<3x84xf32> -> vector<3x1568xf32>
    %46 = vector.extract_strided_slice %0 {offsets = [0, 85], sizes = [3, 1483], strides = [1, 1]} : vector<3x1568xf32> to vector<3x1483xf32>
    %47 = vector.extract_strided_slice %0 {offsets = [0, 0], sizes = [3, 85], strides = [1, 1]} : vector<3x1568xf32> to vector<3x85xf32>
    %48 = tpu.concatenate %46, %47 in 1 : vector<3x1483xf32>, vector<3x85xf32> -> vector<3x1568xf32>
    %49 = vector.extract_strided_slice %0 {offsets = [0, 86], sizes = [3, 1482], strides = [1, 1]} : vector<3x1568xf32> to vector<3x1482xf32>
    %50 = vector.extract_strided_slice %0 {offsets = [0, 0], sizes = [3, 86], strides = [1, 1]} : vector<3x1568xf32> to vector<3x86xf32>
    %51 = tpu.concatenate %49, %50 in 1 : vector<3x1482xf32>, vector<3x86xf32> -> vector<3x1568xf32>
    %52 = vector.extract_strided_slice %0 {offsets = [0, 87], sizes = [3, 1481], strides = [1, 1]} : vector<3x1568xf32> to vector<3x1481xf32>
    %53 = vector.extract_strided_slice %0 {offsets = [0, 0], sizes = [3, 87], strides = [1, 1]} : vector<3x1568xf32> to vector<3x87xf32>
    %54 = tpu.concatenate %52, %53 in 1 : vector<3x1481xf32>, vector<3x87xf32> -> vector<3x1568xf32>
    %55 = vector.extract_strided_slice %0 {offsets = [0, 88], sizes = [3, 1480], strides = [1, 1]} : vector<3x1568xf32> to vector<3x1480xf32>
    %56 = vector.extract_strided_slice %0 {offsets = [0, 0], sizes = [3, 88], strides = [1, 1]} : vector<3x1568xf32> to vector<3x88xf32>
    %57 = tpu.concatenate %55, %56 in 1 : vector<3x1480xf32>, vector<3x88xf32> -> vector<3x1568xf32>
    %58 = vector.extract_strided_slice %0 {offsets = [0, 112], sizes = [3, 1456], strides = [1, 1]} : vector<3x1568xf32> to vector<3x1456xf32>
    %59 = vector.extract_strided_slice %0 {offsets = [0, 0], sizes = [3, 112], strides = [1, 1]} : vector<3x1568xf32> to vector<3x112xf32>
    %60 = tpu.concatenate %58, %59 in 1 : vector<3x1456xf32>, vector<3x112xf32> -> vector<3x1568xf32>
    %61 = vector.extract_strided_slice %0 {offsets = [0, 113], sizes = [3, 1455], strides = [1, 1]} : vector<3x1568xf32> to vector<3x1455xf32>
    %62 = vector.extract_strided_slice %0 {offsets = [0, 0], sizes = [3, 113], strides = [1, 1]} : vector<3x1568xf32> to vector<3x113xf32>
    %63 = tpu.concatenate %61, %62 in 1 : vector<3x1455xf32>, vector<3x113xf32> -> vector<3x1568xf32>
    %64 = vector.extract_strided_slice %0 {offsets = [0, 114], sizes = [3, 1454], strides = [1, 1]} : vector<3x1568xf32> to vector<3x1454xf32>
    %65 = vector.extract_strided_slice %0 {offsets = [0, 0], sizes = [3, 114], strides = [1, 1]} : vector<3x1568xf32> to vector<3x114xf32>
    %66 = tpu.concatenate %64, %65 in 1 : vector<3x1454xf32>, vector<3x114xf32> -> vector<3x1568xf32>
    %67 = vector.extract_strided_slice %0 {offsets = [0, 115], sizes = [3, 1453], strides = [1, 1]} : vector<3x1568xf32> to vector<3x1453xf32>
    %68 = vector.extract_strided_slice %0 {offsets = [0, 0], sizes = [3, 115], strides = [1, 1]} : vector<3x1568xf32> to vector<3x115xf32>
    %69 = tpu.concatenate %67, %68 in 1 : vector<3x1453xf32>, vector<3x115xf32> -> vector<3x1568xf32>
    %70 = vector.extract_strided_slice %0 {offsets = [0, 116], sizes = [3, 1452], strides = [1, 1]} : vector<3x1568xf32> to vector<3x1452xf32>
    %71 = vector.extract_strided_slice %0 {offsets = [0, 0], sizes = [3, 116], strides = [1, 1]} : vector<3x1568xf32> to vector<3x116xf32>
    %72 = tpu.concatenate %70, %71 in 1 : vector<3x1452xf32>, vector<3x116xf32> -> vector<3x1568xf32>
    %73 = tpu.concatenate %0, %3, %6, %9, %12, %15, %18, %21, %24, %27, %30, %33, %36, %39, %42, %45 in 0 : vector<3x1568xf32>, vector<3x1568xf32>, vector<3x1568xf32>, vector<3x1568xf32>, vector<3x1568xf32>, vector<3x1568xf32>, vector<3x1568xf32>, vector<3x1568xf32>, vector<3x1568xf32>, vector<3x1568xf32>, vector<3x1568xf32>, vector<3x1568xf32>, vector<3x1568xf32>, vector<3x1568xf32>, vector<3x1568xf32>, vector<3x1568xf32> -> vector<48x1568xf32>
    %74 = tpu.concatenate %48, %51, %54, %57, %60, %63, %66, %69, %72 in 0 : vector<3x1568xf32>, vector<3x1568xf32>, vector<3x1568xf32>, vector<3x1568xf32>, vector<3x1568xf32>, vector<3x1568xf32>, vector<3x1568xf32>, vector<3x1568xf32>, vector<3x1568xf32> -> vector<27x1568xf32>
    %75 = tpu.concatenate %73, %74 in 0 : vector<48x1568xf32>, vector<27x1568xf32> -> vector<75x1568xf32>
    %c0_1 = arith.constant 0 : index
    %c0_2 = arith.constant 0 : index
    %76 = vector.load %arg1[%c0_1, %c0_2] : memref<6x75xf32, #tpu.memory_space<vmem>>, vector<6x75xf32>
    %cst = arith.constant dense<0.000000e+00> : vector<6x1568xf32>
    %77 = tpu.matmul %76, %75, %cst {dimension_numbers = #tpu.dot_dimension_numbers<[1], [0], [0], [1], [0, 0, 1, 1], [], []>} : vector<6x75xf32>, vector<75x1568xf32>, vector<6x1568xf32> -> vector<6x1568xf32>
    %78 = vector.extract_strided_slice %77 {offsets = [0, 1], sizes = [6, 1567], strides = [1, 1]} : vector<6x1568xf32> to vector<6x1567xf32>
    %79 = vector.extract_strided_slice %77 {offsets = [0, 0], sizes = [6, 1], strides = [1, 1]} : vector<6x1568xf32> to vector<6x1xf32>
    %80 = tpu.concatenate %78, %79 in 1 : vector<6x1567xf32>, vector<6x1xf32> -> vector<6x1568xf32>
    %81 = arith.maximumf %77, %80 : vector<6x1568xf32>
    %82 = vector.extract_strided_slice %77 {offsets = [0, 28], sizes = [6, 1540], strides = [1, 1]} : vector<6x1568xf32> to vector<6x1540xf32>
    %83 = vector.extract_strided_slice %77 {offsets = [0, 0], sizes = [6, 28], strides = [1, 1]} : vector<6x1568xf32> to vector<6x28xf32>
    %84 = tpu.concatenate %82, %83 in 1 : vector<6x1540xf32>, vector<6x28xf32> -> vector<6x1568xf32>
    %85 = arith.maximumf %81, %84 : vector<6x1568xf32>
    %86 = vector.extract_strided_slice %77 {offsets = [0, 29], sizes = [6, 1539], strides = [1, 1]} : vector<6x1568xf32> to vector<6x1539xf32>
    %87 = vector.extract_strided_slice %77 {offsets = [0, 0], sizes = [6, 29], strides = [1, 1]} : vector<6x1568xf32> to vector<6x29xf32>
    %88 = tpu.concatenate %86, %87 in 1 : vector<6x1539xf32>, vector<6x29xf32> -> vector<6x1568xf32>
    %89 = arith.maximumf %85, %88 : vector<6x1568xf32>
    %c0_3 = arith.constant 0 : index
    %c0_4 = arith.constant 0 : index
    %90 = vector.load %arg2[%c0_3, %c0_4] : memref<6x1xf32, #tpu.memory_space<vmem>>, vector<6x1xf32>
    %91 = vector.broadcast %90 : vector<6x1xf32> to vector<6x1568xf32>
    %92 = arith.addf %89, %91 : vector<6x1568xf32>
    %cst_5 = arith.constant 0.000000e+00 : f32
    %93 = vector.broadcast %cst_5 : f32 to vector<6x1568xf32>
    %94 = arith.maximumf %92, %93 : vector<6x1568xf32>
    %95 = vector.extract_strided_slice %94 {offsets = [0, 2], sizes = [6, 1566], strides = [1, 1]} : vector<6x1568xf32> to vector<6x1566xf32>
    %96 = vector.extract_strided_slice %94 {offsets = [0, 0], sizes = [6, 2], strides = [1, 1]} : vector<6x1568xf32> to vector<6x2xf32>
    %97 = tpu.concatenate %95, %96 in 1 : vector<6x1566xf32>, vector<6x2xf32> -> vector<6x1568xf32>
    %98 = vector.extract_strided_slice %94 {offsets = [0, 4], sizes = [6, 1564], strides = [1, 1]} : vector<6x1568xf32> to vector<6x1564xf32>
    %99 = vector.extract_strided_slice %94 {offsets = [0, 0], sizes = [6, 4], strides = [1, 1]} : vector<6x1568xf32> to vector<6x4xf32>
    %100 = tpu.concatenate %98, %99 in 1 : vector<6x1564xf32>, vector<6x4xf32> -> vector<6x1568xf32>
    %101 = vector.extract_strided_slice %94 {offsets = [0, 6], sizes = [6, 1562], strides = [1, 1]} : vector<6x1568xf32> to vector<6x1562xf32>
    %102 = vector.extract_strided_slice %94 {offsets = [0, 0], sizes = [6, 6], strides = [1, 1]} : vector<6x1568xf32> to vector<6x6xf32>
    %103 = tpu.concatenate %101, %102 in 1 : vector<6x1562xf32>, vector<6x6xf32> -> vector<6x1568xf32>
    %104 = vector.extract_strided_slice %94 {offsets = [0, 8], sizes = [6, 1560], strides = [1, 1]} : vector<6x1568xf32> to vector<6x1560xf32>
    %105 = vector.extract_strided_slice %94 {offsets = [0, 0], sizes = [6, 8], strides = [1, 1]} : vector<6x1568xf32> to vector<6x8xf32>
    %106 = tpu.concatenate %104, %105 in 1 : vector<6x1560xf32>, vector<6x8xf32> -> vector<6x1568xf32>
    %107 = vector.extract_strided_slice %94 {offsets = [0, 56], sizes = [6, 1512], strides = [1, 1]} : vector<6x1568xf32> to vector<6x1512xf32>
    %108 = vector.extract_strided_slice %94 {offsets = [0, 0], sizes = [6, 56], strides = [1, 1]} : vector<6x1568xf32> to vector<6x56xf32>
    %109 = tpu.concatenate %107, %108 in 1 : vector<6x1512xf32>, vector<6x56xf32> -> vector<6x1568xf32>
    %110 = vector.extract_strided_slice %94 {offsets = [0, 58], sizes = [6, 1510], strides = [1, 1]} : vector<6x1568xf32> to vector<6x1510xf32>
    %111 = vector.extract_strided_slice %94 {offsets = [0, 0], sizes = [6, 58], strides = [1, 1]} : vector<6x1568xf32> to vector<6x58xf32>
    %112 = tpu.concatenate %110, %111 in 1 : vector<6x1510xf32>, vector<6x58xf32> -> vector<6x1568xf32>
    %113 = vector.extract_strided_slice %94 {offsets = [0, 60], sizes = [6, 1508], strides = [1, 1]} : vector<6x1568xf32> to vector<6x1508xf32>
    %114 = vector.extract_strided_slice %94 {offsets = [0, 0], sizes = [6, 60], strides = [1, 1]} : vector<6x1568xf32> to vector<6x60xf32>
    %115 = tpu.concatenate %113, %114 in 1 : vector<6x1508xf32>, vector<6x60xf32> -> vector<6x1568xf32>
    %116 = vector.extract_strided_slice %94 {offsets = [0, 62], sizes = [6, 1506], strides = [1, 1]} : vector<6x1568xf32> to vector<6x1506xf32>
    %117 = vector.extract_strided_slice %94 {offsets = [0, 0], sizes = [6, 62], strides = [1, 1]} : vector<6x1568xf32> to vector<6x62xf32>
    %118 = tpu.concatenate %116, %117 in 1 : vector<6x1506xf32>, vector<6x62xf32> -> vector<6x1568xf32>
    %119 = vector.extract_strided_slice %94 {offsets = [0, 64], sizes = [6, 1504], strides = [1, 1]} : vector<6x1568xf32> to vector<6x1504xf32>
    %120 = vector.extract_strided_slice %94 {offsets = [0, 0], sizes = [6, 64], strides = [1, 1]} : vector<6x1568xf32> to vector<6x64xf32>
    %121 = tpu.concatenate %119, %120 in 1 : vector<6x1504xf32>, vector<6x64xf32> -> vector<6x1568xf32>
    %122 = vector.extract_strided_slice %94 {offsets = [0, 112], sizes = [6, 1456], strides = [1, 1]} : vector<6x1568xf32> to vector<6x1456xf32>
    %123 = vector.extract_strided_slice %94 {offsets = [0, 0], sizes = [6, 112], strides = [1, 1]} : vector<6x1568xf32> to vector<6x112xf32>
    %124 = tpu.concatenate %122, %123 in 1 : vector<6x1456xf32>, vector<6x112xf32> -> vector<6x1568xf32>
    %125 = vector.extract_strided_slice %94 {offsets = [0, 114], sizes = [6, 1454], strides = [1, 1]} : vector<6x1568xf32> to vector<6x1454xf32>
    %126 = vector.extract_strided_slice %94 {offsets = [0, 0], sizes = [6, 114], strides = [1, 1]} : vector<6x1568xf32> to vector<6x114xf32>
    %127 = tpu.concatenate %125, %126 in 1 : vector<6x1454xf32>, vector<6x114xf32> -> vector<6x1568xf32>
    %128 = vector.extract_strided_slice %94 {offsets = [0, 116], sizes = [6, 1452], strides = [1, 1]} : vector<6x1568xf32> to vector<6x1452xf32>
    %129 = vector.extract_strided_slice %94 {offsets = [0, 0], sizes = [6, 116], strides = [1, 1]} : vector<6x1568xf32> to vector<6x116xf32>
    %130 = tpu.concatenate %128, %129 in 1 : vector<6x1452xf32>, vector<6x116xf32> -> vector<6x1568xf32>
    %131 = vector.extract_strided_slice %94 {offsets = [0, 118], sizes = [6, 1450], strides = [1, 1]} : vector<6x1568xf32> to vector<6x1450xf32>
    %132 = vector.extract_strided_slice %94 {offsets = [0, 0], sizes = [6, 118], strides = [1, 1]} : vector<6x1568xf32> to vector<6x118xf32>
    %133 = tpu.concatenate %131, %132 in 1 : vector<6x1450xf32>, vector<6x118xf32> -> vector<6x1568xf32>
    %134 = vector.extract_strided_slice %94 {offsets = [0, 120], sizes = [6, 1448], strides = [1, 1]} : vector<6x1568xf32> to vector<6x1448xf32>
    %135 = vector.extract_strided_slice %94 {offsets = [0, 0], sizes = [6, 120], strides = [1, 1]} : vector<6x1568xf32> to vector<6x120xf32>
    %136 = tpu.concatenate %134, %135 in 1 : vector<6x1448xf32>, vector<6x120xf32> -> vector<6x1568xf32>
    %137 = vector.extract_strided_slice %94 {offsets = [0, 168], sizes = [6, 1400], strides = [1, 1]} : vector<6x1568xf32> to vector<6x1400xf32>
    %138 = vector.extract_strided_slice %94 {offsets = [0, 0], sizes = [6, 168], strides = [1, 1]} : vector<6x1568xf32> to vector<6x168xf32>
    %139 = tpu.concatenate %137, %138 in 1 : vector<6x1400xf32>, vector<6x168xf32> -> vector<6x1568xf32>
    %140 = vector.extract_strided_slice %94 {offsets = [0, 170], sizes = [6, 1398], strides = [1, 1]} : vector<6x1568xf32> to vector<6x1398xf32>
    %141 = vector.extract_strided_slice %94 {offsets = [0, 0], sizes = [6, 170], strides = [1, 1]} : vector<6x1568xf32> to vector<6x170xf32>
    %142 = tpu.concatenate %140, %141 in 1 : vector<6x1398xf32>, vector<6x170xf32> -> vector<6x1568xf32>
    %143 = vector.extract_strided_slice %94 {offsets = [0, 172], sizes = [6, 1396], strides = [1, 1]} : vector<6x1568xf32> to vector<6x1396xf32>
    %144 = vector.extract_strided_slice %94 {offsets = [0, 0], sizes = [6, 172], strides = [1, 1]} : vector<6x1568xf32> to vector<6x172xf32>
    %145 = tpu.concatenate %143, %144 in 1 : vector<6x1396xf32>, vector<6x172xf32> -> vector<6x1568xf32>
    %146 = vector.extract_strided_slice %94 {offsets = [0, 174], sizes = [6, 1394], strides = [1, 1]} : vector<6x1568xf32> to vector<6x1394xf32>
    %147 = vector.extract_strided_slice %94 {offsets = [0, 0], sizes = [6, 174], strides = [1, 1]} : vector<6x1568xf32> to vector<6x174xf32>
    %148 = tpu.concatenate %146, %147 in 1 : vector<6x1394xf32>, vector<6x174xf32> -> vector<6x1568xf32>
    %149 = vector.extract_strided_slice %94 {offsets = [0, 176], sizes = [6, 1392], strides = [1, 1]} : vector<6x1568xf32> to vector<6x1392xf32>
    %150 = vector.extract_strided_slice %94 {offsets = [0, 0], sizes = [6, 176], strides = [1, 1]} : vector<6x1568xf32> to vector<6x176xf32>
    %151 = tpu.concatenate %149, %150 in 1 : vector<6x1392xf32>, vector<6x176xf32> -> vector<6x1568xf32>
    %152 = vector.extract_strided_slice %94 {offsets = [0, 224], sizes = [6, 1344], strides = [1, 1]} : vector<6x1568xf32> to vector<6x1344xf32>
    %153 = vector.extract_strided_slice %94 {offsets = [0, 0], sizes = [6, 224], strides = [1, 1]} : vector<6x1568xf32> to vector<6x224xf32>
    %154 = tpu.concatenate %152, %153 in 1 : vector<6x1344xf32>, vector<6x224xf32> -> vector<6x1568xf32>
    %155 = vector.extract_strided_slice %94 {offsets = [0, 226], sizes = [6, 1342], strides = [1, 1]} : vector<6x1568xf32> to vector<6x1342xf32>
    %156 = vector.extract_strided_slice %94 {offsets = [0, 0], sizes = [6, 226], strides = [1, 1]} : vector<6x1568xf32> to vector<6x226xf32>
    %157 = tpu.concatenate %155, %156 in 1 : vector<6x1342xf32>, vector<6x226xf32> -> vector<6x1568xf32>
    %158 = vector.extract_strided_slice %94 {offsets = [0, 228], sizes = [6, 1340], strides = [1, 1]} : vector<6x1568xf32> to vector<6x1340xf32>
    %159 = vector.extract_strided_slice %94 {offsets = [0, 0], sizes = [6, 228], strides = [1, 1]} : vector<6x1568xf32> to vector<6x228xf32>
    %160 = tpu.concatenate %158, %159 in 1 : vector<6x1340xf32>, vector<6x228xf32> -> vector<6x1568xf32>
    %161 = vector.extract_strided_slice %94 {offsets = [0, 230], sizes = [6, 1338], strides = [1, 1]} : vector<6x1568xf32> to vector<6x1338xf32>
    %162 = vector.extract_strided_slice %94 {offsets = [0, 0], sizes = [6, 230], strides = [1, 1]} : vector<6x1568xf32> to vector<6x230xf32>
    %163 = tpu.concatenate %161, %162 in 1 : vector<6x1338xf32>, vector<6x230xf32> -> vector<6x1568xf32>
    %164 = vector.extract_strided_slice %94 {offsets = [0, 232], sizes = [6, 1336], strides = [1, 1]} : vector<6x1568xf32> to vector<6x1336xf32>
    %165 = vector.extract_strided_slice %94 {offsets = [0, 0], sizes = [6, 232], strides = [1, 1]} : vector<6x1568xf32> to vector<6x232xf32>
    %166 = tpu.concatenate %164, %165 in 1 : vector<6x1336xf32>, vector<6x232xf32> -> vector<6x1568xf32>
    %167 = tpu.concatenate %94, %97, %100, %103, %106, %109, %112, %115, %118, %121, %124, %127, %130, %133, %136, %139 in 0 : vector<6x1568xf32>, vector<6x1568xf32>, vector<6x1568xf32>, vector<6x1568xf32>, vector<6x1568xf32>, vector<6x1568xf32>, vector<6x1568xf32>, vector<6x1568xf32>, vector<6x1568xf32>, vector<6x1568xf32>, vector<6x1568xf32>, vector<6x1568xf32>, vector<6x1568xf32>, vector<6x1568xf32>, vector<6x1568xf32>, vector<6x1568xf32> -> vector<96x1568xf32>
    %168 = tpu.concatenate %142, %145, %148, %151, %154, %157, %160, %163, %166 in 0 : vector<6x1568xf32>, vector<6x1568xf32>, vector<6x1568xf32>, vector<6x1568xf32>, vector<6x1568xf32>, vector<6x1568xf32>, vector<6x1568xf32>, vector<6x1568xf32>, vector<6x1568xf32> -> vector<54x1568xf32>
    %169 = tpu.concatenate %167, %168 in 0 : vector<96x1568xf32>, vector<54x1568xf32> -> vector<150x1568xf32>
    %c0_6 = arith.constant 0 : index
    %c0_7 = arith.constant 0 : index
    %170 = vector.load %arg3[%c0_6, %c0_7] : memref<16x150xf32, #tpu.memory_space<vmem>>, vector<16x150xf32>
    %cst_8 = arith.constant dense<0.000000e+00> : vector<16x1568xf32>
    %171 = tpu.matmul %170, %169, %cst_8 {dimension_numbers = #tpu.dot_dimension_numbers<[1], [0], [0], [1], [0, 0, 1, 1], [], []>} : vector<16x150xf32>, vector<150x1568xf32>, vector<16x1568xf32> -> vector<16x1568xf32>
    %172 = vector.extract_strided_slice %171 {offsets = [0, 2], sizes = [16, 1566], strides = [1, 1]} : vector<16x1568xf32> to vector<16x1566xf32>
    %173 = vector.extract_strided_slice %171 {offsets = [0, 0], sizes = [16, 2], strides = [1, 1]} : vector<16x1568xf32> to vector<16x2xf32>
    %174 = tpu.concatenate %172, %173 in 1 : vector<16x1566xf32>, vector<16x2xf32> -> vector<16x1568xf32>
    %175 = arith.maximumf %171, %174 : vector<16x1568xf32>
    %176 = vector.extract_strided_slice %171 {offsets = [0, 56], sizes = [16, 1512], strides = [1, 1]} : vector<16x1568xf32> to vector<16x1512xf32>
    %177 = vector.extract_strided_slice %171 {offsets = [0, 0], sizes = [16, 56], strides = [1, 1]} : vector<16x1568xf32> to vector<16x56xf32>
    %178 = tpu.concatenate %176, %177 in 1 : vector<16x1512xf32>, vector<16x56xf32> -> vector<16x1568xf32>
    %179 = arith.maximumf %175, %178 : vector<16x1568xf32>
    %180 = vector.extract_strided_slice %171 {offsets = [0, 58], sizes = [16, 1510], strides = [1, 1]} : vector<16x1568xf32> to vector<16x1510xf32>
    %181 = vector.extract_strided_slice %171 {offsets = [0, 0], sizes = [16, 58], strides = [1, 1]} : vector<16x1568xf32> to vector<16x58xf32>
    %182 = tpu.concatenate %180, %181 in 1 : vector<16x1510xf32>, vector<16x58xf32> -> vector<16x1568xf32>
    %183 = arith.maximumf %179, %182 : vector<16x1568xf32>
    %c0_9 = arith.constant 0 : index
    %c0_10 = arith.constant 0 : index
    %184 = vector.load %arg4[%c0_9, %c0_10] : memref<16x1xf32, #tpu.memory_space<vmem>>, vector<16x1xf32>
    %185 = vector.broadcast %184 : vector<16x1xf32> to vector<16x1568xf32>
    %186 = arith.addf %183, %185 : vector<16x1568xf32>
    %cst_11 = arith.constant 0.000000e+00 : f32
    %187 = vector.broadcast %cst_11 : f32 to vector<16x1568xf32>
    %188 = arith.maximumf %186, %187 : vector<16x1568xf32>
    %c0_12 = arith.constant 0 : index
    %c0_13 = arith.constant 0 : index
    %189 = vector.load %arg5[%c0_12, %c0_13] : memref<1568x32xf32, #tpu.memory_space<vmem>>, vector<1568x32xf32>
    %cst_14 = arith.constant dense<0.000000e+00> : vector<16x32xf32>
    %190 = tpu.matmul %188, %189, %cst_14 {dimension_numbers = #tpu.dot_dimension_numbers<[1], [0], [0], [1], [0, 0, 1, 1], [], []>} : vector<16x1568xf32>, vector<1568x32xf32>, vector<16x32xf32> -> vector<16x32xf32>
    %191 = vector.extract_strided_slice %190 {offsets = [0, 0], sizes = [1, 16], strides = [1, 1]} : vector<16x32xf32> to vector<1x16xf32>
    %192 = vector.extract_strided_slice %190 {offsets = [1, 0], sizes = [1, 16], strides = [1, 1]} : vector<16x32xf32> to vector<1x16xf32>
    %193 = vector.extract_strided_slice %190 {offsets = [2, 0], sizes = [1, 16], strides = [1, 1]} : vector<16x32xf32> to vector<1x16xf32>
    %194 = vector.extract_strided_slice %190 {offsets = [3, 0], sizes = [1, 16], strides = [1, 1]} : vector<16x32xf32> to vector<1x16xf32>
    %195 = vector.extract_strided_slice %190 {offsets = [4, 0], sizes = [1, 16], strides = [1, 1]} : vector<16x32xf32> to vector<1x16xf32>
    %196 = vector.extract_strided_slice %190 {offsets = [5, 0], sizes = [1, 16], strides = [1, 1]} : vector<16x32xf32> to vector<1x16xf32>
    %197 = vector.extract_strided_slice %190 {offsets = [6, 0], sizes = [1, 16], strides = [1, 1]} : vector<16x32xf32> to vector<1x16xf32>
    %198 = vector.extract_strided_slice %190 {offsets = [7, 0], sizes = [1, 16], strides = [1, 1]} : vector<16x32xf32> to vector<1x16xf32>
    %199 = vector.extract_strided_slice %190 {offsets = [8, 0], sizes = [1, 16], strides = [1, 1]} : vector<16x32xf32> to vector<1x16xf32>
    %200 = vector.extract_strided_slice %190 {offsets = [9, 0], sizes = [1, 16], strides = [1, 1]} : vector<16x32xf32> to vector<1x16xf32>
    %201 = vector.extract_strided_slice %190 {offsets = [10, 0], sizes = [1, 16], strides = [1, 1]} : vector<16x32xf32> to vector<1x16xf32>
    %202 = vector.extract_strided_slice %190 {offsets = [11, 0], sizes = [1, 16], strides = [1, 1]} : vector<16x32xf32> to vector<1x16xf32>
    %203 = vector.extract_strided_slice %190 {offsets = [12, 0], sizes = [1, 16], strides = [1, 1]} : vector<16x32xf32> to vector<1x16xf32>
    %204 = vector.extract_strided_slice %190 {offsets = [13, 0], sizes = [1, 16], strides = [1, 1]} : vector<16x32xf32> to vector<1x16xf32>
    %205 = vector.extract_strided_slice %190 {offsets = [14, 0], sizes = [1, 16], strides = [1, 1]} : vector<16x32xf32> to vector<1x16xf32>
    %206 = vector.extract_strided_slice %190 {offsets = [15, 0], sizes = [1, 16], strides = [1, 1]} : vector<16x32xf32> to vector<1x16xf32>
    %207 = tpu.concatenate %191, %192, %193, %194, %195, %196, %197, %198, %199, %200, %201, %202, %203, %204, %205, %206 in 1 : vector<1x16xf32>, vector<1x16xf32>, vector<1x16xf32>, vector<1x16xf32>, vector<1x16xf32>, vector<1x16xf32>, vector<1x16xf32>, vector<1x16xf32>, vector<1x16xf32>, vector<1x16xf32>, vector<1x16xf32>, vector<1x16xf32>, vector<1x16xf32>, vector<1x16xf32>, vector<1x16xf32>, vector<1x16xf32> -> vector<1x256xf32>
    %208 = vector.extract_strided_slice %190 {offsets = [0, 16], sizes = [1, 16], strides = [1, 1]} : vector<16x32xf32> to vector<1x16xf32>
    %209 = vector.extract_strided_slice %190 {offsets = [1, 16], sizes = [1, 16], strides = [1, 1]} : vector<16x32xf32> to vector<1x16xf32>
    %210 = vector.extract_strided_slice %190 {offsets = [2, 16], sizes = [1, 16], strides = [1, 1]} : vector<16x32xf32> to vector<1x16xf32>
    %211 = vector.extract_strided_slice %190 {offsets = [3, 16], sizes = [1, 16], strides = [1, 1]} : vector<16x32xf32> to vector<1x16xf32>
    %212 = vector.extract_strided_slice %190 {offsets = [4, 16], sizes = [1, 16], strides = [1, 1]} : vector<16x32xf32> to vector<1x16xf32>
    %213 = vector.extract_strided_slice %190 {offsets = [5, 16], sizes = [1, 16], strides = [1, 1]} : vector<16x32xf32> to vector<1x16xf32>
    %214 = vector.extract_strided_slice %190 {offsets = [6, 16], sizes = [1, 16], strides = [1, 1]} : vector<16x32xf32> to vector<1x16xf32>
    %215 = vector.extract_strided_slice %190 {offsets = [7, 16], sizes = [1, 16], strides = [1, 1]} : vector<16x32xf32> to vector<1x16xf32>
    %216 = vector.extract_strided_slice %190 {offsets = [8, 16], sizes = [1, 16], strides = [1, 1]} : vector<16x32xf32> to vector<1x16xf32>
    %217 = vector.extract_strided_slice %190 {offsets = [9, 16], sizes = [1, 16], strides = [1, 1]} : vector<16x32xf32> to vector<1x16xf32>
    %218 = vector.extract_strided_slice %190 {offsets = [10, 16], sizes = [1, 16], strides = [1, 1]} : vector<16x32xf32> to vector<1x16xf32>
    %219 = vector.extract_strided_slice %190 {offsets = [11, 16], sizes = [1, 16], strides = [1, 1]} : vector<16x32xf32> to vector<1x16xf32>
    %220 = vector.extract_strided_slice %190 {offsets = [12, 16], sizes = [1, 16], strides = [1, 1]} : vector<16x32xf32> to vector<1x16xf32>
    %221 = vector.extract_strided_slice %190 {offsets = [13, 16], sizes = [1, 16], strides = [1, 1]} : vector<16x32xf32> to vector<1x16xf32>
    %222 = vector.extract_strided_slice %190 {offsets = [14, 16], sizes = [1, 16], strides = [1, 1]} : vector<16x32xf32> to vector<1x16xf32>
    %223 = vector.extract_strided_slice %190 {offsets = [15, 16], sizes = [1, 16], strides = [1, 1]} : vector<16x32xf32> to vector<1x16xf32>
    %224 = tpu.concatenate %208, %209, %210, %211, %212, %213, %214, %215, %216, %217, %218, %219, %220, %221, %222, %223 in 1 : vector<1x16xf32>, vector<1x16xf32>, vector<1x16xf32>, vector<1x16xf32>, vector<1x16xf32>, vector<1x16xf32>, vector<1x16xf32>, vector<1x16xf32>, vector<1x16xf32>, vector<1x16xf32>, vector<1x16xf32>, vector<1x16xf32>, vector<1x16xf32>, vector<1x16xf32>, vector<1x16xf32>, vector<1x16xf32> -> vector<1x256xf32>
    %225 = tpu.concatenate %207, %224 in 0 : vector<1x256xf32>, vector<1x256xf32> -> vector<2x256xf32>
    %c0_15 = arith.constant 0 : index
    %c0_16 = arith.constant 0 : index
    %226 = vector.load %arg6[%c0_15, %c0_16] : memref<256x128xf32, #tpu.memory_space<vmem>>, vector<256x128xf32>
    %cst_17 = arith.constant dense<0.000000e+00> : vector<2x128xf32>
    %227 = tpu.matmul %225, %226, %cst_17 {dimension_numbers = #tpu.dot_dimension_numbers<[1], [0], [0], [1], [0, 0, 1, 1], [], []>} : vector<2x256xf32>, vector<256x128xf32>, vector<2x128xf32> -> vector<2x128xf32>
    %c0_18 = arith.constant 0 : index
    %c0_19 = arith.constant 0 : index
    %228 = vector.load %arg7[%c0_18, %c0_19] : memref<1x128xf32, #tpu.memory_space<vmem>>, vector<1x128xf32>
    %229 = vector.broadcast %228 : vector<1x128xf32> to vector<2x128xf32>
    %230 = arith.addf %227, %229 : vector<2x128xf32>
    %cst_20 = arith.constant 0.000000e+00 : f32
    %231 = vector.broadcast %cst_20 : f32 to vector<2x128xf32>
    %232 = arith.maximumf %230, %231 : vector<2x128xf32>
    %c0_21 = arith.constant 0 : index
    %c0_22 = arith.constant 0 : index
    %233 = vector.load %arg8[%c0_21, %c0_22] : memref<128x128xf32, #tpu.memory_space<vmem>>, vector<128x128xf32>
    %cst_23 = arith.constant dense<0.000000e+00> : vector<2x128xf32>
    %234 = tpu.matmul %232, %233, %cst_23 {dimension_numbers = #tpu.dot_dimension_numbers<[1], [0], [0], [1], [0, 0, 1, 1], [], []>} : vector<2x128xf32>, vector<128x128xf32>, vector<2x128xf32> -> vector<2x128xf32>
    %c0_24 = arith.constant 0 : index
    %c0_25 = arith.constant 0 : index
    %235 = vector.load %arg9[%c0_24, %c0_25] : memref<1x128xf32, #tpu.memory_space<vmem>>, vector<1x128xf32>
    %236 = vector.broadcast %235 : vector<1x128xf32> to vector<2x128xf32>
    %237 = arith.addf %234, %236 : vector<2x128xf32>
    %cst_26 = arith.constant 0.000000e+00 : f32
    %238 = vector.broadcast %cst_26 : f32 to vector<2x128xf32>
    %239 = arith.maximumf %237, %238 : vector<2x128xf32>
    %c0_27 = arith.constant 0 : index
    %c0_28 = arith.constant 0 : index
    %240 = vector.load %arg10[%c0_27, %c0_28] : memref<128x10xf32, #tpu.memory_space<vmem>>, vector<128x10xf32>
    %cst_29 = arith.constant dense<0.000000e+00> : vector<2x10xf32>
    %241 = tpu.matmul %239, %240, %cst_29 {dimension_numbers = #tpu.dot_dimension_numbers<[1], [0], [0], [1], [0, 0, 1, 1], [], []>} : vector<2x128xf32>, vector<128x10xf32>, vector<2x10xf32> -> vector<2x10xf32>
    %c0_30 = arith.constant 0 : index
    %c0_31 = arith.constant 0 : index
    %242 = vector.load %arg11[%c0_30, %c0_31] : memref<1x10xf32, #tpu.memory_space<vmem>>, vector<1x10xf32>
    %243 = vector.broadcast %242 : vector<1x10xf32> to vector<2x10xf32>
    %244 = arith.addf %241, %243 : vector<2x10xf32>
    %c0_32 = arith.constant 0 : index
    %c0_33 = arith.constant 0 : index
    %245 = vector.load %arg12[%c0_32, %c0_33] : memref<2x10xf32, #tpu.memory_space<vmem>>, vector<2x10xf32>
    tpu.vector_store %arg12[%c0_32, %c0_33], %244 {strides = array<i32>} : memref<2x10xf32, #tpu.memory_space<vmem>>, vector<2x10xf32>,
    return
  }
}

</mosaic_0001>

<llo_original>
// kernel: forward.1
$region0: #{forward.1}
  #allocation0 [shape = 'u32[]', space=smem, size = 0x4, offset = 0x4, fixed_abs, tag = 'smem constant byte address 0x4 - core index']
  #allocation1 [shape = 'u32[144,128]{1,0:T(1,128)}', space=vmem, size = 0x12000, scoped, tag = 'internal scratch']
  %s0 = inlined_call_operand.vmem [shape: f32[3,1568], index: 0, kind: input, shape index: {}]
  %s1 = inlined_call_operand.vmem [shape: f32[6,75], index: 1, kind: input, shape index: {}]
  %s2 = inlined_call_operand.vmem [shape: f32[6,1], index: 2, kind: input, shape index: {}]
  %s3 = inlined_call_operand.vmem [shape: f32[16,150], index: 3, kind: input, shape index: {}]
  %s4 = inlined_call_operand.vmem [shape: f32[16,1], index: 4, kind: input, shape index: {}]
  %s5 = inlined_call_operand.hbm [shape: f32[1568,32], index: 5, kind: input, shape index: {}]
  %s6 = inlined_call_operand.vmem [shape: f32[256,128], index: 6, kind: input, shape index: {}]
  %s7 = inlined_call_operand.vmem [shape: f32[1,128], index: 7, kind: input, shape index: {}]
  %s8 = inlined_call_operand.vmem [shape: f32[128,128], index: 8, kind: input, shape index: {}]
  %s9 = inlined_call_operand.vmem [shape: f32[1,128], index: 9, kind: input, shape index: {}]
  %s10 = inlined_call_operand.vmem [shape: f32[128,10], index: 10, kind: input, shape index: {}]
  %s11 = inlined_call_operand.vmem [shape: f32[1,10], index: 11, kind: input, shape index: {}]
  %s12 = inlined_call_operand.hbm [shape: f32[2,10], index: 12, kind: output, shape index: {}]
  %s13 = sld [smem:[#allocation0]]
  $region62: #{forward.1} parent=0
    _
  %s15 = ssub.s32 1, %s13
  %s16 = scalar_select 0, %s15, %s13
  $region1: #{forward.1} parent=0
    #allocation2 [shape = 'u8[802816]{0}', space=vmem, size = 0xc4000, scoped, tag = 'input window, operand 5, single buffered']
    #allocation3 [shape = 's32[1]{0}', space=sflag, size = 0x4, scoped, tag = 'scoped memory for forward.1']
    #allocation4 [shape = 's32[1]{0}', space=sflag, size = 0x4, scoped, tag = 'scoped memory for forward.1']
    #allocation5 [shape = 'u8[1024]{0}', space=vmem, size = 0x400, scoped, tag = 'output window, operand 0, single buffered']
    %17 = vsyncpa [#allocation3], 0
    %18 = vsyncpa [#allocation4], 0
    // Predicated region
    $region2: #{forward.1} parent=1 // pred_check
      _
    $region3: #{forward.1} parent=1 // pred_check_branch
      %20 = sbr.rel (0) target = $region5
    $region4: #{forward.1} parent=1 // pred_region
      _
    $region5: #{forward.1} parent=1 // pred_fallthru
      _
    // Predicated region
    $region6: #{forward.1} parent=1 // pred_check
      _
    $region7: #{forward.1} parent=1 // pred_check_branch
      %22 = sbr.rel (0) target = $region9
    $region8: #{forward.1} parent=1 // pred_region
      _
    $region9: #{forward.1} parent=1 // pred_fallthru
      _
    // Predicated region
    $region10: #{forward.1} parent=1 // pred_check
      _
    $region11: #{forward.1} parent=1 // pred_check_branch
      %24 = sbr.rel (0) target = $region13
    $region12: #{forward.1} parent=1 // pred_region
      _
    $region13: #{forward.1} parent=1 // pred_fallthru
      _
    // Predicated region
    $region14: #{forward.1} parent=1 // pred_check
      _
    $region15: #{forward.1} parent=1 // pred_check_branch
      %26 = sbr.rel (0) target = $region17
    $region16: #{forward.1} parent=1 // pred_region
      _
    $region17: #{forward.1} parent=1 // pred_fallthru
      _
    // Predicated region
    $region18: #{forward.1} parent=1 // pred_check
      _
    $region19: #{forward.1} parent=1 // pred_check_branch
      %28 = sbr.rel (0) target = $region21
    $region20: #{forward.1} parent=1 // pred_region
      _
    $region21: #{forward.1} parent=1 // pred_fallthru
      _
    // Predicated region
    $region22: #{forward.1} parent=1 // pred_check
      _
    $region23: #{forward.1} parent=1 // pred_check_branch
      %30 = sbr.rel (0) target = $region25
    $region24: #{forward.1} parent=1 // pred_region
      %s32 = ssub.s32 25088, 25088
      %33 = vsyncadd [#allocation3], %s32
      %s34 = sshll.u32 [#allocation2], 4
      %s35 = int_to_ptr.vmem [resolvable:$true] %s34
      %40 = dma.hbm_to_vmem [thread:$0]  %s5, 25088, %s35, [#allocation3], 128, 128, 8
    $region25: #{forward.1} parent=1 // pred_fallthru
      _
    // Predicated region
    $region26: #{forward.1} parent=1 // pred_check
      _
    $region27: #{forward.1} parent=1 // pred_check_branch
      %42 = sbr.rel (0) target = $region29
    $region28: #{forward.1} parent=1 // pred_region
      _
    $region29: #{forward.1} parent=1 // pred_fallthru
      _
    // Predicated region
    $region30: #{forward.1} parent=1 // pred_check
      _
    $region31: #{forward.1} parent=1 // pred_check_branch
      %44 = sbr.rel (0) target = $region33
    $region32: #{forward.1} parent=1 // pred_region
      _
    $region33: #{forward.1} parent=1 // pred_fallthru
      _
    // Predicated region
    $region34: #{forward.1} parent=1 // pred_check
      _
    $region35: #{forward.1} parent=1 // pred_check_branch
      %46 = sbr.rel (0) target = $region37
    $region36: #{forward.1} parent=1 // pred_region
      _
    $region37: #{forward.1} parent=1 // pred_fallthru
      _
    // Predicated region
    $region38: #{forward.1} parent=1 // pred_check
      _
    $region39: #{forward.1} parent=1 // pred_check_branch
      %48 = sbr.rel (0) target = $region41
    $region40: #{forward.1} parent=1 // pred_region
      _
    $region41: #{forward.1} parent=1 // pred_fallthru
      _
    // Predicated region
    $region42: #{forward.1} parent=1 // pred_check
      _
    $region43: #{forward.1} parent=1 // pred_check_branch
      %50 = sbr.rel (0) target = $region45
    $region44: #{forward.1} parent=1 // pred_region
      _
    $region45: #{forward.1} parent=1 // pred_fallthru
      _
    // Predicated region
    $region46: #{forward.1} parent=1 // pred_check
      _
    $region47: #{forward.1} parent=1 // pred_check_branch
      %52 = sbr.rel (0) target = $region49
    $region48: #{forward.1} parent=1 // pred_region
      _
    $region49: #{forward.1} parent=1 // pred_fallthru
      _
    // Predicated region
    $region50: #{forward.1} parent=1 // pred_check
      _
    $region51: #{forward.1} parent=1 // pred_check_branch
      %54 = sbr.rel (0) target = $region53
    $region52: #{forward.1} parent=1 // pred_region
      %55 = dma.done [#allocation3], 25088
    $region53: #{forward.1} parent=1 // pred_fallthru
      _
    %v56 = vld [vmem:[%s0] sm:$0x77]
    %v57 = vld [vmem:[%s0 + $0x8] sm:$0x77]
    %v58 = vld [vmem:[%s0 + $0x10] sm:$0x77]
    %v59 = vld [vmem:[%s0 + $0x18] sm:$0x77]
    %v60 = vld [vmem:[%s0 + $0x20] sm:$0x77]
    %v61 = vld [vmem:[%s0 + $0x28] sm:$0x77]
    %v62 = vld [vmem:[%s0 + $0x30] sm:$0x7]
    %v70 = vcombine.high %v56, %v56
    %v71 = vcombine.high %v57, %v57
    %v72 = vcombine.high %v58, %v58
    %v73 = vcombine.high %v59, %v59
    %v74 = vcombine.high %v60, %v60
    %v75 = vcombine.high %v61, %v61
    %76 = vrot.lane.b32.xlu0 %v56, 127
    %v77 = vpop.permute.xlu0 %76
    %78 = vrot.lane.b32.xlu0 %v70, 127
    %v79 = vpop.permute.xlu0 %78
    %80 = vrot.lane.b32.xlu0 %v57, 127
    %v81 = vpop.permute.xlu0 %80
    %82 = vrot.lane.b32.xlu0 %v71, 127
    %v83 = vpop.permute.xlu0 %82
    %84 = vrot.lane.b32.xlu0 %v58, 127
    %v85 = vpop.permute.xlu0 %84
    %86 = vrot.lane.b32.xlu0 %v72, 127
    %v87 = vpop.permute.xlu0 %86
    %88 = vrot.lane.b32.xlu0 %v59, 127
    %v89 = vpop.permute.xlu0 %88
    %90 = vrot.lane.b32.xlu0 %v73, 127
    %v91 = vpop.permute.xlu0 %90
    %92 = vrot.lane.b32.xlu0 %v60, 127
    %v93 = vpop.permute.xlu0 %92
    %94 = vrot.lane.b32.xlu0 %v74, 127
    %v95 = vpop.permute.xlu0 %94
    %96 = vrot.lane.b32.xlu0 %v61, 127
    %v97 = vpop.permute.xlu0 %96
    %98 = vrot.lane.b32.xlu0 %v75, 127
    %v99 = vpop.permute.xlu0 %98
    %100 = vrot.lane.b32.xlu0 %v62, 127
    %v101 = vpop.permute.xlu0 %100
    %vm102 = vcmask 1039360
    %v103 = vsel %vm102, %v77, %v79
    %v104 = vsel %vm102, %v79, %v81
    %v105 = vsel %vm102, %v81, %v83
    %v106 = vsel %vm102, %v83, %v85
    %v107 = vsel %vm102, %v85, %v87
    %v108 = vsel %vm102, %v87, %v89
    %v109 = vsel %vm102, %v89, %v91
    %v110 = vsel %vm102, %v91, %v93
    %v111 = vsel %vm102, %v93, %v95
    %v112 = vsel %vm102, %v95, %v97
    %v113 = vsel %vm102, %v97, %v99
    %v114 = vsel %vm102, %v99, %v101
    %116 = vrot.lane.b32.xlu0 %v56, 31
    %v117 = vpop.permute.xlu0 %116
    %vm119 = vcmask 252928
    %v120 = vsel %vm119, %v101, %v117
    %121 = vrot.lane.b32.xlu0 %v56, 126
    %v122 = vpop.permute.xlu0 %121
    %123 = vrot.lane.b32.xlu0 %v70, 126
    %v124 = vpop.permute.xlu0 %123
    %125 = vrot.lane.b32.xlu0 %v57, 126
    %v126 = vpop.permute.xlu0 %125
    %127 = vrot.lane.b32.xlu0 %v71, 126
    %v128 = vpop.permute.xlu0 %127
    %129 = vrot.lane.b32.xlu0 %v58, 126
    %v130 = vpop.permute.xlu0 %129
    %131 = vrot.lane.b32.xlu0 %v72, 126
    %v132 = vpop.permute.xlu0 %131
    %133 = vrot.lane.b32.xlu0 %v59, 126
    %v134 = vpop.permute.xlu0 %133
    %135 = vrot.lane.b32.xlu0 %v73, 126
    %v136 = vpop.permute.xlu0 %135
    %137 = vrot.lane.b32.xlu0 %v60, 126
    %v138 = vpop.permute.xlu0 %137
    %139 = vrot.lane.b32.xlu0 %v74, 126
    %v140 = vpop.permute.xlu0 %139
    %141 = vrot.lane.b32.xlu0 %v61, 126
    %v142 = vpop.permute.xlu0 %141
    %143 = vrot.lane.b32.xlu0 %v75, 126
    %v144 = vpop.permute.xlu0 %143
    %145 = vrot.lane.b32.xlu0 %v62, 126
    %v146 = vpop.permute.xlu0 %145
    %vm147 = vcmask 1031168
    %v148 = vsel %vm147, %v122, %v124
    %v149 = vsel %vm147, %v124, %v126
    %v150 = vsel %vm147, %v126, %v128
    %v151 = vsel %vm147, %v128, %v130
    %v152 = vsel %vm147, %v130, %v132
    %v153 = vsel %vm147, %v132, %v134
    %v154 = vsel %vm147, %v134, %v136
    %v155 = vsel %vm147, %v136, %v138
    %v156 = vsel %vm147, %v138, %v140
    %v157 = vsel %vm147, %v140, %v142
    %v158 = vsel %vm147, %v142, %v144
    %v159 = vsel %vm147, %v144, %v146
    %161 = vrot.lane.b32.xlu0 %v56, 30
    %v162 = vpop.permute.xlu0 %161
    %vm164 = vcmask 244736
    %v165 = vsel %vm164, %v146, %v162
    %166 = vrot.lane.b32.xlu0 %v56, 125
    %v167 = vpop.permute.xlu0 %166
    %168 = vrot.lane.b32.xlu0 %v70, 125
    %v169 = vpop.permute.xlu0 %168
    %170 = vrot.lane.b32.xlu0 %v57, 125
    %v171 = vpop.permute.xlu0 %170
    %172 = vrot.lane.b32.xlu0 %v71, 125
    %v173 = vpop.permute.xlu0 %172
    %174 = vrot.lane.b32.xlu0 %v58, 125
    %v175 = vpop.permute.xlu0 %174
    %176 = vrot.lane.b32.xlu0 %v72, 125
    %v177 = vpop.permute.xlu0 %176
    %178 = vrot.lane.b32.xlu0 %v59, 125
    %v179 = vpop.permute.xlu0 %178
    %180 = vrot.lane.b32.xlu0 %v73, 125
    %v181 = vpop.permute.xlu0 %180
    %182 = vrot.lane.b32.xlu0 %v60, 125
    %v183 = vpop.permute.xlu0 %182
    %184 = vrot.lane.b32.xlu0 %v74, 125
    %v185 = vpop.permute.xlu0 %184
    %186 = vrot.lane.b32.xlu0 %v61, 125
    %v187 = vpop.permute.xlu0 %186
    %188 = vrot.lane.b32.xlu0 %v75, 125
    %v189 = vpop.permute.xlu0 %188
    %190 = vrot.lane.b32.xlu0 %v62, 125
    %v191 = vpop.permute.xlu0 %190
    %vm192 = vcmask 1022976
    %v193 = vsel %vm192, %v167, %v169
    %v194 = vsel %vm192, %v169, %v171
    %v195 = vsel %vm192, %v171, %v173
    %v196 = vsel %vm192, %v173, %v175
    %v197 = vsel %vm192, %v175, %v177
    %v198 = vsel %vm192, %v177, %v179
    %v199 = vsel %vm192, %v179, %v181
    %v200 = vsel %vm192, %v181, %v183
    %v201 = vsel %vm192, %v183, %v185
    %v202 = vsel %vm192, %v185, %v187
    %v203 = vsel %vm192, %v187, %v189
    %v204 = vsel %vm192, %v189, %v191
    %206 = vrot.lane.b32.xlu0 %v56, 29
    %v207 = vpop.permute.xlu0 %206
    %vm209 = vcmask 236544
    %v210 = vsel %vm209, %v191, %v207
    %211 = vrot.lane.b32.xlu0 %v56, 124
    %v212 = vpop.permute.xlu0 %211
    %213 = vrot.lane.b32.xlu0 %v70, 124
    %v214 = vpop.permute.xlu0 %213
    %215 = vrot.lane.b32.xlu0 %v57, 124
    %v216 = vpop.permute.xlu0 %215
    %217 = vrot.lane.b32.xlu0 %v71, 124
    %v218 = vpop.permute.xlu0 %217
    %219 = vrot.lane.b32.xlu0 %v58, 124
    %v220 = vpop.permute.xlu0 %219
    %221 = vrot.lane.b32.xlu0 %v72, 124
    %v222 = vpop.permute.xlu0 %221
    %223 = vrot.lane.b32.xlu0 %v59, 124
    %v224 = vpop.permute.xlu0 %223
    %225 = vrot.lane.b32.xlu0 %v73, 124
    %v226 = vpop.permute.xlu0 %225
    %227 = vrot.lane.b32.xlu0 %v60, 124
    %v228 = vpop.permute.xlu0 %227
    %229 = vrot.lane.b32.xlu0 %v74, 124
    %v230 = vpop.permute.xlu0 %229
    %231 = vrot.lane.b32.xlu0 %v61, 124
    %v232 = vpop.permute.xlu0 %231
    %233 = vrot.lane.b32.xlu0 %v75, 124
    %v234 = vpop.permute.xlu0 %233
    %235 = vrot.lane.b32.xlu0 %v62, 124
    %v236 = vpop.permute.xlu0 %235
    %vm237 = vcmask 1014784
    %v238 = vsel %vm237, %v212, %v214
    %v239 = vsel %vm237, %v214, %v216
    %v240 = vsel %vm237, %v216, %v218
    %v241 = vsel %vm237, %v218, %v220
    %v242 = vsel %vm237, %v220, %v222
    %v243 = vsel %vm237, %v222, %v224
    %v244 = vsel %vm237, %v224, %v226
    %v245 = vsel %vm237, %v226, %v228
    %v246 = vsel %vm237, %v228, %v230
    %v247 = vsel %vm237, %v230, %v232
    %v248 = vsel %vm237, %v232, %v234
    %v249 = vsel %vm237, %v234, %v236
    %251 = vrot.lane.b32.xlu0 %v56, 28
    %v252 = vpop.permute.xlu0 %251
    %vm254 = vcmask 228352
    %v255 = vsel %vm254, %v236, %v252
    %256 = vrot.lane.b32.xlu0 %v56, 100
    %v257 = vpop.permute.xlu0 %256
    %258 = vrot.lane.b32.xlu0 %v70, 100
    %v259 = vpop.permute.xlu0 %258
    %260 = vrot.lane.b32.xlu0 %v57, 100
    %v261 = vpop.permute.xlu0 %260
    %262 = vrot.lane.b32.xlu0 %v71, 100
    %v263 = vpop.permute.xlu0 %262
    %264 = vrot.lane.b32.xlu0 %v58, 100
    %v265 = vpop.permute.xlu0 %264
    %266 = vrot.lane.b32.xlu0 %v72, 100
    %v267 = vpop.permute.xlu0 %266
    %268 = vrot.lane.b32.xlu0 %v59, 100
    %v269 = vpop.permute.xlu0 %268
    %270 = vrot.lane.b32.xlu0 %v73, 100
    %v271 = vpop.permute.xlu0 %270
    %272 = vrot.lane.b32.xlu0 %v60, 100
    %v273 = vpop.permute.xlu0 %272
    %274 = vrot.lane.b32.xlu0 %v74, 100
    %v275 = vpop.permute.xlu0 %274
    %276 = vrot.lane.b32.xlu0 %v61, 100
    %v277 = vpop.permute.xlu0 %276
    %278 = vrot.lane.b32.xlu0 %v75, 100
    %v279 = vpop.permute.xlu0 %278
    %280 = vrot.lane.b32.xlu0 %v62, 100
    %v281 = vpop.permute.xlu0 %280
    %vm282 = vcmask 818176
    %v283 = vsel %vm282, %v257, %v259
    %v284 = vsel %vm282, %v259, %v261
    %v285 = vsel %vm282, %v261, %v263
    %v286 = vsel %vm282, %v263, %v265
    %v287 = vsel %vm282, %v265, %v267
    %v288 = vsel %vm282, %v267, %v269
    %v289 = vsel %vm282, %v269, %v271
    %v290 = vsel %vm282, %v271, %v273
    %v291 = vsel %vm282, %v273, %v275
    %v292 = vsel %vm282, %v275, %v277
    %v293 = vsel %vm282, %v277, %v279
    %v294 = vsel %vm282, %v279, %v281
    %296 = vrot.lane.b32.xlu0 %v56, 4
    %v297 = vpop.permute.xlu0 %296
    %vm299 = vcmask 31744
    %v300 = vsel %vm299, %v281, %v297
    %301 = vrot.lane.b32.xlu0 %v56, 99
    %v302 = vpop.permute.xlu0 %301
    %303 = vrot.lane.b32.xlu0 %v70, 99
    %v304 = vpop.permute.xlu0 %303
    %305 = vrot.lane.b32.xlu0 %v57, 99
    %v306 = vpop.permute.xlu0 %305
    %307 = vrot.lane.b32.xlu0 %v71, 99
    %v308 = vpop.permute.xlu0 %307
    %309 = vrot.lane.b32.xlu0 %v58, 99
    %v310 = vpop.permute.xlu0 %309
    %311 = vrot.lane.b32.xlu0 %v72, 99
    %v312 = vpop.permute.xlu0 %311
    %313 = vrot.lane.b32.xlu0 %v59, 99
    %v314 = vpop.permute.xlu0 %313
    %315 = vrot.lane.b32.xlu0 %v73, 99
    %v316 = vpop.permute.xlu0 %315
    %317 = vrot.lane.b32.xlu0 %v60, 99
    %v318 = vpop.permute.xlu0 %317
    %319 = vrot.lane.b32.xlu0 %v74, 99
    %v320 = vpop.permute.xlu0 %319
    %321 = vrot.lane.b32.xlu0 %v61, 99
    %v322 = vpop.permute.xlu0 %321
    %323 = vrot.lane.b32.xlu0 %v75, 99
    %v324 = vpop.permute.xlu0 %323
    %325 = vrot.lane.b32.xlu0 %v62, 99
    %v326 = vpop.permute.xlu0 %325
    %vm327 = vcmask 809984
    %v328 = vsel %vm327, %v302, %v304
    %v329 = vsel %vm327, %v304, %v306
    %v330 = vsel %vm327, %v306, %v308
    %v331 = vsel %vm327, %v308, %v310
    %v332 = vsel %vm327, %v310, %v312
    %v333 = vsel %vm327, %v312, %v314
    %v334 = vsel %vm327, %v314, %v316
    %v335 = vsel %vm327, %v316, %v318
    %v336 = vsel %vm327, %v318, %v320
    %v337 = vsel %vm327, %v320, %v322
    %v338 = vsel %vm327, %v322, %v324
    %v339 = vsel %vm327, %v324, %v326
    %341 = vrot.lane.b32.xlu0 %v56, 3
    %v342 = vpop.permute.xlu0 %341
    %vm344 = vcmask 23552
    %v345 = vsel %vm344, %v326, %v342
    %346 = vrot.lane.b32.xlu0 %v56, 98
    %v347 = vpop.permute.xlu0 %346
    %348 = vrot.lane.b32.xlu0 %v70, 98
    %v349 = vpop.permute.xlu0 %348
    %350 = vrot.lane.b32.xlu0 %v57, 98
    %v351 = vpop.permute.xlu0 %350
    %352 = vrot.lane.b32.xlu0 %v71, 98
    %v353 = vpop.permute.xlu0 %352
    %354 = vrot.lane.b32.xlu0 %v58, 98
    %v355 = vpop.permute.xlu0 %354
    %356 = vrot.lane.b32.xlu0 %v72, 98
    %v357 = vpop.permute.xlu0 %356
    %358 = vrot.lane.b32.xlu0 %v59, 98
    %v359 = vpop.permute.xlu0 %358
    %360 = vrot.lane.b32.xlu0 %v73, 98
    %v361 = vpop.permute.xlu0 %360
    %362 = vrot.lane.b32.xlu0 %v60, 98
    %v363 = vpop.permute.xlu0 %362
    %364 = vrot.lane.b32.xlu0 %v74, 98
    %v365 = vpop.permute.xlu0 %364
    %366 = vrot.lane.b32.xlu0 %v61, 98
    %v367 = vpop.permute.xlu0 %366
    %368 = vrot.lane.b32.xlu0 %v75, 98
    %v369 = vpop.permute.xlu0 %368
    %370 = vrot.lane.b32.xlu0 %v62, 98
    %v371 = vpop.permute.xlu0 %370
    %vm372 = vcmask 801792
    %v373 = vsel %vm372, %v347, %v349
    %v374 = vsel %vm372, %v349, %v351
    %v375 = vsel %vm372, %v351, %v353
    %v376 = vsel %vm372, %v353, %v355
    %v377 = vsel %vm372, %v355, %v357
    %v378 = vsel %vm372, %v357, %v359
    %v379 = vsel %vm372, %v359, %v361
    %v380 = vsel %vm372, %v361, %v363
    %v381 = vsel %vm372, %v363, %v365
    %v382 = vsel %vm372, %v365, %v367
    %v383 = vsel %vm372, %v367, %v369
    %v384 = vsel %vm372, %v369, %v371
    %386 = vrot.lane.b32.xlu0 %v56, 2
    %v387 = vpop.permute.xlu0 %386
    %vm389 = vcmask 15360
    %v390 = vsel %vm389, %v371, %v387
    %391 = vrot.lane.b32.xlu0 %v56, 97
    %v392 = vpop.permute.xlu0 %391
    %393 = vrot.lane.b32.xlu0 %v70, 97
    %v394 = vpop.permute.xlu0 %393
    %395 = vrot.lane.b32.xlu0 %v57, 97
    %v396 = vpop.permute.xlu0 %395
    %397 = vrot.lane.b32.xlu0 %v71, 97
    %v398 = vpop.permute.xlu0 %397
    %399 = vrot.lane.b32.xlu0 %v58, 97
    %v400 = vpop.permute.xlu0 %399
    %401 = vrot.lane.b32.xlu0 %v72, 97
    %v402 = vpop.permute.xlu0 %401
    %403 = vrot.lane.b32.xlu0 %v59, 97
    %v404 = vpop.permute.xlu0 %403
    %405 = vrot.lane.b32.xlu0 %v73, 97
    %v406 = vpop.permute.xlu0 %405
    %407 = vrot.lane.b32.xlu0 %v60, 97
    %v408 = vpop.permute.xlu0 %407
    %409 = vrot.lane.b32.xlu0 %v74, 97
    %v410 = vpop.permute.xlu0 %409
    %411 = vrot.lane.b32.xlu0 %v61, 97
    %v412 = vpop.permute.xlu0 %411
    %413 = vrot.lane.b32.xlu0 %v75, 97
    %v414 = vpop.permute.xlu0 %413
    %415 = vrot.lane.b32.xlu0 %v62, 97
    %v416 = vpop.permute.xlu0 %415
    %vm417 = vcmask 793600
    %v418 = vsel %vm417, %v392, %v394
    %v419 = vsel %vm417, %v394, %v396
    %v420 = vsel %vm417, %v396, %v398
    %v421 = vsel %vm417, %v398, %v400
    %v422 = vsel %vm417, %v400, %v402
    %v423 = vsel %vm417, %v402, %v404
    %v424 = vsel %vm417, %v404, %v406
    %v425 = vsel %vm417, %v406, %v408
    %v426 = vsel %vm417, %v408, %v410
    %v427 = vsel %vm417, %v410, %v412
    %v428 = vsel %vm417, %v412, %v414
    %v429 = vsel %vm417, %v414, %v416
    %443 = vrot.lane.b32.xlu0 %v56, 1
    %v444 = vpop.permute.xlu0 %443
    %vm446 = vcmask 7168
    %v447 = vsel %vm446, %v416, %v444
    %448 = vrot.lane.b32.xlu0 %v56, 96
    %v449 = vpop.permute.xlu0 %448
    %450 = vrot.lane.b32.xlu0 %v70, 96
    %v451 = vpop.permute.xlu0 %450
    %452 = vrot.lane.b32.xlu0 %v57, 96
    %v453 = vpop.permute.xlu0 %452
    %454 = vrot.lane.b32.xlu0 %v71, 96
    %v455 = vpop.permute.xlu0 %454
    %456 = vrot.lane.b32.xlu0 %v58, 96
    %v457 = vpop.permute.xlu0 %456
    %458 = vrot.lane.b32.xlu0 %v72, 96
    %v459 = vpop.permute.xlu0 %458
    %460 = vrot.lane.b32.xlu0 %v59, 96
    %v461 = vpop.permute.xlu0 %460
    %462 = vrot.lane.b32.xlu0 %v73, 96
    %v463 = vpop.permute.xlu0 %462
    %464 = vrot.lane.b32.xlu0 %v60, 96
    %v465 = vpop.permute.xlu0 %464
    %466 = vrot.lane.b32.xlu0 %v74, 96
    %v467 = vpop.permute.xlu0 %466
    %468 = vrot.lane.b32.xlu0 %v61, 96
    %v469 = vpop.permute.xlu0 %468
    %470 = vrot.lane.b32.xlu0 %v75, 96
    %v471 = vpop.permute.xlu0 %470
    %472 = vrot.lane.b32.xlu0 %v62, 96
    %v473 = vpop.permute.xlu0 %472
    %vm474 = vcmask 785408
    %v475 = vsel %vm474, %v449, %v451
    %v476 = vsel %vm474, %v451, %v453
    %v477 = vsel %vm474, %v453, %v455
    %v478 = vsel %vm474, %v455, %v457
    %v479 = vsel %vm474, %v457, %v459
    %v480 = vsel %vm474, %v459, %v461
    %v481 = vsel %vm474, %v461, %v463
    %v482 = vsel %vm474, %v463, %v465
    %v483 = vsel %vm474, %v465, %v467
    %v484 = vsel %vm474, %v467, %v469
    %v485 = vsel %vm474, %v469, %v471
    %v486 = vsel %vm474, %v471, %v473
    %487 = vrot.lane.b32.xlu0 %v56, 72
    %v488 = vpop.permute.xlu0 %487
    %489 = vrot.lane.b32.xlu0 %v70, 72
    %v490 = vpop.permute.xlu0 %489
    %491 = vrot.lane.b32.xlu0 %v57, 72
    %v492 = vpop.permute.xlu0 %491
    %493 = vrot.lane.b32.xlu0 %v71, 72
    %v494 = vpop.permute.xlu0 %493
    %495 = vrot.lane.b32.xlu0 %v58, 72
    %v496 = vpop.permute.xlu0 %495
    %497 = vrot.lane.b32.xlu0 %v72, 72
    %v498 = vpop.permute.xlu0 %497
    %499 = vrot.lane.b32.xlu0 %v59, 72
    %v500 = vpop.permute.xlu0 %499
    %501 = vrot.lane.b32.xlu0 %v73, 72
    %v502 = vpop.permute.xlu0 %501
    %503 = vrot.lane.b32.xlu0 %v60, 72
    %v504 = vpop.permute.xlu0 %503
    %505 = vrot.lane.b32.xlu0 %v74, 72
    %v506 = vpop.permute.xlu0 %505
    %507 = vrot.lane.b32.xlu0 %v61, 72
    %v508 = vpop.permute.xlu0 %507
    %509 = vrot.lane.b32.xlu0 %v75, 72
    %v510 = vpop.permute.xlu0 %509
    %511 = vrot.lane.b32.xlu0 %v62, 72
    %v512 = vpop.permute.xlu0 %511
    %vm513 = vcmask 588800
    %v514 = vsel %vm513, %v488, %v490
    %v515 = vsel %vm513, %v490, %v492
    %v516 = vsel %vm513, %v492, %v494
    %v517 = vsel %vm513, %v494, %v496
    %v518 = vsel %vm513, %v496, %v498
    %v519 = vsel %vm513, %v498, %v500
    %v520 = vsel %vm513, %v500, %v502
    %v521 = vsel %vm513, %v502, %v504
    %v522 = vsel %vm513, %v504, %v506
    %v523 = vsel %vm513, %v506, %v508
    %v524 = vsel %vm513, %v508, %v510
    %v525 = vsel %vm513, %v510, %v512
    %527 = vrot.lane.b32.xlu0 %v56, 104
    %v528 = vpop.permute.xlu0 %527
    %vm530 = vcmask 850944
    %v531 = vsel %vm530, %v525, %v528
    %532 = vrot.lane.b32.xlu0 %v56, 71
    %v533 = vpop.permute.xlu0 %532
    %534 = vrot.lane.b32.xlu0 %v70, 71
    %v535 = vpop.permute.xlu0 %534
    %536 = vrot.lane.b32.xlu0 %v57, 71
    %v537 = vpop.permute.xlu0 %536
    %538 = vrot.lane.b32.xlu0 %v71, 71
    %v539 = vpop.permute.xlu0 %538
    %540 = vrot.lane.b32.xlu0 %v58, 71
    %v541 = vpop.permute.xlu0 %540
    %542 = vrot.lane.b32.xlu0 %v72, 71
    %v543 = vpop.permute.xlu0 %542
    %544 = vrot.lane.b32.xlu0 %v59, 71
    %v545 = vpop.permute.xlu0 %544
    %546 = vrot.lane.b32.xlu0 %v73, 71
    %v547 = vpop.permute.xlu0 %546
    %548 = vrot.lane.b32.xlu0 %v60, 71
    %v549 = vpop.permute.xlu0 %548
    %550 = vrot.lane.b32.xlu0 %v74, 71
    %v551 = vpop.permute.xlu0 %550
    %552 = vrot.lane.b32.xlu0 %v61, 71
    %v553 = vpop.permute.xlu0 %552
    %554 = vrot.lane.b32.xlu0 %v75, 71
    %v555 = vpop.permute.xlu0 %554
    %556 = vrot.lane.b32.xlu0 %v62, 71
    %v557 = vpop.permute.xlu0 %556
    %vm558 = vcmask 580608
    %v559 = vsel %vm558, %v533, %v535
    %v560 = vsel %vm558, %v535, %v537
    %v561 = vsel %vm558, %v537, %v539
    %v562 = vsel %vm558, %v539, %v541
    %v563 = vsel %vm558, %v541, %v543
    %v564 = vsel %vm558, %v543, %v545
    %v565 = vsel %vm558, %v545, %v547
    %v566 = vsel %vm558, %v547, %v549
    %v567 = vsel %vm558, %v549, %v551
    %v568 = vsel %vm558, %v551, %v553
    %v569 = vsel %vm558, %v553, %v555
    %v570 = vsel %vm558, %v555, %v557
    %572 = vrot.lane.b32.xlu0 %v56, 103
    %v573 = vpop.permute.xlu0 %572
    %vm575 = vcmask 842752
    %v576 = vsel %vm575, %v570, %v573
    %577 = vrot.lane.b32.xlu0 %v56, 70
    %v578 = vpop.permute.xlu0 %577
    %579 = vrot.lane.b32.xlu0 %v70, 70
    %v580 = vpop.permute.xlu0 %579
    %581 = vrot.lane.b32.xlu0 %v57, 70
    %v582 = vpop.permute.xlu0 %581
    %583 = vrot.lane.b32.xlu0 %v71, 70
    %v584 = vpop.permute.xlu0 %583
    %585 = vrot.lane.b32.xlu0 %v58, 70
    %v586 = vpop.permute.xlu0 %585
    %587 = vrot.lane.b32.xlu0 %v72, 70
    %v588 = vpop.permute.xlu0 %587
    %589 = vrot.lane.b32.xlu0 %v59, 70
    %v590 = vpop.permute.xlu0 %589
    %591 = vrot.lane.b32.xlu0 %v73, 70
    %v592 = vpop.permute.xlu0 %591
    %593 = vrot.lane.b32.xlu0 %v60, 70
    %v594 = vpop.permute.xlu0 %593
    %595 = vrot.lane.b32.xlu0 %v74, 70
    %v596 = vpop.permute.xlu0 %595
    %597 = vrot.lane.b32.xlu0 %v61, 70
    %v598 = vpop.permute.xlu0 %597
    %599 = vrot.lane.b32.xlu0 %v75, 70
    %v600 = vpop.permute.xlu0 %599
    %601 = vrot.lane.b32.xlu0 %v62, 70
    %v602 = vpop.permute.xlu0 %601
    %vm603 = vcmask 572416
    %v604 = vsel %vm603, %v578, %v580
    %v605 = vsel %vm603, %v580, %v582
    %v606 = vsel %vm603, %v582, %v584
    %v607 = vsel %vm603, %v584, %v586
    %v608 = vsel %vm603, %v586, %v588
    %v609 = vsel %vm603, %v588, %v590
    %v610 = vsel %vm603, %v590, %v592
    %v611 = vsel %vm603, %v592, %v594
    %v612 = vsel %vm603, %v594, %v596
    %v613 = vsel %vm603, %v596, %v598
    %v614 = vsel %vm603, %v598, %v600
    %v615 = vsel %vm603, %v600, %v602
    %617 = vrot.lane.b32.xlu0 %v56, 102
    %v618 = vpop.permute.xlu0 %617
    %vm620 = vcmask 834560
    %v621 = vsel %vm620, %v615, %v618
    %622 = vrot.lane.b32.xlu0 %v56, 69
    %v623 = vpop.permute.xlu0 %622
    %624 = vrot.lane.b32.xlu0 %v70, 69
    %v625 = vpop.permute.xlu0 %624
    %626 = vrot.lane.b32.xlu0 %v57, 69
    %v627 = vpop.permute.xlu0 %626
    %628 = vrot.lane.b32.xlu0 %v71, 69
    %v629 = vpop.permute.xlu0 %628
    %630 = vrot.lane.b32.xlu0 %v58, 69
    %v631 = vpop.permute.xlu0 %630
    %632 = vrot.lane.b32.xlu0 %v72, 69
    %v633 = vpop.permute.xlu0 %632
    %634 = vrot.lane.b32.xlu0 %v59, 69
    %v635 = vpop.permute.xlu0 %634
    %636 = vrot.lane.b32.xlu0 %v73, 69
    %v637 = vpop.permute.xlu0 %636
    %638 = vrot.lane.b32.xlu0 %v60, 69
    %v639 = vpop.permute.xlu0 %638
    %640 = vrot.lane.b32.xlu0 %v74, 69
    %v641 = vpop.permute.xlu0 %640
    %642 = vrot.lane.b32.xlu0 %v61, 69
    %v643 = vpop.permute.xlu0 %642
    %644 = vrot.lane.b32.xlu0 %v75, 69
    %v645 = vpop.permute.xlu0 %644
    %646 = vrot.lane.b32.xlu0 %v62, 69
    %v647 = vpop.permute.xlu0 %646
    %vm648 = vcmask 564224
    %v649 = vsel %vm648, %v623, %v625
    %v650 = vsel %vm648, %v625, %v627
    %v651 = vsel %vm648, %v627, %v629
    %v652 = vsel %vm648, %v629, %v631
    %v653 = vsel %vm648, %v631, %v633
    %v654 = vsel %vm648, %v633, %v635
    %v655 = vsel %vm648, %v635, %v637
    %v656 = vsel %vm648, %v637, %v639
    %v657 = vsel %vm648, %v639, %v641
    %v658 = vsel %vm648, %v641, %v643
    %v659 = vsel %vm648, %v643, %v645
    %v660 = vsel %vm648, %v645, %v647
    %662 = vrot.lane.b32.xlu0 %v56, 101
    %v663 = vpop.permute.xlu0 %662
    %vm665 = vcmask 826368
    %v666 = vsel %vm665, %v660, %v663
    %667 = vrot.lane.b32.xlu0 %v56, 68
    %v668 = vpop.permute.xlu0 %667
    %669 = vrot.lane.b32.xlu0 %v70, 68
    %v670 = vpop.permute.xlu0 %669
    %671 = vrot.lane.b32.xlu0 %v57, 68
    %v672 = vpop.permute.xlu0 %671
    %673 = vrot.lane.b32.xlu0 %v71, 68
    %v674 = vpop.permute.xlu0 %673
    %675 = vrot.lane.b32.xlu0 %v58, 68
    %v676 = vpop.permute.xlu0 %675
    %677 = vrot.lane.b32.xlu0 %v72, 68
    %v678 = vpop.permute.xlu0 %677
    %679 = vrot.lane.b32.xlu0 %v59, 68
    %v680 = vpop.permute.xlu0 %679
    %681 = vrot.lane.b32.xlu0 %v73, 68
    %v682 = vpop.permute.xlu0 %681
    %683 = vrot.lane.b32.xlu0 %v60, 68
    %v684 = vpop.permute.xlu0 %683
    %685 = vrot.lane.b32.xlu0 %v74, 68
    %v686 = vpop.permute.xlu0 %685
    %687 = vrot.lane.b32.xlu0 %v61, 68
    %v688 = vpop.permute.xlu0 %687
    %689 = vrot.lane.b32.xlu0 %v75, 68
    %v690 = vpop.permute.xlu0 %689
    %691 = vrot.lane.b32.xlu0 %v62, 68
    %v692 = vpop.permute.xlu0 %691
    %vm693 = vcmask 556032
    %v694 = vsel %vm693, %v668, %v670
    %v695 = vsel %vm693, %v670, %v672
    %v696 = vsel %vm693, %v672, %v674
    %v697 = vsel %vm693, %v674, %v676
    %v698 = vsel %vm693, %v676, %v678
    %v699 = vsel %vm693, %v678, %v680
    %v700 = vsel %vm693, %v680, %v682
    %v701 = vsel %vm693, %v682, %v684
    %v702 = vsel %vm693, %v684, %v686
    %v703 = vsel %vm693, %v686, %v688
    %v704 = vsel %vm693, %v688, %v690
    %v705 = vsel %vm693, %v690, %v692
    %v708 = vsel %vm282, %v705, %v257
    %709 = vrot.lane.b32.xlu0 %v56, 44
    %v710 = vpop.permute.xlu0 %709
    %711 = vrot.lane.b32.xlu0 %v70, 44
    %v712 = vpop.permute.xlu0 %711
    %713 = vrot.lane.b32.xlu0 %v57, 44
    %v714 = vpop.permute.xlu0 %713
    %715 = vrot.lane.b32.xlu0 %v71, 44
    %v716 = vpop.permute.xlu0 %715
    %717 = vrot.lane.b32.xlu0 %v58, 44
    %v718 = vpop.permute.xlu0 %717
    %719 = vrot.lane.b32.xlu0 %v72, 44
    %v720 = vpop.permute.xlu0 %719
    %721 = vrot.lane.b32.xlu0 %v59, 44
    %v722 = vpop.permute.xlu0 %721
    %723 = vrot.lane.b32.xlu0 %v73, 44
    %v724 = vpop.permute.xlu0 %723
    %725 = vrot.lane.b32.xlu0 %v60, 44
    %v726 = vpop.permute.xlu0 %725
    %727 = vrot.lane.b32.xlu0 %v74, 44
    %v728 = vpop.permute.xlu0 %727
    %729 = vrot.lane.b32.xlu0 %v61, 44
    %v730 = vpop.permute.xlu0 %729
    %731 = vrot.lane.b32.xlu0 %v75, 44
    %v732 = vpop.permute.xlu0 %731
    %733 = vrot.lane.b32.xlu0 %v62, 44
    %v734 = vpop.permute.xlu0 %733
    %vm735 = vcmask 359424
    %v736 = vsel %vm735, %v710, %v712
    %v737 = vsel %vm735, %v712, %v714
    %v738 = vsel %vm735, %v714, %v716
    %v739 = vsel %vm735, %v716, %v718
    %v740 = vsel %vm735, %v718, %v720
    %v741 = vsel %vm735, %v720, %v722
    %v742 = vsel %vm735, %v722, %v724
    %v743 = vsel %vm735, %v724, %v726
    %v744 = vsel %vm735, %v726, %v728
    %v745 = vsel %vm735, %v728, %v730
    %v746 = vsel %vm735, %v730, %v732
    %v747 = vsel %vm735, %v732, %v734
    %749 = vrot.lane.b32.xlu0 %v56, 76
    %v750 = vpop.permute.xlu0 %749
    %vm752 = vcmask 621568
    %v753 = vsel %vm752, %v747, %v750
    %754 = vrot.lane.b32.xlu0 %v56, 43
    %v755 = vpop.permute.xlu0 %754
    %756 = vrot.lane.b32.xlu0 %v70, 43
    %v757 = vpop.permute.xlu0 %756
    %758 = vrot.lane.b32.xlu0 %v57, 43
    %v759 = vpop.permute.xlu0 %758
    %760 = vrot.lane.b32.xlu0 %v71, 43
    %v761 = vpop.permute.xlu0 %760
    %762 = vrot.lane.b32.xlu0 %v58, 43
    %v763 = vpop.permute.xlu0 %762
    %764 = vrot.lane.b32.xlu0 %v72, 43
    %v765 = vpop.permute.xlu0 %764
    %766 = vrot.lane.b32.xlu0 %v59, 43
    %v767 = vpop.permute.xlu0 %766
    %768 = vrot.lane.b32.xlu0 %v73, 43
    %v769 = vpop.permute.xlu0 %768
    %770 = vrot.lane.b32.xlu0 %v60, 43
    %v771 = vpop.permute.xlu0 %770
    %772 = vrot.lane.b32.xlu0 %v74, 43
    %v773 = vpop.permute.xlu0 %772
    %774 = vrot.lane.b32.xlu0 %v61, 43
    %v775 = vpop.permute.xlu0 %774
    %776 = vrot.lane.b32.xlu0 %v75, 43
    %v777 = vpop.permute.xlu0 %776
    %778 = vrot.lane.b32.xlu0 %v62, 43
    %v779 = vpop.permute.xlu0 %778
    %vm780 = vcmask 351232
    %v781 = vsel %vm780, %v755, %v757
    %v782 = vsel %vm780, %v757, %v759
    %v783 = vsel %vm780, %v759, %v761
    %v784 = vsel %vm780, %v761, %v763
    %v785 = vsel %vm780, %v763, %v765
    %v786 = vsel %vm780, %v765, %v767
    %v787 = vsel %vm780, %v767, %v769
    %v788 = vsel %vm780, %v769, %v771
    %v789 = vsel %vm780, %v771, %v773
    %v790 = vsel %vm780, %v773, %v775
    %v791 = vsel %vm780, %v775, %v777
    %v792 = vsel %vm780, %v777, %v779
    %805 = vrot.lane.b32.xlu0 %v56, 75
    %v806 = vpop.permute.xlu0 %805
    %vm808 = vcmask 613376
    %v809 = vsel %vm808, %v792, %v806
    %810 = vrot.lane.b32.xlu0 %v56, 42
    %v811 = vpop.permute.xlu0 %810
    %812 = vrot.lane.b32.xlu0 %v70, 42
    %v813 = vpop.permute.xlu0 %812
    %814 = vrot.lane.b32.xlu0 %v57, 42
    %v815 = vpop.permute.xlu0 %814
    %816 = vrot.lane.b32.xlu0 %v71, 42
    %v817 = vpop.permute.xlu0 %816
    %818 = vrot.lane.b32.xlu0 %v58, 42
    %v819 = vpop.permute.xlu0 %818
    %820 = vrot.lane.b32.xlu0 %v72, 42
    %v821 = vpop.permute.xlu0 %820
    %822 = vrot.lane.b32.xlu0 %v59, 42
    %v823 = vpop.permute.xlu0 %822
    %824 = vrot.lane.b32.xlu0 %v73, 42
    %v825 = vpop.permute.xlu0 %824
    %826 = vrot.lane.b32.xlu0 %v60, 42
    %v827 = vpop.permute.xlu0 %826
    %828 = vrot.lane.b32.xlu0 %v74, 42
    %v829 = vpop.permute.xlu0 %828
    %830 = vrot.lane.b32.xlu0 %v61, 42
    %v831 = vpop.permute.xlu0 %830
    %832 = vrot.lane.b32.xlu0 %v75, 42
    %v833 = vpop.permute.xlu0 %832
    %834 = vrot.lane.b32.xlu0 %v62, 42
    %v835 = vpop.permute.xlu0 %834
    %vm836 = vcmask 343040
    %v837 = vsel %vm836, %v811, %v813
    %v838 = vsel %vm836, %v813, %v815
    %v839 = vsel %vm836, %v815, %v817
    %v840 = vsel %vm836, %v817, %v819
    %v841 = vsel %vm836, %v819, %v821
    %v842 = vsel %vm836, %v821, %v823
    %v843 = vsel %vm836, %v823, %v825
    %v844 = vsel %vm836, %v825, %v827
    %v845 = vsel %vm836, %v827, %v829
    %v846 = vsel %vm836, %v829, %v831
    %v847 = vsel %vm836, %v831, %v833
    %v848 = vsel %vm836, %v833, %v835
    %850 = vrot.lane.b32.xlu0 %v56, 74
    %v851 = vpop.permute.xlu0 %850
    %vm853 = vcmask 605184
    %v854 = vsel %vm853, %v848, %v851
    %855 = vrot.lane.b32.xlu0 %v56, 41
    %v856 = vpop.permute.xlu0 %855
    %857 = vrot.lane.b32.xlu0 %v70, 41
    %v858 = vpop.permute.xlu0 %857
    %859 = vrot.lane.b32.xlu0 %v57, 41
    %v860 = vpop.permute.xlu0 %859
    %861 = vrot.lane.b32.xlu0 %v71, 41
    %v862 = vpop.permute.xlu0 %861
    %863 = vrot.lane.b32.xlu0 %v58, 41
    %v864 = vpop.permute.xlu0 %863
    %865 = vrot.lane.b32.xlu0 %v72, 41
    %v866 = vpop.permute.xlu0 %865
    %867 = vrot.lane.b32.xlu0 %v59, 41
    %v868 = vpop.permute.xlu0 %867
    %869 = vrot.lane.b32.xlu0 %v73, 41
    %v870 = vpop.permute.xlu0 %869
    %871 = vrot.lane.b32.xlu0 %v60, 41
    %v872 = vpop.permute.xlu0 %871
    %873 = vrot.lane.b32.xlu0 %v74, 41
    %v874 = vpop.permute.xlu0 %873
    %875 = vrot.lane.b32.xlu0 %v61, 41
    %v876 = vpop.permute.xlu0 %875
    %877 = vrot.lane.b32.xlu0 %v75, 41
    %v878 = vpop.permute.xlu0 %877
    %879 = vrot.lane.b32.xlu0 %v62, 41
    %v880 = vpop.permute.xlu0 %879
    %vm881 = vcmask 334848
    %v882 = vsel %vm881, %v856, %v858
    %v883 = vsel %vm881, %v858, %v860
    %v884 = vsel %vm881, %v860, %v862
    %v885 = vsel %vm881, %v862, %v864
    %v886 = vsel %vm881, %v864, %v866
    %v887 = vsel %vm881, %v866, %v868
    %v888 = vsel %vm881, %v868, %v870
    %v889 = vsel %vm881, %v870, %v872
    %v890 = vsel %vm881, %v872, %v874
    %v891 = vsel %vm881, %v874, %v876
    %v892 = vsel %vm881, %v876, %v878
    %v893 = vsel %vm881, %v878, %v880
    %895 = vrot.lane.b32.xlu0 %v56, 73
    %v896 = vpop.permute.xlu0 %895
    %vm898 = vcmask 596992
    %v899 = vsel %vm898, %v893, %v896
    %900 = vrot.lane.b32.xlu0 %v56, 40
    %v901 = vpop.permute.xlu0 %900
    %902 = vrot.lane.b32.xlu0 %v70, 40
    %v903 = vpop.permute.xlu0 %902
    %904 = vrot.lane.b32.xlu0 %v57, 40
    %v905 = vpop.permute.xlu0 %904
    %906 = vrot.lane.b32.xlu0 %v71, 40
    %v907 = vpop.permute.xlu0 %906
    %908 = vrot.lane.b32.xlu0 %v58, 40
    %v909 = vpop.permute.xlu0 %908
    %910 = vrot.lane.b32.xlu0 %v72, 40
    %v911 = vpop.permute.xlu0 %910
    %912 = vrot.lane.b32.xlu0 %v59, 40
    %v913 = vpop.permute.xlu0 %912
    %914 = vrot.lane.b32.xlu0 %v73, 40
    %v915 = vpop.permute.xlu0 %914
    %916 = vrot.lane.b32.xlu0 %v60, 40
    %v917 = vpop.permute.xlu0 %916
    %918 = vrot.lane.b32.xlu0 %v74, 40
    %v919 = vpop.permute.xlu0 %918
    %920 = vrot.lane.b32.xlu0 %v61, 40
    %v921 = vpop.permute.xlu0 %920
    %922 = vrot.lane.b32.xlu0 %v75, 40
    %v923 = vpop.permute.xlu0 %922
    %924 = vrot.lane.b32.xlu0 %v62, 40
    %v925 = vpop.permute.xlu0 %924
    %vm926 = vcmask 326656
    %v927 = vsel %vm926, %v901, %v903
    %v928 = vsel %vm926, %v903, %v905
    %v929 = vsel %vm926, %v905, %v907
    %v930 = vsel %vm926, %v907, %v909
    %v931 = vsel %vm926, %v909, %v911
    %v932 = vsel %vm926, %v911, %v913
    %v933 = vsel %vm926, %v913, %v915
    %v934 = vsel %vm926, %v915, %v917
    %v935 = vsel %vm926, %v917, %v919
    %v936 = vsel %vm926, %v919, %v921
    %v937 = vsel %vm926, %v921, %v923
    %v938 = vsel %vm926, %v923, %v925
    %v941 = vsel %vm513, %v938, %v488
    %942 = vrot.lane.b32.xlu0 %v56, 16
    %v943 = vpop.permute.xlu0 %942
    %944 = vrot.lane.b32.xlu0 %v70, 16
    %v945 = vpop.permute.xlu0 %944
    %946 = vrot.lane.b32.xlu0 %v57, 16
    %v947 = vpop.permute.xlu0 %946
    %948 = vrot.lane.b32.xlu0 %v71, 16
    %v949 = vpop.permute.xlu0 %948
    %950 = vrot.lane.b32.xlu0 %v58, 16
    %v951 = vpop.permute.xlu0 %950
    %952 = vrot.lane.b32.xlu0 %v72, 16
    %v953 = vpop.permute.xlu0 %952
    %954 = vrot.lane.b32.xlu0 %v59, 16
    %v955 = vpop.permute.xlu0 %954
    %956 = vrot.lane.b32.xlu0 %v73, 16
    %v957 = vpop.permute.xlu0 %956
    %958 = vrot.lane.b32.xlu0 %v60, 16
    %v959 = vpop.permute.xlu0 %958
    %960 = vrot.lane.b32.xlu0 %v74, 16
    %v961 = vpop.permute.xlu0 %960
    %962 = vrot.lane.b32.xlu0 %v61, 16
    %v963 = vpop.permute.xlu0 %962
    %964 = vrot.lane.b32.xlu0 %v75, 16
    %v965 = vpop.permute.xlu0 %964
    %966 = vrot.lane.b32.xlu0 %v62, 16
    %v967 = vpop.permute.xlu0 %966
    %vm968 = vcmask 130048
    %v969 = vsel %vm968, %v943, %v945
    %v970 = vsel %vm968, %v945, %v947
    %v971 = vsel %vm968, %v947, %v949
    %v972 = vsel %vm968, %v949, %v951
    %v973 = vsel %vm968, %v951, %v953
    %v974 = vsel %vm968, %v953, %v955
    %v975 = vsel %vm968, %v955, %v957
    %v976 = vsel %vm968, %v957, %v959
    %v977 = vsel %vm968, %v959, %v961
    %v978 = vsel %vm968, %v961, %v963
    %v979 = vsel %vm968, %v963, %v965
    %v980 = vsel %vm968, %v965, %v967
    %982 = vrot.lane.b32.xlu0 %v56, 48
    %v983 = vpop.permute.xlu0 %982
    %vm985 = vcmask 392192
    %v986 = vsel %vm985, %v980, %v983
    %987 = vrot.lane.b32.xlu0 %v56, 15
    %v988 = vpop.permute.xlu0 %987
    %989 = vrot.lane.b32.xlu0 %v70, 15
    %v990 = vpop.permute.xlu0 %989
    %991 = vrot.lane.b32.xlu0 %v57, 15
    %v992 = vpop.permute.xlu0 %991
    %993 = vrot.lane.b32.xlu0 %v71, 15
    %v994 = vpop.permute.xlu0 %993
    %995 = vrot.lane.b32.xlu0 %v58, 15
    %v996 = vpop.permute.xlu0 %995
    %997 = vrot.lane.b32.xlu0 %v72, 15
    %v998 = vpop.permute.xlu0 %997
    %999 = vrot.lane.b32.xlu0 %v59, 15
    %v1000 = vpop.permute.xlu0 %999
    %1001 = vrot.lane.b32.xlu0 %v73, 15
    %v1002 = vpop.permute.xlu0 %1001
    %1003 = vrot.lane.b32.xlu0 %v60, 15
    %v1004 = vpop.permute.xlu0 %1003
    %1005 = vrot.lane.b32.xlu0 %v74, 15
    %v1006 = vpop.permute.xlu0 %1005
    %1007 = vrot.lane.b32.xlu0 %v61, 15
    %v1008 = vpop.permute.xlu0 %1007
    %1009 = vrot.lane.b32.xlu0 %v75, 15
    %v1010 = vpop.permute.xlu0 %1009
    %1011 = vrot.lane.b32.xlu0 %v62, 15
    %v1012 = vpop.permute.xlu0 %1011
    %vm1013 = vcmask 121856
    %v1014 = vsel %vm1013, %v988, %v990
    %v1015 = vsel %vm1013, %v990, %v992
    %v1016 = vsel %vm1013, %v992, %v994
    %v1017 = vsel %vm1013, %v994, %v996
    %v1018 = vsel %vm1013, %v996, %v998
    %v1019 = vsel %vm1013, %v998, %v1000
    %v1020 = vsel %vm1013, %v1000, %v1002
    %v1021 = vsel %vm1013, %v1002, %v1004
    %v1022 = vsel %vm1013, %v1004, %v1006
    %v1023 = vsel %vm1013, %v1006, %v1008
    %v1024 = vsel %vm1013, %v1008, %v1010
    %v1025 = vsel %vm1013, %v1010, %v1012
    %1027 = vrot.lane.b32.xlu0 %v56, 47
    %v1028 = vpop.permute.xlu0 %1027
    %vm1030 = vcmask 384000
    %v1031 = vsel %vm1030, %v1025, %v1028
    %1032 = vrot.lane.b32.xlu0 %v56, 14
    %v1033 = vpop.permute.xlu0 %1032
    %1034 = vrot.lane.b32.xlu0 %v70, 14
    %v1035 = vpop.permute.xlu0 %1034
    %1036 = vrot.lane.b32.xlu0 %v57, 14
    %v1037 = vpop.permute.xlu0 %1036
    %1038 = vrot.lane.b32.xlu0 %v71, 14
    %v1039 = vpop.permute.xlu0 %1038
    %1040 = vrot.lane.b32.xlu0 %v58, 14
    %v1041 = vpop.permute.xlu0 %1040
    %1042 = vrot.lane.b32.xlu0 %v72, 14
    %v1043 = vpop.permute.xlu0 %1042
    %1044 = vrot.lane.b32.xlu0 %v59, 14
    %v1045 = vpop.permute.xlu0 %1044
    %1046 = vrot.lane.b32.xlu0 %v73, 14
    %v1047 = vpop.permute.xlu0 %1046
    %1048 = vrot.lane.b32.xlu0 %v60, 14
    %v1049 = vpop.permute.xlu0 %1048
    %1050 = vrot.lane.b32.xlu0 %v74, 14
    %v1051 = vpop.permute.xlu0 %1050
    %1052 = vrot.lane.b32.xlu0 %v61, 14
    %v1053 = vpop.permute.xlu0 %1052
    %1054 = vrot.lane.b32.xlu0 %v75, 14
    %v1055 = vpop.permute.xlu0 %1054
    %1056 = vrot.lane.b32.xlu0 %v62, 14
    %v1057 = vpop.permute.xlu0 %1056
    %vm1058 = vcmask 113664
    %v1059 = vsel %vm1058, %v1033, %v1035
    %v1060 = vsel %vm1058, %v1035, %v1037
    %v1061 = vsel %vm1058, %v1037, %v1039
    %v1062 = vsel %vm1058, %v1039, %v1041
    %v1063 = vsel %vm1058, %v1041, %v1043
    %v1064 = vsel %vm1058, %v1043, %v1045
    %v1065 = vsel %vm1058, %v1045, %v1047
    %v1066 = vsel %vm1058, %v1047, %v1049
    %v1067 = vsel %vm1058, %v1049, %v1051
    %v1068 = vsel %vm1058, %v1051, %v1053
    %v1069 = vsel %vm1058, %v1053, %v1055
    %v1070 = vsel %vm1058, %v1055, %v1057
    %1072 = vrot.lane.b32.xlu0 %v56, 46
    %v1073 = vpop.permute.xlu0 %1072
    %vm1075 = vcmask 375808
    %v1076 = vsel %vm1075, %v1070, %v1073
    %1077 = vrot.lane.b32.xlu0 %v56, 13
    %v1078 = vpop.permute.xlu0 %1077
    %1079 = vrot.lane.b32.xlu0 %v70, 13
    %v1080 = vpop.permute.xlu0 %1079
    %1081 = vrot.lane.b32.xlu0 %v57, 13
    %v1082 = vpop.permute.xlu0 %1081
    %1083 = vrot.lane.b32.xlu0 %v71, 13
    %v1084 = vpop.permute.xlu0 %1083
    %1085 = vrot.lane.b32.xlu0 %v58, 13
    %v1086 = vpop.permute.xlu0 %1085
    %1087 = vrot.lane.b32.xlu0 %v72, 13
    %v1088 = vpop.permute.xlu0 %1087
    %1089 = vrot.lane.b32.xlu0 %v59, 13
    %v1090 = vpop.permute.xlu0 %1089
    %1091 = vrot.lane.b32.xlu0 %v73, 13
    %v1092 = vpop.permute.xlu0 %1091
    %1093 = vrot.lane.b32.xlu0 %v60, 13
    %v1094 = vpop.permute.xlu0 %1093
    %1095 = vrot.lane.b32.xlu0 %v74, 13
    %v1096 = vpop.permute.xlu0 %1095
    %1097 = vrot.lane.b32.xlu0 %v61, 13
    %v1098 = vpop.permute.xlu0 %1097
    %1099 = vrot.lane.b32.xlu0 %v75, 13
    %v1100 = vpop.permute.xlu0 %1099
    %1101 = vrot.lane.b32.xlu0 %v62, 13
    %v1102 = vpop.permute.xlu0 %1101
    %vm1103 = vcmask 105472
    %v1104 = vsel %vm1103, %v1078, %v1080
    %v1105 = vsel %vm1103, %v1080, %v1082
    %v1106 = vsel %vm1103, %v1082, %v1084
    %v1107 = vsel %vm1103, %v1084, %v1086
    %v1108 = vsel %vm1103, %v1086, %v1088
    %v1109 = vsel %vm1103, %v1088, %v1090
    %v1110 = vsel %vm1103, %v1090, %v1092
    %v1111 = vsel %vm1103, %v1092, %v1094
    %v1112 = vsel %vm1103, %v1094, %v1096
    %v1113 = vsel %vm1103, %v1096, %v1098
    %v1114 = vsel %vm1103, %v1098, %v1100
    %v1115 = vsel %vm1103, %v1100, %v1102
    %1117 = vrot.lane.b32.xlu0 %v56, 45
    %v1118 = vpop.permute.xlu0 %1117
    %vm1120 = vcmask 367616
    %v1121 = vsel %vm1120, %v1115, %v1118
    %1122 = vrot.lane.b32.xlu0 %v56, 12
    %v1123 = vpop.permute.xlu0 %1122
    %1124 = vrot.lane.b32.xlu0 %v70, 12
    %v1125 = vpop.permute.xlu0 %1124
    %1126 = vrot.lane.b32.xlu0 %v57, 12
    %v1127 = vpop.permute.xlu0 %1126
    %1128 = vrot.lane.b32.xlu0 %v71, 12
    %v1129 = vpop.permute.xlu0 %1128
    %1130 = vrot.lane.b32.xlu0 %v58, 12
    %v1131 = vpop.permute.xlu0 %1130
    %1132 = vrot.lane.b32.xlu0 %v72, 12
    %v1133 = vpop.permute.xlu0 %1132
    %1134 = vrot.lane.b32.xlu0 %v59, 12
    %v1135 = vpop.permute.xlu0 %1134
    %1136 = vrot.lane.b32.xlu0 %v73, 12
    %v1137 = vpop.permute.xlu0 %1136
    %1138 = vrot.lane.b32.xlu0 %v60, 12
    %v1139 = vpop.permute.xlu0 %1138
    %1140 = vrot.lane.b32.xlu0 %v74, 12
    %v1141 = vpop.permute.xlu0 %1140
    %1142 = vrot.lane.b32.xlu0 %v61, 12
    %v1143 = vpop.permute.xlu0 %1142
    %1144 = vrot.lane.b32.xlu0 %v75, 12
    %v1145 = vpop.permute.xlu0 %1144
    %1146 = vrot.lane.b32.xlu0 %v62, 12
    %v1147 = vpop.permute.xlu0 %1146
    %vm1148 = vcmask 97280
    %v1149 = vsel %vm1148, %v1123, %v1125
    %v1150 = vsel %vm1148, %v1125, %v1127
    %v1151 = vsel %vm1148, %v1127, %v1129
    %v1152 = vsel %vm1148, %v1129, %v1131
    %v1153 = vsel %vm1148, %v1131, %v1133
    %v1154 = vsel %vm1148, %v1133, %v1135
    %v1155 = vsel %vm1148, %v1135, %v1137
    %v1156 = vsel %vm1148, %v1137, %v1139
    %v1157 = vsel %vm1148, %v1139, %v1141
    %v1158 = vsel %vm1148, %v1141, %v1143
    %v1159 = vsel %vm1148, %v1143, %v1145
    %v1160 = vsel %vm1148, %v1145, %v1147
    %v1163 = vsel %vm735, %v1160, %v710
    %v1171 = vrot.slane %v103, 5
    %v1172 = vrot.slane %v104, 5
    %v1173 = vrot.slane %v105, 5
    %v1174 = vrot.slane %v106, 5
    %v1175 = vrot.slane %v107, 5
    %v1176 = vrot.slane %v108, 5
    %v1177 = vrot.slane %v109, 5
    %v1178 = vrot.slane %v110, 5
    %v1179 = vrot.slane %v111, 5
    %v1180 = vrot.slane %v112, 5
    %v1181 = vrot.slane %v113, 5
    %v1182 = vrot.slane %v114, 5
    %v1183 = vrot.slane %v120, 5
    %v1198 = vrot.slane %v148, 2
    %v1199 = vrot.slane %v149, 2
    %v1200 = vrot.slane %v150, 2
    %v1201 = vrot.slane %v151, 2
    %v1202 = vrot.slane %v152, 2
    %v1203 = vrot.slane %v153, 2
    %v1204 = vrot.slane %v154, 2
    %v1205 = vrot.slane %v155, 2
    %v1206 = vrot.slane %v156, 2
    %v1207 = vrot.slane %v157, 2
    %v1208 = vrot.slane %v158, 2
    %v1209 = vrot.slane %v159, 2
    %v1210 = vrot.slane %v165, 2
    %v1225 = vrot.slane %v193, 7
    %v1226 = vrot.slane %v194, 7
    %v1227 = vrot.slane %v195, 7
    %v1228 = vrot.slane %v196, 7
    %v1229 = vrot.slane %v197, 7
    %v1230 = vrot.slane %v198, 7
    %v1231 = vrot.slane %v199, 7
    %v1232 = vrot.slane %v200, 7
    %v1233 = vrot.slane %v201, 7
    %v1234 = vrot.slane %v202, 7
    %v1235 = vrot.slane %v203, 7
    %v1236 = vrot.slane %v204, 7
    %v1237 = vrot.slane %v210, 7
    %v1252 = vrot.slane %v238, 4
    %v1253 = vrot.slane %v239, 4
    %v1254 = vrot.slane %v240, 4
    %v1255 = vrot.slane %v241, 4
    %v1256 = vrot.slane %v242, 4
    %v1257 = vrot.slane %v243, 4
    %v1258 = vrot.slane %v244, 4
    %v1259 = vrot.slane %v245, 4
    %v1260 = vrot.slane %v246, 4
    %v1261 = vrot.slane %v247, 4
    %v1262 = vrot.slane %v248, 4
    %v1263 = vrot.slane %v249, 4
    %v1264 = vrot.slane %v255, 4
    %v1279 = vrot.slane %v283, 1
    %v1280 = vrot.slane %v284, 1
    %v1281 = vrot.slane %v285, 1
    %v1282 = vrot.slane %v286, 1
    %v1283 = vrot.slane %v287, 1
    %v1284 = vrot.slane %v288, 1
    %v1285 = vrot.slane %v289, 1
    %v1286 = vrot.slane %v290, 1
    %v1287 = vrot.slane %v291, 1
    %v1288 = vrot.slane %v292, 1
    %v1289 = vrot.slane %v293, 1
    %v1290 = vrot.slane %v294, 1
    %v1291 = vrot.slane %v300, 1
    %v1306 = vrot.slane %v328, 6
    %v1307 = vrot.slane %v329, 6
    %v1308 = vrot.slane %v330, 6
    %v1309 = vrot.slane %v331, 6
    %v1310 = vrot.slane %v332, 6
    %v1311 = vrot.slane %v333, 6
    %v1312 = vrot.slane %v334, 6
    %v1313 = vrot.slane %v335, 6
    %v1314 = vrot.slane %v336, 6
    %v1315 = vrot.slane %v337, 6
    %v1316 = vrot.slane %v338, 6
    %v1317 = vrot.slane %v339, 6
    %v1318 = vrot.slane %v345, 6
    %v1333 = vrot.slane %v373, 3
    %v1334 = vrot.slane %v374, 3
    %v1335 = vrot.slane %v375, 3
    %v1336 = vrot.slane %v376, 3
    %v1337 = vrot.slane %v377, 3
    %v1338 = vrot.slane %v378, 3
    %v1339 = vrot.slane %v379, 3
    %v1340 = vrot.slane %v380, 3
    %v1341 = vrot.slane %v381, 3
    %v1342 = vrot.slane %v382, 3
    %v1343 = vrot.slane %v383, 3
    %v1344 = vrot.slane %v384, 3
    %v1345 = vrot.slane %v390, 3
    %v1359 = vrot.slane %v475, 5
    %v1360 = vrot.slane %v476, 5
    %v1361 = vrot.slane %v477, 5
    %v1362 = vrot.slane %v478, 5
    %v1363 = vrot.slane %v479, 5
    %v1364 = vrot.slane %v480, 5
    %v1365 = vrot.slane %v481, 5
    %v1366 = vrot.slane %v482, 5
    %v1367 = vrot.slane %v483, 5
    %v1368 = vrot.slane %v484, 5
    %v1369 = vrot.slane %v485, 5
    %v1370 = vrot.slane %v486, 5
    %v1371 = vrot.slane %v56, 5
    %v1386 = vrot.slane %v514, 2
    %v1387 = vrot.slane %v515, 2
    %v1388 = vrot.slane %v516, 2
    %v1389 = vrot.slane %v517, 2
    %v1390 = vrot.slane %v518, 2
    %v1391 = vrot.slane %v519, 2
    %v1392 = vrot.slane %v520, 2
    %v1393 = vrot.slane %v521, 2
    %v1394 = vrot.slane %v522, 2
    %v1395 = vrot.slane %v523, 2
    %v1396 = vrot.slane %v524, 2
    %v1397 = vrot.slane %v531, 2
    %v1398 = vrot.slane %v528, 2
    %v1413 = vrot.slane %v559, 7
    %v1414 = vrot.slane %v560, 7
    %v1415 = vrot.slane %v561, 7
    %v1416 = vrot.slane %v562, 7
    %v1417 = vrot.slane %v563, 7
    %v1418 = vrot.slane %v564, 7
    %v1419 = vrot.slane %v565, 7
    %v1420 = vrot.slane %v566, 7
    %v1421 = vrot.slane %v567, 7
    %v1422 = vrot.slane %v568, 7
    %v1423 = vrot.slane %v569, 7
    %v1424 = vrot.slane %v576, 7
    %v1425 = vrot.slane %v573, 7
    %v1440 = vrot.slane %v604, 4
    %v1441 = vrot.slane %v605, 4
    %v1442 = vrot.slane %v606, 4
    %v1443 = vrot.slane %v607, 4
    %v1444 = vrot.slane %v608, 4
    %v1445 = vrot.slane %v609, 4
    %v1446 = vrot.slane %v610, 4
    %v1447 = vrot.slane %v611, 4
    %v1448 = vrot.slane %v612, 4
    %v1449 = vrot.slane %v613, 4
    %v1450 = vrot.slane %v614, 4
    %v1451 = vrot.slane %v621, 4
    %v1452 = vrot.slane %v618, 4
    %v1467 = vrot.slane %v649, 1
    %v1468 = vrot.slane %v650, 1
    %v1469 = vrot.slane %v651, 1
    %v1470 = vrot.slane %v652, 1
    %v1471 = vrot.slane %v653, 1
    %v1472 = vrot.slane %v654, 1
    %v1473 = vrot.slane %v655, 1
    %v1474 = vrot.slane %v656, 1
    %v1475 = vrot.slane %v657, 1
    %v1476 = vrot.slane %v658, 1
    %v1477 = vrot.slane %v659, 1
    %v1478 = vrot.slane %v666, 1
    %v1479 = vrot.slane %v663, 1
    %v1494 = vrot.slane %v694, 6
    %v1495 = vrot.slane %v695, 6
    %v1496 = vrot.slane %v696, 6
    %v1497 = vrot.slane %v697, 6
    %v1498 = vrot.slane %v698, 6
    %v1499 = vrot.slane %v699, 6
    %v1500 = vrot.slane %v700, 6
    %v1501 = vrot.slane %v701, 6
    %v1502 = vrot.slane %v702, 6
    %v1503 = vrot.slane %v703, 6
    %v1504 = vrot.slane %v704, 6
    %v1505 = vrot.slane %v708, 6
    %v1506 = vrot.slane %v257, 6
    %v1521 = vrot.slane %v736, 3
    %v1522 = vrot.slane %v737, 3
    %v1523 = vrot.slane %v738, 3
    %v1524 = vrot.slane %v739, 3
    %v1525 = vrot.slane %v740, 3
    %v1526 = vrot.slane %v741, 3
    %v1527 = vrot.slane %v742, 3
    %v1528 = vrot.slane %v743, 3
    %v1529 = vrot.slane %v744, 3
    %v1530 = vrot.slane %v745, 3
    %v1531 = vrot.slane %v746, 3
    %v1532 = vrot.slane %v753, 3
    %v1533 = vrot.slane %v750, 3
    %vm1547 = vcmask 1042432
    %v1548 = vsel %vm1547, %v56, %v1171
    %v1549 = vsel %vm1547, %v70, %v1172
    %v1550 = vsel %vm1547, %v57, %v1173
    %v1551 = vsel %vm1547, %v71, %v1174
    %v1552 = vsel %vm1547, %v58, %v1175
    %v1553 = vsel %vm1547, %v72, %v1176
    %v1554 = vsel %vm1547, %v59, %v1177
    %v1555 = vsel %vm1547, %v73, %v1178
    %v1556 = vsel %vm1547, %v60, %v1179
    %v1557 = vsel %vm1547, %v74, %v1180
    %v1558 = vsel %vm1547, %v61, %v1181
    %v1559 = vsel %vm1547, %v75, %v1182
    %v1560 = vsel %vm1547, %v62, %v1183
    %vm1561 = vcmask 1045504
    %v1562 = vsel %vm1561, %v1548, %v1198
    %v1563 = vsel %vm1561, %v1549, %v1199
    %v1564 = vsel %vm1561, %v1550, %v1200
    %v1565 = vsel %vm1561, %v1551, %v1201
    %v1566 = vsel %vm1561, %v1552, %v1202
    %v1567 = vsel %vm1561, %v1553, %v1203
    %v1568 = vsel %vm1561, %v1554, %v1204
    %v1569 = vsel %vm1561, %v1555, %v1205
    %v1570 = vsel %vm1561, %v1556, %v1206
    %v1571 = vsel %vm1561, %v1557, %v1207
    %v1572 = vsel %vm1561, %v1558, %v1208
    %v1573 = vsel %vm1561, %v1559, %v1209
    %v1574 = vsel %vm1561, %v1560, %v1210
    %vm1575 = vcmask 1040384
    %v1576 = vsel %vm1575, %v1198, %v1225
    %v1577 = vsel %vm1575, %v1199, %v1226
    %v1578 = vsel %vm1575, %v1200, %v1227
    %v1579 = vsel %vm1575, %v1201, %v1228
    %v1580 = vsel %vm1575, %v1202, %v1229
    %v1581 = vsel %vm1575, %v1203, %v1230
    %v1582 = vsel %vm1575, %v1204, %v1231
    %v1583 = vsel %vm1575, %v1205, %v1232
    %v1584 = vsel %vm1575, %v1206, %v1233
    %v1585 = vsel %vm1575, %v1207, %v1234
    %v1586 = vsel %vm1575, %v1208, %v1235
    %v1587 = vsel %vm1575, %v1209, %v1236
    %v1588 = vsel %vm1575, %v1210, %v1237
    %vm1589 = vcmask 1043456
    %v1590 = vsel %vm1589, %v1576, %v1252
    %v1591 = vsel %vm1589, %v1577, %v1253
    %v1592 = vsel %vm1589, %v1578, %v1254
    %v1593 = vsel %vm1589, %v1579, %v1255
    %v1594 = vsel %vm1589, %v1580, %v1256
    %v1595 = vsel %vm1589, %v1581, %v1257
    %v1596 = vsel %vm1589, %v1582, %v1258
    %v1597 = vsel %vm1589, %v1583, %v1259
    %v1598 = vsel %vm1589, %v1584, %v1260
    %v1599 = vsel %vm1589, %v1585, %v1261
    %v1600 = vsel %vm1589, %v1586, %v1262
    %v1601 = vsel %vm1589, %v1587, %v1263
    %v1602 = vsel %vm1589, %v1588, %v1264
    %vm1603 = vcmask 1046528
    %v1604 = vsel %vm1603, %v1590, %v1279
    %v1605 = vsel %vm1603, %v1591, %v1280
    %v1606 = vsel %vm1603, %v1592, %v1281
    %v1607 = vsel %vm1603, %v1593, %v1282
    %v1608 = vsel %vm1603, %v1594, %v1283
    %v1609 = vsel %vm1603, %v1595, %v1284
    %v1610 = vsel %vm1603, %v1596, %v1285
    %v1611 = vsel %vm1603, %v1597, %v1286
    %v1612 = vsel %vm1603, %v1598, %v1287
    %v1613 = vsel %vm1603, %v1599, %v1288
    %v1614 = vsel %vm1603, %v1600, %v1289
    %v1615 = vsel %vm1603, %v1601, %v1290
    %v1616 = vsel %vm1603, %v1602, %v1291
    %vm1617 = vcmask 1041408
    %v1618 = vsel %vm1617, %v1279, %v1306
    %v1619 = vsel %vm1617, %v1280, %v1307
    %v1620 = vsel %vm1617, %v1281, %v1308
    %v1621 = vsel %vm1617, %v1282, %v1309
    %v1622 = vsel %vm1617, %v1283, %v1310
    %v1623 = vsel %vm1617, %v1284, %v1311
    %v1624 = vsel %vm1617, %v1285, %v1312
    %v1625 = vsel %vm1617, %v1286, %v1313
    %v1626 = vsel %vm1617, %v1287, %v1314
    %v1627 = vsel %vm1617, %v1288, %v1315
    %v1628 = vsel %vm1617, %v1289, %v1316
    %v1629 = vsel %vm1617, %v1290, %v1317
    %v1630 = vsel %vm1617, %v1291, %v1318
    %vm1631 = vcmask 1044480
    %v1632 = vsel %vm1631, %v1618, %v1333
    %v1633 = vsel %vm1631, %v1619, %v1334
    %v1634 = vsel %vm1631, %v1620, %v1335
    %v1635 = vsel %vm1631, %v1621, %v1336
    %v1636 = vsel %vm1631, %v1622, %v1337
    %v1637 = vsel %vm1631, %v1623, %v1338
    %v1638 = vsel %vm1631, %v1624, %v1339
    %v1639 = vsel %vm1631, %v1625, %v1340
    %v1640 = vsel %vm1631, %v1626, %v1341
    %v1641 = vsel %vm1631, %v1627, %v1342
    %v1642 = vsel %vm1631, %v1628, %v1343
    %v1643 = vsel %vm1631, %v1629, %v1344
    %v1644 = vsel %vm1631, %v1630, %v1345
    %v1645 = vsel %vm1547, %v418, %v1359
    %v1646 = vsel %vm1547, %v419, %v1360
    %v1647 = vsel %vm1547, %v420, %v1361
    %v1648 = vsel %vm1547, %v421, %v1362
    %v1649 = vsel %vm1547, %v422, %v1363
    %v1650 = vsel %vm1547, %v423, %v1364
    %v1651 = vsel %vm1547, %v424, %v1365
    %v1652 = vsel %vm1547, %v425, %v1366
    %v1653 = vsel %vm1547, %v426, %v1367
    %v1654 = vsel %vm1547, %v427, %v1368
    %v1655 = vsel %vm1547, %v428, %v1369
    %v1656 = vsel %vm1547, %v429, %v1370
    %v1657 = vsel %vm1547, %v447, %v1371
    %v1658 = vsel %vm1561, %v1645, %v1386
    %v1659 = vsel %vm1561, %v1646, %v1387
    %v1660 = vsel %vm1561, %v1647, %v1388
    %v1661 = vsel %vm1561, %v1648, %v1389
    %v1662 = vsel %vm1561, %v1649, %v1390
    %v1663 = vsel %vm1561, %v1650, %v1391
    %v1664 = vsel %vm1561, %v1651, %v1392
    %v1665 = vsel %vm1561, %v1652, %v1393
    %v1666 = vsel %vm1561, %v1653, %v1394
    %v1667 = vsel %vm1561, %v1654, %v1395
    %v1668 = vsel %vm1561, %v1655, %v1396
    %v1669 = vsel %vm1561, %v1656, %v1397
    %v1670 = vsel %vm1561, %v1657, %v1398
    %v1671 = vsel %vm1575, %v1386, %v1413
    %v1672 = vsel %vm1575, %v1387, %v1414
    %v1673 = vsel %vm1575, %v1388, %v1415
    %v1674 = vsel %vm1575, %v1389, %v1416
    %v1675 = vsel %vm1575, %v1390, %v1417
    %v1676 = vsel %vm1575, %v1391, %v1418
    %v1677 = vsel %vm1575, %v1392, %v1419
    %v1678 = vsel %vm1575, %v1393, %v1420
    %v1679 = vsel %vm1575, %v1394, %v1421
    %v1680 = vsel %vm1575, %v1395, %v1422
    %v1681 = vsel %vm1575, %v1396, %v1423
    %v1682 = vsel %vm1575, %v1397, %v1424
    %v1683 = vsel %vm1575, %v1398, %v1425
    %v1684 = vsel %vm1589, %v1671, %v1440
    %v1685 = vsel %vm1589, %v1672, %v1441
    %v1686 = vsel %vm1589, %v1673, %v1442
    %v1687 = vsel %vm1589, %v1674, %v1443
    %v1688 = vsel %vm1589, %v1675, %v1444
    %v1689 = vsel %vm1589, %v1676, %v1445
    %v1690 = vsel %vm1589, %v1677, %v1446
    %v1691 = vsel %vm1589, %v1678, %v1447
    %v1692 = vsel %vm1589, %v1679, %v1448
    %v1693 = vsel %vm1589, %v1680, %v1449
    %v1694 = vsel %vm1589, %v1681, %v1450
    %v1695 = vsel %vm1589, %v1682, %v1451
    %v1696 = vsel %vm1589, %v1683, %v1452
    %v1697 = vsel %vm1603, %v1684, %v1467
    %v1698 = vsel %vm1603, %v1685, %v1468
    %v1699 = vsel %vm1603, %v1686, %v1469
    %v1700 = vsel %vm1603, %v1687, %v1470
    %v1701 = vsel %vm1603, %v1688, %v1471
    %v1702 = vsel %vm1603, %v1689, %v1472
    %v1703 = vsel %vm1603, %v1690, %v1473
    %v1704 = vsel %vm1603, %v1691, %v1474
    %v1705 = vsel %vm1603, %v1692, %v1475
    %v1706 = vsel %vm1603, %v1693, %v1476
    %v1707 = vsel %vm1603, %v1694, %v1477
    %v1708 = vsel %vm1603, %v1695, %v1478
    %v1709 = vsel %vm1603, %v1696, %v1479
    %v1710 = vsel %vm1617, %v1467, %v1494
    %v1711 = vsel %vm1617, %v1468, %v1495
    %v1712 = vsel %vm1617, %v1469, %v1496
    %v1713 = vsel %vm1617, %v1470, %v1497
    %v1714 = vsel %vm1617, %v1471, %v1498
    %v1715 = vsel %vm1617, %v1472, %v1499
    %v1716 = vsel %vm1617, %v1473, %v1500
    %v1717 = vsel %vm1617, %v1474, %v1501
    %v1718 = vsel %vm1617, %v1475, %v1502
    %v1719 = vsel %vm1617, %v1476, %v1503
    %v1720 = vsel %vm1617, %v1477, %v1504
    %v1721 = vsel %vm1617, %v1478, %v1505
    %v1722 = vsel %vm1617, %v1479, %v1506
    %v1723 = vsel %vm1631, %v1710, %v1521
    %v1724 = vsel %vm1631, %v1711, %v1522
    %v1725 = vsel %vm1631, %v1712, %v1523
    %v1726 = vsel %vm1631, %v1713, %v1524
    %v1727 = vsel %vm1631, %v1714, %v1525
    %v1728 = vsel %vm1631, %v1715, %v1526
    %v1729 = vsel %vm1631, %v1716, %v1527
    %v1730 = vsel %vm1631, %v1717, %v1528
    %v1731 = vsel %vm1631, %v1718, %v1529
    %v1732 = vsel %vm1631, %v1719, %v1530
    %v1733 = vsel %vm1631, %v1720, %v1531
    %v1734 = vsel %vm1631, %v1721, %v1532
    %v1735 = vsel %vm1631, %v1722, %v1533
    %v1737 = vrot.slane %v837, 5
    %v1738 = vrot.slane %v838, 5
    %v1739 = vrot.slane %v839, 5
    %v1740 = vrot.slane %v840, 5
    %v1741 = vrot.slane %v841, 5
    %v1742 = vrot.slane %v842, 5
    %v1743 = vrot.slane %v843, 5
    %v1744 = vrot.slane %v844, 5
    %v1745 = vrot.slane %v845, 5
    %v1746 = vrot.slane %v846, 5
    %v1747 = vrot.slane %v847, 5
    %v1748 = vrot.slane %v854, 5
    %v1749 = vrot.slane %v851, 5
    %v1764 = vrot.slane %v882, 2
    %v1765 = vrot.slane %v883, 2
    %v1766 = vrot.slane %v884, 2
    %v1767 = vrot.slane %v885, 2
    %v1768 = vrot.slane %v886, 2
    %v1769 = vrot.slane %v887, 2
    %v1770 = vrot.slane %v888, 2
    %v1771 = vrot.slane %v889, 2
    %v1772 = vrot.slane %v890, 2
    %v1773 = vrot.slane %v891, 2
    %v1774 = vrot.slane %v892, 2
    %v1775 = vrot.slane %v899, 2
    %v1776 = vrot.slane %v896, 2
    %v1791 = vrot.slane %v927, 7
    %v1792 = vrot.slane %v928, 7
    %v1793 = vrot.slane %v929, 7
    %v1794 = vrot.slane %v930, 7
    %v1795 = vrot.slane %v931, 7
    %v1796 = vrot.slane %v932, 7
    %v1797 = vrot.slane %v933, 7
    %v1798 = vrot.slane %v934, 7
    %v1799 = vrot.slane %v935, 7
    %v1800 = vrot.slane %v936, 7
    %v1801 = vrot.slane %v937, 7
    %v1802 = vrot.slane %v941, 7
    %v1803 = vrot.slane %v488, 7
    %v1818 = vrot.slane %v969, 4
    %v1819 = vrot.slane %v970, 4
    %v1820 = vrot.slane %v971, 4
    %v1821 = vrot.slane %v972, 4
    %v1822 = vrot.slane %v973, 4
    %v1823 = vrot.slane %v974, 4
    %v1824 = vrot.slane %v975, 4
    %v1825 = vrot.slane %v976, 4
    %v1826 = vrot.slane %v977, 4
    %v1827 = vrot.slane %v978, 4
    %v1828 = vrot.slane %v979, 4
    %v1829 = vrot.slane %v986, 4
    %v1830 = vrot.slane %v983, 4
    %v1845 = vrot.slane %v1014, 1
    %v1846 = vrot.slane %v1015, 1
    %v1847 = vrot.slane %v1016, 1
    %v1848 = vrot.slane %v1017, 1
    %v1849 = vrot.slane %v1018, 1
    %v1850 = vrot.slane %v1019, 1
    %v1851 = vrot.slane %v1020, 1
    %v1852 = vrot.slane %v1021, 1
    %v1853 = vrot.slane %v1022, 1
    %v1854 = vrot.slane %v1023, 1
    %v1855 = vrot.slane %v1024, 1
    %v1856 = vrot.slane %v1031, 1
    %v1857 = vrot.slane %v1028, 1
    %v1872 = vrot.slane %v1059, 6
    %v1873 = vrot.slane %v1060, 6
    %v1874 = vrot.slane %v1061, 6
    %v1875 = vrot.slane %v1062, 6
    %v1876 = vrot.slane %v1063, 6
    %v1877 = vrot.slane %v1064, 6
    %v1878 = vrot.slane %v1065, 6
    %v1879 = vrot.slane %v1066, 6
    %v1880 = vrot.slane %v1067, 6
    %v1881 = vrot.slane %v1068, 6
    %v1882 = vrot.slane %v1069, 6
    %v1883 = vrot.slane %v1076, 6
    %v1884 = vrot.slane %v1073, 6
    %v1899 = vrot.slane %v1104, 3
    %v1900 = vrot.slane %v1105, 3
    %v1901 = vrot.slane %v1106, 3
    %v1902 = vrot.slane %v1107, 3
    %v1903 = vrot.slane %v1108, 3
    %v1904 = vrot.slane %v1109, 3
    %v1905 = vrot.slane %v1110, 3
    %v1906 = vrot.slane %v1111, 3
    %v1907 = vrot.slane %v1112, 3
    %v1908 = vrot.slane %v1113, 3
    %v1909 = vrot.slane %v1114, 3
    %v1910 = vrot.slane %v1121, 3
    %v1911 = vrot.slane %v1118, 3
    %v1925 = vsel %vm1547, %v781, %v1737
    %v1926 = vsel %vm1547, %v782, %v1738
    %v1927 = vsel %vm1547, %v783, %v1739
    %v1928 = vsel %vm1547, %v784, %v1740
    %v1929 = vsel %vm1547, %v785, %v1741
    %v1930 = vsel %vm1547, %v786, %v1742
    %v1931 = vsel %vm1547, %v787, %v1743
    %v1932 = vsel %vm1547, %v788, %v1744
    %v1933 = vsel %vm1547, %v789, %v1745
    %v1934 = vsel %vm1547, %v790, %v1746
    %v1935 = vsel %vm1547, %v791, %v1747
    %v1936 = vsel %vm1547, %v809, %v1748
    %v1937 = vsel %vm1547, %v806, %v1749
    %v1938 = vsel %vm1561, %v1925, %v1764
    %v1939 = vsel %vm1561, %v1926, %v1765
    %v1940 = vsel %vm1561, %v1927, %v1766
    %v1941 = vsel %vm1561, %v1928, %v1767
    %v1942 = vsel %vm1561, %v1929, %v1768
    %v1943 = vsel %vm1561, %v1930, %v1769
    %v1944 = vsel %vm1561, %v1931, %v1770
    %v1945 = vsel %vm1561, %v1932, %v1771
    %v1946 = vsel %vm1561, %v1933, %v1772
    %v1947 = vsel %vm1561, %v1934, %v1773
    %v1948 = vsel %vm1561, %v1935, %v1774
    %v1949 = vsel %vm1561, %v1936, %v1775
    %v1950 = vsel %vm1561, %v1937, %v1776
    %v1951 = vsel %vm1575, %v1764, %v1791
    %v1952 = vsel %vm1575, %v1765, %v1792
    %v1953 = vsel %vm1575, %v1766, %v1793
    %v1954 = vsel %vm1575, %v1767, %v1794
    %v1955 = vsel %vm1575, %v1768, %v1795
    %v1956 = vsel %vm1575, %v1769, %v1796
    %v1957 = vsel %vm1575, %v1770, %v1797
    %v1958 = vsel %vm1575, %v1771, %v1798
    %v1959 = vsel %vm1575, %v1772, %v1799
    %v1960 = vsel %vm1575, %v1773, %v1800
    %v1961 = vsel %vm1575, %v1774, %v1801
    %v1962 = vsel %vm1575, %v1775, %v1802
    %v1963 = vsel %vm1575, %v1776, %v1803
    %v1964 = vsel %vm1589, %v1951, %v1818
    %v1965 = vsel %vm1589, %v1952, %v1819
    %v1966 = vsel %vm1589, %v1953, %v1820
    %v1967 = vsel %vm1589, %v1954, %v1821
    %v1968 = vsel %vm1589, %v1955, %v1822
    %v1969 = vsel %vm1589, %v1956, %v1823
    %v1970 = vsel %vm1589, %v1957, %v1824
    %v1971 = vsel %vm1589, %v1958, %v1825
    %v1972 = vsel %vm1589, %v1959, %v1826
    %v1973 = vsel %vm1589, %v1960, %v1827
    %v1974 = vsel %vm1589, %v1961, %v1828
    %v1975 = vsel %vm1589, %v1962, %v1829
    %v1976 = vsel %vm1589, %v1963, %v1830
    %v1977 = vsel %vm1603, %v1964, %v1845
    %v1978 = vsel %vm1603, %v1965, %v1846
    %v1979 = vsel %vm1603, %v1966, %v1847
    %v1980 = vsel %vm1603, %v1967, %v1848
    %v1981 = vsel %vm1603, %v1968, %v1849
    %v1982 = vsel %vm1603, %v1969, %v1850
    %v1983 = vsel %vm1603, %v1970, %v1851
    %v1984 = vsel %vm1603, %v1971, %v1852
    %v1985 = vsel %vm1603, %v1972, %v1853
    %v1986 = vsel %vm1603, %v1973, %v1854
    %v1987 = vsel %vm1603, %v1974, %v1855
    %v1988 = vsel %vm1603, %v1975, %v1856
    %v1989 = vsel %vm1603, %v1976, %v1857
    %v1990 = vsel %vm1617, %v1845, %v1872
    %v1991 = vsel %vm1617, %v1846, %v1873
    %v1992 = vsel %vm1617, %v1847, %v1874
    %v1993 = vsel %vm1617, %v1848, %v1875
    %v1994 = vsel %vm1617, %v1849, %v1876
    %v1995 = vsel %vm1617, %v1850, %v1877
    %v1996 = vsel %vm1617, %v1851, %v1878
    %v1997 = vsel %vm1617, %v1852, %v1879
    %v1998 = vsel %vm1617, %v1853, %v1880
    %v1999 = vsel %vm1617, %v1854, %v1881
    %v2000 = vsel %vm1617, %v1855, %v1882
    %v2001 = vsel %vm1617, %v1856, %v1883
    %v2002 = vsel %vm1617, %v1857, %v1884
    %v2003 = vsel %vm1631, %v1990, %v1899
    %v2004 = vsel %vm1631, %v1991, %v1900
    %v2005 = vsel %vm1631, %v1992, %v1901
    %v2006 = vsel %vm1631, %v1993, %v1902
    %v2007 = vsel %vm1631, %v1994, %v1903
    %v2008 = vsel %vm1631, %v1995, %v1904
    %v2009 = vsel %vm1631, %v1996, %v1905
    %v2010 = vsel %vm1631, %v1997, %v1906
    %v2011 = vsel %vm1631, %v1998, %v1907
    %v2012 = vsel %vm1631, %v1999, %v1908
    %v2013 = vsel %vm1631, %v2000, %v1909
    %v2014 = vsel %vm1631, %v2001, %v1910
    %v2015 = vsel %vm1631, %v2002, %v1911
    %v2016 = vld [vmem:[%s1] sm:$0x3f]
    %v2018 = vsel %vm808, %v2016, 0
    %v2020 = vsel %vm1547, %v1149, 0
    %v2022 = vsel %vm1547, %v1150, 0
    %v2024 = vsel %vm1547, %v1151, 0
    %v2026 = vsel %vm1547, %v1152, 0
    %v2028 = vsel %vm1547, %v1153, 0
    %v2030 = vsel %vm1547, %v1154, 0
    %v2032 = vsel %vm1547, %v1155, 0
    %v2034 = vsel %vm1547, %v1156, 0
    %v2036 = vsel %vm1547, %v1157, 0
    %v2038 = vsel %vm1547, %v1158, 0
    %v2040 = vsel %vm1547, %v1159, 0
    %v2043 = vsel %vm1547, %v1163, 0
    %v2045 = vsel %vm1547, %v710, 0
    %2047 = vmatprep.subr.mxu0 %v1563
    %2048 = vmatpush1.msra.mxu0 %v1562
    %2049 = vmatprep.subr.mxu0 %v1605
    %2050 = vmatpush1.msra.mxu0 %v1604
    %2051 = vmatprep.subr.mxu0 %v1633
    %2052 = vmatpush1.msra.mxu0 %v1632
    %2053 = vmatprep.subr.mxu0 %v1659
    %2054 = vmatpush1.msra.mxu0 %v1658
    %2055 = vmatprep.subr.mxu0 %v1698
    %2056 = vmatpush1.msra.mxu0 %v1697
    %2057 = vmatprep.subr.mxu0 %v1724
    %2058 = vmatpush1.msra.mxu0 %v1723
    %2059 = vmatprep.subr.mxu0 %v1939
    %2060 = vmatpush1.msra.mxu0 %v1938
    %2061 = vmatprep.subr.mxu0 %v1978
    %2062 = vmatpush1.msra.mxu0 %v1977
    %2063 = vmatprep.subr.mxu0 %v2004
    %2064 = vmatpush1.msra.mxu0 %v2003
    %2065 = vmatprep.subr.mxu0 %v2022
    %2066 = vmatpush1.msra.mxu0 %v2020
    %2067 = vmatprep.subr.mxu0 0.0
    %2068 = vmatpush1.msra.mxu0 0.0
    %2069 = vmatprep.subr.mxu0 0.0
    %2070 = vmatpush1.msra.mxu0 0.0
    %2071 = vmatprep.subr.mxu0 0.0
    %2072 = vmatpush1.msra.mxu0 0.0
    %2073 = vmatprep.subr.mxu0 0.0
    %2074 = vmatpush1.msra.mxu0 0.0
    %2075 = vmatprep.subr.mxu0 0.0
    %2076 = vmatpush1.msra.mxu0 0.0
    %2077 = vmatprep.subr.mxu0 0.0
    %2078 = vmatpush1.msra.mxu0 0.0
    %2079 = vmatprep.subr.mxu0 0.0
    %2080 = vmatpush1.msra.mxu0 0.0
    %2081 = vmatprep.subr.mxu0 0.0
    %2082 = vmatpush1.msra.mxu0 0.0
    %2083 = vmatprep.subr.mxu0 0.0
    %2084 = vmatpush1.msra.mxu0 0.0
    %2085 = vmatprep.subr.mxu0 0.0
    %2086 = vmatpush1.msra.mxu0 0.0
    %2087 = vmatprep.subr.mxu0 0.0
    %2088 = vmatpush1.msra.mxu0 0.0
    %2089 = vmatprep.subr.mxu0 0.0
    %2090 = vmatpush1.msra.mxu0 0.0
    %2091 = vmatprep.subr.mxu0 0.0
    %2092 = vmatpush1.msra.mxu0 0.0
    %2093 = vmatprep.subr.mxu0 0.0
    %2094 = vmatpush1.msra.mxu0 0.0
    %2095 = vmatprep.subr.mxu0 0.0
    %2096 = vmatpush1.msra.mxu0 0.0
    %2097 = vmatprep.subr.mxu0 0.0
    %2098 = vmatpush1.msra.mxu0 0.0
    %2099 = vmatprep.subr.mxu0 0.0
    %2100 = vmatpush1.msra.mxu0 0.0
    %2101 = vmatprep.subr.mxu0 0.0
    %2102 = vmatpush1.msra.mxu0 0.0
    %2103 = vmatprep.subr.mxu0 0.0
    %2104 = vmatpush1.msra.mxu0 0.0
    %2105 = vmatprep.subr.mxu0 0.0
    %2106 = vmatpush1.msra.mxu0 0.0
    %2107 = vmatprep.subr.mxu0 0.0
    %2108 = vmatpush1.msra.mxu0 0.0
    %2109 = vmatprep.subr.mxu0 0.0
    %2110 = vmatpush1.msra.mxu0 0.0
    %2111 = vmatprep.mubr.f32.mxu0 0.0
    %2112 = vmatmul.mubr.f32.gmra.mrb[0].mxu0 %v2018
    %v2113 = vpop.f32.mrb[0].mxu0
    %v2114 = vadd.f32 0.0, %v2113
    %v2115 = vpop.f32.mrb[0].mxu0
    %v2116 = vadd.f32 0.0, %v2115
    %2117 = vdwg.mxu0
    %2118 = vmatprep.subr.mxu0 %v1565
    %2119 = vmatpush1.msra.mxu0 %v1564
    %2120 = vmatprep.subr.mxu0 %v1607
    %2121 = vmatpush1.msra.mxu0 %v1606
    %2122 = vmatprep.subr.mxu0 %v1635
    %2123 = vmatpush1.msra.mxu0 %v1634
    %2124 = vmatprep.subr.mxu0 %v1661
    %2125 = vmatpush1.msra.mxu0 %v1660
    %2126 = vmatprep.subr.mxu0 %v1700
    %2127 = vmatpush1.msra.mxu0 %v1699
    %2128 = vmatprep.subr.mxu0 %v1726
    %2129 = vmatpush1.msra.mxu0 %v1725
    %2130 = vmatprep.subr.mxu0 %v1941
    %2131 = vmatpush1.msra.mxu0 %v1940
    %2132 = vmatprep.subr.mxu0 %v1980
    %2133 = vmatpush1.msra.mxu0 %v1979
    %2134 = vmatprep.subr.mxu0 %v2006
    %2135 = vmatpush1.msra.mxu0 %v2005
    %2136 = vmatprep.subr.mxu0 %v2026
    %2137 = vmatpush1.msra.mxu0 %v2024
    %2138 = vmatprep.subr.mxu0 0.0
    %2139 = vmatpush1.msra.mxu0 0.0
    %2140 = vmatprep.subr.mxu0 0.0
    %2141 = vmatpush1.msra.mxu0 0.0
    %2142 = vmatprep.subr.mxu0 0.0
    %2143 = vmatpush1.msra.mxu0 0.0
    %2144 = vmatprep.subr.mxu0 0.0
    %2145 = vmatpush1.msra.mxu0 0.0
    %2146 = vmatprep.subr.mxu0 0.0
    %2147 = vmatpush1.msra.mxu0 0.0
    %2148 = vmatprep.subr.mxu0 0.0
    %2149 = vmatpush1.msra.mxu0 0.0
    %2150 = vmatprep.subr.mxu0 0.0
    %2151 = vmatpush1.msra.mxu0 0.0
    %2152 = vmatprep.subr.mxu0 0.0
    %2153 = vmatpush1.msra.mxu0 0.0
    %2154 = vmatprep.subr.mxu0 0.0
    %2155 = vmatpush1.msra.mxu0 0.0
    %2156 = vmatprep.subr.mxu0 0.0
    %2157 = vmatpush1.msra.mxu0 0.0
    %2158 = vmatprep.subr.mxu0 0.0
    %2159 = vmatpush1.msra.mxu0 0.0
    %2160 = vmatprep.subr.mxu0 0.0
    %2161 = vmatpush1.msra.mxu0 0.0
    %2162 = vmatprep.subr.mxu0 0.0
    %2163 = vmatpush1.msra.mxu0 0.0
    %2164 = vmatprep.subr.mxu0 0.0
    %2165 = vmatpush1.msra.mxu0 0.0
    %2166 = vmatprep.subr.mxu0 0.0
    %2167 = vmatpush1.msra.mxu0 0.0
    %2168 = vmatprep.subr.mxu0 0.0
    %2169 = vmatpush1.msra.mxu0 0.0
    %2170 = vmatprep.subr.mxu0 0.0
    %2171 = vmatpush1.msra.mxu0 0.0
    %2172 = vmatprep.subr.mxu0 0.0
    %2173 = vmatpush1.msra.mxu0 0.0
    %2174 = vmatprep.subr.mxu0 0.0
    %2175 = vmatpush1.msra.mxu0 0.0
    %2176 = vmatprep.subr.mxu0 0.0
    %2177 = vmatpush1.msra.mxu0 0.0
    %2178 = vmatprep.subr.mxu0 0.0
    %2179 = vmatpush1.msra.mxu0 0.0
    %2180 = vmatprep.subr.mxu0 0.0
    %2181 = vmatpush1.msra.mxu0 0.0
    %2182 = vmatprep.mubr.f32.mxu0 0.0
    %2183 = vmatmul.mubr.f32.gmra.mrb[0].mxu0 %v2018
    %v2184 = vpop.f32.mrb[0].mxu0
    %v2185 = vadd.f32 0.0, %v2184
    %v2186 = vpop.f32.mrb[0].mxu0
    %v2187 = vadd.f32 0.0, %v2186
    %2188 = vdwg.mxu0
    %2189 = vmatprep.subr.mxu0 %v1567
    %2190 = vmatpush1.msra.mxu0 %v1566
    %2191 = vmatprep.subr.mxu0 %v1609
    %2192 = vmatpush1.msra.mxu0 %v1608
    %2193 = vmatprep.subr.mxu0 %v1637
    %2194 = vmatpush1.msra.mxu0 %v1636
    %2195 = vmatprep.subr.mxu0 %v1663
    %2196 = vmatpush1.msra.mxu0 %v1662
    %2197 = vmatprep.subr.mxu0 %v1702
    %2198 = vmatpush1.msra.mxu0 %v1701
    %2199 = vmatprep.subr.mxu0 %v1728
    %2200 = vmatpush1.msra.mxu0 %v1727
    %2201 = vmatprep.subr.mxu0 %v1943
    %2202 = vmatpush1.msra.mxu0 %v1942
    %2203 = vmatprep.subr.mxu0 %v1982
    %2204 = vmatpush1.msra.mxu0 %v1981
    %2205 = vmatprep.subr.mxu0 %v2008
    %2206 = vmatpush1.msra.mxu0 %v2007
    %2207 = vmatprep.subr.mxu0 %v2030
    %2208 = vmatpush1.msra.mxu0 %v2028
    %2209 = vmatprep.subr.mxu0 0.0
    %2210 = vmatpush1.msra.mxu0 0.0
    %2211 = vmatprep.subr.mxu0 0.0
    %2212 = vmatpush1.msra.mxu0 0.0
    %2213 = vmatprep.subr.mxu0 0.0
    %2214 = vmatpush1.msra.mxu0 0.0
    %2215 = vmatprep.subr.mxu0 0.0
    %2216 = vmatpush1.msra.mxu0 0.0
    %2217 = vmatprep.subr.mxu0 0.0
    %2218 = vmatpush1.msra.mxu0 0.0
    %2219 = vmatprep.subr.mxu0 0.0
    %2220 = vmatpush1.msra.mxu0 0.0
    %2221 = vmatprep.subr.mxu0 0.0
    %2222 = vmatpush1.msra.mxu0 0.0
    %2223 = vmatprep.subr.mxu0 0.0
    %2224 = vmatpush1.msra.mxu0 0.0
    %2225 = vmatprep.subr.mxu0 0.0
    %2226 = vmatpush1.msra.mxu0 0.0
    %2227 = vmatprep.subr.mxu0 0.0
    %2228 = vmatpush1.msra.mxu0 0.0
    %2229 = vmatprep.subr.mxu0 0.0
    %2230 = vmatpush1.msra.mxu0 0.0
    %2231 = vmatprep.subr.mxu0 0.0
    %2232 = vmatpush1.msra.mxu0 0.0
    %2233 = vmatprep.subr.mxu0 0.0
    %2234 = vmatpush1.msra.mxu0 0.0
    %2235 = vmatprep.subr.mxu0 0.0
    %2236 = vmatpush1.msra.mxu0 0.0
    %2237 = vmatprep.subr.mxu0 0.0
    %2238 = vmatpush1.msra.mxu0 0.0
    %2239 = vmatprep.subr.mxu0 0.0
    %2240 = vmatpush1.msra.mxu0 0.0
    %2241 = vmatprep.subr.mxu0 0.0
    %2242 = vmatpush1.msra.mxu0 0.0
    %2243 = vmatprep.subr.mxu0 0.0
    %2244 = vmatpush1.msra.mxu0 0.0
    %2245 = vmatprep.subr.mxu0 0.0
    %2246 = vmatpush1.msra.mxu0 0.0
    %2247 = vmatprep.subr.mxu0 0.0
    %2248 = vmatpush1.msra.mxu0 0.0
    %2249 = vmatprep.subr.mxu0 0.0
    %2250 = vmatpush1.msra.mxu0 0.0
    %2251 = vmatprep.subr.mxu0 0.0
    %2252 = vmatpush1.msra.mxu0 0.0
    %2253 = vmatprep.mubr.f32.mxu0 0.0
    %2254 = vmatmul.mubr.f32.gmra.mrb[0].mxu0 %v2018
    %v2255 = vpop.f32.mrb[0].mxu0
    %v2256 = vadd.f32 0.0, %v2255
    %v2257 = vpop.f32.mrb[0].mxu0
    %v2258 = vadd.f32 0.0, %v2257
    %2259 = vdwg.mxu0
    %2260 = vmatprep.subr.mxu0 %v1569
    %2261 = vmatpush1.msra.mxu0 %v1568
    %2262 = vmatprep.subr.mxu0 %v1611
    %2263 = vmatpush1.msra.mxu0 %v1610
    %2264 = vmatprep.subr.mxu0 %v1639
    %2265 = vmatpush1.msra.mxu0 %v1638
    %2266 = vmatprep.subr.mxu0 %v1665
    %2267 = vmatpush1.msra.mxu0 %v1664
    %2268 = vmatprep.subr.mxu0 %v1704
    %2269 = vmatpush1.msra.mxu0 %v1703
    %2270 = vmatprep.subr.mxu0 %v1730
    %2271 = vmatpush1.msra.mxu0 %v1729
    %2272 = vmatprep.subr.mxu0 %v1945
    %2273 = vmatpush1.msra.mxu0 %v1944
    %2274 = vmatprep.subr.mxu0 %v1984
    %2275 = vmatpush1.msra.mxu0 %v1983
    %2276 = vmatprep.subr.mxu0 %v2010
    %2277 = vmatpush1.msra.mxu0 %v2009
    %2278 = vmatprep.subr.mxu0 %v2034
    %2279 = vmatpush1.msra.mxu0 %v2032
    %2280 = vmatprep.subr.mxu0 0.0
    %2281 = vmatpush1.msra.mxu0 0.0
    %2282 = vmatprep.subr.mxu0 0.0
    %2283 = vmatpush1.msra.mxu0 0.0
    %2284 = vmatprep.subr.mxu0 0.0
    %2285 = vmatpush1.msra.mxu0 0.0
    %2286 = vmatprep.subr.mxu0 0.0
    %2287 = vmatpush1.msra.mxu0 0.0
    %2288 = vmatprep.subr.mxu0 0.0
    %2289 = vmatpush1.msra.mxu0 0.0
    %2290 = vmatprep.subr.mxu0 0.0
    %2291 = vmatpush1.msra.mxu0 0.0
    %2292 = vmatprep.subr.mxu0 0.0
    %2293 = vmatpush1.msra.mxu0 0.0
    %2294 = vmatprep.subr.mxu0 0.0
    %2295 = vmatpush1.msra.mxu0 0.0
    %2296 = vmatprep.subr.mxu0 0.0
    %2297 = vmatpush1.msra.mxu0 0.0
    %2298 = vmatprep.subr.mxu0 0.0
    %2299 = vmatpush1.msra.mxu0 0.0
    %2300 = vmatprep.subr.mxu0 0.0
    %2301 = vmatpush1.msra.mxu0 0.0
    %2302 = vmatprep.subr.mxu0 0.0
    %2303 = vmatpush1.msra.mxu0 0.0
    %2304 = vmatprep.subr.mxu0 0.0
    %2305 = vmatpush1.msra.mxu0 0.0
    %2306 = vmatprep.subr.mxu0 0.0
    %2307 = vmatpush1.msra.mxu0 0.0
    %2308 = vmatprep.subr.mxu0 0.0
    %2309 = vmatpush1.msra.mxu0 0.0
    %2310 = vmatprep.subr.mxu0 0.0
    %2311 = vmatpush1.msra.mxu0 0.0
    %2312 = vmatprep.subr.mxu0 0.0
    %2313 = vmatpush1.msra.mxu0 0.0
    %2314 = vmatprep.subr.mxu0 0.0
    %2315 = vmatpush1.msra.mxu0 0.0
    %2316 = vmatprep.subr.mxu0 0.0
    %2317 = vmatpush1.msra.mxu0 0.0
    %2318 = vmatprep.subr.mxu0 0.0
    %2319 = vmatpush1.msra.mxu0 0.0
    %2320 = vmatprep.subr.mxu0 0.0
    %2321 = vmatpush1.msra.mxu0 0.0
    %2322 = vmatprep.subr.mxu0 0.0
    %2323 = vmatpush1.msra.mxu0 0.0
    %2324 = vmatprep.mubr.f32.mxu0 0.0
    %2325 = vmatmul.mubr.f32.gmra.mrb[0].mxu0 %v2018
    %v2326 = vpop.f32.mrb[0].mxu0
    %v2327 = vadd.f32 0.0, %v2326
    %v2328 = vpop.f32.mrb[0].mxu0
    %v2329 = vadd.f32 0.0, %v2328
    %2330 = vdwg.mxu0
    %2331 = vmatprep.subr.mxu0 %v1571
    %2332 = vmatpush1.msra.mxu0 %v1570
    %2333 = vmatprep.subr.mxu0 %v1613
    %2334 = vmatpush1.msra.mxu0 %v1612
    %2335 = vmatprep.subr.mxu0 %v1641
    %2336 = vmatpush1.msra.mxu0 %v1640
    %2337 = vmatprep.subr.mxu0 %v1667
    %2338 = vmatpush1.msra.mxu0 %v1666
    %2339 = vmatprep.subr.mxu0 %v1706
    %2340 = vmatpush1.msra.mxu0 %v1705
    %2341 = vmatprep.subr.mxu0 %v1732
    %2342 = vmatpush1.msra.mxu0 %v1731
    %2343 = vmatprep.subr.mxu0 %v1947
    %2344 = vmatpush1.msra.mxu0 %v1946
    %2345 = vmatprep.subr.mxu0 %v1986
    %2346 = vmatpush1.msra.mxu0 %v1985
    %2347 = vmatprep.subr.mxu0 %v2012
    %2348 = vmatpush1.msra.mxu0 %v2011
    %2349 = vmatprep.subr.mxu0 %v2038
    %2350 = vmatpush1.msra.mxu0 %v2036
    %2351 = vmatprep.subr.mxu0 0.0
    %2352 = vmatpush1.msra.mxu0 0.0
    %2353 = vmatprep.subr.mxu0 0.0
    %2354 = vmatpush1.msra.mxu0 0.0
    %2355 = vmatprep.subr.mxu0 0.0
    %2356 = vmatpush1.msra.mxu0 0.0
    %2357 = vmatprep.subr.mxu0 0.0
    %2358 = vmatpush1.msra.mxu0 0.0
    %2359 = vmatprep.subr.mxu0 0.0
    %2360 = vmatpush1.msra.mxu0 0.0
    %2361 = vmatprep.subr.mxu0 0.0
    %2362 = vmatpush1.msra.mxu0 0.0
    %2363 = vmatprep.subr.mxu0 0.0
    %2364 = vmatpush1.msra.mxu0 0.0
    %2365 = vmatprep.subr.mxu0 0.0
    %2366 = vmatpush1.msra.mxu0 0.0
    %2367 = vmatprep.subr.mxu0 0.0
    %2368 = vmatpush1.msra.mxu0 0.0
    %2369 = vmatprep.subr.mxu0 0.0
    %2370 = vmatpush1.msra.mxu0 0.0
    %2371 = vmatprep.subr.mxu0 0.0
    %2372 = vmatpush1.msra.mxu0 0.0
    %2373 = vmatprep.subr.mxu0 0.0
    %2374 = vmatpush1.msra.mxu0 0.0
    %2375 = vmatprep.subr.mxu0 0.0
    %2376 = vmatpush1.msra.mxu0 0.0
    %2377 = vmatprep.subr.mxu0 0.0
    %2378 = vmatpush1.msra.mxu0 0.0
    %2379 = vmatprep.subr.mxu0 0.0
    %2380 = vmatpush1.msra.mxu0 0.0
    %2381 = vmatprep.subr.mxu0 0.0
    %2382 = vmatpush1.msra.mxu0 0.0
    %2383 = vmatprep.subr.mxu0 0.0
    %2384 = vmatpush1.msra.mxu0 0.0
    %2385 = vmatprep.subr.mxu0 0.0
    %2386 = vmatpush1.msra.mxu0 0.0
    %2387 = vmatprep.subr.mxu0 0.0
    %2388 = vmatpush1.msra.mxu0 0.0
    %2389 = vmatprep.subr.mxu0 0.0
    %2390 = vmatpush1.msra.mxu0 0.0
    %2391 = vmatprep.subr.mxu0 0.0
    %2392 = vmatpush1.msra.mxu0 0.0
    %2393 = vmatprep.subr.mxu0 0.0
    %2394 = vmatpush1.msra.mxu0 0.0
    %2395 = vmatprep.mubr.f32.mxu0 0.0
    %2396 = vmatmul.mubr.f32.gmra.mrb[0].mxu0 %v2018
    %v2397 = vpop.f32.mrb[0].mxu0
    %v2398 = vadd.f32 0.0, %v2397
    %v2399 = vpop.f32.mrb[0].mxu0
    %v2400 = vadd.f32 0.0, %v2399
    %2401 = vdwg.mxu0
    %2402 = vmatprep.subr.mxu0 %v1573
    %2403 = vmatpush1.msra.mxu0 %v1572
    %2404 = vmatprep.subr.mxu0 %v1615
    %2405 = vmatpush1.msra.mxu0 %v1614
    %2406 = vmatprep.subr.mxu0 %v1643
    %2407 = vmatpush1.msra.mxu0 %v1642
    %2408 = vmatprep.subr.mxu0 %v1669
    %2409 = vmatpush1.msra.mxu0 %v1668
    %2410 = vmatprep.subr.mxu0 %v1708
    %2411 = vmatpush1.msra.mxu0 %v1707
    %2412 = vmatprep.subr.mxu0 %v1734
    %2413 = vmatpush1.msra.mxu0 %v1733
    %2414 = vmatprep.subr.mxu0 %v1949
    %2415 = vmatpush1.msra.mxu0 %v1948
    %2416 = vmatprep.subr.mxu0 %v1988
    %2417 = vmatpush1.msra.mxu0 %v1987
    %2418 = vmatprep.subr.mxu0 %v2014
    %2419 = vmatpush1.msra.mxu0 %v2013
    %2420 = vmatprep.subr.mxu0 %v2043
    %2421 = vmatpush1.msra.mxu0 %v2040
    %2422 = vmatprep.subr.mxu0 0.0
    %2423 = vmatpush1.msra.mxu0 0.0
    %2424 = vmatprep.subr.mxu0 0.0
    %2425 = vmatpush1.msra.mxu0 0.0
    %2426 = vmatprep.subr.mxu0 0.0
    %2427 = vmatpush1.msra.mxu0 0.0
    %2428 = vmatprep.subr.mxu0 0.0
    %2429 = vmatpush1.msra.mxu0 0.0
    %2430 = vmatprep.subr.mxu0 0.0
    %2431 = vmatpush1.msra.mxu0 0.0
    %2432 = vmatprep.subr.mxu0 0.0
    %2433 = vmatpush1.msra.mxu0 0.0
    %2434 = vmatprep.subr.mxu0 0.0
    %2435 = vmatpush1.msra.mxu0 0.0
    %2436 = vmatprep.subr.mxu0 0.0
    %2437 = vmatpush1.msra.mxu0 0.0
    %2438 = vmatprep.subr.mxu0 0.0
    %2439 = vmatpush1.msra.mxu0 0.0
    %2440 = vmatprep.subr.mxu0 0.0
    %2441 = vmatpush1.msra.mxu0 0.0
    %2442 = vmatprep.subr.mxu0 0.0
    %2443 = vmatpush1.msra.mxu0 0.0
    %2444 = vmatprep.subr.mxu0 0.0
    %2445 = vmatpush1.msra.mxu0 0.0
    %2446 = vmatprep.subr.mxu0 0.0
    %2447 = vmatpush1.msra.mxu0 0.0
    %2448 = vmatprep.subr.mxu0 0.0
    %2449 = vmatpush1.msra.mxu0 0.0
    %2450 = vmatprep.subr.mxu0 0.0
    %2451 = vmatpush1.msra.mxu0 0.0
    %2452 = vmatprep.subr.mxu0 0.0
    %2453 = vmatpush1.msra.mxu0 0.0
    %2454 = vmatprep.subr.mxu0 0.0
    %2455 = vmatpush1.msra.mxu0 0.0
    %2456 = vmatprep.subr.mxu0 0.0
    %2457 = vmatpush1.msra.mxu0 0.0
    %2458 = vmatprep.subr.mxu0 0.0
    %2459 = vmatpush1.msra.mxu0 0.0
    %2460 = vmatprep.subr.mxu0 0.0
    %2461 = vmatpush1.msra.mxu0 0.0
    %2462 = vmatprep.subr.mxu0 0.0
    %2463 = vmatpush1.msra.mxu0 0.0
    %2464 = vmatprep.subr.mxu0 0.0
    %2465 = vmatpush1.msra.mxu0 0.0
    %2466 = vmatprep.mubr.f32.mxu0 0.0
    %2467 = vmatmul.mubr.f32.gmra.mrb[0].mxu0 %v2018
    %v2468 = vpop.f32.mrb[0].mxu0
    %v2469 = vadd.f32 0.0, %v2468
    %v2470 = vpop.f32.mrb[0].mxu0
    %v2471 = vadd.f32 0.0, %v2470
    %2472 = vdwg.mxu0
    %2473 = vmatprep.subr.mxu0 0.0
    %2474 = vmatpush1.msra.mxu0 %v1574
    %2475 = vmatprep.subr.mxu0 0.0
    %2476 = vmatpush1.msra.mxu0 %v1616
    %2477 = vmatprep.subr.mxu0 0.0
    %2478 = vmatpush1.msra.mxu0 %v1644
    %2479 = vmatprep.subr.mxu0 0.0
    %2480 = vmatpush1.msra.mxu0 %v1670
    %2481 = vmatprep.subr.mxu0 0.0
    %2482 = vmatpush1.msra.mxu0 %v1709
    %2483 = vmatprep.subr.mxu0 0.0
    %2484 = vmatpush1.msra.mxu0 %v1735
    %2485 = vmatprep.subr.mxu0 0.0
    %2486 = vmatpush1.msra.mxu0 %v1950
    %2487 = vmatprep.subr.mxu0 0.0
    %2488 = vmatpush1.msra.mxu0 %v1989
    %2489 = vmatprep.subr.mxu0 0.0
    %2490 = vmatpush1.msra.mxu0 %v2015
    %2491 = vmatprep.subr.mxu0 0.0
    %2492 = vmatpush1.msra.mxu0 %v2045
    %2493 = vmatprep.subr.mxu0 0.0
    %2494 = vmatpush1.msra.mxu0 0.0
    %2495 = vmatprep.subr.mxu0 0.0
    %2496 = vmatpush1.msra.mxu0 0.0
    %2497 = vmatprep.subr.mxu0 0.0
    %2498 = vmatpush1.msra.mxu0 0.0
    %2499 = vmatprep.subr.mxu0 0.0
    %2500 = vmatpush1.msra.mxu0 0.0
    %2501 = vmatprep.subr.mxu0 0.0
    %2502 = vmatpush1.msra.mxu0 0.0
    %2503 = vmatprep.subr.mxu0 0.0
    %2504 = vmatpush1.msra.mxu0 0.0
    %2505 = vmatprep.subr.mxu0 0.0
    %2506 = vmatpush1.msra.mxu0 0.0
    %2507 = vmatprep.subr.mxu0 0.0
    %2508 = vmatpush1.msra.mxu0 0.0
    %2509 = vmatprep.subr.mxu0 0.0
    %2510 = vmatpush1.msra.mxu0 0.0
    %2511 = vmatprep.subr.mxu0 0.0
    %2512 = vmatpush1.msra.mxu0 0.0
    %2513 = vmatprep.subr.mxu0 0.0
    %2514 = vmatpush1.msra.mxu0 0.0
    %2515 = vmatprep.subr.mxu0 0.0
    %2516 = vmatpush1.msra.mxu0 0.0
    %2517 = vmatprep.subr.mxu0 0.0
    %2518 = vmatpush1.msra.mxu0 0.0
    %2519 = vmatprep.subr.mxu0 0.0
    %2520 = vmatpush1.msra.mxu0 0.0
    %2521 = vmatprep.subr.mxu0 0.0
    %2522 = vmatpush1.msra.mxu0 0.0
    %2523 = vmatprep.subr.mxu0 0.0
    %2524 = vmatpush1.msra.mxu0 0.0
    %2525 = vmatprep.subr.mxu0 0.0
    %2526 = vmatpush1.msra.mxu0 0.0
    %2527 = vmatprep.subr.mxu0 0.0
    %2528 = vmatpush1.msra.mxu0 0.0
    %2529 = vmatprep.subr.mxu0 0.0
    %2530 = vmatpush1.msra.mxu0 0.0
    %2531 = vmatprep.subr.mxu0 0.0
    %2532 = vmatpush1.msra.mxu0 0.0
    %2533 = vmatprep.subr.mxu0 0.0
    %2534 = vmatpush1.msra.mxu0 0.0
    %2535 = vmatprep.subr.mxu0 0.0
    %2536 = vmatpush1.msra.mxu0 0.0
    %2537 = vmatprep.mubr.f32.mxu0 0.0
    %2538 = vmatmul.mubr.f32.gmra.mrb[0].mxu0 %v2018
    %v2539 = vpop.f32.mrb[0].mxu0
    %v2540 = vadd.f32 0.0, %v2539
    %v2541 = vpop.f32.mrb[0].mxu0
    %2542 = vdwg.mxu0
    %2556 = vrot.lane.b32.xlu0 %v2114, 127
    %v2557 = vpop.permute.xlu0 %2556
    %2558 = vrot.lane.b32.xlu0 %v2116, 127
    %v2559 = vpop.permute.xlu0 %2558
    %2560 = vrot.lane.b32.xlu0 %v2185, 127
    %v2561 = vpop.permute.xlu0 %2560
    %2562 = vrot.lane.b32.xlu0 %v2187, 127
    %v2563 = vpop.permute.xlu0 %2562
    %2564 = vrot.lane.b32.xlu0 %v2256, 127
    %v2565 = vpop.permute.xlu0 %2564
    %2566 = vrot.lane.b32.xlu0 %v2258, 127
    %v2567 = vpop.permute.xlu0 %2566
    %2568 = vrot.lane.b32.xlu0 %v2327, 127
    %v2569 = vpop.permute.xlu0 %2568
    %2570 = vrot.lane.b32.xlu0 %v2329, 127
    %v2571 = vpop.permute.xlu0 %2570
    %2572 = vrot.lane.b32.xlu0 %v2398, 127
    %v2573 = vpop.permute.xlu0 %2572
    %2574 = vrot.lane.b32.xlu0 %v2400, 127
    %v2575 = vpop.permute.xlu0 %2574
    %2576 = vrot.lane.b32.xlu0 %v2469, 127
    %v2577 = vpop.permute.xlu0 %2576
    %2578 = vrot.lane.b32.xlu0 %v2471, 127
    %v2579 = vpop.permute.xlu0 %2578
    %2580 = vrot.lane.b32.xlu0 %v2540, 127
    %v2581 = vpop.permute.xlu0 %2580
    %v2582 = vsel %vm102, %v2557, %v2559
    %v2583 = vsel %vm102, %v2559, %v2561
    %v2584 = vsel %vm102, %v2561, %v2563
    %v2585 = vsel %vm102, %v2563, %v2565
    %v2586 = vsel %vm102, %v2565, %v2567
    %v2587 = vsel %vm102, %v2567, %v2569
    %v2588 = vsel %vm102, %v2569, %v2571
    %v2589 = vsel %vm102, %v2571, %v2573
    %v2590 = vsel %vm102, %v2573, %v2575
    %v2591 = vsel %vm102, %v2575, %v2577
    %v2592 = vsel %vm102, %v2577, %v2579
    %v2593 = vsel %vm102, %v2579, %v2581
    %2607 = vrot.lane.b32.xlu0 %v2114, 31
    %v2608 = vpop.permute.xlu0 %2607
    %v2610 = vsel %vm119, %v2581, %v2608
    %v2611 = vmax.f32 %v2114, %v2582
    %v2612 = vmax.f32 %v2116, %v2583
    %v2613 = vmax.f32 %v2185, %v2584
    %v2614 = vmax.f32 %v2187, %v2585
    %v2615 = vmax.f32 %v2256, %v2586
    %v2616 = vmax.f32 %v2258, %v2587
    %v2617 = vmax.f32 %v2327, %v2588
    %v2618 = vmax.f32 %v2329, %v2589
    %v2619 = vmax.f32 %v2398, %v2590
    %v2620 = vmax.f32 %v2400, %v2591
    %v2621 = vmax.f32 %v2469, %v2592
    %v2622 = vmax.f32 %v2471, %v2593
    %v2623 = vmax.f32 %v2540, %v2610
    %2624 = vrot.lane.b32.xlu0 %v2114, 100
    %v2625 = vpop.permute.xlu0 %2624
    %2626 = vrot.lane.b32.xlu0 %v2116, 100
    %v2627 = vpop.permute.xlu0 %2626
    %2628 = vrot.lane.b32.xlu0 %v2185, 100
    %v2629 = vpop.permute.xlu0 %2628
    %2630 = vrot.lane.b32.xlu0 %v2187, 100
    %v2631 = vpop.permute.xlu0 %2630
    %2632 = vrot.lane.b32.xlu0 %v2256, 100
    %v2633 = vpop.permute.xlu0 %2632
    %2634 = vrot.lane.b32.xlu0 %v2258, 100
    %v2635 = vpop.permute.xlu0 %2634
    %2636 = vrot.lane.b32.xlu0 %v2327, 100
    %v2637 = vpop.permute.xlu0 %2636
    %2638 = vrot.lane.b32.xlu0 %v2329, 100
    %v2639 = vpop.permute.xlu0 %2638
    %2640 = vrot.lane.b32.xlu0 %v2398, 100
    %v2641 = vpop.permute.xlu0 %2640
    %2642 = vrot.lane.b32.xlu0 %v2400, 100
    %v2643 = vpop.permute.xlu0 %2642
    %2644 = vrot.lane.b32.xlu0 %v2469, 100
    %v2645 = vpop.permute.xlu0 %2644
    %2646 = vrot.lane.b32.xlu0 %v2471, 100
    %v2647 = vpop.permute.xlu0 %2646
    %2648 = vrot.lane.b32.xlu0 %v2540, 100
    %v2649 = vpop.permute.xlu0 %2648
    %v2650 = vsel %vm282, %v2625, %v2627
    %v2651 = vsel %vm282, %v2627, %v2629
    %v2652 = vsel %vm282, %v2629, %v2631
    %v2653 = vsel %vm282, %v2631, %v2633
    %v2654 = vsel %vm282, %v2633, %v2635
    %v2655 = vsel %vm282, %v2635, %v2637
    %v2656 = vsel %vm282, %v2637, %v2639
    %v2657 = vsel %vm282, %v2639, %v2641
    %v2658 = vsel %vm282, %v2641, %v2643
    %v2659 = vsel %vm282, %v2643, %v2645
    %v2660 = vsel %vm282, %v2645, %v2647
    %v2661 = vsel %vm282, %v2647, %v2649
    %2675 = vrot.lane.b32.xlu0 %v2114, 4
    %v2676 = vpop.permute.xlu0 %2675
    %v2678 = vsel %vm299, %v2649, %v2676
    %v2679 = vmax.f32 %v2611, %v2650
    %v2680 = vmax.f32 %v2612, %v2651
    %v2681 = vmax.f32 %v2613, %v2652
    %v2682 = vmax.f32 %v2614, %v2653
    %v2683 = vmax.f32 %v2615, %v2654
    %v2684 = vmax.f32 %v2616, %v2655
    %v2685 = vmax.f32 %v2617, %v2656
    %v2686 = vmax.f32 %v2618, %v2657
    %v2687 = vmax.f32 %v2619, %v2658
    %v2688 = vmax.f32 %v2620, %v2659
    %v2689 = vmax.f32 %v2621, %v2660
    %v2690 = vmax.f32 %v2622, %v2661
    %v2691 = vmax.f32 %v2623, %v2678
    %2692 = vrot.lane.b32.xlu0 %v2114, 99
    %v2693 = vpop.permute.xlu0 %2692
    %2694 = vrot.lane.b32.xlu0 %v2116, 99
    %v2695 = vpop.permute.xlu0 %2694
    %2696 = vrot.lane.b32.xlu0 %v2185, 99
    %v2697 = vpop.permute.xlu0 %2696
    %2698 = vrot.lane.b32.xlu0 %v2187, 99
    %v2699 = vpop.permute.xlu0 %2698
    %2700 = vrot.lane.b32.xlu0 %v2256, 99
    %v2701 = vpop.permute.xlu0 %2700
    %2702 = vrot.lane.b32.xlu0 %v2258, 99
    %v2703 = vpop.permute.xlu0 %2702
    %2704 = vrot.lane.b32.xlu0 %v2327, 99
    %v2705 = vpop.permute.xlu0 %2704
    %2706 = vrot.lane.b32.xlu0 %v2329, 99
    %v2707 = vpop.permute.xlu0 %2706
    %2708 = vrot.lane.b32.xlu0 %v2398, 99
    %v2709 = vpop.permute.xlu0 %2708
    %2710 = vrot.lane.b32.xlu0 %v2400, 99
    %v2711 = vpop.permute.xlu0 %2710
    %2712 = vrot.lane.b32.xlu0 %v2469, 99
    %v2713 = vpop.permute.xlu0 %2712
    %2714 = vrot.lane.b32.xlu0 %v2471, 99
    %v2715 = vpop.permute.xlu0 %2714
    %2716 = vrot.lane.b32.xlu0 %v2540, 99
    %v2717 = vpop.permute.xlu0 %2716
    %v2718 = vsel %vm327, %v2693, %v2695
    %v2719 = vsel %vm327, %v2695, %v2697
    %v2720 = vsel %vm327, %v2697, %v2699
    %v2721 = vsel %vm327, %v2699, %v2701
    %v2722 = vsel %vm327, %v2701, %v2703
    %v2723 = vsel %vm327, %v2703, %v2705
    %v2724 = vsel %vm327, %v2705, %v2707
    %v2725 = vsel %vm327, %v2707, %v2709
    %v2726 = vsel %vm327, %v2709, %v2711
    %v2727 = vsel %vm327, %v2711, %v2713
    %v2728 = vsel %vm327, %v2713, %v2715
    %v2729 = vsel %vm327, %v2715, %v2717
    %2743 = vrot.lane.b32.xlu0 %v2114, 3
    %v2744 = vpop.permute.xlu0 %2743
    %v2746 = vsel %vm344, %v2717, %v2744
    %v2747 = vmax.f32 %v2679, %v2718
    %v2748 = vmax.f32 %v2680, %v2719
    %v2749 = vmax.f32 %v2681, %v2720
    %v2750 = vmax.f32 %v2682, %v2721
    %v2751 = vmax.f32 %v2683, %v2722
    %v2752 = vmax.f32 %v2684, %v2723
    %v2753 = vmax.f32 %v2685, %v2724
    %v2754 = vmax.f32 %v2686, %v2725
    %v2755 = vmax.f32 %v2687, %v2726
    %v2756 = vmax.f32 %v2688, %v2727
    %v2757 = vmax.f32 %v2689, %v2728
    %v2758 = vmax.f32 %v2690, %v2729
    %v2759 = vmax.f32 %v2691, %v2746
    %v2760 = vld [vmem:[%s2] sm:$0x3f]
    %2762 = vset.pattern.permute.xlu0 0
    %2763 = vperm.xlu0 %2762, %v2760
    %v2764 = vpop.permute.xlu0 %2763
    %v2766 = vadd.f32 %v2747, %v2764
    %v2767 = vadd.f32 %v2748, %v2764
    %v2768 = vadd.f32 %v2749, %v2764
    %v2769 = vadd.f32 %v2750, %v2764
    %v2770 = vadd.f32 %v2751, %v2764
    %v2771 = vadd.f32 %v2752, %v2764
    %v2772 = vadd.f32 %v2753, %v2764
    %v2773 = vadd.f32 %v2754, %v2764
    %v2774 = vadd.f32 %v2755, %v2764
    %v2775 = vadd.f32 %v2756, %v2764
    %v2776 = vadd.f32 %v2757, %v2764
    %v2777 = vadd.f32 %v2758, %v2764
    %v2778 = vadd.f32 %v2759, %v2764
    %v2779 = vmax.f32 %v2766, 0.0
    %v2780 = vmax.f32 %v2767, 0.0
    %v2781 = vmax.f32 %v2768, 0.0
    %v2782 = vmax.f32 %v2769, 0.0
    %v2783 = vmax.f32 %v2770, 0.0
    %v2784 = vmax.f32 %v2771, 0.0
    %v2785 = vmax.f32 %v2772, 0.0
    %v2786 = vmax.f32 %v2773, 0.0
    %v2787 = vmax.f32 %v2774, 0.0
    %v2788 = vmax.f32 %v2775, 0.0
    %v2789 = vmax.f32 %v2776, 0.0
    %v2790 = vmax.f32 %v2777, 0.0
    %v2791 = vmax.f32 %v2778, 0.0
    %2805 = vrot.lane.b32.xlu0 %v2779, 126
    %v2806 = vpop.permute.xlu0 %2805
    %2807 = vrot.lane.b32.xlu0 %v2780, 126
    %v2808 = vpop.permute.xlu0 %2807
    %2809 = vrot.lane.b32.xlu0 %v2781, 126
    %v2810 = vpop.permute.xlu0 %2809
    %2811 = vrot.lane.b32.xlu0 %v2782, 126
    %v2812 = vpop.permute.xlu0 %2811
    %2813 = vrot.lane.b32.xlu0 %v2783, 126
    %v2814 = vpop.permute.xlu0 %2813
    %2815 = vrot.lane.b32.xlu0 %v2784, 126
    %v2816 = vpop.permute.xlu0 %2815
    %2817 = vrot.lane.b32.xlu0 %v2785, 126
    %v2818 = vpop.permute.xlu0 %2817
    %2819 = vrot.lane.b32.xlu0 %v2786, 126
    %v2820 = vpop.permute.xlu0 %2819
    %2821 = vrot.lane.b32.xlu0 %v2787, 126
    %v2822 = vpop.permute.xlu0 %2821
    %2823 = vrot.lane.b32.xlu0 %v2788, 126
    %v2824 = vpop.permute.xlu0 %2823
    %2825 = vrot.lane.b32.xlu0 %v2789, 126
    %v2826 = vpop.permute.xlu0 %2825
    %2827 = vrot.lane.b32.xlu0 %v2790, 126
    %v2828 = vpop.permute.xlu0 %2827
    %2829 = vrot.lane.b32.xlu0 %v2791, 126
    %v2830 = vpop.permute.xlu0 %2829
    %v2831 = vsel %vm147, %v2806, %v2808
    %v2832 = vsel %vm147, %v2808, %v2810
    %v2833 = vsel %vm147, %v2810, %v2812
    %v2834 = vsel %vm147, %v2812, %v2814
    %v2835 = vsel %vm147, %v2814, %v2816
    %v2836 = vsel %vm147, %v2816, %v2818
    %v2837 = vsel %vm147, %v2818, %v2820
    %v2838 = vsel %vm147, %v2820, %v2822
    %v2839 = vsel %vm147, %v2822, %v2824
    %v2840 = vsel %vm147, %v2824, %v2826
    %v2841 = vsel %vm147, %v2826, %v2828
    %v2842 = vsel %vm147, %v2828, %v2830
    %2844 = vrot.lane.b32.xlu0 %v2779, 30
    %v2845 = vpop.permute.xlu0 %2844
    %v2847 = vsel %vm164, %v2830, %v2845
    %2848 = vrot.lane.b32.xlu0 %v2779, 124
    %v2849 = vpop.permute.xlu0 %2848
    %2850 = vrot.lane.b32.xlu0 %v2780, 124
    %v2851 = vpop.permute.xlu0 %2850
    %2852 = vrot.lane.b32.xlu0 %v2781, 124
    %v2853 = vpop.permute.xlu0 %2852
    %2854 = vrot.lane.b32.xlu0 %v2782, 124
    %v2855 = vpop.permute.xlu0 %2854
    %2856 = vrot.lane.b32.xlu0 %v2783, 124
    %v2857 = vpop.permute.xlu0 %2856
    %2858 = vrot.lane.b32.xlu0 %v2784, 124
    %v2859 = vpop.permute.xlu0 %2858
    %2860 = vrot.lane.b32.xlu0 %v2785, 124
    %v2861 = vpop.permute.xlu0 %2860
    %2862 = vrot.lane.b32.xlu0 %v2786, 124
    %v2863 = vpop.permute.xlu0 %2862
    %2864 = vrot.lane.b32.xlu0 %v2787, 124
    %v2865 = vpop.permute.xlu0 %2864
    %2866 = vrot.lane.b32.xlu0 %v2788, 124
    %v2867 = vpop.permute.xlu0 %2866
    %2868 = vrot.lane.b32.xlu0 %v2789, 124
    %v2869 = vpop.permute.xlu0 %2868
    %2870 = vrot.lane.b32.xlu0 %v2790, 124
    %v2871 = vpop.permute.xlu0 %2870
    %2872 = vrot.lane.b32.xlu0 %v2791, 124
    %v2873 = vpop.permute.xlu0 %2872
    %v2874 = vsel %vm237, %v2849, %v2851
    %v2875 = vsel %vm237, %v2851, %v2853
    %v2876 = vsel %vm237, %v2853, %v2855
    %v2877 = vsel %vm237, %v2855, %v2857
    %v2878 = vsel %vm237, %v2857, %v2859
    %v2879 = vsel %vm237, %v2859, %v2861
    %v2880 = vsel %vm237, %v2861, %v2863
    %v2881 = vsel %vm237, %v2863, %v2865
    %v2882 = vsel %vm237, %v2865, %v2867
    %v2883 = vsel %vm237, %v2867, %v2869
    %v2884 = vsel %vm237, %v2869, %v2871
    %v2885 = vsel %vm237, %v2871, %v2873
    %2887 = vrot.lane.b32.xlu0 %v2779, 28
    %v2888 = vpop.permute.xlu0 %2887
    %v2890 = vsel %vm254, %v2873, %v2888
    %2891 = vrot.lane.b32.xlu0 %v2779, 122
    %v2892 = vpop.permute.xlu0 %2891
    %2893 = vrot.lane.b32.xlu0 %v2780, 122
    %v2894 = vpop.permute.xlu0 %2893
    %2895 = vrot.lane.b32.xlu0 %v2781, 122
    %v2896 = vpop.permute.xlu0 %2895
    %2897 = vrot.lane.b32.xlu0 %v2782, 122
    %v2898 = vpop.permute.xlu0 %2897
    %2899 = vrot.lane.b32.xlu0 %v2783, 122
    %v2900 = vpop.permute.xlu0 %2899
    %2901 = vrot.lane.b32.xlu0 %v2784, 122
    %v2902 = vpop.permute.xlu0 %2901
    %2903 = vrot.lane.b32.xlu0 %v2785, 122
    %v2904 = vpop.permute.xlu0 %2903
    %2905 = vrot.lane.b32.xlu0 %v2786, 122
    %v2906 = vpop.permute.xlu0 %2905
    %2907 = vrot.lane.b32.xlu0 %v2787, 122
    %v2908 = vpop.permute.xlu0 %2907
    %2909 = vrot.lane.b32.xlu0 %v2788, 122
    %v2910 = vpop.permute.xlu0 %2909
    %2911 = vrot.lane.b32.xlu0 %v2789, 122
    %v2912 = vpop.permute.xlu0 %2911
    %2913 = vrot.lane.b32.xlu0 %v2790, 122
    %v2914 = vpop.permute.xlu0 %2913
    %2915 = vrot.lane.b32.xlu0 %v2791, 122
    %v2916 = vpop.permute.xlu0 %2915
    %vm2917 = vcmask 998400
    %v2918 = vsel %vm2917, %v2892, %v2894
    %v2919 = vsel %vm2917, %v2894, %v2896
    %v2920 = vsel %vm2917, %v2896, %v2898
    %v2921 = vsel %vm2917, %v2898, %v2900
    %v2922 = vsel %vm2917, %v2900, %v2902
    %v2923 = vsel %vm2917, %v2902, %v2904
    %v2924 = vsel %vm2917, %v2904, %v2906
    %v2925 = vsel %vm2917, %v2906, %v2908
    %v2926 = vsel %vm2917, %v2908, %v2910
    %v2927 = vsel %vm2917, %v2910, %v2912
    %v2928 = vsel %vm2917, %v2912, %v2914
    %v2929 = vsel %vm2917, %v2914, %v2916
    %2931 = vrot.lane.b32.xlu0 %v2779, 26
    %v2932 = vpop.permute.xlu0 %2931
    %vm2934 = vcmask 211968
    %v2935 = vsel %vm2934, %v2916, %v2932
    %2936 = vrot.lane.b32.xlu0 %v2779, 120
    %v2937 = vpop.permute.xlu0 %2936
    %2938 = vrot.lane.b32.xlu0 %v2780, 120
    %v2939 = vpop.permute.xlu0 %2938
    %2940 = vrot.lane.b32.xlu0 %v2781, 120
    %v2941 = vpop.permute.xlu0 %2940
    %2942 = vrot.lane.b32.xlu0 %v2782, 120
    %v2943 = vpop.permute.xlu0 %2942
    %2944 = vrot.lane.b32.xlu0 %v2783, 120
    %v2945 = vpop.permute.xlu0 %2944
    %2946 = vrot.lane.b32.xlu0 %v2784, 120
    %v2947 = vpop.permute.xlu0 %2946
    %2948 = vrot.lane.b32.xlu0 %v2785, 120
    %v2949 = vpop.permute.xlu0 %2948
    %2950 = vrot.lane.b32.xlu0 %v2786, 120
    %v2951 = vpop.permute.xlu0 %2950
    %2952 = vrot.lane.b32.xlu0 %v2787, 120
    %v2953 = vpop.permute.xlu0 %2952
    %2954 = vrot.lane.b32.xlu0 %v2788, 120
    %v2955 = vpop.permute.xlu0 %2954
    %2956 = vrot.lane.b32.xlu0 %v2789, 120
    %v2957 = vpop.permute.xlu0 %2956
    %2958 = vrot.lane.b32.xlu0 %v2790, 120
    %v2959 = vpop.permute.xlu0 %2958
    %2960 = vrot.lane.b32.xlu0 %v2791, 120
    %v2961 = vpop.permute.xlu0 %2960
    %vm2962 = vcmask 982016
    %v2963 = vsel %vm2962, %v2937, %v2939
    %v2964 = vsel %vm2962, %v2939, %v2941
    %v2965 = vsel %vm2962, %v2941, %v2943
    %v2966 = vsel %vm2962, %v2943, %v2945
    %v2967 = vsel %vm2962, %v2945, %v2947
    %v2968 = vsel %vm2962, %v2947, %v2949
    %v2969 = vsel %vm2962, %v2949, %v2951
    %v2970 = vsel %vm2962, %v2951, %v2953
    %v2971 = vsel %vm2962, %v2953, %v2955
    %v2972 = vsel %vm2962, %v2955, %v2957
    %v2973 = vsel %vm2962, %v2957, %v2959
    %v2974 = vsel %vm2962, %v2959, %v2961
    %2988 = vrot.lane.b32.xlu0 %v2779, 24
    %v2989 = vpop.permute.xlu0 %2988
    %vm2991 = vcmask 195584
    %v2992 = vsel %vm2991, %v2961, %v2989
    %2993 = vrot.lane.b32.xlu0 %v2779, 72
    %v2994 = vpop.permute.xlu0 %2993
    %2995 = vrot.lane.b32.xlu0 %v2780, 72
    %v2996 = vpop.permute.xlu0 %2995
    %2997 = vrot.lane.b32.xlu0 %v2781, 72
    %v2998 = vpop.permute.xlu0 %2997
    %2999 = vrot.lane.b32.xlu0 %v2782, 72
    %v3000 = vpop.permute.xlu0 %2999
    %3001 = vrot.lane.b32.xlu0 %v2783, 72
    %v3002 = vpop.permute.xlu0 %3001
    %3003 = vrot.lane.b32.xlu0 %v2784, 72
    %v3004 = vpop.permute.xlu0 %3003
    %3005 = vrot.lane.b32.xlu0 %v2785, 72
    %v3006 = vpop.permute.xlu0 %3005
    %3007 = vrot.lane.b32.xlu0 %v2786, 72
    %v3008 = vpop.permute.xlu0 %3007
    %3009 = vrot.lane.b32.xlu0 %v2787, 72
    %v3010 = vpop.permute.xlu0 %3009
    %3011 = vrot.lane.b32.xlu0 %v2788, 72
    %v3012 = vpop.permute.xlu0 %3011
    %3013 = vrot.lane.b32.xlu0 %v2789, 72
    %v3014 = vpop.permute.xlu0 %3013
    %3015 = vrot.lane.b32.xlu0 %v2790, 72
    %v3016 = vpop.permute.xlu0 %3015
    %3017 = vrot.lane.b32.xlu0 %v2791, 72
    %v3018 = vpop.permute.xlu0 %3017
    %v3019 = vsel %vm513, %v2994, %v2996
    %v3020 = vsel %vm513, %v2996, %v2998
    %v3021 = vsel %vm513, %v2998, %v3000
    %v3022 = vsel %vm513, %v3000, %v3002
    %v3023 = vsel %vm513, %v3002, %v3004
    %v3024 = vsel %vm513, %v3004, %v3006
    %v3025 = vsel %vm513, %v3006, %v3008
    %v3026 = vsel %vm513, %v3008, %v3010
    %v3027 = vsel %vm513, %v3010, %v3012
    %v3028 = vsel %vm513, %v3012, %v3014
    %v3029 = vsel %vm513, %v3014, %v3016
    %v3030 = vsel %vm513, %v3016, %v3018
    %3032 = vrot.lane.b32.xlu0 %v2779, 104
    %v3033 = vpop.permute.xlu0 %3032
    %v3035 = vsel %vm530, %v3030, %v3033
    %3036 = vrot.lane.b32.xlu0 %v2779, 70
    %v3037 = vpop.permute.xlu0 %3036
    %3038 = vrot.lane.b32.xlu0 %v2780, 70
    %v3039 = vpop.permute.xlu0 %3038
    %3040 = vrot.lane.b32.xlu0 %v2781, 70
    %v3041 = vpop.permute.xlu0 %3040
    %3042 = vrot.lane.b32.xlu0 %v2782, 70
    %v3043 = vpop.permute.xlu0 %3042
    %3044 = vrot.lane.b32.xlu0 %v2783, 70
    %v3045 = vpop.permute.xlu0 %3044
    %3046 = vrot.lane.b32.xlu0 %v2784, 70
    %v3047 = vpop.permute.xlu0 %3046
    %3048 = vrot.lane.b32.xlu0 %v2785, 70
    %v3049 = vpop.permute.xlu0 %3048
    %3050 = vrot.lane.b32.xlu0 %v2786, 70
    %v3051 = vpop.permute.xlu0 %3050
    %3052 = vrot.lane.b32.xlu0 %v2787, 70
    %v3053 = vpop.permute.xlu0 %3052
    %3054 = vrot.lane.b32.xlu0 %v2788, 70
    %v3055 = vpop.permute.xlu0 %3054
    %3056 = vrot.lane.b32.xlu0 %v2789, 70
    %v3057 = vpop.permute.xlu0 %3056
    %3058 = vrot.lane.b32.xlu0 %v2790, 70
    %v3059 = vpop.permute.xlu0 %3058
    %3060 = vrot.lane.b32.xlu0 %v2791, 70
    %v3061 = vpop.permute.xlu0 %3060
    %v3062 = vsel %vm603, %v3037, %v3039
    %v3063 = vsel %vm603, %v3039, %v3041
    %v3064 = vsel %vm603, %v3041, %v3043
    %v3065 = vsel %vm603, %v3043, %v3045
    %v3066 = vsel %vm603, %v3045, %v3047
    %v3067 = vsel %vm603, %v3047, %v3049
    %v3068 = vsel %vm603, %v3049, %v3051
    %v3069 = vsel %vm603, %v3051, %v3053
    %v3070 = vsel %vm603, %v3053, %v3055
    %v3071 = vsel %vm603, %v3055, %v3057
    %v3072 = vsel %vm603, %v3057, %v3059
    %v3073 = vsel %vm603, %v3059, %v3061
    %3075 = vrot.lane.b32.xlu0 %v2779, 102
    %v3076 = vpop.permute.xlu0 %3075
    %v3078 = vsel %vm620, %v3073, %v3076
    %3079 = vrot.lane.b32.xlu0 %v2779, 68
    %v3080 = vpop.permute.xlu0 %3079
    %3081 = vrot.lane.b32.xlu0 %v2780, 68
    %v3082 = vpop.permute.xlu0 %3081
    %3083 = vrot.lane.b32.xlu0 %v2781, 68
    %v3084 = vpop.permute.xlu0 %3083
    %3085 = vrot.lane.b32.xlu0 %v2782, 68
    %v3086 = vpop.permute.xlu0 %3085
    %3087 = vrot.lane.b32.xlu0 %v2783, 68
    %v3088 = vpop.permute.xlu0 %3087
    %3089 = vrot.lane.b32.xlu0 %v2784, 68
    %v3090 = vpop.permute.xlu0 %3089
    %3091 = vrot.lane.b32.xlu0 %v2785, 68
    %v3092 = vpop.permute.xlu0 %3091
    %3093 = vrot.lane.b32.xlu0 %v2786, 68
    %v3094 = vpop.permute.xlu0 %3093
    %3095 = vrot.lane.b32.xlu0 %v2787, 68
    %v3096 = vpop.permute.xlu0 %3095
    %3097 = vrot.lane.b32.xlu0 %v2788, 68
    %v3098 = vpop.permute.xlu0 %3097
    %3099 = vrot.lane.b32.xlu0 %v2789, 68
    %v3100 = vpop.permute.xlu0 %3099
    %3101 = vrot.lane.b32.xlu0 %v2790, 68
    %v3102 = vpop.permute.xlu0 %3101
    %3103 = vrot.lane.b32.xlu0 %v2791, 68
    %v3104 = vpop.permute.xlu0 %3103
    %v3105 = vsel %vm693, %v3080, %v3082
    %v3106 = vsel %vm693, %v3082, %v3084
    %v3107 = vsel %vm693, %v3084, %v3086
    %v3108 = vsel %vm693, %v3086, %v3088
    %v3109 = vsel %vm693, %v3088, %v3090
    %v3110 = vsel %vm693, %v3090, %v3092
    %v3111 = vsel %vm693, %v3092, %v3094
    %v3112 = vsel %vm693, %v3094, %v3096
    %v3113 = vsel %vm693, %v3096, %v3098
    %v3114 = vsel %vm693, %v3098, %v3100
    %v3115 = vsel %vm693, %v3100, %v3102
    %v3116 = vsel %vm693, %v3102, %v3104
    %3118 = vrot.lane.b32.xlu0 %v2779, 100
    %v3119 = vpop.permute.xlu0 %3118
    %v3121 = vsel %vm282, %v3116, %v3119
    %3122 = vrot.lane.b32.xlu0 %v2779, 66
    %v3123 = vpop.permute.xlu0 %3122
    %3124 = vrot.lane.b32.xlu0 %v2780, 66
    %v3125 = vpop.permute.xlu0 %3124
    %3126 = vrot.lane.b32.xlu0 %v2781, 66
    %v3127 = vpop.permute.xlu0 %3126
    %3128 = vrot.lane.b32.xlu0 %v2782, 66
    %v3129 = vpop.permute.xlu0 %3128
    %3130 = vrot.lane.b32.xlu0 %v2783, 66
    %v3131 = vpop.permute.xlu0 %3130
    %3132 = vrot.lane.b32.xlu0 %v2784, 66
    %v3133 = vpop.permute.xlu0 %3132
    %3134 = vrot.lane.b32.xlu0 %v2785, 66
    %v3135 = vpop.permute.xlu0 %3134
    %3136 = vrot.lane.b32.xlu0 %v2786, 66
    %v3137 = vpop.permute.xlu0 %3136
    %3138 = vrot.lane.b32.xlu0 %v2787, 66
    %v3139 = vpop.permute.xlu0 %3138
    %3140 = vrot.lane.b32.xlu0 %v2788, 66
    %v3141 = vpop.permute.xlu0 %3140
    %3142 = vrot.lane.b32.xlu0 %v2789, 66
    %v3143 = vpop.permute.xlu0 %3142
    %3144 = vrot.lane.b32.xlu0 %v2790, 66
    %v3145 = vpop.permute.xlu0 %3144
    %3146 = vrot.lane.b32.xlu0 %v2791, 66
    %v3147 = vpop.permute.xlu0 %3146
    %vm3148 = vcmask 539648
    %v3149 = vsel %vm3148, %v3123, %v3125
    %v3150 = vsel %vm3148, %v3125, %v3127
    %v3151 = vsel %vm3148, %v3127, %v3129
    %v3152 = vsel %vm3148, %v3129, %v3131
    %v3153 = vsel %vm3148, %v3131, %v3133
    %v3154 = vsel %vm3148, %v3133, %v3135
    %v3155 = vsel %vm3148, %v3135, %v3137
    %v3156 = vsel %vm3148, %v3137, %v3139
    %v3157 = vsel %vm3148, %v3139, %v3141
    %v3158 = vsel %vm3148, %v3141, %v3143
    %v3159 = vsel %vm3148, %v3143, %v3145
    %v3160 = vsel %vm3148, %v3145, %v3147
    %3173 = vrot.lane.b32.xlu0 %v2779, 98
    %v3174 = vpop.permute.xlu0 %3173
    %v3176 = vsel %vm372, %v3160, %v3174
    %3177 = vrot.lane.b32.xlu0 %v2779, 64
    %v3178 = vpop.permute.xlu0 %3177
    %3179 = vrot.lane.b32.xlu0 %v2780, 64
    %v3180 = vpop.permute.xlu0 %3179
    %3181 = vrot.lane.b32.xlu0 %v2781, 64
    %v3182 = vpop.permute.xlu0 %3181
    %3183 = vrot.lane.b32.xlu0 %v2782, 64
    %v3184 = vpop.permute.xlu0 %3183
    %3185 = vrot.lane.b32.xlu0 %v2783, 64
    %v3186 = vpop.permute.xlu0 %3185
    %3187 = vrot.lane.b32.xlu0 %v2784, 64
    %v3188 = vpop.permute.xlu0 %3187
    %3189 = vrot.lane.b32.xlu0 %v2785, 64
    %v3190 = vpop.permute.xlu0 %3189
    %3191 = vrot.lane.b32.xlu0 %v2786, 64
    %v3192 = vpop.permute.xlu0 %3191
    %3193 = vrot.lane.b32.xlu0 %v2787, 64
    %v3194 = vpop.permute.xlu0 %3193
    %3195 = vrot.lane.b32.xlu0 %v2788, 64
    %v3196 = vpop.permute.xlu0 %3195
    %3197 = vrot.lane.b32.xlu0 %v2789, 64
    %v3198 = vpop.permute.xlu0 %3197
    %3199 = vrot.lane.b32.xlu0 %v2790, 64
    %v3200 = vpop.permute.xlu0 %3199
    %3201 = vrot.lane.b32.xlu0 %v2791, 64
    %v3202 = vpop.permute.xlu0 %3201
    %vm3203 = vcmask 523264
    %v3204 = vsel %vm3203, %v3178, %v3180
    %v3205 = vsel %vm3203, %v3180, %v3182
    %v3206 = vsel %vm3203, %v3182, %v3184
    %v3207 = vsel %vm3203, %v3184, %v3186
    %v3208 = vsel %vm3203, %v3186, %v3188
    %v3209 = vsel %vm3203, %v3188, %v3190
    %v3210 = vsel %vm3203, %v3190, %v3192
    %v3211 = vsel %vm3203, %v3192, %v3194
    %v3212 = vsel %vm3203, %v3194, %v3196
    %v3213 = vsel %vm3203, %v3196, %v3198
    %v3214 = vsel %vm3203, %v3198, %v3200
    %v3215 = vsel %vm3203, %v3200, %v3202
    %3217 = vrot.lane.b32.xlu0 %v2779, 96
    %v3218 = vpop.permute.xlu0 %3217
    %v3220 = vsel %vm474, %v3215, %v3218
    %3221 = vrot.lane.b32.xlu0 %v2779, 16
    %v3222 = vpop.permute.xlu0 %3221
    %3223 = vrot.lane.b32.xlu0 %v2780, 16
    %v3224 = vpop.permute.xlu0 %3223
    %3225 = vrot.lane.b32.xlu0 %v2781, 16
    %v3226 = vpop.permute.xlu0 %3225
    %3227 = vrot.lane.b32.xlu0 %v2782, 16
    %v3228 = vpop.permute.xlu0 %3227
    %3229 = vrot.lane.b32.xlu0 %v2783, 16
    %v3230 = vpop.permute.xlu0 %3229
    %3231 = vrot.lane.b32.xlu0 %v2784, 16
    %v3232 = vpop.permute.xlu0 %3231
    %3233 = vrot.lane.b32.xlu0 %v2785, 16
    %v3234 = vpop.permute.xlu0 %3233
    %3235 = vrot.lane.b32.xlu0 %v2786, 16
    %v3236 = vpop.permute.xlu0 %3235
    %3237 = vrot.lane.b32.xlu0 %v2787, 16
    %v3238 = vpop.permute.xlu0 %3237
    %3239 = vrot.lane.b32.xlu0 %v2788, 16
    %v3240 = vpop.permute.xlu0 %3239
    %3241 = vrot.lane.b32.xlu0 %v2789, 16
    %v3242 = vpop.permute.xlu0 %3241
    %3243 = vrot.lane.b32.xlu0 %v2790, 16
    %v3244 = vpop.permute.xlu0 %3243
    %3245 = vrot.lane.b32.xlu0 %v2791, 16
    %v3246 = vpop.permute.xlu0 %3245
    %v3247 = vsel %vm968, %v3222, %v3224
    %v3248 = vsel %vm968, %v3224, %v3226
    %v3249 = vsel %vm968, %v3226, %v3228
    %v3250 = vsel %vm968, %v3228, %v3230
    %v3251 = vsel %vm968, %v3230, %v3232
    %v3252 = vsel %vm968, %v3232, %v3234
    %v3253 = vsel %vm968, %v3234, %v3236
    %v3254 = vsel %vm968, %v3236, %v3238
    %v3255 = vsel %vm968, %v3238, %v3240
    %v3256 = vsel %vm968, %v3240, %v3242
    %v3257 = vsel %vm968, %v3242, %v3244
    %v3258 = vsel %vm968, %v3244, %v3246
    %3260 = vrot.lane.b32.xlu0 %v2779, 48
    %v3261 = vpop.permute.xlu0 %3260
    %v3263 = vsel %vm985, %v3258, %v3261
    %3264 = vrot.lane.b32.xlu0 %v2779, 14
    %v3265 = vpop.permute.xlu0 %3264
    %3266 = vrot.lane.b32.xlu0 %v2780, 14
    %v3267 = vpop.permute.xlu0 %3266
    %3268 = vrot.lane.b32.xlu0 %v2781, 14
    %v3269 = vpop.permute.xlu0 %3268
    %3270 = vrot.lane.b32.xlu0 %v2782, 14
    %v3271 = vpop.permute.xlu0 %3270
    %3272 = vrot.lane.b32.xlu0 %v2783, 14
    %v3273 = vpop.permute.xlu0 %3272
    %3274 = vrot.lane.b32.xlu0 %v2784, 14
    %v3275 = vpop.permute.xlu0 %3274
    %3276 = vrot.lane.b32.xlu0 %v2785, 14
    %v3277 = vpop.permute.xlu0 %3276
    %3278 = vrot.lane.b32.xlu0 %v2786, 14
    %v3279 = vpop.permute.xlu0 %3278
    %3280 = vrot.lane.b32.xlu0 %v2787, 14
    %v3281 = vpop.permute.xlu0 %3280
    %3282 = vrot.lane.b32.xlu0 %v2788, 14
    %v3283 = vpop.permute.xlu0 %3282
    %3284 = vrot.lane.b32.xlu0 %v2789, 14
    %v3285 = vpop.permute.xlu0 %3284
    %3286 = vrot.lane.b32.xlu0 %v2790, 14
    %v3287 = vpop.permute.xlu0 %3286
    %3288 = vrot.lane.b32.xlu0 %v2791, 14
    %v3289 = vpop.permute.xlu0 %3288
    %v3290 = vsel %vm1058, %v3265, %v3267
    %v3291 = vsel %vm1058, %v3267, %v3269
    %v3292 = vsel %vm1058, %v3269, %v3271
    %v3293 = vsel %vm1058, %v3271, %v3273
    %v3294 = vsel %vm1058, %v3273, %v3275
    %v3295 = vsel %vm1058, %v3275, %v3277
    %v3296 = vsel %vm1058, %v3277, %v3279
    %v3297 = vsel %vm1058, %v3279, %v3281
    %v3298 = vsel %vm1058, %v3281, %v3283
    %v3299 = vsel %vm1058, %v3283, %v3285
    %v3300 = vsel %vm1058, %v3285, %v3287
    %v3301 = vsel %vm1058, %v3287, %v3289
    %3303 = vrot.lane.b32.xlu0 %v2779, 46
    %v3304 = vpop.permute.xlu0 %3303
    %v3306 = vsel %vm1075, %v3301, %v3304
    %3307 = vrot.lane.b32.xlu0 %v2779, 12
    %v3308 = vpop.permute.xlu0 %3307
    %3309 = vrot.lane.b32.xlu0 %v2780, 12
    %v3310 = vpop.permute.xlu0 %3309
    %3311 = vrot.lane.b32.xlu0 %v2781, 12
    %v3312 = vpop.permute.xlu0 %3311
    %3313 = vrot.lane.b32.xlu0 %v2782, 12
    %v3314 = vpop.permute.xlu0 %3313
    %3315 = vrot.lane.b32.xlu0 %v2783, 12
    %v3316 = vpop.permute.xlu0 %3315
    %3317 = vrot.lane.b32.xlu0 %v2784, 12
    %v3318 = vpop.permute.xlu0 %3317
    %3319 = vrot.lane.b32.xlu0 %v2785, 12
    %v3320 = vpop.permute.xlu0 %3319
    %3321 = vrot.lane.b32.xlu0 %v2786, 12
    %v3322 = vpop.permute.xlu0 %3321
    %3323 = vrot.lane.b32.xlu0 %v2787, 12
    %v3324 = vpop.permute.xlu0 %3323
    %3325 = vrot.lane.b32.xlu0 %v2788, 12
    %v3326 = vpop.permute.xlu0 %3325
    %3327 = vrot.lane.b32.xlu0 %v2789, 12
    %v3328 = vpop.permute.xlu0 %3327
    %3329 = vrot.lane.b32.xlu0 %v2790, 12
    %v3330 = vpop.permute.xlu0 %3329
    %3331 = vrot.lane.b32.xlu0 %v2791, 12
    %v3332 = vpop.permute.xlu0 %3331
    %v3333 = vsel %vm1148, %v3308, %v3310
    %v3334 = vsel %vm1148, %v3310, %v3312
    %v3335 = vsel %vm1148, %v3312, %v3314
    %v3336 = vsel %vm1148, %v3314, %v3316
    %v3337 = vsel %vm1148, %v3316, %v3318
    %v3338 = vsel %vm1148, %v3318, %v3320
    %v3339 = vsel %vm1148, %v3320, %v3322
    %v3340 = vsel %vm1148, %v3322, %v3324
    %v3341 = vsel %vm1148, %v3324, %v3326
    %v3342 = vsel %vm1148, %v3326, %v3328
    %v3343 = vsel %vm1148, %v3328, %v3330
    %v3344 = vsel %vm1148, %v3330, %v3332
    %3357 = vrot.lane.b32.xlu0 %v2779, 44
    %v3358 = vpop.permute.xlu0 %3357
    %v3360 = vsel %vm735, %v3344, %v3358
    %3361 = vrot.lane.b32.xlu0 %v2779, 10
    %v3362 = vpop.permute.xlu0 %3361
    %3363 = vrot.lane.b32.xlu0 %v2780, 10
    %v3364 = vpop.permute.xlu0 %3363
    %3365 = vrot.lane.b32.xlu0 %v2781, 10
    %v3366 = vpop.permute.xlu0 %3365
    %3367 = vrot.lane.b32.xlu0 %v2782, 10
    %v3368 = vpop.permute.xlu0 %3367
    %3369 = vrot.lane.b32.xlu0 %v2783, 10
    %v3370 = vpop.permute.xlu0 %3369
    %3371 = vrot.lane.b32.xlu0 %v2784, 10
    %v3372 = vpop.permute.xlu0 %3371
    %3373 = vrot.lane.b32.xlu0 %v2785, 10
    %v3374 = vpop.permute.xlu0 %3373
    %3375 = vrot.lane.b32.xlu0 %v2786, 10
    %v3376 = vpop.permute.xlu0 %3375
    %3377 = vrot.lane.b32.xlu0 %v2787, 10
    %v3378 = vpop.permute.xlu0 %3377
    %3379 = vrot.lane.b32.xlu0 %v2788, 10
    %v3380 = vpop.permute.xlu0 %3379
    %3381 = vrot.lane.b32.xlu0 %v2789, 10
    %v3382 = vpop.permute.xlu0 %3381
    %3383 = vrot.lane.b32.xlu0 %v2790, 10
    %v3384 = vpop.permute.xlu0 %3383
    %3385 = vrot.lane.b32.xlu0 %v2791, 10
    %v3386 = vpop.permute.xlu0 %3385
    %vm3387 = vcmask 80896
    %v3388 = vsel %vm3387, %v3362, %v3364
    %v3389 = vsel %vm3387, %v3364, %v3366
    %v3390 = vsel %vm3387, %v3366, %v3368
    %v3391 = vsel %vm3387, %v3368, %v3370
    %v3392 = vsel %vm3387, %v3370, %v3372
    %v3393 = vsel %vm3387, %v3372, %v3374
    %v3394 = vsel %vm3387, %v3374, %v3376
    %v3395 = vsel %vm3387, %v3376, %v3378
    %v3396 = vsel %vm3387, %v3378, %v3380
    %v3397 = vsel %vm3387, %v3380, %v3382
    %v3398 = vsel %vm3387, %v3382, %v3384
    %v3399 = vsel %vm3387, %v3384, %v3386
    %3401 = vrot.lane.b32.xlu0 %v2779, 42
    %v3402 = vpop.permute.xlu0 %3401
    %v3404 = vsel %vm836, %v3399, %v3402
    %3405 = vrot.lane.b32.xlu0 %v2779, 8
    %v3406 = vpop.permute.xlu0 %3405
    %3407 = vrot.lane.b32.xlu0 %v2780, 8
    %v3408 = vpop.permute.xlu0 %3407
    %3409 = vrot.lane.b32.xlu0 %v2781, 8
    %v3410 = vpop.permute.xlu0 %3409
    %3411 = vrot.lane.b32.xlu0 %v2782, 8
    %v3412 = vpop.permute.xlu0 %3411
    %3413 = vrot.lane.b32.xlu0 %v2783, 8
    %v3414 = vpop.permute.xlu0 %3413
    %3415 = vrot.lane.b32.xlu0 %v2784, 8
    %v3416 = vpop.permute.xlu0 %3415
    %3417 = vrot.lane.b32.xlu0 %v2785, 8
    %v3418 = vpop.permute.xlu0 %3417
    %3419 = vrot.lane.b32.xlu0 %v2786, 8
    %v3420 = vpop.permute.xlu0 %3419
    %3421 = vrot.lane.b32.xlu0 %v2787, 8
    %v3422 = vpop.permute.xlu0 %3421
    %3423 = vrot.lane.b32.xlu0 %v2788, 8
    %v3424 = vpop.permute.xlu0 %3423
    %3425 = vrot.lane.b32.xlu0 %v2789, 8
    %v3426 = vpop.permute.xlu0 %3425
    %3427 = vrot.lane.b32.xlu0 %v2790, 8
    %v3428 = vpop.permute.xlu0 %3427
    %3429 = vrot.lane.b32.xlu0 %v2791, 8
    %v3430 = vpop.permute.xlu0 %3429
    %vm3431 = vcmask 64512
    %v3432 = vsel %vm3431, %v3406, %v3408
    %v3433 = vsel %vm3431, %v3408, %v3410
    %v3434 = vsel %vm3431, %v3410, %v3412
    %v3435 = vsel %vm3431, %v3412, %v3414
    %v3436 = vsel %vm3431, %v3414, %v3416
    %v3437 = vsel %vm3431, %v3416, %v3418
    %v3438 = vsel %vm3431, %v3418, %v3420
    %v3439 = vsel %vm3431, %v3420, %v3422
    %v3440 = vsel %vm3431, %v3422, %v3424
    %v3441 = vsel %vm3431, %v3424, %v3426
    %v3442 = vsel %vm3431, %v3426, %v3428
    %v3443 = vsel %vm3431, %v3428, %v3430
    %3445 = vrot.lane.b32.xlu0 %v2779, 40
    %v3446 = vpop.permute.xlu0 %3445
    %v3448 = vsel %vm926, %v3443, %v3446
    %3449 = vrot.lane.b32.xlu0 %v2780, 88
    %v3450 = vpop.permute.xlu0 %3449
    %3451 = vrot.lane.b32.xlu0 %v2781, 88
    %v3452 = vpop.permute.xlu0 %3451
    %3453 = vrot.lane.b32.xlu0 %v2782, 88
    %v3454 = vpop.permute.xlu0 %3453
    %3455 = vrot.lane.b32.xlu0 %v2783, 88
    %v3456 = vpop.permute.xlu0 %3455
    %3457 = vrot.lane.b32.xlu0 %v2784, 88
    %v3458 = vpop.permute.xlu0 %3457
    %3459 = vrot.lane.b32.xlu0 %v2785, 88
    %v3460 = vpop.permute.xlu0 %3459
    %3461 = vrot.lane.b32.xlu0 %v2786, 88
    %v3462 = vpop.permute.xlu0 %3461
    %3463 = vrot.lane.b32.xlu0 %v2787, 88
    %v3464 = vpop.permute.xlu0 %3463
    %3465 = vrot.lane.b32.xlu0 %v2788, 88
    %v3466 = vpop.permute.xlu0 %3465
    %3467 = vrot.lane.b32.xlu0 %v2789, 88
    %v3468 = vpop.permute.xlu0 %3467
    %3469 = vrot.lane.b32.xlu0 %v2790, 88
    %v3470 = vpop.permute.xlu0 %3469
    %3471 = vrot.lane.b32.xlu0 %v2791, 88
    %v3472 = vpop.permute.xlu0 %3471
    %vm3473 = vcmask 719872
    %v3474 = vsel %vm3473, %v3450, %v3452
    %v3475 = vsel %vm3473, %v3452, %v3454
    %v3476 = vsel %vm3473, %v3454, %v3456
    %v3477 = vsel %vm3473, %v3456, %v3458
    %v3478 = vsel %vm3473, %v3458, %v3460
    %v3479 = vsel %vm3473, %v3460, %v3462
    %v3480 = vsel %vm3473, %v3462, %v3464
    %v3481 = vsel %vm3473, %v3464, %v3466
    %v3482 = vsel %vm3473, %v3466, %v3468
    %v3483 = vsel %vm3473, %v3468, %v3470
    %v3484 = vsel %vm3473, %v3470, %v3472
    %v3487 = vsel %vm2962, %v3484, %v2937
    %3488 = vrot.lane.b32.xlu0 %v2780, 86
    %v3489 = vpop.permute.xlu0 %3488
    %3490 = vrot.lane.b32.xlu0 %v2781, 86
    %v3491 = vpop.permute.xlu0 %3490
    %3492 = vrot.lane.b32.xlu0 %v2782, 86
    %v3493 = vpop.permute.xlu0 %3492
    %3494 = vrot.lane.b32.xlu0 %v2783, 86
    %v3495 = vpop.permute.xlu0 %3494
    %3496 = vrot.lane.b32.xlu0 %v2784, 86
    %v3497 = vpop.permute.xlu0 %3496
    %3498 = vrot.lane.b32.xlu0 %v2785, 86
    %v3499 = vpop.permute.xlu0 %3498
    %3500 = vrot.lane.b32.xlu0 %v2786, 86
    %v3501 = vpop.permute.xlu0 %3500
    %3502 = vrot.lane.b32.xlu0 %v2787, 86
    %v3503 = vpop.permute.xlu0 %3502
    %3504 = vrot.lane.b32.xlu0 %v2788, 86
    %v3505 = vpop.permute.xlu0 %3504
    %3506 = vrot.lane.b32.xlu0 %v2789, 86
    %v3507 = vpop.permute.xlu0 %3506
    %3508 = vrot.lane.b32.xlu0 %v2790, 86
    %v3509 = vpop.permute.xlu0 %3508
    %3510 = vrot.lane.b32.xlu0 %v2791, 86
    %v3511 = vpop.permute.xlu0 %3510
    %vm3512 = vcmask 703488
    %v3513 = vsel %vm3512, %v3489, %v3491
    %v3514 = vsel %vm3512, %v3491, %v3493
    %v3515 = vsel %vm3512, %v3493, %v3495
    %v3516 = vsel %vm3512, %v3495, %v3497
    %v3517 = vsel %vm3512, %v3497, %v3499
    %v3518 = vsel %vm3512, %v3499, %v3501
    %v3519 = vsel %vm3512, %v3501, %v3503
    %v3520 = vsel %vm3512, %v3503, %v3505
    %v3521 = vsel %vm3512, %v3505, %v3507
    %v3522 = vsel %vm3512, %v3507, %v3509
    %v3523 = vsel %vm3512, %v3509, %v3511
    %3535 = vrot.lane.b32.xlu0 %v2779, 118
    %v3536 = vpop.permute.xlu0 %3535
    %3537 = vrot.lane.b32.xlu0 %v2780, 118
    %v3538 = vpop.permute.xlu0 %3537
    %vm3539 = vcmask 965632
    %v3540 = vsel %vm3539, %v3536, %v3538
    %v3544 = vsel %vm3539, %v3523, %v3536
    %3545 = vrot.lane.b32.xlu0 %v2780, 84
    %v3546 = vpop.permute.xlu0 %3545
    %3547 = vrot.lane.b32.xlu0 %v2781, 84
    %v3548 = vpop.permute.xlu0 %3547
    %3549 = vrot.lane.b32.xlu0 %v2782, 84
    %v3550 = vpop.permute.xlu0 %3549
    %3551 = vrot.lane.b32.xlu0 %v2783, 84
    %v3552 = vpop.permute.xlu0 %3551
    %3553 = vrot.lane.b32.xlu0 %v2784, 84
    %v3554 = vpop.permute.xlu0 %3553
    %3555 = vrot.lane.b32.xlu0 %v2785, 84
    %v3556 = vpop.permute.xlu0 %3555
    %3557 = vrot.lane.b32.xlu0 %v2786, 84
    %v3558 = vpop.permute.xlu0 %3557
    %3559 = vrot.lane.b32.xlu0 %v2787, 84
    %v3560 = vpop.permute.xlu0 %3559
    %3561 = vrot.lane.b32.xlu0 %v2788, 84
    %v3562 = vpop.permute.xlu0 %3561
    %3563 = vrot.lane.b32.xlu0 %v2789, 84
    %v3564 = vpop.permute.xlu0 %3563
    %3565 = vrot.lane.b32.xlu0 %v2790, 84
    %v3566 = vpop.permute.xlu0 %3565
    %3567 = vrot.lane.b32.xlu0 %v2791, 84
    %v3568 = vpop.permute.xlu0 %3567
    %vm3569 = vcmask 687104
    %v3570 = vsel %vm3569, %v3546, %v3548
    %v3571 = vsel %vm3569, %v3548, %v3550
    %v3572 = vsel %vm3569, %v3550, %v3552
    %v3573 = vsel %vm3569, %v3552, %v3554
    %v3574 = vsel %vm3569, %v3554, %v3556
    %v3575 = vsel %vm3569, %v3556, %v3558
    %v3576 = vsel %vm3569, %v3558, %v3560
    %v3577 = vsel %vm3569, %v3560, %v3562
    %v3578 = vsel %vm3569, %v3562, %v3564
    %v3579 = vsel %vm3569, %v3564, %v3566
    %v3580 = vsel %vm3569, %v3566, %v3568
    %3582 = vrot.lane.b32.xlu0 %v2779, 116
    %v3583 = vpop.permute.xlu0 %3582
    %3584 = vrot.lane.b32.xlu0 %v2780, 116
    %v3585 = vpop.permute.xlu0 %3584
    %vm3586 = vcmask 949248
    %v3587 = vsel %vm3586, %v3583, %v3585
    %v3589 = vsel %vm3586, %v3580, %v3583
    %3590 = vrot.lane.b32.xlu0 %v2780, 82
    %v3591 = vpop.permute.xlu0 %3590
    %3592 = vrot.lane.b32.xlu0 %v2781, 82
    %v3593 = vpop.permute.xlu0 %3592
    %3594 = vrot.lane.b32.xlu0 %v2782, 82
    %v3595 = vpop.permute.xlu0 %3594
    %3596 = vrot.lane.b32.xlu0 %v2783, 82
    %v3597 = vpop.permute.xlu0 %3596
    %3598 = vrot.lane.b32.xlu0 %v2784, 82
    %v3599 = vpop.permute.xlu0 %3598
    %3600 = vrot.lane.b32.xlu0 %v2785, 82
    %v3601 = vpop.permute.xlu0 %3600
    %3602 = vrot.lane.b32.xlu0 %v2786, 82
    %v3603 = vpop.permute.xlu0 %3602
    %3604 = vrot.lane.b32.xlu0 %v2787, 82
    %v3605 = vpop.permute.xlu0 %3604
    %3606 = vrot.lane.b32.xlu0 %v2788, 82
    %v3607 = vpop.permute.xlu0 %3606
    %3608 = vrot.lane.b32.xlu0 %v2789, 82
    %v3609 = vpop.permute.xlu0 %3608
    %3610 = vrot.lane.b32.xlu0 %v2790, 82
    %v3611 = vpop.permute.xlu0 %3610
    %3612 = vrot.lane.b32.xlu0 %v2791, 82
    %v3613 = vpop.permute.xlu0 %3612
    %vm3614 = vcmask 670720
    %v3615 = vsel %vm3614, %v3591, %v3593
    %v3616 = vsel %vm3614, %v3593, %v3595
    %v3617 = vsel %vm3614, %v3595, %v3597
    %v3618 = vsel %vm3614, %v3597, %v3599
    %v3619 = vsel %vm3614, %v3599, %v3601
    %v3620 = vsel %vm3614, %v3601, %v3603
    %v3621 = vsel %vm3614, %v3603, %v3605
    %v3622 = vsel %vm3614, %v3605, %v3607
    %v3623 = vsel %vm3614, %v3607, %v3609
    %v3624 = vsel %vm3614, %v3609, %v3611
    %v3625 = vsel %vm3614, %v3611, %v3613
    %3627 = vrot.lane.b32.xlu0 %v2779, 114
    %v3628 = vpop.permute.xlu0 %3627
    %3629 = vrot.lane.b32.xlu0 %v2780, 114
    %v3630 = vpop.permute.xlu0 %3629
    %vm3631 = vcmask 932864
    %v3632 = vsel %vm3631, %v3628, %v3630
    %v3634 = vsel %vm3631, %v3625, %v3628
    %3635 = vrot.lane.b32.xlu0 %v2780, 80
    %v3636 = vpop.permute.xlu0 %3635
    %3637 = vrot.lane.b32.xlu0 %v2781, 80
    %v3638 = vpop.permute.xlu0 %3637
    %3639 = vrot.lane.b32.xlu0 %v2782, 80
    %v3640 = vpop.permute.xlu0 %3639
    %3641 = vrot.lane.b32.xlu0 %v2783, 80
    %v3642 = vpop.permute.xlu0 %3641
    %3643 = vrot.lane.b32.xlu0 %v2784, 80
    %v3644 = vpop.permute.xlu0 %3643
    %3645 = vrot.lane.b32.xlu0 %v2785, 80
    %v3646 = vpop.permute.xlu0 %3645
    %3647 = vrot.lane.b32.xlu0 %v2786, 80
    %v3648 = vpop.permute.xlu0 %3647
    %3649 = vrot.lane.b32.xlu0 %v2787, 80
    %v3650 = vpop.permute.xlu0 %3649
    %3651 = vrot.lane.b32.xlu0 %v2788, 80
    %v3652 = vpop.permute.xlu0 %3651
    %3653 = vrot.lane.b32.xlu0 %v2789, 80
    %v3654 = vpop.permute.xlu0 %3653
    %3655 = vrot.lane.b32.xlu0 %v2790, 80
    %v3656 = vpop.permute.xlu0 %3655
    %3657 = vrot.lane.b32.xlu0 %v2791, 80
    %v3658 = vpop.permute.xlu0 %3657
    %vm3659 = vcmask 654336
    %v3660 = vsel %vm3659, %v3636, %v3638
    %v3661 = vsel %vm3659, %v3638, %v3640
    %v3662 = vsel %vm3659, %v3640, %v3642
    %v3663 = vsel %vm3659, %v3642, %v3644
    %v3664 = vsel %vm3659, %v3644, %v3646
    %v3665 = vsel %vm3659, %v3646, %v3648
    %v3666 = vsel %vm3659, %v3648, %v3650
    %v3667 = vsel %vm3659, %v3650, %v3652
    %v3668 = vsel %vm3659, %v3652, %v3654
    %v3669 = vsel %vm3659, %v3654, %v3656
    %v3670 = vsel %vm3659, %v3656, %v3658
    %3672 = vrot.lane.b32.xlu0 %v2779, 112
    %v3673 = vpop.permute.xlu0 %3672
    %3674 = vrot.lane.b32.xlu0 %v2780, 112
    %v3675 = vpop.permute.xlu0 %3674
    %vm3676 = vcmask 916480
    %v3677 = vsel %vm3676, %v3673, %v3675
    %v3679 = vsel %vm3676, %v3670, %v3673
    %3680 = vrot.lane.b32.xlu0 %v2780, 32
    %v3681 = vpop.permute.xlu0 %3680
    %3682 = vrot.lane.b32.xlu0 %v2781, 32
    %v3683 = vpop.permute.xlu0 %3682
    %3684 = vrot.lane.b32.xlu0 %v2782, 32
    %v3685 = vpop.permute.xlu0 %3684
    %3686 = vrot.lane.b32.xlu0 %v2783, 32
    %v3687 = vpop.permute.xlu0 %3686
    %3688 = vrot.lane.b32.xlu0 %v2784, 32
    %v3689 = vpop.permute.xlu0 %3688
    %3690 = vrot.lane.b32.xlu0 %v2785, 32
    %v3691 = vpop.permute.xlu0 %3690
    %3692 = vrot.lane.b32.xlu0 %v2786, 32
    %v3693 = vpop.permute.xlu0 %3692
    %3694 = vrot.lane.b32.xlu0 %v2787, 32
    %v3695 = vpop.permute.xlu0 %3694
    %3696 = vrot.lane.b32.xlu0 %v2788, 32
    %v3697 = vpop.permute.xlu0 %3696
    %3698 = vrot.lane.b32.xlu0 %v2789, 32
    %v3699 = vpop.permute.xlu0 %3698
    %3700 = vrot.lane.b32.xlu0 %v2790, 32
    %v3701 = vpop.permute.xlu0 %3700
    %3702 = vrot.lane.b32.xlu0 %v2791, 32
    %v3703 = vpop.permute.xlu0 %3702
    %vm3704 = vcmask 261120
    %v3705 = vsel %vm3704, %v3681, %v3683
    %v3706 = vsel %vm3704, %v3683, %v3685
    %v3707 = vsel %vm3704, %v3685, %v3687
    %v3708 = vsel %vm3704, %v3687, %v3689
    %v3709 = vsel %vm3704, %v3689, %v3691
    %v3710 = vsel %vm3704, %v3691, %v3693
    %v3711 = vsel %vm3704, %v3693, %v3695
    %v3712 = vsel %vm3704, %v3695, %v3697
    %v3713 = vsel %vm3704, %v3697, %v3699
    %v3714 = vsel %vm3704, %v3699, %v3701
    %v3715 = vsel %vm3704, %v3701, %v3703
    %v3730 = vsel %vm3203, %v3715, %v3178
    %3731 = vrot.lane.b32.xlu0 %v2780, 30
    %v3732 = vpop.permute.xlu0 %3731
    %3733 = vrot.lane.b32.xlu0 %v2781, 30
    %v3734 = vpop.permute.xlu0 %3733
    %3735 = vrot.lane.b32.xlu0 %v2782, 30
    %v3736 = vpop.permute.xlu0 %3735
    %3737 = vrot.lane.b32.xlu0 %v2783, 30
    %v3738 = vpop.permute.xlu0 %3737
    %3739 = vrot.lane.b32.xlu0 %v2784, 30
    %v3740 = vpop.permute.xlu0 %3739
    %3741 = vrot.lane.b32.xlu0 %v2785, 30
    %v3742 = vpop.permute.xlu0 %3741
    %3743 = vrot.lane.b32.xlu0 %v2786, 30
    %v3744 = vpop.permute.xlu0 %3743
    %3745 = vrot.lane.b32.xlu0 %v2787, 30
    %v3746 = vpop.permute.xlu0 %3745
    %3747 = vrot.lane.b32.xlu0 %v2788, 30
    %v3748 = vpop.permute.xlu0 %3747
    %3749 = vrot.lane.b32.xlu0 %v2789, 30
    %v3750 = vpop.permute.xlu0 %3749
    %3751 = vrot.lane.b32.xlu0 %v2790, 30
    %v3752 = vpop.permute.xlu0 %3751
    %3753 = vrot.lane.b32.xlu0 %v2791, 30
    %v3754 = vpop.permute.xlu0 %3753
    %v3755 = vsel %vm164, %v3732, %v3734
    %v3756 = vsel %vm164, %v3734, %v3736
    %v3757 = vsel %vm164, %v3736, %v3738
    %v3758 = vsel %vm164, %v3738, %v3740
    %v3759 = vsel %vm164, %v3740, %v3742
    %v3760 = vsel %vm164, %v3742, %v3744
    %v3761 = vsel %vm164, %v3744, %v3746
    %v3762 = vsel %vm164, %v3746, %v3748
    %v3763 = vsel %vm164, %v3748, %v3750
    %v3764 = vsel %vm164, %v3750, %v3752
    %v3765 = vsel %vm164, %v3752, %v3754
    %3767 = vrot.lane.b32.xlu0 %v2779, 62
    %v3768 = vpop.permute.xlu0 %3767
    %3769 = vrot.lane.b32.xlu0 %v2780, 62
    %v3770 = vpop.permute.xlu0 %3769
    %vm3771 = vcmask 506880
    %v3772 = vsel %vm3771, %v3768, %v3770
    %v3774 = vsel %vm3771, %v3765, %v3768
    %3775 = vrot.lane.b32.xlu0 %v2780, 28
    %v3776 = vpop.permute.xlu0 %3775
    %3777 = vrot.lane.b32.xlu0 %v2781, 28
    %v3778 = vpop.permute.xlu0 %3777
    %3779 = vrot.lane.b32.xlu0 %v2782, 28
    %v3780 = vpop.permute.xlu0 %3779
    %3781 = vrot.lane.b32.xlu0 %v2783, 28
    %v3782 = vpop.permute.xlu0 %3781
    %3783 = vrot.lane.b32.xlu0 %v2784, 28
    %v3784 = vpop.permute.xlu0 %3783
    %3785 = vrot.lane.b32.xlu0 %v2785, 28
    %v3786 = vpop.permute.xlu0 %3785
    %3787 = vrot.lane.b32.xlu0 %v2786, 28
    %v3788 = vpop.permute.xlu0 %3787
    %3789 = vrot.lane.b32.xlu0 %v2787, 28
    %v3790 = vpop.permute.xlu0 %3789
    %3791 = vrot.lane.b32.xlu0 %v2788, 28
    %v3792 = vpop.permute.xlu0 %3791
    %3793 = vrot.lane.b32.xlu0 %v2789, 28
    %v3794 = vpop.permute.xlu0 %3793
    %3795 = vrot.lane.b32.xlu0 %v2790, 28
    %v3796 = vpop.permute.xlu0 %3795
    %3797 = vrot.lane.b32.xlu0 %v2791, 28
    %v3798 = vpop.permute.xlu0 %3797
    %v3799 = vsel %vm254, %v3776, %v3778
    %v3800 = vsel %vm254, %v3778, %v3780
    %v3801 = vsel %vm254, %v3780, %v3782
    %v3802 = vsel %vm254, %v3782, %v3784
    %v3803 = vsel %vm254, %v3784, %v3786
    %v3804 = vsel %vm254, %v3786, %v3788
    %v3805 = vsel %vm254, %v3788, %v3790
    %v3806 = vsel %vm254, %v3790, %v3792
    %v3807 = vsel %vm254, %v3792, %v3794
    %v3808 = vsel %vm254, %v3794, %v3796
    %v3809 = vsel %vm254, %v3796, %v3798
    %3811 = vrot.lane.b32.xlu0 %v2779, 60
    %v3812 = vpop.permute.xlu0 %3811
    %3813 = vrot.lane.b32.xlu0 %v2780, 60
    %v3814 = vpop.permute.xlu0 %3813
    %vm3815 = vcmask 490496
    %v3816 = vsel %vm3815, %v3812, %v3814
    %v3818 = vsel %vm3815, %v3809, %v3812
    %3819 = vrot.lane.b32.xlu0 %v2780, 26
    %v3820 = vpop.permute.xlu0 %3819
    %3821 = vrot.lane.b32.xlu0 %v2781, 26
    %v3822 = vpop.permute.xlu0 %3821
    %3823 = vrot.lane.b32.xlu0 %v2782, 26
    %v3824 = vpop.permute.xlu0 %3823
    %3825 = vrot.lane.b32.xlu0 %v2783, 26
    %v3826 = vpop.permute.xlu0 %3825
    %3827 = vrot.lane.b32.xlu0 %v2784, 26
    %v3828 = vpop.permute.xlu0 %3827
    %3829 = vrot.lane.b32.xlu0 %v2785, 26
    %v3830 = vpop.permute.xlu0 %3829
    %3831 = vrot.lane.b32.xlu0 %v2786, 26
    %v3832 = vpop.permute.xlu0 %3831
    %3833 = vrot.lane.b32.xlu0 %v2787, 26
    %v3834 = vpop.permute.xlu0 %3833
    %3835 = vrot.lane.b32.xlu0 %v2788, 26
    %v3836 = vpop.permute.xlu0 %3835
    %3837 = vrot.lane.b32.xlu0 %v2789, 26
    %v3838 = vpop.permute.xlu0 %3837
    %3839 = vrot.lane.b32.xlu0 %v2790, 26
    %v3840 = vpop.permute.xlu0 %3839
    %3841 = vrot.lane.b32.xlu0 %v2791, 26
    %v3842 = vpop.permute.xlu0 %3841
    %v3843 = vsel %vm2934, %v3820, %v3822
    %v3844 = vsel %vm2934, %v3822, %v3824
    %v3845 = vsel %vm2934, %v3824, %v3826
    %v3846 = vsel %vm2934, %v3826, %v3828
    %v3847 = vsel %vm2934, %v3828, %v3830
    %v3848 = vsel %vm2934, %v3830, %v3832
    %v3849 = vsel %vm2934, %v3832, %v3834
    %v3850 = vsel %vm2934, %v3834, %v3836
    %v3851 = vsel %vm2934, %v3836, %v3838
    %v3852 = vsel %vm2934, %v3838, %v3840
    %v3853 = vsel %vm2934, %v3840, %v3842
    %3855 = vrot.lane.b32.xlu0 %v2779, 58
    %v3856 = vpop.permute.xlu0 %3855
    %3857 = vrot.lane.b32.xlu0 %v2780, 58
    %v3858 = vpop.permute.xlu0 %3857
    %vm3859 = vcmask 474112
    %v3860 = vsel %vm3859, %v3856, %v3858
    %v3862 = vsel %vm3859, %v3853, %v3856
    %3863 = vrot.lane.b32.xlu0 %v2780, 24
    %v3864 = vpop.permute.xlu0 %3863
    %3865 = vrot.lane.b32.xlu0 %v2781, 24
    %v3866 = vpop.permute.xlu0 %3865
    %3867 = vrot.lane.b32.xlu0 %v2782, 24
    %v3868 = vpop.permute.xlu0 %3867
    %3869 = vrot.lane.b32.xlu0 %v2783, 24
    %v3870 = vpop.permute.xlu0 %3869
    %3871 = vrot.lane.b32.xlu0 %v2784, 24
    %v3872 = vpop.permute.xlu0 %3871
    %3873 = vrot.lane.b32.xlu0 %v2785, 24
    %v3874 = vpop.permute.xlu0 %3873
    %3875 = vrot.lane.b32.xlu0 %v2786, 24
    %v3876 = vpop.permute.xlu0 %3875
    %3877 = vrot.lane.b32.xlu0 %v2787, 24
    %v3878 = vpop.permute.xlu0 %3877
    %3879 = vrot.lane.b32.xlu0 %v2788, 24
    %v3880 = vpop.permute.xlu0 %3879
    %3881 = vrot.lane.b32.xlu0 %v2789, 24
    %v3882 = vpop.permute.xlu0 %3881
    %3883 = vrot.lane.b32.xlu0 %v2790, 24
    %v3884 = vpop.permute.xlu0 %3883
    %3885 = vrot.lane.b32.xlu0 %v2791, 24
    %v3886 = vpop.permute.xlu0 %3885
    %v3887 = vsel %vm2991, %v3864, %v3866
    %v3888 = vsel %vm2991, %v3866, %v3868
    %v3889 = vsel %vm2991, %v3868, %v3870
    %v3890 = vsel %vm2991, %v3870, %v3872
    %v3891 = vsel %vm2991, %v3872, %v3874
    %v3892 = vsel %vm2991, %v3874, %v3876
    %v3893 = vsel %vm2991, %v3876, %v3878
    %v3894 = vsel %vm2991, %v3878, %v3880
    %v3895 = vsel %vm2991, %v3880, %v3882
    %v3896 = vsel %vm2991, %v3882, %v3884
    %v3897 = vsel %vm2991, %v3884, %v3886
    %3899 = vrot.lane.b32.xlu0 %v2779, 56
    %v3900 = vpop.permute.xlu0 %3899
    %3901 = vrot.lane.b32.xlu0 %v2780, 56
    %v3902 = vpop.permute.xlu0 %3901
    %vm3903 = vcmask 457728
    %v3904 = vsel %vm3903, %v3900, %v3902
    %v3906 = vsel %vm3903, %v3897, %v3900
    %v3908 = vrot.slane %v2831, 2
    %v3909 = vrot.slane %v2832, 2
    %v3910 = vrot.slane %v2833, 2
    %v3911 = vrot.slane %v2834, 2
    %v3912 = vrot.slane %v2835, 2
    %v3913 = vrot.slane %v2836, 2
    %v3914 = vrot.slane %v2837, 2
    %v3915 = vrot.slane %v2838, 2
    %v3916 = vrot.slane %v2839, 2
    %v3917 = vrot.slane %v2840, 2
    %v3918 = vrot.slane %v2841, 2
    %v3919 = vrot.slane %v2842, 2
    %v3920 = vrot.slane %v2847, 2
    %v3935 = vrot.slane %v2874, 4
    %v3936 = vrot.slane %v2875, 4
    %v3937 = vrot.slane %v2876, 4
    %v3938 = vrot.slane %v2877, 4
    %v3939 = vrot.slane %v2878, 4
    %v3940 = vrot.slane %v2879, 4
    %v3941 = vrot.slane %v2880, 4
    %v3942 = vrot.slane %v2881, 4
    %v3943 = vrot.slane %v2882, 4
    %v3944 = vrot.slane %v2883, 4
    %v3945 = vrot.slane %v2884, 4
    %v3946 = vrot.slane %v2885, 4
    %v3947 = vrot.slane %v2890, 4
    %v3962 = vrot.slane %v2918, 6
    %v3963 = vrot.slane %v2919, 6
    %v3964 = vrot.slane %v2920, 6
    %v3965 = vrot.slane %v2921, 6
    %v3966 = vrot.slane %v2922, 6
    %v3967 = vrot.slane %v2923, 6
    %v3968 = vrot.slane %v2924, 6
    %v3969 = vrot.slane %v2925, 6
    %v3970 = vrot.slane %v2926, 6
    %v3971 = vrot.slane %v2927, 6
    %v3972 = vrot.slane %v2928, 6
    %v3973 = vrot.slane %v2929, 6
    %v3974 = vrot.slane %v2935, 6
    %v3989 = vrot.slane %v3019, 2
    %v3990 = vrot.slane %v3020, 2
    %v3991 = vrot.slane %v3021, 2
    %v3992 = vrot.slane %v3022, 2
    %v3993 = vrot.slane %v3023, 2
    %v3994 = vrot.slane %v3024, 2
    %v3995 = vrot.slane %v3025, 2
    %v3996 = vrot.slane %v3026, 2
    %v3997 = vrot.slane %v3027, 2
    %v3998 = vrot.slane %v3028, 2
    %v3999 = vrot.slane %v3029, 2
    %v4000 = vrot.slane %v3035, 2
    %v4001 = vrot.slane %v3033, 2
    %v4016 = vrot.slane %v3062, 4
    %v4017 = vrot.slane %v3063, 4
    %v4018 = vrot.slane %v3064, 4
    %v4019 = vrot.slane %v3065, 4
    %v4020 = vrot.slane %v3066, 4
    %v4021 = vrot.slane %v3067, 4
    %v4022 = vrot.slane %v3068, 4
    %v4023 = vrot.slane %v3069, 4
    %v4024 = vrot.slane %v3070, 4
    %v4025 = vrot.slane %v3071, 4
    %v4026 = vrot.slane %v3072, 4
    %v4027 = vrot.slane %v3078, 4
    %v4028 = vrot.slane %v3076, 4
    %v4043 = vrot.slane %v3105, 6
    %v4044 = vrot.slane %v3106, 6
    %v4045 = vrot.slane %v3107, 6
    %v4046 = vrot.slane %v3108, 6
    %v4047 = vrot.slane %v3109, 6
    %v4048 = vrot.slane %v3110, 6
    %v4049 = vrot.slane %v3111, 6
    %v4050 = vrot.slane %v3112, 6
    %v4051 = vrot.slane %v3113, 6
    %v4052 = vrot.slane %v3114, 6
    %v4053 = vrot.slane %v3115, 6
    %v4054 = vrot.slane %v3121, 6
    %v4055 = vrot.slane %v3119, 6
    %v4070 = vrot.slane %v3204, 2
    %v4071 = vrot.slane %v3205, 2
    %v4072 = vrot.slane %v3206, 2
    %v4073 = vrot.slane %v3207, 2
    %v4074 = vrot.slane %v3208, 2
    %v4075 = vrot.slane %v3209, 2
    %v4076 = vrot.slane %v3210, 2
    %v4077 = vrot.slane %v3211, 2
    %v4078 = vrot.slane %v3212, 2
    %v4079 = vrot.slane %v3213, 2
    %v4080 = vrot.slane %v3214, 2
    %v4081 = vrot.slane %v3220, 2
    %v4082 = vrot.slane %v3218, 2
    %v4097 = vrot.slane %v3247, 4
    %v4098 = vrot.slane %v3248, 4
    %v4099 = vrot.slane %v3249, 4
    %v4100 = vrot.slane %v3250, 4
    %v4101 = vrot.slane %v3251, 4
    %v4102 = vrot.slane %v3252, 4
    %v4103 = vrot.slane %v3253, 4
    %v4104 = vrot.slane %v3254, 4
    %v4105 = vrot.slane %v3255, 4
    %v4106 = vrot.slane %v3256, 4
    %v4107 = vrot.slane %v3257, 4
    %v4108 = vrot.slane %v3263, 4
    %v4109 = vrot.slane %v3261, 4
    %v4124 = vrot.slane %v3290, 6
    %v4125 = vrot.slane %v3291, 6
    %v4126 = vrot.slane %v3292, 6
    %v4127 = vrot.slane %v3293, 6
    %v4128 = vrot.slane %v3294, 6
    %v4129 = vrot.slane %v3295, 6
    %v4130 = vrot.slane %v3296, 6
    %v4131 = vrot.slane %v3297, 6
    %v4132 = vrot.slane %v3298, 6
    %v4133 = vrot.slane %v3299, 6
    %v4134 = vrot.slane %v3300, 6
    %v4135 = vrot.slane %v3306, 6
    %v4136 = vrot.slane %v3304, 6
    %v4151 = vrot.slane %v3388, 2
    %v4152 = vrot.slane %v3389, 2
    %v4153 = vrot.slane %v3390, 2
    %v4154 = vrot.slane %v3391, 2
    %v4155 = vrot.slane %v3392, 2
    %v4156 = vrot.slane %v3393, 2
    %v4157 = vrot.slane %v3394, 2
    %v4158 = vrot.slane %v3395, 2
    %v4159 = vrot.slane %v3396, 2
    %v4160 = vrot.slane %v3397, 2
    %v4161 = vrot.slane %v3398, 2
    %v4162 = vrot.slane %v3404, 2
    %v4163 = vrot.slane %v3402, 2
    %v4178 = vrot.slane %v3432, 4
    %v4179 = vrot.slane %v3433, 4
    %v4180 = vrot.slane %v3434, 4
    %v4181 = vrot.slane %v3435, 4
    %v4182 = vrot.slane %v3436, 4
    %v4183 = vrot.slane %v3437, 4
    %v4184 = vrot.slane %v3438, 4
    %v4185 = vrot.slane %v3439, 4
    %v4186 = vrot.slane %v3440, 4
    %v4187 = vrot.slane %v3441, 4
    %v4188 = vrot.slane %v3442, 4
    %v4189 = vrot.slane %v3448, 4
    %v4190 = vrot.slane %v3446, 4
    %v4205 = vrot.slane %v3474, 6
    %v4206 = vrot.slane %v3475, 6
    %v4207 = vrot.slane %v3476, 6
    %v4208 = vrot.slane %v3477, 6
    %v4209 = vrot.slane %v3478, 6
    %v4210 = vrot.slane %v3479, 6
    %v4211 = vrot.slane %v3480, 6
    %v4212 = vrot.slane %v3481, 6
    %v4213 = vrot.slane %v3482, 6
    %v4214 = vrot.slane %v3483, 6
    %v4215 = vrot.slane %v3487, 6
    %v4216 = vrot.slane %v2963, 6
    %v4217 = vrot.slane %v2939, 6
    %v4231 = vsel %vm1561, %v2779, %v3908
    %v4232 = vsel %vm1561, %v2780, %v3909
    %v4233 = vsel %vm1561, %v2781, %v3910
    %v4234 = vsel %vm1561, %v2782, %v3911
    %v4235 = vsel %vm1561, %v2783, %v3912
    %v4236 = vsel %vm1561, %v2784, %v3913
    %v4237 = vsel %vm1561, %v2785, %v3914
    %v4238 = vsel %vm1561, %v2786, %v3915
    %v4239 = vsel %vm1561, %v2787, %v3916
    %v4240 = vsel %vm1561, %v2788, %v3917
    %v4241 = vsel %vm1561, %v2789, %v3918
    %v4242 = vsel %vm1561, %v2790, %v3919
    %v4243 = vsel %vm1561, %v2791, %v3920
    %v4244 = vsel %vm1589, %v3908, %v3935
    %v4245 = vsel %vm1589, %v3909, %v3936
    %v4246 = vsel %vm1589, %v3910, %v3937
    %v4247 = vsel %vm1589, %v3911, %v3938
    %v4248 = vsel %vm1589, %v3912, %v3939
    %v4249 = vsel %vm1589, %v3913, %v3940
    %v4250 = vsel %vm1589, %v3914, %v3941
    %v4251 = vsel %vm1589, %v3915, %v3942
    %v4252 = vsel %vm1589, %v3916, %v3943
    %v4253 = vsel %vm1589, %v3917, %v3944
    %v4254 = vsel %vm1589, %v3918, %v3945
    %v4255 = vsel %vm1589, %v3919, %v3946
    %v4256 = vsel %vm1589, %v3920, %v3947
    %v4257 = vsel %vm1617, %v3935, %v3962
    %v4258 = vsel %vm1617, %v3936, %v3963
    %v4259 = vsel %vm1617, %v3937, %v3964
    %v4260 = vsel %vm1617, %v3938, %v3965
    %v4261 = vsel %vm1617, %v3939, %v3966
    %v4262 = vsel %vm1617, %v3940, %v3967
    %v4263 = vsel %vm1617, %v3941, %v3968
    %v4264 = vsel %vm1617, %v3942, %v3969
    %v4265 = vsel %vm1617, %v3943, %v3970
    %v4266 = vsel %vm1617, %v3944, %v3971
    %v4267 = vsel %vm1617, %v3945, %v3972
    %v4268 = vsel %vm1617, %v3946, %v3973
    %v4269 = vsel %vm1617, %v3947, %v3974
    %v4270 = vsel %vm1561, %v2963, %v3989
    %v4271 = vsel %vm1561, %v2964, %v3990
    %v4272 = vsel %vm1561, %v2965, %v3991
    %v4273 = vsel %vm1561, %v2966, %v3992
    %v4274 = vsel %vm1561, %v2967, %v3993
    %v4275 = vsel %vm1561, %v2968, %v3994
    %v4276 = vsel %vm1561, %v2969, %v3995
    %v4277 = vsel %vm1561, %v2970, %v3996
    %v4278 = vsel %vm1561, %v2971, %v3997
    %v4279 = vsel %vm1561, %v2972, %v3998
    %v4280 = vsel %vm1561, %v2973, %v3999
    %v4281 = vsel %vm1561, %v2974, %v4000
    %v4282 = vsel %vm1561, %v2992, %v4001
    %v4283 = vsel %vm1589, %v3989, %v4016
    %v4284 = vsel %vm1589, %v3990, %v4017
    %v4285 = vsel %vm1589, %v3991, %v4018
    %v4286 = vsel %vm1589, %v3992, %v4019
    %v4287 = vsel %vm1589, %v3993, %v4020
    %v4288 = vsel %vm1589, %v3994, %v4021
    %v4289 = vsel %vm1589, %v3995, %v4022
    %v4290 = vsel %vm1589, %v3996, %v4023
    %v4291 = vsel %vm1589, %v3997, %v4024
    %v4292 = vsel %vm1589, %v3998, %v4025
    %v4293 = vsel %vm1589, %v3999, %v4026
    %v4294 = vsel %vm1589, %v4000, %v4027
    %v4295 = vsel %vm1589, %v4001, %v4028
    %v4296 = vsel %vm1617, %v4016, %v4043
    %v4297 = vsel %vm1617, %v4017, %v4044
    %v4298 = vsel %vm1617, %v4018, %v4045
    %v4299 = vsel %vm1617, %v4019, %v4046
    %v4300 = vsel %vm1617, %v4020, %v4047
    %v4301 = vsel %vm1617, %v4021, %v4048
    %v4302 = vsel %vm1617, %v4022, %v4049
    %v4303 = vsel %vm1617, %v4023, %v4050
    %v4304 = vsel %vm1617, %v4024, %v4051
    %v4305 = vsel %vm1617, %v4025, %v4052
    %v4306 = vsel %vm1617, %v4026, %v4053
    %v4307 = vsel %vm1617, %v4027, %v4054
    %v4308 = vsel %vm1617, %v4028, %v4055
    %v4309 = vsel %vm1561, %v3149, %v4070
    %v4310 = vsel %vm1561, %v3150, %v4071
    %v4311 = vsel %vm1561, %v3151, %v4072
    %v4312 = vsel %vm1561, %v3152, %v4073
    %v4313 = vsel %vm1561, %v3153, %v4074
    %v4314 = vsel %vm1561, %v3154, %v4075
    %v4315 = vsel %vm1561, %v3155, %v4076
    %v4316 = vsel %vm1561, %v3156, %v4077
    %v4317 = vsel %vm1561, %v3157, %v4078
    %v4318 = vsel %vm1561, %v3158, %v4079
    %v4319 = vsel %vm1561, %v3159, %v4080
    %v4320 = vsel %vm1561, %v3176, %v4081
    %v4321 = vsel %vm1561, %v3174, %v4082
    %v4322 = vsel %vm1589, %v4070, %v4097
    %v4323 = vsel %vm1589, %v4071, %v4098
    %v4324 = vsel %vm1589, %v4072, %v4099
    %v4325 = vsel %vm1589, %v4073, %v4100
    %v4326 = vsel %vm1589, %v4074, %v4101
    %v4327 = vsel %vm1589, %v4075, %v4102
    %v4328 = vsel %vm1589, %v4076, %v4103
    %v4329 = vsel %vm1589, %v4077, %v4104
    %v4330 = vsel %vm1589, %v4078, %v4105
    %v4331 = vsel %vm1589, %v4079, %v4106
    %v4332 = vsel %vm1589, %v4080, %v4107
    %v4333 = vsel %vm1589, %v4081, %v4108
    %v4334 = vsel %vm1589, %v4082, %v4109
    %v4335 = vsel %vm1617, %v4097, %v4124
    %v4336 = vsel %vm1617, %v4098, %v4125
    %v4337 = vsel %vm1617, %v4099, %v4126
    %v4338 = vsel %vm1617, %v4100, %v4127
    %v4339 = vsel %vm1617, %v4101, %v4128
    %v4340 = vsel %vm1617, %v4102, %v4129
    %v4341 = vsel %vm1617, %v4103, %v4130
    %v4342 = vsel %vm1617, %v4104, %v4131
    %v4343 = vsel %vm1617, %v4105, %v4132
    %v4344 = vsel %vm1617, %v4106, %v4133
    %v4345 = vsel %vm1617, %v4107, %v4134
    %v4346 = vsel %vm1617, %v4108, %v4135
    %v4347 = vsel %vm1617, %v4109, %v4136
    %v4348 = vsel %vm1561, %v3333, %v4151
    %v4349 = vsel %vm1561, %v3334, %v4152
    %v4350 = vsel %vm1561, %v3335, %v4153
    %v4351 = vsel %vm1561, %v3336, %v4154
    %v4352 = vsel %vm1561, %v3337, %v4155
    %v4353 = vsel %vm1561, %v3338, %v4156
    %v4354 = vsel %vm1561, %v3339, %v4157
    %v4355 = vsel %vm1561, %v3340, %v4158
    %v4356 = vsel %vm1561, %v3341, %v4159
    %v4357 = vsel %vm1561, %v3342, %v4160
    %v4358 = vsel %vm1561, %v3343, %v4161
    %v4359 = vsel %vm1561, %v3360, %v4162
    %v4360 = vsel %vm1561, %v3358, %v4163
    %v4361 = vsel %vm1589, %v4151, %v4178
    %v4362 = vsel %vm1589, %v4152, %v4179
    %v4363 = vsel %vm1589, %v4153, %v4180
    %v4364 = vsel %vm1589, %v4154, %v4181
    %v4365 = vsel %vm1589, %v4155, %v4182
    %v4366 = vsel %vm1589, %v4156, %v4183
    %v4367 = vsel %vm1589, %v4157, %v4184
    %v4368 = vsel %vm1589, %v4158, %v4185
    %v4369 = vsel %vm1589, %v4159, %v4186
    %v4370 = vsel %vm1589, %v4160, %v4187
    %v4371 = vsel %vm1589, %v4161, %v4188
    %v4372 = vsel %vm1589, %v4162, %v4189
    %v4373 = vsel %vm1589, %v4163, %v4190
    %v4374 = vsel %vm1617, %v4178, %v4205
    %v4375 = vsel %vm1617, %v4179, %v4206
    %v4376 = vsel %vm1617, %v4180, %v4207
    %v4377 = vsel %vm1617, %v4181, %v4208
    %v4378 = vsel %vm1617, %v4182, %v4209
    %v4379 = vsel %vm1617, %v4183, %v4210
    %v4380 = vsel %vm1617, %v4184, %v4211
    %v4381 = vsel %vm1617, %v4185, %v4212
    %v4382 = vsel %vm1617, %v4186, %v4213
    %v4383 = vsel %vm1617, %v4187, %v4214
    %v4384 = vsel %vm1617, %v4188, %v4215
    %v4385 = vsel %vm1617, %v4189, %v4216
    %v4386 = vsel %vm1617, %v4190, %v4217
    %v4388 = vrot.slane %v3570, 2
    %v4389 = vrot.slane %v3571, 2
    %v4390 = vrot.slane %v3572, 2
    %v4391 = vrot.slane %v3573, 2
    %v4392 = vrot.slane %v3574, 2
    %v4393 = vrot.slane %v3575, 2
    %v4394 = vrot.slane %v3576, 2
    %v4395 = vrot.slane %v3577, 2
    %v4396 = vrot.slane %v3578, 2
    %v4397 = vrot.slane %v3579, 2
    %v4398 = vrot.slane %v3589, 2
    %v4399 = vrot.slane %v3587, 2
    %v4400 = vrot.slane %v3585, 2
    %v4415 = vrot.slane %v3615, 4
    %v4416 = vrot.slane %v3616, 4
    %v4417 = vrot.slane %v3617, 4
    %v4418 = vrot.slane %v3618, 4
    %v4419 = vrot.slane %v3619, 4
    %v4420 = vrot.slane %v3620, 4
    %v4421 = vrot.slane %v3621, 4
    %v4422 = vrot.slane %v3622, 4
    %v4423 = vrot.slane %v3623, 4
    %v4424 = vrot.slane %v3624, 4
    %v4425 = vrot.slane %v3634, 4
    %v4426 = vrot.slane %v3632, 4
    %v4427 = vrot.slane %v3630, 4
    %v4442 = vrot.slane %v3660, 6
    %v4443 = vrot.slane %v3661, 6
    %v4444 = vrot.slane %v3662, 6
    %v4445 = vrot.slane %v3663, 6
    %v4446 = vrot.slane %v3664, 6
    %v4447 = vrot.slane %v3665, 6
    %v4448 = vrot.slane %v3666, 6
    %v4449 = vrot.slane %v3667, 6
    %v4450 = vrot.slane %v3668, 6
    %v4451 = vrot.slane %v3669, 6
    %v4452 = vrot.slane %v3679, 6
    %v4453 = vrot.slane %v3677, 6
    %v4454 = vrot.slane %v3675, 6
    %v4469 = vrot.slane %v3755, 2
    %v4470 = vrot.slane %v3756, 2
    %v4471 = vrot.slane %v3757, 2
    %v4472 = vrot.slane %v3758, 2
    %v4473 = vrot.slane %v3759, 2
    %v4474 = vrot.slane %v3760, 2
    %v4475 = vrot.slane %v3761, 2
    %v4476 = vrot.slane %v3762, 2
    %v4477 = vrot.slane %v3763, 2
    %v4478 = vrot.slane %v3764, 2
    %v4479 = vrot.slane %v3774, 2
    %v4480 = vrot.slane %v3772, 2
    %v4481 = vrot.slane %v3770, 2
    %v4496 = vrot.slane %v3799, 4
    %v4497 = vrot.slane %v3800, 4
    %v4498 = vrot.slane %v3801, 4
    %v4499 = vrot.slane %v3802, 4
    %v4500 = vrot.slane %v3803, 4
    %v4501 = vrot.slane %v3804, 4
    %v4502 = vrot.slane %v3805, 4
    %v4503 = vrot.slane %v3806, 4
    %v4504 = vrot.slane %v3807, 4
    %v4505 = vrot.slane %v3808, 4
    %v4506 = vrot.slane %v3818, 4
    %v4507 = vrot.slane %v3816, 4
    %v4508 = vrot.slane %v3814, 4
    %v4523 = vrot.slane %v3843, 6
    %v4524 = vrot.slane %v3844, 6
    %v4525 = vrot.slane %v3845, 6
    %v4526 = vrot.slane %v3846, 6
    %v4527 = vrot.slane %v3847, 6
    %v4528 = vrot.slane %v3848, 6
    %v4529 = vrot.slane %v3849, 6
    %v4530 = vrot.slane %v3850, 6
    %v4531 = vrot.slane %v3851, 6
    %v4532 = vrot.slane %v3852, 6
    %v4533 = vrot.slane %v3862, 6
    %v4534 = vrot.slane %v3860, 6
    %v4535 = vrot.slane %v3858, 6
    %v4549 = vsel %vm1561, %v3513, %v4388
    %v4550 = vsel %vm1561, %v3514, %v4389
    %v4551 = vsel %vm1561, %v3515, %v4390
    %v4552 = vsel %vm1561, %v3516, %v4391
    %v4553 = vsel %vm1561, %v3517, %v4392
    %v4554 = vsel %vm1561, %v3518, %v4393
    %v4555 = vsel %vm1561, %v3519, %v4394
    %v4556 = vsel %vm1561, %v3520, %v4395
    %v4557 = vsel %vm1561, %v3521, %v4396
    %v4558 = vsel %vm1561, %v3522, %v4397
    %v4559 = vsel %vm1561, %v3544, %v4398
    %v4560 = vsel %vm1561, %v3540, %v4399
    %v4561 = vsel %vm1561, %v3538, %v4400
    %v4562 = vsel %vm1589, %v4388, %v4415
    %v4563 = vsel %vm1589, %v4389, %v4416
    %v4564 = vsel %vm1589, %v4390, %v4417
    %v4565 = vsel %vm1589, %v4391, %v4418
    %v4566 = vsel %vm1589, %v4392, %v4419
    %v4567 = vsel %vm1589, %v4393, %v4420
    %v4568 = vsel %vm1589, %v4394, %v4421
    %v4569 = vsel %vm1589, %v4395, %v4422
    %v4570 = vsel %vm1589, %v4396, %v4423
    %v4571 = vsel %vm1589, %v4397, %v4424
    %v4572 = vsel %vm1589, %v4398, %v4425
    %v4573 = vsel %vm1589, %v4399, %v4426
    %v4574 = vsel %vm1589, %v4400, %v4427
    %v4575 = vsel %vm1617, %v4415, %v4442
    %v4576 = vsel %vm1617, %v4416, %v4443
    %v4577 = vsel %vm1617, %v4417, %v4444
    %v4578 = vsel %vm1617, %v4418, %v4445
    %v4579 = vsel %vm1617, %v4419, %v4446
    %v4580 = vsel %vm1617, %v4420, %v4447
    %v4581 = vsel %vm1617, %v4421, %v4448
    %v4582 = vsel %vm1617, %v4422, %v4449
    %v4583 = vsel %vm1617, %v4423, %v4450
    %v4584 = vsel %vm1617, %v4424, %v4451
    %v4585 = vsel %vm1617, %v4425, %v4452
    %v4586 = vsel %vm1617, %v4426, %v4453
    %v4587 = vsel %vm1617, %v4427, %v4454
    %v4588 = vsel %vm1561, %v3705, %v4469
    %v4589 = vsel %vm1561, %v3706, %v4470
    %v4590 = vsel %vm1561, %v3707, %v4471
    %v4591 = vsel %vm1561, %v3708, %v4472
    %v4592 = vsel %vm1561, %v3709, %v4473
    %v4593 = vsel %vm1561, %v3710, %v4474
    %v4594 = vsel %vm1561, %v3711, %v4475
    %v4595 = vsel %vm1561, %v3712, %v4476
    %v4596 = vsel %vm1561, %v3713, %v4477
    %v4597 = vsel %vm1561, %v3714, %v4478
    %v4598 = vsel %vm1561, %v3730, %v4479
    %v4599 = vsel %vm1561, %v3204, %v4480
    %v4600 = vsel %vm1561, %v3180, %v4481
    %v4601 = vsel %vm1589, %v4469, %v4496
    %v4602 = vsel %vm1589, %v4470, %v4497
    %v4603 = vsel %vm1589, %v4471, %v4498
    %v4604 = vsel %vm1589, %v4472, %v4499
    %v4605 = vsel %vm1589, %v4473, %v4500
    %v4606 = vsel %vm1589, %v4474, %v4501
    %v4607 = vsel %vm1589, %v4475, %v4502
    %v4608 = vsel %vm1589, %v4476, %v4503
    %v4609 = vsel %vm1589, %v4477, %v4504
    %v4610 = vsel %vm1589, %v4478, %v4505
    %v4611 = vsel %vm1589, %v4479, %v4506
    %v4612 = vsel %vm1589, %v4480, %v4507
    %v4613 = vsel %vm1589, %v4481, %v4508
    %v4614 = vsel %vm1617, %v4496, %v4523
    %v4615 = vsel %vm1617, %v4497, %v4524
    %v4616 = vsel %vm1617, %v4498, %v4525
    %v4617 = vsel %vm1617, %v4499, %v4526
    %v4618 = vsel %vm1617, %v4500, %v4527
    %v4619 = vsel %vm1617, %v4501, %v4528
    %v4620 = vsel %vm1617, %v4502, %v4529
    %v4621 = vsel %vm1617, %v4503, %v4530
    %v4622 = vsel %vm1617, %v4504, %v4531
    %v4623 = vsel %vm1617, %v4505, %v4532
    %v4624 = vsel %vm1617, %v4506, %v4533
    %v4625 = vsel %vm1617, %v4507, %v4534
    %v4626 = vsel %vm1617, %v4508, %v4535
    %v4627 = vld [vmem:[%s3] sm:$0xff]
    %v4628 = vld [vmem:[%s3 + $0x8] sm:$0xff]
    %v4629 = vld [vmem:[%s3 + $0x10] sm:$0xff]
    %v4630 = vld [vmem:[%s3 + $0x18] sm:$0xff]
    %vm4631 = vcmask 179200
    %v4633 = vsel %vm4631, %v4628, 0
    %v4636 = vsel %vm4631, %v4630, 0
    %v4638 = vsel %vm1561, %v3887, 0
    %v4640 = vsel %vm1561, %v3888, 0
    %v4642 = vsel %vm1561, %v3889, 0
    %v4644 = vsel %vm1561, %v3890, 0
    %v4646 = vsel %vm1561, %v3891, 0
    %v4648 = vsel %vm1561, %v3892, 0
    %v4650 = vsel %vm1561, %v3893, 0
    %v4652 = vsel %vm1561, %v3894, 0
    %v4654 = vsel %vm1561, %v3895, 0
    %v4656 = vsel %vm1561, %v3896, 0
    %v4659 = vsel %vm1561, %v3906, 0
    %v4661 = vsel %vm1561, %v3904, 0
    %v4663 = vsel %vm1561, %v3902, 0
    %4665 = vmatprep.subr.mxu0 %v4232
    %4666 = vmatpush1.msra.mxu0 %v4231
    %4667 = vmatprep.subr.mxu0 %v4245
    %4668 = vmatpush1.msra.mxu0 %v4244
    %4669 = vmatprep.subr.mxu0 %v4258
    %4670 = vmatpush1.msra.mxu0 %v4257
    %4671 = vmatprep.subr.mxu0 %v4271
    %4672 = vmatpush1.msra.mxu0 %v4270
    %4673 = vmatprep.subr.mxu0 %v4284
    %4674 = vmatpush1.msra.mxu0 %v4283
    %4675 = vmatprep.subr.mxu0 %v4297
    %4676 = vmatpush1.msra.mxu0 %v4296
    %4677 = vmatprep.subr.mxu0 %v4310
    %4678 = vmatpush1.msra.mxu0 %v4309
    %4679 = vmatprep.subr.mxu0 %v4323
    %4680 = vmatpush1.msra.mxu0 %v4322
    %4681 = vmatprep.subr.mxu0 %v4336
    %4682 = vmatpush1.msra.mxu0 %v4335
    %4683 = vmatprep.subr.mxu0 %v4349
    %4684 = vmatpush1.msra.mxu0 %v4348
    %4685 = vmatprep.subr.mxu0 %v4362
    %4686 = vmatpush1.msra.mxu0 %v4361
    %4687 = vmatprep.subr.mxu0 %v4375
    %4688 = vmatpush1.msra.mxu0 %v4374
    %4689 = vmatprep.subr.mxu0 %v4550
    %4690 = vmatpush1.msra.mxu0 %v4549
    %4691 = vmatprep.subr.mxu0 %v4563
    %4692 = vmatpush1.msra.mxu0 %v4562
    %4693 = vmatprep.subr.mxu0 %v4576
    %4694 = vmatpush1.msra.mxu0 %v4575
    %4695 = vmatprep.subr.mxu0 %v4589
    %4696 = vmatpush1.msra.mxu0 %v4588
    %4697 = vmatprep.subr.mxu0 %v4602
    %4698 = vmatpush1.msra.mxu0 %v4601
    %4699 = vmatprep.subr.mxu0 %v4615
    %4700 = vmatpush1.msra.mxu0 %v4614
    %4701 = vmatprep.subr.mxu0 %v4640
    %4702 = vmatpush1.msra.mxu0 %v4638
    %4703 = vmatprep.subr.mxu0 0.0
    %4704 = vmatpush1.msra.mxu0 0.0
    %4705 = vmatprep.subr.mxu0 0.0
    %4706 = vmatpush1.msra.mxu0 0.0
    %4707 = vmatprep.subr.mxu0 0.0
    %4708 = vmatpush1.msra.mxu0 0.0
    %4709 = vmatprep.subr.mxu0 0.0
    %4710 = vmatpush1.msra.mxu0 0.0
    %4711 = vmatprep.subr.mxu0 0.0
    %4712 = vmatpush1.msra.mxu0 0.0
    %4713 = vmatprep.subr.mxu0 0.0
    %4714 = vmatpush1.msra.mxu0 0.0
    %4715 = vmatprep.subr.mxu0 0.0
    %4716 = vmatpush1.msra.mxu0 0.0
    %4717 = vmatprep.subr.mxu0 0.0
    %4718 = vmatpush1.msra.mxu0 0.0
    %4719 = vmatprep.subr.mxu0 0.0
    %4720 = vmatpush1.msra.mxu0 0.0
    %4721 = vmatprep.subr.mxu0 0.0
    %4722 = vmatpush1.msra.mxu0 0.0
    %4723 = vmatprep.subr.mxu0 0.0
    %4724 = vmatpush1.msra.mxu0 0.0
    %4725 = vmatprep.subr.mxu0 0.0
    %4726 = vmatpush1.msra.mxu0 0.0
    %4727 = vmatprep.subr.mxu0 0.0
    %4728 = vmatpush1.msra.mxu0 0.0
    %4729 = vmatprep.mubr.f32.mxu0 %v4633
    %4730 = vmatmul.mubr.f32.gmra.mrb[0].mxu0 %v4627
    %v4731 = vpop.f32.mrb[0].mxu0
    %v4732 = vadd.f32 0.0, %v4731
    %v4733 = vpop.f32.mrb[0].mxu0
    %v4734 = vadd.f32 0.0, %v4733
    %4735 = vmatprep.mubr.f32.mxu0 %v4636
    %4736 = vmatmul.mubr.f32.gmra.mrb[0].mxu0 %v4629
    %v4737 = vpop.f32.mrb[0].mxu0
    %v4738 = vadd.f32 0.0, %v4737
    %v4739 = vpop.f32.mrb[0].mxu0
    %v4740 = vadd.f32 0.0, %v4739
    %4741 = vdwg.mxu0
    %4742 = vmatprep.subr.mxu0 %v4234
    %4743 = vmatpush1.msra.mxu0 %v4233
    %4744 = vmatprep.subr.mxu0 %v4247
    %4745 = vmatpush1.msra.mxu0 %v4246
    %4746 = vmatprep.subr.mxu0 %v4260
    %4747 = vmatpush1.msra.mxu0 %v4259
    %4748 = vmatprep.subr.mxu0 %v4273
    %4749 = vmatpush1.msra.mxu0 %v4272
    %4750 = vmatprep.subr.mxu0 %v4286
    %4751 = vmatpush1.msra.mxu0 %v4285
    %4752 = vmatprep.subr.mxu0 %v4299
    %4753 = vmatpush1.msra.mxu0 %v4298
    %4754 = vmatprep.subr.mxu0 %v4312
    %4755 = vmatpush1.msra.mxu0 %v4311
    %4756 = vmatprep.subr.mxu0 %v4325
    %4757 = vmatpush1.msra.mxu0 %v4324
    %4758 = vmatprep.subr.mxu0 %v4338
    %4759 = vmatpush1.msra.mxu0 %v4337
    %4760 = vmatprep.subr.mxu0 %v4351
    %4761 = vmatpush1.msra.mxu0 %v4350
    %4762 = vmatprep.subr.mxu0 %v4364
    %4763 = vmatpush1.msra.mxu0 %v4363
    %4764 = vmatprep.subr.mxu0 %v4377
    %4765 = vmatpush1.msra.mxu0 %v4376
    %4766 = vmatprep.subr.mxu0 %v4552
    %4767 = vmatpush1.msra.mxu0 %v4551
    %4768 = vmatprep.subr.mxu0 %v4565
    %4769 = vmatpush1.msra.mxu0 %v4564
    %4770 = vmatprep.subr.mxu0 %v4578
    %4771 = vmatpush1.msra.mxu0 %v4577
    %4772 = vmatprep.subr.mxu0 %v4591
    %4773 = vmatpush1.msra.mxu0 %v4590
    %4774 = vmatprep.subr.mxu0 %v4604
    %4775 = vmatpush1.msra.mxu0 %v4603
    %4776 = vmatprep.subr.mxu0 %v4617
    %4777 = vmatpush1.msra.mxu0 %v4616
    %4778 = vmatprep.subr.mxu0 %v4644
    %4779 = vmatpush1.msra.mxu0 %v4642
    %4780 = vmatprep.subr.mxu0 0.0
    %4781 = vmatpush1.msra.mxu0 0.0
    %4782 = vmatprep.subr.mxu0 0.0
    %4783 = vmatpush1.msra.mxu0 0.0
    %4784 = vmatprep.subr.mxu0 0.0
    %4785 = vmatpush1.msra.mxu0 0.0
    %4786 = vmatprep.subr.mxu0 0.0
    %4787 = vmatpush1.msra.mxu0 0.0
    %4788 = vmatprep.subr.mxu0 0.0
    %4789 = vmatpush1.msra.mxu0 0.0
    %4790 = vmatprep.subr.mxu0 0.0
    %4791 = vmatpush1.msra.mxu0 0.0
    %4792 = vmatprep.subr.mxu0 0.0
    %4793 = vmatpush1.msra.mxu0 0.0
    %4794 = vmatprep.subr.mxu0 0.0
    %4795 = vmatpush1.msra.mxu0 0.0
    %4796 = vmatprep.subr.mxu0 0.0
    %4797 = vmatpush1.msra.mxu0 0.0
    %4798 = vmatprep.subr.mxu0 0.0
    %4799 = vmatpush1.msra.mxu0 0.0
    %4800 = vmatprep.subr.mxu0 0.0
    %4801 = vmatpush1.msra.mxu0 0.0
    %4802 = vmatprep.subr.mxu0 0.0
    %4803 = vmatpush1.msra.mxu0 0.0
    %4804 = vmatprep.subr.mxu0 0.0
    %4805 = vmatpush1.msra.mxu0 0.0
    %4806 = vmatprep.mubr.f32.mxu0 %v4633
    %4807 = vmatmul.mubr.f32.gmra.mrb[0].mxu0 %v4627
    %v4808 = vpop.f32.mrb[0].mxu0
    %v4809 = vadd.f32 0.0, %v4808
    %v4810 = vpop.f32.mrb[0].mxu0
    %v4811 = vadd.f32 0.0, %v4810
    %4812 = vmatprep.mubr.f32.mxu0 %v4636
    %4813 = vmatmul.mubr.f32.gmra.mrb[0].mxu0 %v4629
    %v4814 = vpop.f32.mrb[0].mxu0
    %v4815 = vadd.f32 0.0, %v4814
    %v4816 = vpop.f32.mrb[0].mxu0
    %v4817 = vadd.f32 0.0, %v4816
    %4818 = vdwg.mxu0
    %4819 = vmatprep.subr.mxu0 %v4236
    %4820 = vmatpush1.msra.mxu0 %v4235
    %4821 = vmatprep.subr.mxu0 %v4249
    %4822 = vmatpush1.msra.mxu0 %v4248
    %4823 = vmatprep.subr.mxu0 %v4262
    %4824 = vmatpush1.msra.mxu0 %v4261
    %4825 = vmatprep.subr.mxu0 %v4275
    %4826 = vmatpush1.msra.mxu0 %v4274
    %4827 = vmatprep.subr.mxu0 %v4288
    %4828 = vmatpush1.msra.mxu0 %v4287
    %4829 = vmatprep.subr.mxu0 %v4301
    %4830 = vmatpush1.msra.mxu0 %v4300
    %4831 = vmatprep.subr.mxu0 %v4314
    %4832 = vmatpush1.msra.mxu0 %v4313
    %4833 = vmatprep.subr.mxu0 %v4327
    %4834 = vmatpush1.msra.mxu0 %v4326
    %4835 = vmatprep.subr.mxu0 %v4340
    %4836 = vmatpush1.msra.mxu0 %v4339
    %4837 = vmatprep.subr.mxu0 %v4353
    %4838 = vmatpush1.msra.mxu0 %v4352
    %4839 = vmatprep.subr.mxu0 %v4366
    %4840 = vmatpush1.msra.mxu0 %v4365
    %4841 = vmatprep.subr.mxu0 %v4379
    %4842 = vmatpush1.msra.mxu0 %v4378
    %4843 = vmatprep.subr.mxu0 %v4554
    %4844 = vmatpush1.msra.mxu0 %v4553
    %4845 = vmatprep.subr.mxu0 %v4567
    %4846 = vmatpush1.msra.mxu0 %v4566
    %4847 = vmatprep.subr.mxu0 %v4580
    %4848 = vmatpush1.msra.mxu0 %v4579
    %4849 = vmatprep.subr.mxu0 %v4593
    %4850 = vmatpush1.msra.mxu0 %v4592
    %4851 = vmatprep.subr.mxu0 %v4606
    %4852 = vmatpush1.msra.mxu0 %v4605
    %4853 = vmatprep.subr.mxu0 %v4619
    %4854 = vmatpush1.msra.mxu0 %v4618
    %4855 = vmatprep.subr.mxu0 %v4648
    %4856 = vmatpush1.msra.mxu0 %v4646
    %4857 = vmatprep.subr.mxu0 0.0
    %4858 = vmatpush1.msra.mxu0 0.0
    %4859 = vmatprep.subr.mxu0 0.0
    %4860 = vmatpush1.msra.mxu0 0.0
    %4861 = vmatprep.subr.mxu0 0.0
    %4862 = vmatpush1.msra.mxu0 0.0
    %4863 = vmatprep.subr.mxu0 0.0
    %4864 = vmatpush1.msra.mxu0 0.0
    %4865 = vmatprep.subr.mxu0 0.0
    %4866 = vmatpush1.msra.mxu0 0.0
    %4867 = vmatprep.subr.mxu0 0.0
    %4868 = vmatpush1.msra.mxu0 0.0
    %4869 = vmatprep.subr.mxu0 0.0
    %4870 = vmatpush1.msra.mxu0 0.0
    %4871 = vmatprep.subr.mxu0 0.0
    %4872 = vmatpush1.msra.mxu0 0.0
    %4873 = vmatprep.subr.mxu0 0.0
    %4874 = vmatpush1.msra.mxu0 0.0
    %4875 = vmatprep.subr.mxu0 0.0
    %4876 = vmatpush1.msra.mxu0 0.0
    %4877 = vmatprep.subr.mxu0 0.0
    %4878 = vmatpush1.msra.mxu0 0.0
    %4879 = vmatprep.subr.mxu0 0.0
    %4880 = vmatpush1.msra.mxu0 0.0
    %4881 = vmatprep.subr.mxu0 0.0
    %4882 = vmatpush1.msra.mxu0 0.0
    %4883 = vmatprep.mubr.f32.mxu0 %v4633
    %4884 = vmatmul.mubr.f32.gmra.mrb[0].mxu0 %v4627
    %v4885 = vpop.f32.mrb[0].mxu0
    %v4886 = vadd.f32 0.0, %v4885
    %v4887 = vpop.f32.mrb[0].mxu0
    %v4888 = vadd.f32 0.0, %v4887
    %4889 = vmatprep.mubr.f32.mxu0 %v4636
    %4890 = vmatmul.mubr.f32.gmra.mrb[0].mxu0 %v4629
    %v4891 = vpop.f32.mrb[0].mxu0
    %v4892 = vadd.f32 0.0, %v4891
    %v4893 = vpop.f32.mrb[0].mxu0
    %v4894 = vadd.f32 0.0, %v4893
    %4895 = vdwg.mxu0
    %4896 = vmatprep.subr.mxu0 %v4238
    %4897 = vmatpush1.msra.mxu0 %v4237
    %4898 = vmatprep.subr.mxu0 %v4251
    %4899 = vmatpush1.msra.mxu0 %v4250
    %4900 = vmatprep.subr.mxu0 %v4264
    %4901 = vmatpush1.msra.mxu0 %v4263
    %4902 = vmatprep.subr.mxu0 %v4277
    %4903 = vmatpush1.msra.mxu0 %v4276
    %4904 = vmatprep.subr.mxu0 %v4290
    %4905 = vmatpush1.msra.mxu0 %v4289
    %4906 = vmatprep.subr.mxu0 %v4303
    %4907 = vmatpush1.msra.mxu0 %v4302
    %4908 = vmatprep.subr.mxu0 %v4316
    %4909 = vmatpush1.msra.mxu0 %v4315
    %4910 = vmatprep.subr.mxu0 %v4329
    %4911 = vmatpush1.msra.mxu0 %v4328
    %4912 = vmatprep.subr.mxu0 %v4342
    %4913 = vmatpush1.msra.mxu0 %v4341
    %4914 = vmatprep.subr.mxu0 %v4355
    %4915 = vmatpush1.msra.mxu0 %v4354
    %4916 = vmatprep.subr.mxu0 %v4368
    %4917 = vmatpush1.msra.mxu0 %v4367
    %4918 = vmatprep.subr.mxu0 %v4381
    %4919 = vmatpush1.msra.mxu0 %v4380
    %4920 = vmatprep.subr.mxu0 %v4556
    %4921 = vmatpush1.msra.mxu0 %v4555
    %4922 = vmatprep.subr.mxu0 %v4569
    %4923 = vmatpush1.msra.mxu0 %v4568
    %4924 = vmatprep.subr.mxu0 %v4582
    %4925 = vmatpush1.msra.mxu0 %v4581
    %4926 = vmatprep.subr.mxu0 %v4595
    %4927 = vmatpush1.msra.mxu0 %v4594
    %4928 = vmatprep.subr.mxu0 %v4608
    %4929 = vmatpush1.msra.mxu0 %v4607
    %4930 = vmatprep.subr.mxu0 %v4621
    %4931 = vmatpush1.msra.mxu0 %v4620
    %4932 = vmatprep.subr.mxu0 %v4652
    %4933 = vmatpush1.msra.mxu0 %v4650
    %4934 = vmatprep.subr.mxu0 0.0
    %4935 = vmatpush1.msra.mxu0 0.0
    %4936 = vmatprep.subr.mxu0 0.0
    %4937 = vmatpush1.msra.mxu0 0.0
    %4938 = vmatprep.subr.mxu0 0.0
    %4939 = vmatpush1.msra.mxu0 0.0
    %4940 = vmatprep.subr.mxu0 0.0
    %4941 = vmatpush1.msra.mxu0 0.0
    %4942 = vmatprep.subr.mxu0 0.0
    %4943 = vmatpush1.msra.mxu0 0.0
    %4944 = vmatprep.subr.mxu0 0.0
    %4945 = vmatpush1.msra.mxu0 0.0
    %4946 = vmatprep.subr.mxu0 0.0
    %4947 = vmatpush1.msra.mxu0 0.0
    %4948 = vmatprep.subr.mxu0 0.0
    %4949 = vmatpush1.msra.mxu0 0.0
    %4950 = vmatprep.subr.mxu0 0.0
    %4951 = vmatpush1.msra.mxu0 0.0
    %4952 = vmatprep.subr.mxu0 0.0
    %4953 = vmatpush1.msra.mxu0 0.0
    %4954 = vmatprep.subr.mxu0 0.0
    %4955 = vmatpush1.msra.mxu0 0.0
    %4956 = vmatprep.subr.mxu0 0.0
    %4957 = vmatpush1.msra.mxu0 0.0
    %4958 = vmatprep.subr.mxu0 0.0
    %4959 = vmatpush1.msra.mxu0 0.0
    %4960 = vmatprep.mubr.f32.mxu0 %v4633
    %4961 = vmatmul.mubr.f32.gmra.mrb[0].mxu0 %v4627
    %v4962 = vpop.f32.mrb[0].mxu0
    %v4963 = vadd.f32 0.0, %v4962
    %v4964 = vpop.f32.mrb[0].mxu0
    %v4965 = vadd.f32 0.0, %v4964
    %4966 = vmatprep.mubr.f32.mxu0 %v4636
    %4967 = vmatmul.mubr.f32.gmra.mrb[0].mxu0 %v4629
    %v4968 = vpop.f32.mrb[0].mxu0
    %v4969 = vadd.f32 0.0, %v4968
    %v4970 = vpop.f32.mrb[0].mxu0
    %v4971 = vadd.f32 0.0, %v4970
    %4972 = vdwg.mxu0
    %4973 = vmatprep.subr.mxu0 %v4240
    %4974 = vmatpush1.msra.mxu0 %v4239
    %4975 = vmatprep.subr.mxu0 %v4253
    %4976 = vmatpush1.msra.mxu0 %v4252
    %4977 = vmatprep.subr.mxu0 %v4266
    %4978 = vmatpush1.msra.mxu0 %v4265
    %4979 = vmatprep.subr.mxu0 %v4279
    %4980 = vmatpush1.msra.mxu0 %v4278
    %4981 = vmatprep.subr.mxu0 %v4292
    %4982 = vmatpush1.msra.mxu0 %v4291
    %4983 = vmatprep.subr.mxu0 %v4305
    %4984 = vmatpush1.msra.mxu0 %v4304
    %4985 = vmatprep.subr.mxu0 %v4318
    %4986 = vmatpush1.msra.mxu0 %v4317
    %4987 = vmatprep.subr.mxu0 %v4331
    %4988 = vmatpush1.msra.mxu0 %v4330
    %4989 = vmatprep.subr.mxu0 %v4344
    %4990 = vmatpush1.msra.mxu0 %v4343
    %4991 = vmatprep.subr.mxu0 %v4357
    %4992 = vmatpush1.msra.mxu0 %v4356
    %4993 = vmatprep.subr.mxu0 %v4370
    %4994 = vmatpush1.msra.mxu0 %v4369
    %4995 = vmatprep.subr.mxu0 %v4383
    %4996 = vmatpush1.msra.mxu0 %v4382
    %4997 = vmatprep.subr.mxu0 %v4558
    %4998 = vmatpush1.msra.mxu0 %v4557
    %4999 = vmatprep.subr.mxu0 %v4571
    %5000 = vmatpush1.msra.mxu0 %v4570
    %5001 = vmatprep.subr.mxu0 %v4584
    %5002 = vmatpush1.msra.mxu0 %v4583
    %5003 = vmatprep.subr.mxu0 %v4597
    %5004 = vmatpush1.msra.mxu0 %v4596
    %5005 = vmatprep.subr.mxu0 %v4610
    %5006 = vmatpush1.msra.mxu0 %v4609
    %5007 = vmatprep.subr.mxu0 %v4623
    %5008 = vmatpush1.msra.mxu0 %v4622
    %5009 = vmatprep.subr.mxu0 %v4656
    %5010 = vmatpush1.msra.mxu0 %v4654
    %5011 = vmatprep.subr.mxu0 0.0
    %5012 = vmatpush1.msra.mxu0 0.0
    %5013 = vmatprep.subr.mxu0 0.0
    %5014 = vmatpush1.msra.mxu0 0.0
    %5015 = vmatprep.subr.mxu0 0.0
    %5016 = vmatpush1.msra.mxu0 0.0
    %5017 = vmatprep.subr.mxu0 0.0
    %5018 = vmatpush1.msra.mxu0 0.0
    %5019 = vmatprep.subr.mxu0 0.0
    %5020 = vmatpush1.msra.mxu0 0.0
    %5021 = vmatprep.subr.mxu0 0.0
    %5022 = vmatpush1.msra.mxu0 0.0
    %5023 = vmatprep.subr.mxu0 0.0
    %5024 = vmatpush1.msra.mxu0 0.0
    %5025 = vmatprep.subr.mxu0 0.0
    %5026 = vmatpush1.msra.mxu0 0.0
    %5027 = vmatprep.subr.mxu0 0.0
    %5028 = vmatpush1.msra.mxu0 0.0
    %5029 = vmatprep.subr.mxu0 0.0
    %5030 = vmatpush1.msra.mxu0 0.0
    %5031 = vmatprep.subr.mxu0 0.0
    %5032 = vmatpush1.msra.mxu0 0.0
    %5033 = vmatprep.subr.mxu0 0.0
    %5034 = vmatpush1.msra.mxu0 0.0
    %5035 = vmatprep.subr.mxu0 0.0
    %5036 = vmatpush1.msra.mxu0 0.0
    %5037 = vmatprep.mubr.f32.mxu0 %v4633
    %5038 = vmatmul.mubr.f32.gmra.mrb[0].mxu0 %v4627
    %v5039 = vpop.f32.mrb[0].mxu0
    %v5040 = vadd.f32 0.0, %v5039
    %v5041 = vpop.f32.mrb[0].mxu0
    %v5042 = vadd.f32 0.0, %v5041
    %5043 = vmatprep.mubr.f32.mxu0 %v4636
    %5044 = vmatmul.mubr.f32.gmra.mrb[0].mxu0 %v4629
    %v5045 = vpop.f32.mrb[0].mxu0
    %v5046 = vadd.f32 0.0, %v5045
    %v5047 = vpop.f32.mrb[0].mxu0
    %v5048 = vadd.f32 0.0, %v5047
    %5049 = vdwg.mxu0
    %5050 = vmatprep.subr.mxu0 %v4242
    %5051 = vmatpush1.msra.mxu0 %v4241
    %5052 = vmatprep.subr.mxu0 %v4255
    %5053 = vmatpush1.msra.mxu0 %v4254
    %5054 = vmatprep.subr.mxu0 %v4268
    %5055 = vmatpush1.msra.mxu0 %v4267
    %5056 = vmatprep.subr.mxu0 %v4281
    %5057 = vmatpush1.msra.mxu0 %v4280
    %5058 = vmatprep.subr.mxu0 %v4294
    %5059 = vmatpush1.msra.mxu0 %v4293
    %5060 = vmatprep.subr.mxu0 %v4307
    %5061 = vmatpush1.msra.mxu0 %v4306
    %5062 = vmatprep.subr.mxu0 %v4320
    %5063 = vmatpush1.msra.mxu0 %v4319
    %5064 = vmatprep.subr.mxu0 %v4333
    %5065 = vmatpush1.msra.mxu0 %v4332
    %5066 = vmatprep.subr.mxu0 %v4346
    %5067 = vmatpush1.msra.mxu0 %v4345
    %5068 = vmatprep.subr.mxu0 %v4359
    %5069 = vmatpush1.msra.mxu0 %v4358
    %5070 = vmatprep.subr.mxu0 %v4372
    %5071 = vmatpush1.msra.mxu0 %v4371
    %5072 = vmatprep.subr.mxu0 %v4385
    %5073 = vmatpush1.msra.mxu0 %v4384
    %5074 = vmatprep.subr.mxu0 %v4560
    %5075 = vmatpush1.msra.mxu0 %v4559
    %5076 = vmatprep.subr.mxu0 %v4573
    %5077 = vmatpush1.msra.mxu0 %v4572
    %5078 = vmatprep.subr.mxu0 %v4586
    %5079 = vmatpush1.msra.mxu0 %v4585
    %5080 = vmatprep.subr.mxu0 %v4599
    %5081 = vmatpush1.msra.mxu0 %v4598
    %5082 = vmatprep.subr.mxu0 %v4612
    %5083 = vmatpush1.msra.mxu0 %v4611
    %5084 = vmatprep.subr.mxu0 %v4625
    %5085 = vmatpush1.msra.mxu0 %v4624
    %5086 = vmatprep.subr.mxu0 %v4661
    %5087 = vmatpush1.msra.mxu0 %v4659
    %5088 = vmatprep.subr.mxu0 0.0
    %5089 = vmatpush1.msra.mxu0 0.0
    %5090 = vmatprep.subr.mxu0 0.0
    %5091 = vmatpush1.msra.mxu0 0.0
    %5092 = vmatprep.subr.mxu0 0.0
    %5093 = vmatpush1.msra.mxu0 0.0
    %5094 = vmatprep.subr.mxu0 0.0
    %5095 = vmatpush1.msra.mxu0 0.0
    %5096 = vmatprep.subr.mxu0 0.0
    %5097 = vmatpush1.msra.mxu0 0.0
    %5098 = vmatprep.subr.mxu0 0.0
    %5099 = vmatpush1.msra.mxu0 0.0
    %5100 = vmatprep.subr.mxu0 0.0
    %5101 = vmatpush1.msra.mxu0 0.0
    %5102 = vmatprep.subr.mxu0 0.0
    %5103 = vmatpush1.msra.mxu0 0.0
    %5104 = vmatprep.subr.mxu0 0.0
    %5105 = vmatpush1.msra.mxu0 0.0
    %5106 = vmatprep.subr.mxu0 0.0
    %5107 = vmatpush1.msra.mxu0 0.0
    %5108 = vmatprep.subr.mxu0 0.0
    %5109 = vmatpush1.msra.mxu0 0.0
    %5110 = vmatprep.subr.mxu0 0.0
    %5111 = vmatpush1.msra.mxu0 0.0
    %5112 = vmatprep.subr.mxu0 0.0
    %5113 = vmatpush1.msra.mxu0 0.0
    %5114 = vmatprep.mubr.f32.mxu0 %v4633
    %5115 = vmatmul.mubr.f32.gmra.mrb[0].mxu0 %v4627
    %v5116 = vpop.f32.mrb[0].mxu0
    %v5117 = vadd.f32 0.0, %v5116
    %v5118 = vpop.f32.mrb[0].mxu0
    %v5119 = vadd.f32 0.0, %v5118
    %5120 = vmatprep.mubr.f32.mxu0 %v4636
    %5121 = vmatmul.mubr.f32.gmra.mrb[0].mxu0 %v4629
    %v5122 = vpop.f32.mrb[0].mxu0
    %v5123 = vadd.f32 0.0, %v5122
    %v5124 = vpop.f32.mrb[0].mxu0
    %v5125 = vadd.f32 0.0, %v5124
    %5126 = vdwg.mxu0
    %5127 = vmatprep.subr.mxu0 0.0
    %5128 = vmatpush1.msra.mxu0 %v4243
    %5129 = vmatprep.subr.mxu0 0.0
    %5130 = vmatpush1.msra.mxu0 %v4256
    %5131 = vmatprep.subr.mxu0 0.0
    %5132 = vmatpush1.msra.mxu0 %v4269
    %5133 = vmatprep.subr.mxu0 0.0
    %5134 = vmatpush1.msra.mxu0 %v4282
    %5135 = vmatprep.subr.mxu0 0.0
    %5136 = vmatpush1.msra.mxu0 %v4295
    %5137 = vmatprep.subr.mxu0 0.0
    %5138 = vmatpush1.msra.mxu0 %v4308
    %5139 = vmatprep.subr.mxu0 0.0
    %5140 = vmatpush1.msra.mxu0 %v4321
    %5141 = vmatprep.subr.mxu0 0.0
    %5142 = vmatpush1.msra.mxu0 %v4334
    %5143 = vmatprep.subr.mxu0 0.0
    %5144 = vmatpush1.msra.mxu0 %v4347
    %5145 = vmatprep.subr.mxu0 0.0
    %5146 = vmatpush1.msra.mxu0 %v4360
    %5147 = vmatprep.subr.mxu0 0.0
    %5148 = vmatpush1.msra.mxu0 %v4373
    %5149 = vmatprep.subr.mxu0 0.0
    %5150 = vmatpush1.msra.mxu0 %v4386
    %5151 = vmatprep.subr.mxu0 0.0
    %5152 = vmatpush1.msra.mxu0 %v4561
    %5153 = vmatprep.subr.mxu0 0.0
    %5154 = vmatpush1.msra.mxu0 %v4574
    %5155 = vmatprep.subr.mxu0 0.0
    %5156 = vmatpush1.msra.mxu0 %v4587
    %5157 = vmatprep.subr.mxu0 0.0
    %5158 = vmatpush1.msra.mxu0 %v4600
    %5159 = vmatprep.subr.mxu0 0.0
    %5160 = vmatpush1.msra.mxu0 %v4613
    %5161 = vmatprep.subr.mxu0 0.0
    %5162 = vmatpush1.msra.mxu0 %v4626
    %5163 = vmatprep.subr.mxu0 0.0
    %5164 = vmatpush1.msra.mxu0 %v4663
    %5165 = vmatprep.subr.mxu0 0.0
    %5166 = vmatpush1.msra.mxu0 0.0
    %5167 = vmatprep.subr.mxu0 0.0
    %5168 = vmatpush1.msra.mxu0 0.0
    %5169 = vmatprep.subr.mxu0 0.0
    %5170 = vmatpush1.msra.mxu0 0.0
    %5171 = vmatprep.subr.mxu0 0.0
    %5172 = vmatpush1.msra.mxu0 0.0
    %5173 = vmatprep.subr.mxu0 0.0
    %5174 = vmatpush1.msra.mxu0 0.0
    %5175 = vmatprep.subr.mxu0 0.0
    %5176 = vmatpush1.msra.mxu0 0.0
    %5177 = vmatprep.subr.mxu0 0.0
    %5178 = vmatpush1.msra.mxu0 0.0
    %5179 = vmatprep.subr.mxu0 0.0
    %5180 = vmatpush1.msra.mxu0 0.0
    %5181 = vmatprep.subr.mxu0 0.0
    %5182 = vmatpush1.msra.mxu0 0.0
    %5183 = vmatprep.subr.mxu0 0.0
    %5184 = vmatpush1.msra.mxu0 0.0
    %5185 = vmatprep.subr.mxu0 0.0
    %5186 = vmatpush1.msra.mxu0 0.0
    %5187 = vmatprep.subr.mxu0 0.0
    %5188 = vmatpush1.msra.mxu0 0.0
    %5189 = vmatprep.subr.mxu0 0.0
    %5190 = vmatpush1.msra.mxu0 0.0
    %5191 = vmatprep.mubr.f32.mxu0 %v4633
    %5192 = vmatmul.mubr.f32.gmra.mrb[0].mxu0 %v4627
    %v5193 = vpop.f32.mrb[0].mxu0
    %v5194 = vadd.f32 0.0, %v5193
    %v5195 = vpop.f32.mrb[0].mxu0
    %5196 = vmatprep.mubr.f32.mxu0 %v4636
    %5197 = vmatmul.mubr.f32.gmra.mrb[0].mxu0 %v4629
    %v5198 = vpop.f32.mrb[0].mxu0
    %v5199 = vadd.f32 0.0, %v5198
    %v5200 = vpop.f32.mrb[0].mxu0
    %5201 = vdwg.mxu0
    %5228 = vrot.lane.b32.xlu0 %v4732, 126
    %v5229 = vpop.permute.xlu0 %5228
    %5230 = vrot.lane.b32.xlu0 %v4734, 126
    %v5231 = vpop.permute.xlu0 %5230
    %5232 = vrot.lane.b32.xlu0 %v4809, 126
    %v5233 = vpop.permute.xlu0 %5232
    %5234 = vrot.lane.b32.xlu0 %v4811, 126
    %v5235 = vpop.permute.xlu0 %5234
    %5236 = vrot.lane.b32.xlu0 %v4886, 126
    %v5237 = vpop.permute.xlu0 %5236
    %5238 = vrot.lane.b32.xlu0 %v4888, 126
    %v5239 = vpop.permute.xlu0 %5238
    %5240 = vrot.lane.b32.xlu0 %v4963, 126
    %v5241 = vpop.permute.xlu0 %5240
    %5242 = vrot.lane.b32.xlu0 %v4965, 126
    %v5243 = vpop.permute.xlu0 %5242
    %5244 = vrot.lane.b32.xlu0 %v5040, 126
    %v5245 = vpop.permute.xlu0 %5244
    %5246 = vrot.lane.b32.xlu0 %v5042, 126
    %v5247 = vpop.permute.xlu0 %5246
    %5248 = vrot.lane.b32.xlu0 %v5117, 126
    %v5249 = vpop.permute.xlu0 %5248
    %5250 = vrot.lane.b32.xlu0 %v5119, 126
    %v5251 = vpop.permute.xlu0 %5250
    %5252 = vrot.lane.b32.xlu0 %v5194, 126
    %v5253 = vpop.permute.xlu0 %5252
    %5254 = vrot.lane.b32.xlu0 %v4738, 126
    %v5255 = vpop.permute.xlu0 %5254
    %5256 = vrot.lane.b32.xlu0 %v4740, 126
    %v5257 = vpop.permute.xlu0 %5256
    %5258 = vrot.lane.b32.xlu0 %v4815, 126
    %v5259 = vpop.permute.xlu0 %5258
    %5260 = vrot.lane.b32.xlu0 %v4817, 126
    %v5261 = vpop.permute.xlu0 %5260
    %5262 = vrot.lane.b32.xlu0 %v4892, 126
    %v5263 = vpop.permute.xlu0 %5262
    %5264 = vrot.lane.b32.xlu0 %v4894, 126
    %v5265 = vpop.permute.xlu0 %5264
    %5266 = vrot.lane.b32.xlu0 %v4969, 126
    %v5267 = vpop.permute.xlu0 %5266
    %5268 = vrot.lane.b32.xlu0 %v4971, 126
    %v5269 = vpop.permute.xlu0 %5268
    %5270 = vrot.lane.b32.xlu0 %v5046, 126
    %v5271 = vpop.permute.xlu0 %5270
    %5272 = vrot.lane.b32.xlu0 %v5048, 126
    %v5273 = vpop.permute.xlu0 %5272
    %5274 = vrot.lane.b32.xlu0 %v5123, 126
    %v5275 = vpop.permute.xlu0 %5274
    %5276 = vrot.lane.b32.xlu0 %v5125, 126
    %v5277 = vpop.permute.xlu0 %5276
    %5278 = vrot.lane.b32.xlu0 %v5199, 126
    %v5279 = vpop.permute.xlu0 %5278
    %v5280 = vsel %vm147, %v5229, %v5231
    %v5281 = vsel %vm147, %v5231, %v5233
    %v5282 = vsel %vm147, %v5233, %v5235
    %v5283 = vsel %vm147, %v5235, %v5237
    %v5284 = vsel %vm147, %v5237, %v5239
    %v5285 = vsel %vm147, %v5239, %v5241
    %v5286 = vsel %vm147, %v5241, %v5243
    %v5287 = vsel %vm147, %v5243, %v5245
    %v5288 = vsel %vm147, %v5245, %v5247
    %v5289 = vsel %vm147, %v5247, %v5249
    %v5290 = vsel %vm147, %v5249, %v5251
    %v5291 = vsel %vm147, %v5251, %v5253
    %v5292 = vsel %vm147, %v5255, %v5257
    %v5293 = vsel %vm147, %v5257, %v5259
    %v5294 = vsel %vm147, %v5259, %v5261
    %v5295 = vsel %vm147, %v5261, %v5263
    %v5296 = vsel %vm147, %v5263, %v5265
    %v5297 = vsel %vm147, %v5265, %v5267
    %v5298 = vsel %vm147, %v5267, %v5269
    %v5299 = vsel %vm147, %v5269, %v5271
    %v5300 = vsel %vm147, %v5271, %v5273
    %v5301 = vsel %vm147, %v5273, %v5275
    %v5302 = vsel %vm147, %v5275, %v5277
    %v5303 = vsel %vm147, %v5277, %v5279
    %5330 = vrot.lane.b32.xlu0 %v4732, 30
    %v5331 = vpop.permute.xlu0 %5330
    %5332 = vrot.lane.b32.xlu0 %v4738, 30
    %v5333 = vpop.permute.xlu0 %5332
    %v5336 = vsel %vm164, %v5253, %v5331
    %v5337 = vsel %vm164, %v5279, %v5333
    %v5338 = vmax.f32 %v4732, %v5280
    %v5339 = vmax.f32 %v4734, %v5281
    %v5340 = vmax.f32 %v4809, %v5282
    %v5341 = vmax.f32 %v4811, %v5283
    %v5342 = vmax.f32 %v4886, %v5284
    %v5343 = vmax.f32 %v4888, %v5285
    %v5344 = vmax.f32 %v4963, %v5286
    %v5345 = vmax.f32 %v4965, %v5287
    %v5346 = vmax.f32 %v5040, %v5288
    %v5347 = vmax.f32 %v5042, %v5289
    %v5348 = vmax.f32 %v5117, %v5290
    %v5349 = vmax.f32 %v5119, %v5291
    %v5350 = vmax.f32 %v5194, %v5336
    %v5351 = vmax.f32 %v4738, %v5292
    %v5352 = vmax.f32 %v4740, %v5293
    %v5353 = vmax.f32 %v4815, %v5294
    %v5354 = vmax.f32 %v4817, %v5295
    %v5355 = vmax.f32 %v4892, %v5296
    %v5356 = vmax.f32 %v4894, %v5297
    %v5357 = vmax.f32 %v4969, %v5298
    %v5358 = vmax.f32 %v4971, %v5299
    %v5359 = vmax.f32 %v5046, %v5300
    %v5360 = vmax.f32 %v5048, %v5301
    %v5361 = vmax.f32 %v5123, %v5302
    %v5362 = vmax.f32 %v5125, %v5303
    %v5363 = vmax.f32 %v5199, %v5337
    %5364 = vrot.lane.b32.xlu0 %v4732, 72
    %v5365 = vpop.permute.xlu0 %5364
    %5366 = vrot.lane.b32.xlu0 %v4734, 72
    %v5367 = vpop.permute.xlu0 %5366
    %5368 = vrot.lane.b32.xlu0 %v4809, 72
    %v5369 = vpop.permute.xlu0 %5368
    %5370 = vrot.lane.b32.xlu0 %v4811, 72
    %v5371 = vpop.permute.xlu0 %5370
    %5372 = vrot.lane.b32.xlu0 %v4886, 72
    %v5373 = vpop.permute.xlu0 %5372
    %5374 = vrot.lane.b32.xlu0 %v4888, 72
    %v5375 = vpop.permute.xlu0 %5374
    %5376 = vrot.lane.b32.xlu0 %v4963, 72
    %v5377 = vpop.permute.xlu0 %5376
    %5378 = vrot.lane.b32.xlu0 %v4965, 72
    %v5379 = vpop.permute.xlu0 %5378
    %5380 = vrot.lane.b32.xlu0 %v5040, 72
    %v5381 = vpop.permute.xlu0 %5380
    %5382 = vrot.lane.b32.xlu0 %v5042, 72
    %v5383 = vpop.permute.xlu0 %5382
    %5384 = vrot.lane.b32.xlu0 %v5117, 72
    %v5385 = vpop.permute.xlu0 %5384
    %5386 = vrot.lane.b32.xlu0 %v5119, 72
    %v5387 = vpop.permute.xlu0 %5386
    %5388 = vrot.lane.b32.xlu0 %v5194, 72
    %v5389 = vpop.permute.xlu0 %5388
    %5390 = vrot.lane.b32.xlu0 %v4738, 72
    %v5391 = vpop.permute.xlu0 %5390
    %5392 = vrot.lane.b32.xlu0 %v4740, 72
    %v5393 = vpop.permute.xlu0 %5392
    %5394 = vrot.lane.b32.xlu0 %v4815, 72
    %v5395 = vpop.permute.xlu0 %5394
    %5396 = vrot.lane.b32.xlu0 %v4817, 72
    %v5397 = vpop.permute.xlu0 %5396
    %5398 = vrot.lane.b32.xlu0 %v4892, 72
    %v5399 = vpop.permute.xlu0 %5398
    %5400 = vrot.lane.b32.xlu0 %v4894, 72
    %v5401 = vpop.permute.xlu0 %5400
    %5402 = vrot.lane.b32.xlu0 %v4969, 72
    %v5403 = vpop.permute.xlu0 %5402
    %5404 = vrot.lane.b32.xlu0 %v4971, 72
    %v5405 = vpop.permute.xlu0 %5404
    %5406 = vrot.lane.b32.xlu0 %v5046, 72
    %v5407 = vpop.permute.xlu0 %5406
    %5408 = vrot.lane.b32.xlu0 %v5048, 72
    %v5409 = vpop.permute.xlu0 %5408
    %5410 = vrot.lane.b32.xlu0 %v5123, 72
    %v5411 = vpop.permute.xlu0 %5410
    %5412 = vrot.lane.b32.xlu0 %v5125, 72
    %v5413 = vpop.permute.xlu0 %5412
    %5414 = vrot.lane.b32.xlu0 %v5199, 72
    %v5415 = vpop.permute.xlu0 %5414
    %v5416 = vsel %vm513, %v5365, %v5367
    %v5417 = vsel %vm513, %v5367, %v5369
    %v5418 = vsel %vm513, %v5369, %v5371
    %v5419 = vsel %vm513, %v5371, %v5373
    %v5420 = vsel %vm513, %v5373, %v5375
    %v5421 = vsel %vm513, %v5375, %v5377
    %v5422 = vsel %vm513, %v5377, %v5379
    %v5423 = vsel %vm513, %v5379, %v5381
    %v5424 = vsel %vm513, %v5381, %v5383
    %v5425 = vsel %vm513, %v5383, %v5385
    %v5426 = vsel %vm513, %v5385, %v5387
    %v5427 = vsel %vm513, %v5387, %v5389
    %v5428 = vsel %vm513, %v5391, %v5393
    %v5429 = vsel %vm513, %v5393, %v5395
    %v5430 = vsel %vm513, %v5395, %v5397
    %v5431 = vsel %vm513, %v5397, %v5399
    %v5432 = vsel %vm513, %v5399, %v5401
    %v5433 = vsel %vm513, %v5401, %v5403
    %v5434 = vsel %vm513, %v5403, %v5405
    %v5435 = vsel %vm513, %v5405, %v5407
    %v5436 = vsel %vm513, %v5407, %v5409
    %v5437 = vsel %vm513, %v5409, %v5411
    %v5438 = vsel %vm513, %v5411, %v5413
    %v5439 = vsel %vm513, %v5413, %v5415
    %5464 = vrot.lane.b32.xlu0 %v4732, 104
    %v5465 = vpop.permute.xlu0 %5464
    %5466 = vrot.lane.b32.xlu0 %v4738, 104
    %v5467 = vpop.permute.xlu0 %5466
    %v5470 = vsel %vm530, %v5427, %v5465
    %v5471 = vsel %vm530, %v5439, %v5467
    %v5472 = vmax.f32 %v5338, %v5416
    %v5473 = vmax.f32 %v5339, %v5417
    %v5474 = vmax.f32 %v5340, %v5418
    %v5475 = vmax.f32 %v5341, %v5419
    %v5476 = vmax.f32 %v5342, %v5420
    %v5477 = vmax.f32 %v5343, %v5421
    %v5478 = vmax.f32 %v5344, %v5422
    %v5479 = vmax.f32 %v5345, %v5423
    %v5480 = vmax.f32 %v5346, %v5424
    %v5481 = vmax.f32 %v5347, %v5425
    %v5482 = vmax.f32 %v5348, %v5426
    %v5483 = vmax.f32 %v5349, %v5470
    %v5484 = vmax.f32 %v5350, %v5465
    %v5485 = vmax.f32 %v5351, %v5428
    %v5486 = vmax.f32 %v5352, %v5429
    %v5487 = vmax.f32 %v5353, %v5430
    %v5488 = vmax.f32 %v5354, %v5431
    %v5489 = vmax.f32 %v5355, %v5432
    %v5490 = vmax.f32 %v5356, %v5433
    %v5491 = vmax.f32 %v5357, %v5434
    %v5492 = vmax.f32 %v5358, %v5435
    %v5493 = vmax.f32 %v5359, %v5436
    %v5494 = vmax.f32 %v5360, %v5437
    %v5495 = vmax.f32 %v5361, %v5438
    %v5496 = vmax.f32 %v5362, %v5471
    %v5497 = vmax.f32 %v5363, %v5467
    %5498 = vrot.lane.b32.xlu0 %v4732, 70
    %v5499 = vpop.permute.xlu0 %5498
    %5500 = vrot.lane.b32.xlu0 %v4734, 70
    %v5501 = vpop.permute.xlu0 %5500
    %5502 = vrot.lane.b32.xlu0 %v4809, 70
    %v5503 = vpop.permute.xlu0 %5502
    %5504 = vrot.lane.b32.xlu0 %v4811, 70
    %v5505 = vpop.permute.xlu0 %5504
    %5506 = vrot.lane.b32.xlu0 %v4886, 70
    %v5507 = vpop.permute.xlu0 %5506
    %5508 = vrot.lane.b32.xlu0 %v4888, 70
    %v5509 = vpop.permute.xlu0 %5508
    %5510 = vrot.lane.b32.xlu0 %v4963, 70
    %v5511 = vpop.permute.xlu0 %5510
    %5512 = vrot.lane.b32.xlu0 %v4965, 70
    %v5513 = vpop.permute.xlu0 %5512
    %5514 = vrot.lane.b32.xlu0 %v5040, 70
    %v5515 = vpop.permute.xlu0 %5514
    %5516 = vrot.lane.b32.xlu0 %v5042, 70
    %v5517 = vpop.permute.xlu0 %5516
    %5518 = vrot.lane.b32.xlu0 %v5117, 70
    %v5519 = vpop.permute.xlu0 %5518
    %5520 = vrot.lane.b32.xlu0 %v5119, 70
    %v5521 = vpop.permute.xlu0 %5520
    %5522 = vrot.lane.b32.xlu0 %v5194, 70
    %v5523 = vpop.permute.xlu0 %5522
    %5524 = vrot.lane.b32.xlu0 %v4738, 70
    %v5525 = vpop.permute.xlu0 %5524
    %5526 = vrot.lane.b32.xlu0 %v4740, 70
    %v5527 = vpop.permute.xlu0 %5526
    %5528 = vrot.lane.b32.xlu0 %v4815, 70
    %v5529 = vpop.permute.xlu0 %5528
    %5530 = vrot.lane.b32.xlu0 %v4817, 70
    %v5531 = vpop.permute.xlu0 %5530
    %5532 = vrot.lane.b32.xlu0 %v4892, 70
    %v5533 = vpop.permute.xlu0 %5532
    %5534 = vrot.lane.b32.xlu0 %v4894, 70
    %v5535 = vpop.permute.xlu0 %5534
    %5536 = vrot.lane.b32.xlu0 %v4969, 70
    %v5537 = vpop.permute.xlu0 %5536
    %5538 = vrot.lane.b32.xlu0 %v4971, 70
    %v5539 = vpop.permute.xlu0 %5538
    %5540 = vrot.lane.b32.xlu0 %v5046, 70
    %v5541 = vpop.permute.xlu0 %5540
    %5542 = vrot.lane.b32.xlu0 %v5048, 70
    %v5543 = vpop.permute.xlu0 %5542
    %5544 = vrot.lane.b32.xlu0 %v5123, 70
    %v5545 = vpop.permute.xlu0 %5544
    %5546 = vrot.lane.b32.xlu0 %v5125, 70
    %v5547 = vpop.permute.xlu0 %5546
    %5548 = vrot.lane.b32.xlu0 %v5199, 70
    %v5549 = vpop.permute.xlu0 %5548
    %v5550 = vsel %vm603, %v5499, %v5501
    %v5551 = vsel %vm603, %v5501, %v5503
    %v5552 = vsel %vm603, %v5503, %v5505
    %v5553 = vsel %vm603, %v5505, %v5507
    %v5554 = vsel %vm603, %v5507, %v5509
    %v5555 = vsel %vm603, %v5509, %v5511
    %v5556 = vsel %vm603, %v5511, %v5513
    %v5557 = vsel %vm603, %v5513, %v5515
    %v5558 = vsel %vm603, %v5515, %v5517
    %v5559 = vsel %vm603, %v5517, %v5519
    %v5560 = vsel %vm603, %v5519, %v5521
    %v5561 = vsel %vm603, %v5521, %v5523
    %v5562 = vsel %vm603, %v5525, %v5527
    %v5563 = vsel %vm603, %v5527, %v5529
    %v5564 = vsel %vm603, %v5529, %v5531
    %v5565 = vsel %vm603, %v5531, %v5533
    %v5566 = vsel %vm603, %v5533, %v5535
    %v5567 = vsel %vm603, %v5535, %v5537
    %v5568 = vsel %vm603, %v5537, %v5539
    %v5569 = vsel %vm603, %v5539, %v5541
    %v5570 = vsel %vm603, %v5541, %v5543
    %v5571 = vsel %vm603, %v5543, %v5545
    %v5572 = vsel %vm603, %v5545, %v5547
    %v5573 = vsel %vm603, %v5547, %v5549
    %5598 = vrot.lane.b32.xlu0 %v4732, 102
    %v5599 = vpop.permute.xlu0 %5598
    %5600 = vrot.lane.b32.xlu0 %v4738, 102
    %v5601 = vpop.permute.xlu0 %5600
    %v5604 = vsel %vm620, %v5561, %v5599
    %v5605 = vsel %vm620, %v5573, %v5601
    %v5606 = vmax.f32 %v5472, %v5550
    %v5607 = vmax.f32 %v5473, %v5551
    %v5608 = vmax.f32 %v5474, %v5552
    %v5609 = vmax.f32 %v5475, %v5553
    %v5610 = vmax.f32 %v5476, %v5554
    %v5611 = vmax.f32 %v5477, %v5555
    %v5612 = vmax.f32 %v5478, %v5556
    %v5613 = vmax.f32 %v5479, %v5557
    %v5614 = vmax.f32 %v5480, %v5558
    %v5615 = vmax.f32 %v5481, %v5559
    %v5616 = vmax.f32 %v5482, %v5560
    %v5617 = vmax.f32 %v5483, %v5604
    %v5618 = vmax.f32 %v5484, %v5599
    %v5619 = vmax.f32 %v5485, %v5562
    %v5620 = vmax.f32 %v5486, %v5563
    %v5621 = vmax.f32 %v5487, %v5564
    %v5622 = vmax.f32 %v5488, %v5565
    %v5623 = vmax.f32 %v5489, %v5566
    %v5624 = vmax.f32 %v5490, %v5567
    %v5625 = vmax.f32 %v5491, %v5568
    %v5626 = vmax.f32 %v5492, %v5569
    %v5627 = vmax.f32 %v5493, %v5570
    %v5628 = vmax.f32 %v5494, %v5571
    %v5629 = vmax.f32 %v5495, %v5572
    %v5630 = vmax.f32 %v5496, %v5605
    %v5631 = vmax.f32 %v5497, %v5601
    %v5632 = vld [vmem:[%s4] sm:$0xff]
    %v5633 = vld [vmem:[%s4 + $0x8] sm:$0xff]
    %5635 = vset.pattern.permute.xlu0 0
    %5636 = vperm.xlu0 %5635, %v5632
    %v5637 = vpop.permute.xlu0 %5636
    %5640 = vset.pattern.permute.xlu0 0
    %5641 = vperm.xlu0 %5640, %v5633
    %v5642 = vpop.permute.xlu0 %5641
    %v5644 = vadd.f32 %v5606, %v5637
    %v5645 = vadd.f32 %v5607, %v5637
    %v5646 = vadd.f32 %v5608, %v5637
    %v5647 = vadd.f32 %v5609, %v5637
    %v5648 = vadd.f32 %v5610, %v5637
    %v5649 = vadd.f32 %v5611, %v5637
    %v5650 = vadd.f32 %v5612, %v5637
    %v5651 = vadd.f32 %v5613, %v5637
    %v5652 = vadd.f32 %v5614, %v5637
    %v5653 = vadd.f32 %v5615, %v5637
    %v5654 = vadd.f32 %v5616, %v5637
    %v5655 = vadd.f32 %v5617, %v5637
    %v5656 = vadd.f32 %v5618, %v5637
    %v5657 = vadd.f32 %v5619, %v5642
    %v5658 = vadd.f32 %v5620, %v5642
    %v5659 = vadd.f32 %v5621, %v5642
    %v5660 = vadd.f32 %v5622, %v5642
    %v5661 = vadd.f32 %v5623, %v5642
    %v5662 = vadd.f32 %v5624, %v5642
    %v5663 = vadd.f32 %v5625, %v5642
    %v5664 = vadd.f32 %v5626, %v5642
    %v5665 = vadd.f32 %v5627, %v5642
    %v5666 = vadd.f32 %v5628, %v5642
    %v5667 = vadd.f32 %v5629, %v5642
    %v5668 = vadd.f32 %v5630, %v5642
    %v5669 = vadd.f32 %v5631, %v5642
    %v5670 = vmax.f32 %v5644, 0.0
    %v5671 = vmax.f32 %v5645, 0.0
    %v5672 = vmax.f32 %v5646, 0.0
    %v5673 = vmax.f32 %v5647, 0.0
    %v5674 = vmax.f32 %v5648, 0.0
    %v5675 = vmax.f32 %v5649, 0.0
    %v5676 = vmax.f32 %v5650, 0.0
    %v5677 = vmax.f32 %v5651, 0.0
    %v5678 = vmax.f32 %v5652, 0.0
    %v5679 = vmax.f32 %v5653, 0.0
    %v5680 = vmax.f32 %v5654, 0.0
    %v5681 = vmax.f32 %v5655, 0.0
    %v5682 = vmax.f32 %v5656, 0.0
    %v5683 = vmax.f32 %v5657, 0.0
    %v5684 = vmax.f32 %v5658, 0.0
    %v5685 = vmax.f32 %v5659, 0.0
    %v5686 = vmax.f32 %v5660, 0.0
    %v5687 = vmax.f32 %v5661, 0.0
    %v5688 = vmax.f32 %v5662, 0.0
    %v5689 = vmax.f32 %v5663, 0.0
    %v5690 = vmax.f32 %v5664, 0.0
    %v5691 = vmax.f32 %v5665, 0.0
    %v5692 = vmax.f32 %v5666, 0.0
    %v5693 = vmax.f32 %v5667, 0.0
    %v5694 = vmax.f32 %v5668, 0.0
    %v5695 = vmax.f32 %v5669, 0.0
    %v5696 = vld [vmem:[#allocation2] sm:$0xff]
    %v5697 = vld [vmem:[#allocation2 + $0x8] sm:$0xff]
    %v5698 = vld [vmem:[#allocation2 + $0x10] sm:$0xff]
    %v5699 = vld [vmem:[#allocation2 + $0x18] sm:$0xff]
    %v5700 = vld [vmem:[#allocation2 + $0x20] sm:$0xff]
    %v5701 = vld [vmem:[#allocation2 + $0x28] sm:$0xff]
    %v5702 = vld [vmem:[#allocation2 + $0x30] sm:$0xff]
    %v5703 = vld [vmem:[#allocation2 + $0x38] sm:$0xff]
    %v5704 = vld [vmem:[#allocation2 + $0x40] sm:$0xff]
    %v5705 = vld [vmem:[#allocation2 + $0x48] sm:$0xff]
    %v5706 = vld [vmem:[#allocation2 + $0x50] sm:$0xff]
    %v5707 = vld [vmem:[#allocation2 + $0x58] sm:$0xff]
    %v5708 = vld [vmem:[#allocation2 + $0x60] sm:$0xff]
    %v5709 = vld [vmem:[#allocation2 + $0x68] sm:$0xff]
    %v5710 = vld [vmem:[#allocation2 + $0x70] sm:$0xff]
    %v5711 = vld [vmem:[#allocation2 + $0x78] sm:$0xff]
    %v5712 = vld [vmem:[#allocation2 + $0x80] sm:$0xff]
    %v5713 = vld [vmem:[#allocation2 + $0x88] sm:$0xff]
    %v5714 = vld [vmem:[#allocation2 + $0x90] sm:$0xff]
    %v5715 = vld [vmem:[#allocation2 + $0x98] sm:$0xff]
    %v5716 = vld [vmem:[#allocation2 + $0xa0] sm:$0xff]
    %v5717 = vld [vmem:[#allocation2 + $0xa8] sm:$0xff]
    %v5718 = vld [vmem:[#allocation2 + $0xb0] sm:$0xff]
    %v5719 = vld [vmem:[#allocation2 + $0xb8] sm:$0xff]
    %v5720 = vld [vmem:[#allocation2 + $0xc0] sm:$0xff]
    %v5721 = vld [vmem:[#allocation2 + $0xc8] sm:$0xff]
    %v5722 = vld [vmem:[#allocation2 + $0xd0] sm:$0xff]
    %v5723 = vld [vmem:[#allocation2 + $0xd8] sm:$0xff]
    %v5724 = vld [vmem:[#allocation2 + $0xe0] sm:$0xff]
    %v5725 = vld [vmem:[#allocation2 + $0xe8] sm:$0xff]
    %v5726 = vld [vmem:[#allocation2 + $0xf0] sm:$0xff]
    %v5727 = vld [vmem:[#allocation2 + $0xf8] sm:$0xff]
    %v5728 = vld [vmem:[#allocation2 + $0x100] sm:$0xff]
    %v5729 = vld [vmem:[#allocation2 + $0x108] sm:$0xff]
    %v5730 = vld [vmem:[#allocation2 + $0x110] sm:$0xff]
    %v5731 = vld [vmem:[#allocation2 + $0x118] sm:$0xff]
    %v5732 = vld [vmem:[#allocation2 + $0x120] sm:$0xff]
    %v5733 = vld [vmem:[#allocation2 + $0x128] sm:$0xff]
    %v5734 = vld [vmem:[#allocation2 + $0x130] sm:$0xff]
    %v5735 = vld [vmem:[#allocation2 + $0x138] sm:$0xff]
    %v5736 = vld [vmem:[#allocation2 + $0x140] sm:$0xff]
    %v5737 = vld [vmem:[#allocation2 + $0x148] sm:$0xff]
    %v5738 = vld [vmem:[#allocation2 + $0x150] sm:$0xff]
    %v5739 = vld [vmem:[#allocation2 + $0x158] sm:$0xff]
    %v5740 = vld [vmem:[#allocation2 + $0x160] sm:$0xff]
    %v5741 = vld [vmem:[#allocation2 + $0x168] sm:$0xff]
    %v5742 = vld [vmem:[#allocation2 + $0x170] sm:$0xff]
    %v5743 = vld [vmem:[#allocation2 + $0x178] sm:$0xff]
    %v5744 = vld [vmem:[#allocation2 + $0x180] sm:$0xff]
    %v5745 = vld [vmem:[#allocation2 + $0x188] sm:$0xff]
    %v5746 = vld [vmem:[#allocation2 + $0x190] sm:$0xff]
    %v5747 = vld [vmem:[#allocation2 + $0x198] sm:$0xff]
    %v5748 = vld [vmem:[#allocation2 + $0x1a0] sm:$0xff]
    %v5749 = vld [vmem:[#allocation2 + $0x1a8] sm:$0xff]
    %v5750 = vld [vmem:[#allocation2 + $0x1b0] sm:$0xff]
    %v5751 = vld [vmem:[#allocation2 + $0x1b8] sm:$0xff]
    %v5752 = vld [vmem:[#allocation2 + $0x1c0] sm:$0xff]
    %v5753 = vld [vmem:[#allocation2 + $0x1c8] sm:$0xff]
    %v5754 = vld [vmem:[#allocation2 + $0x1d0] sm:$0xff]
    %v5755 = vld [vmem:[#allocation2 + $0x1d8] sm:$0xff]
    %v5756 = vld [vmem:[#allocation2 + $0x1e0] sm:$0xff]
    %v5757 = vld [vmem:[#allocation2 + $0x1e8] sm:$0xff]
    %v5758 = vld [vmem:[#allocation2 + $0x1f0] sm:$0xff]
    %v5759 = vld [vmem:[#allocation2 + $0x1f8] sm:$0xff]
    %v5760 = vld [vmem:[#allocation2 + $0x200] sm:$0xff]
    %v5761 = vld [vmem:[#allocation2 + $0x208] sm:$0xff]
    %v5762 = vld [vmem:[#allocation2 + $0x210] sm:$0xff]
    %v5763 = vld [vmem:[#allocation2 + $0x218] sm:$0xff]
    %v5764 = vld [vmem:[#allocation2 + $0x220] sm:$0xff]
    %v5765 = vld [vmem:[#allocation2 + $0x228] sm:$0xff]
    %v5766 = vld [vmem:[#allocation2 + $0x230] sm:$0xff]
    %v5767 = vld [vmem:[#allocation2 + $0x238] sm:$0xff]
    %v5768 = vld [vmem:[#allocation2 + $0x240] sm:$0xff]
    %v5769 = vld [vmem:[#allocation2 + $0x248] sm:$0xff]
    %v5770 = vld [vmem:[#allocation2 + $0x250] sm:$0xff]
    %v5771 = vld [vmem:[#allocation2 + $0x258] sm:$0xff]
    %v5772 = vld [vmem:[#allocation2 + $0x260] sm:$0xff]
    %v5773 = vld [vmem:[#allocation2 + $0x268] sm:$0xff]
    %v5774 = vld [vmem:[#allocation2 + $0x270] sm:$0xff]
    %v5775 = vld [vmem:[#allocation2 + $0x278] sm:$0xff]
    %v5776 = vld [vmem:[#allocation2 + $0x280] sm:$0xff]
    %v5777 = vld [vmem:[#allocation2 + $0x288] sm:$0xff]
    %v5778 = vld [vmem:[#allocation2 + $0x290] sm:$0xff]
    %v5779 = vld [vmem:[#allocation2 + $0x298] sm:$0xff]
    %v5780 = vld [vmem:[#allocation2 + $0x2a0] sm:$0xff]
    %v5781 = vld [vmem:[#allocation2 + $0x2a8] sm:$0xff]
    %v5782 = vld [vmem:[#allocation2 + $0x2b0] sm:$0xff]
    %v5783 = vld [vmem:[#allocation2 + $0x2b8] sm:$0xff]
    %v5784 = vld [vmem:[#allocation2 + $0x2c0] sm:$0xff]
    %v5785 = vld [vmem:[#allocation2 + $0x2c8] sm:$0xff]
    %v5786 = vld [vmem:[#allocation2 + $0x2d0] sm:$0xff]
    %v5787 = vld [vmem:[#allocation2 + $0x2d8] sm:$0xff]
    %v5788 = vld [vmem:[#allocation2 + $0x2e0] sm:$0xff]
    %v5789 = vld [vmem:[#allocation2 + $0x2e8] sm:$0xff]
    %v5790 = vld [vmem:[#allocation2 + $0x2f0] sm:$0xff]
    %v5791 = vld [vmem:[#allocation2 + $0x2f8] sm:$0xff]
    %v5792 = vld [vmem:[#allocation2 + $0x300] sm:$0xff]
    %v5793 = vld [vmem:[#allocation2 + $0x308] sm:$0xff]
    %v5794 = vld [vmem:[#allocation2 + $0x310] sm:$0xff]
    %v5795 = vld [vmem:[#allocation2 + $0x318] sm:$0xff]
    %v5796 = vld [vmem:[#allocation2 + $0x320] sm:$0xff]
    %v5797 = vld [vmem:[#allocation2 + $0x328] sm:$0xff]
    %v5798 = vld [vmem:[#allocation2 + $0x330] sm:$0xff]
    %v5799 = vld [vmem:[#allocation2 + $0x338] sm:$0xff]
    %v5800 = vld [vmem:[#allocation2 + $0x340] sm:$0xff]
    %v5801 = vld [vmem:[#allocation2 + $0x348] sm:$0xff]
    %v5802 = vld [vmem:[#allocation2 + $0x350] sm:$0xff]
    %v5803 = vld [vmem:[#allocation2 + $0x358] sm:$0xff]
    %v5804 = vld [vmem:[#allocation2 + $0x360] sm:$0xff]
    %v5805 = vld [vmem:[#allocation2 + $0x368] sm:$0xff]
    %v5806 = vld [vmem:[#allocation2 + $0x370] sm:$0xff]
    %v5807 = vld [vmem:[#allocation2 + $0x378] sm:$0xff]
    %v5808 = vld [vmem:[#allocation2 + $0x380] sm:$0xff]
    %v5809 = vld [vmem:[#allocation2 + $0x388] sm:$0xff]
    %v5810 = vld [vmem:[#allocation2 + $0x390] sm:$0xff]
    %v5811 = vld [vmem:[#allocation2 + $0x398] sm:$0xff]
    %v5812 = vld [vmem:[#allocation2 + $0x3a0] sm:$0xff]
    %v5813 = vld [vmem:[#allocation2 + $0x3a8] sm:$0xff]
    %v5814 = vld [vmem:[#allocation2 + $0x3b0] sm:$0xff]
    %v5815 = vld [vmem:[#allocation2 + $0x3b8] sm:$0xff]
    %v5816 = vld [vmem:[#allocation2 + $0x3c0] sm:$0xff]
    %v5817 = vld [vmem:[#allocation2 + $0x3c8] sm:$0xff]
    %v5818 = vld [vmem:[#allocation2 + $0x3d0] sm:$0xff]
    %v5819 = vld [vmem:[#allocation2 + $0x3d8] sm:$0xff]
    %v5820 = vld [vmem:[#allocation2 + $0x3e0] sm:$0xff]
    %v5821 = vld [vmem:[#allocation2 + $0x3e8] sm:$0xff]
    %v5822 = vld [vmem:[#allocation2 + $0x3f0] sm:$0xff]
    %v5823 = vld [vmem:[#allocation2 + $0x3f8] sm:$0xff]
    %v5824 = vld [vmem:[#allocation2 + $0x400] sm:$0xff]
    %v5825 = vld [vmem:[#allocation2 + $0x408] sm:$0xff]
    %v5826 = vld [vmem:[#allocation2 + $0x410] sm:$0xff]
    %v5827 = vld [vmem:[#allocation2 + $0x418] sm:$0xff]
    %v5828 = vld [vmem:[#allocation2 + $0x420] sm:$0xff]
    %v5829 = vld [vmem:[#allocation2 + $0x428] sm:$0xff]
    %v5830 = vld [vmem:[#allocation2 + $0x430] sm:$0xff]
    %v5831 = vld [vmem:[#allocation2 + $0x438] sm:$0xff]
    %v5832 = vld [vmem:[#allocation2 + $0x440] sm:$0xff]
    %v5833 = vld [vmem:[#allocation2 + $0x448] sm:$0xff]
    %v5834 = vld [vmem:[#allocation2 + $0x450] sm:$0xff]
    %v5835 = vld [vmem:[#allocation2 + $0x458] sm:$0xff]
    %v5836 = vld [vmem:[#allocation2 + $0x460] sm:$0xff]
    %v5837 = vld [vmem:[#allocation2 + $0x468] sm:$0xff]
    %v5838 = vld [vmem:[#allocation2 + $0x470] sm:$0xff]
    %v5839 = vld [vmem:[#allocation2 + $0x478] sm:$0xff]
    %v5840 = vld [vmem:[#allocation2 + $0x480] sm:$0xff]
    %v5841 = vld [vmem:[#allocation2 + $0x488] sm:$0xff]
    %v5842 = vld [vmem:[#allocation2 + $0x490] sm:$0xff]
    %v5843 = vld [vmem:[#allocation2 + $0x498] sm:$0xff]
    %v5844 = vld [vmem:[#allocation2 + $0x4a0] sm:$0xff]
    %v5845 = vld [vmem:[#allocation2 + $0x4a8] sm:$0xff]
    %v5846 = vld [vmem:[#allocation2 + $0x4b0] sm:$0xff]
    %v5847 = vld [vmem:[#allocation2 + $0x4b8] sm:$0xff]
    %v5848 = vld [vmem:[#allocation2 + $0x4c0] sm:$0xff]
    %v5849 = vld [vmem:[#allocation2 + $0x4c8] sm:$0xff]
    %v5850 = vld [vmem:[#allocation2 + $0x4d0] sm:$0xff]
    %v5851 = vld [vmem:[#allocation2 + $0x4d8] sm:$0xff]
    %v5852 = vld [vmem:[#allocation2 + $0x4e0] sm:$0xff]
    %v5853 = vld [vmem:[#allocation2 + $0x4e8] sm:$0xff]
    %v5854 = vld [vmem:[#allocation2 + $0x4f0] sm:$0xff]
    %v5855 = vld [vmem:[#allocation2 + $0x4f8] sm:$0xff]
    %v5856 = vld [vmem:[#allocation2 + $0x500] sm:$0xff]
    %v5857 = vld [vmem:[#allocation2 + $0x508] sm:$0xff]
    %v5858 = vld [vmem:[#allocation2 + $0x510] sm:$0xff]
    %v5859 = vld [vmem:[#allocation2 + $0x518] sm:$0xff]
    %v5860 = vld [vmem:[#allocation2 + $0x520] sm:$0xff]
    %v5861 = vld [vmem:[#allocation2 + $0x528] sm:$0xff]
    %v5862 = vld [vmem:[#allocation2 + $0x530] sm:$0xff]
    %v5863 = vld [vmem:[#allocation2 + $0x538] sm:$0xff]
    %v5864 = vld [vmem:[#allocation2 + $0x540] sm:$0xff]
    %v5865 = vld [vmem:[#allocation2 + $0x548] sm:$0xff]
    %v5866 = vld [vmem:[#allocation2 + $0x550] sm:$0xff]
    %v5867 = vld [vmem:[#allocation2 + $0x558] sm:$0xff]
    %v5868 = vld [vmem:[#allocation2 + $0x560] sm:$0xff]
    %v5869 = vld [vmem:[#allocation2 + $0x568] sm:$0xff]
    %v5870 = vld [vmem:[#allocation2 + $0x570] sm:$0xff]
    %v5871 = vld [vmem:[#allocation2 + $0x578] sm:$0xff]
    %v5872 = vld [vmem:[#allocation2 + $0x580] sm:$0xff]
    %v5873 = vld [vmem:[#allocation2 + $0x588] sm:$0xff]
    %v5874 = vld [vmem:[#allocation2 + $0x590] sm:$0xff]
    %v5875 = vld [vmem:[#allocation2 + $0x598] sm:$0xff]
    %v5876 = vld [vmem:[#allocation2 + $0x5a0] sm:$0xff]
    %v5877 = vld [vmem:[#allocation2 + $0x5a8] sm:$0xff]
    %v5878 = vld [vmem:[#allocation2 + $0x5b0] sm:$0xff]
    %v5879 = vld [vmem:[#allocation2 + $0x5b8] sm:$0xff]
    %v5880 = vld [vmem:[#allocation2 + $0x5c0] sm:$0xff]
    %v5881 = vld [vmem:[#allocation2 + $0x5c8] sm:$0xff]
    %v5882 = vld [vmem:[#allocation2 + $0x5d0] sm:$0xff]
    %v5883 = vld [vmem:[#allocation2 + $0x5d8] sm:$0xff]
    %v5884 = vld [vmem:[#allocation2 + $0x5e0] sm:$0xff]
    %v5885 = vld [vmem:[#allocation2 + $0x5e8] sm:$0xff]
    %v5886 = vld [vmem:[#allocation2 + $0x5f0] sm:$0xff]
    %v5887 = vld [vmem:[#allocation2 + $0x5f8] sm:$0xff]
    %v5888 = vld [vmem:[#allocation2 + $0x600] sm:$0xff]
    %v5889 = vld [vmem:[#allocation2 + $0x608] sm:$0xff]
    %v5890 = vld [vmem:[#allocation2 + $0x610] sm:$0xff]
    %v5891 = vld [vmem:[#allocation2 + $0x618] sm:$0xff]
    %v5893 = vsel %vm3704, %v5682, 0
    %v5896 = vsel %vm3704, %v5695, 0
    %5898 = vmatprep.subr.mxu0 0.0
    %5899 = vmatpush1.msra.mxu0 %v5696
    %5900 = vmatprep.subr.mxu0 0.0
    %5901 = vmatpush1.msra.mxu0 %v5697
    %5902 = vmatprep.subr.mxu0 0.0
    %5903 = vmatpush1.msra.mxu0 %v5698
    %5904 = vmatprep.subr.mxu0 0.0
    %5905 = vmatpush1.msra.mxu0 %v5699
    %5906 = vmatprep.subr.mxu0 0.0
    %5907 = vmatpush1.msra.mxu0 %v5700
    %5908 = vmatprep.subr.mxu0 0.0
    %5909 = vmatpush1.msra.mxu0 %v5701
    %5910 = vmatprep.subr.mxu0 0.0
    %5911 = vmatpush1.msra.mxu0 %v5702
    %5912 = vmatprep.subr.mxu0 0.0
    %5913 = vmatpush1.msra.mxu0 %v5703
    %5914 = vmatprep.subr.mxu0 0.0
    %5915 = vmatpush1.msra.mxu0 %v5704
    %5916 = vmatprep.subr.mxu0 0.0
    %5917 = vmatpush1.msra.mxu0 %v5705
    %5918 = vmatprep.subr.mxu0 0.0
    %5919 = vmatpush1.msra.mxu0 %v5706
    %5920 = vmatprep.subr.mxu0 0.0
    %5921 = vmatpush1.msra.mxu0 %v5707
    %5922 = vmatprep.subr.mxu0 0.0
    %5923 = vmatpush1.msra.mxu0 %v5708
    %5924 = vmatprep.subr.mxu0 0.0
    %5925 = vmatpush1.msra.mxu0 %v5709
    %5926 = vmatprep.subr.mxu0 0.0
    %5927 = vmatpush1.msra.mxu0 %v5710
    %5928 = vmatprep.subr.mxu0 0.0
    %5929 = vmatpush1.msra.mxu0 %v5711
    %5930 = vmatprep.subr.mxu0 0.0
    %5931 = vmatpush1.msra.mxu0 %v5712
    %5932 = vmatprep.subr.mxu0 0.0
    %5933 = vmatpush1.msra.mxu0 %v5713
    %5934 = vmatprep.subr.mxu0 0.0
    %5935 = vmatpush1.msra.mxu0 %v5714
    %5936 = vmatprep.subr.mxu0 0.0
    %5937 = vmatpush1.msra.mxu0 %v5715
    %5938 = vmatprep.subr.mxu0 0.0
    %5939 = vmatpush1.msra.mxu0 %v5716
    %5940 = vmatprep.subr.mxu0 0.0
    %5941 = vmatpush1.msra.mxu0 %v5717
    %5942 = vmatprep.subr.mxu0 0.0
    %5943 = vmatpush1.msra.mxu0 %v5718
    %5944 = vmatprep.subr.mxu0 0.0
    %5945 = vmatpush1.msra.mxu0 %v5719
    %5946 = vmatprep.subr.mxu0 0.0
    %5947 = vmatpush1.msra.mxu0 %v5720
    %5948 = vmatprep.subr.mxu0 0.0
    %5949 = vmatpush1.msra.mxu0 %v5721
    %5950 = vmatprep.subr.mxu0 0.0
    %5951 = vmatpush1.msra.mxu0 %v5722
    %5952 = vmatprep.subr.mxu0 0.0
    %5953 = vmatpush1.msra.mxu0 %v5723
    %5954 = vmatprep.subr.mxu0 0.0
    %5955 = vmatpush1.msra.mxu0 %v5724
    %5956 = vmatprep.subr.mxu0 0.0
    %5957 = vmatpush1.msra.mxu0 %v5725
    %5958 = vmatprep.subr.mxu0 0.0
    %5959 = vmatpush1.msra.mxu0 %v5726
    %5960 = vmatprep.subr.mxu0 0.0
    %5961 = vmatpush1.msra.mxu0 %v5727
    %5962 = vmatprep.mubr.f32.mxu0 %v5671
    %5963 = vmatmul.mubr.f32.gmra.mrb[0].mxu0 %v5670
    %v5964 = vpop.f32.mrb[0].mxu0
    %v5965 = vadd.f32 0.0, %v5964
    %v5966 = vpop.f32.mrb[0].mxu0
    %5967 = vmatprep.mubr.f32.mxu0 %v5684
    %5968 = vmatmul.mubr.f32.gmra.mrb[0].mxu0 %v5683
    %v5969 = vpop.f32.mrb[0].mxu0
    %v5970 = vadd.f32 0.0, %v5969
    %v5971 = vpop.f32.mrb[0].mxu0
    %5972 = vdwg.mxu0
    %5973 = vmatprep.subr.mxu0 0.0
    %5974 = vmatpush1.msra.mxu0 %v5728
    %5975 = vmatprep.subr.mxu0 0.0
    %5976 = vmatpush1.msra.mxu0 %v5729
    %5977 = vmatprep.subr.mxu0 0.0
    %5978 = vmatpush1.msra.mxu0 %v5730
    %5979 = vmatprep.subr.mxu0 0.0
    %5980 = vmatpush1.msra.mxu0 %v5731
    %5981 = vmatprep.subr.mxu0 0.0
    %5982 = vmatpush1.msra.mxu0 %v5732
    %5983 = vmatprep.subr.mxu0 0.0
    %5984 = vmatpush1.msra.mxu0 %v5733
    %5985 = vmatprep.subr.mxu0 0.0
    %5986 = vmatpush1.msra.mxu0 %v5734
    %5987 = vmatprep.subr.mxu0 0.0
    %5988 = vmatpush1.msra.mxu0 %v5735
    %5989 = vmatprep.subr.mxu0 0.0
    %5990 = vmatpush1.msra.mxu0 %v5736
    %5991 = vmatprep.subr.mxu0 0.0
    %5992 = vmatpush1.msra.mxu0 %v5737
    %5993 = vmatprep.subr.mxu0 0.0
    %5994 = vmatpush1.msra.mxu0 %v5738
    %5995 = vmatprep.subr.mxu0 0.0
    %5996 = vmatpush1.msra.mxu0 %v5739
    %5997 = vmatprep.subr.mxu0 0.0
    %5998 = vmatpush1.msra.mxu0 %v5740
    %5999 = vmatprep.subr.mxu0 0.0
    %6000 = vmatpush1.msra.mxu0 %v5741
    %6001 = vmatprep.subr.mxu0 0.0
    %6002 = vmatpush1.msra.mxu0 %v5742
    %6003 = vmatprep.subr.mxu0 0.0
    %6004 = vmatpush1.msra.mxu0 %v5743
    %6005 = vmatprep.subr.mxu0 0.0
    %6006 = vmatpush1.msra.mxu0 %v5744
    %6007 = vmatprep.subr.mxu0 0.0
    %6008 = vmatpush1.msra.mxu0 %v5745
    %6009 = vmatprep.subr.mxu0 0.0
    %6010 = vmatpush1.msra.mxu0 %v5746
    %6011 = vmatprep.subr.mxu0 0.0
    %6012 = vmatpush1.msra.mxu0 %v5747
    %6013 = vmatprep.subr.mxu0 0.0
    %6014 = vmatpush1.msra.mxu0 %v5748
    %6015 = vmatprep.subr.mxu0 0.0
    %6016 = vmatpush1.msra.mxu0 %v5749
    %6017 = vmatprep.subr.mxu0 0.0
    %6018 = vmatpush1.msra.mxu0 %v5750
    %6019 = vmatprep.subr.mxu0 0.0
    %6020 = vmatpush1.msra.mxu0 %v5751
    %6021 = vmatprep.subr.mxu0 0.0
    %6022 = vmatpush1.msra.mxu0 %v5752
    %6023 = vmatprep.subr.mxu0 0.0
    %6024 = vmatpush1.msra.mxu0 %v5753
    %6025 = vmatprep.subr.mxu0 0.0
    %6026 = vmatpush1.msra.mxu0 %v5754
    %6027 = vmatprep.subr.mxu0 0.0
    %6028 = vmatpush1.msra.mxu0 %v5755
    %6029 = vmatprep.subr.mxu0 0.0
    %6030 = vmatpush1.msra.mxu0 %v5756
    %6031 = vmatprep.subr.mxu0 0.0
    %6032 = vmatpush1.msra.mxu0 %v5757
    %6033 = vmatprep.subr.mxu0 0.0
    %6034 = vmatpush1.msra.mxu0 %v5758
    %6035 = vmatprep.subr.mxu0 0.0
    %6036 = vmatpush1.msra.mxu0 %v5759
    %6037 = vmatprep.mubr.f32.mxu0 %v5673
    %6038 = vmatmul.mubr.f32.gmra.mrb[0].mxu0 %v5672
    %v6039 = vpop.f32.mrb[0].mxu0
    %v6040 = vadd.f32 %v5965, %v6039
    %v6041 = vpop.f32.mrb[0].mxu0
    %6042 = vmatprep.mubr.f32.mxu0 %v5686
    %6043 = vmatmul.mubr.f32.gmra.mrb[0].mxu0 %v5685
    %v6044 = vpop.f32.mrb[0].mxu0
    %v6045 = vadd.f32 %v5970, %v6044
    %v6046 = vpop.f32.mrb[0].mxu0
    %6047 = vdwg.mxu0
    %6048 = vmatprep.subr.mxu0 0.0
    %6049 = vmatpush1.msra.mxu0 %v5760
    %6050 = vmatprep.subr.mxu0 0.0
    %6051 = vmatpush1.msra.mxu0 %v5761
    %6052 = vmatprep.subr.mxu0 0.0
    %6053 = vmatpush1.msra.mxu0 %v5762
    %6054 = vmatprep.subr.mxu0 0.0
    %6055 = vmatpush1.msra.mxu0 %v5763
    %6056 = vmatprep.subr.mxu0 0.0
    %6057 = vmatpush1.msra.mxu0 %v5764
    %6058 = vmatprep.subr.mxu0 0.0
    %6059 = vmatpush1.msra.mxu0 %v5765
    %6060 = vmatprep.subr.mxu0 0.0
    %6061 = vmatpush1.msra.mxu0 %v5766
    %6062 = vmatprep.subr.mxu0 0.0
    %6063 = vmatpush1.msra.mxu0 %v5767
    %6064 = vmatprep.subr.mxu0 0.0
    %6065 = vmatpush1.msra.mxu0 %v5768
    %6066 = vmatprep.subr.mxu0 0.0
    %6067 = vmatpush1.msra.mxu0 %v5769
    %6068 = vmatprep.subr.mxu0 0.0
    %6069 = vmatpush1.msra.mxu0 %v5770
    %6070 = vmatprep.subr.mxu0 0.0
    %6071 = vmatpush1.msra.mxu0 %v5771
    %6072 = vmatprep.subr.mxu0 0.0
    %6073 = vmatpush1.msra.mxu0 %v5772
    %6074 = vmatprep.subr.mxu0 0.0
    %6075 = vmatpush1.msra.mxu0 %v5773
    %6076 = vmatprep.subr.mxu0 0.0
    %6077 = vmatpush1.msra.mxu0 %v5774
    %6078 = vmatprep.subr.mxu0 0.0
    %6079 = vmatpush1.msra.mxu0 %v5775
    %6080 = vmatprep.subr.mxu0 0.0
    %6081 = vmatpush1.msra.mxu0 %v5776
    %6082 = vmatprep.subr.mxu0 0.0
    %6083 = vmatpush1.msra.mxu0 %v5777
    %6084 = vmatprep.subr.mxu0 0.0
    %6085 = vmatpush1.msra.mxu0 %v5778
    %6086 = vmatprep.subr.mxu0 0.0
    %6087 = vmatpush1.msra.mxu0 %v5779
    %6088 = vmatprep.subr.mxu0 0.0
    %6089 = vmatpush1.msra.mxu0 %v5780
    %6090 = vmatprep.subr.mxu0 0.0
    %6091 = vmatpush1.msra.mxu0 %v5781
    %6092 = vmatprep.subr.mxu0 0.0
    %6093 = vmatpush1.msra.mxu0 %v5782
    %6094 = vmatprep.subr.mxu0 0.0
    %6095 = vmatpush1.msra.mxu0 %v5783
    %6096 = vmatprep.subr.mxu0 0.0
    %6097 = vmatpush1.msra.mxu0 %v5784
    %6098 = vmatprep.subr.mxu0 0.0
    %6099 = vmatpush1.msra.mxu0 %v5785
    %6100 = vmatprep.subr.mxu0 0.0
    %6101 = vmatpush1.msra.mxu0 %v5786
    %6102 = vmatprep.subr.mxu0 0.0
    %6103 = vmatpush1.msra.mxu0 %v5787
    %6104 = vmatprep.subr.mxu0 0.0
    %6105 = vmatpush1.msra.mxu0 %v5788
    %6106 = vmatprep.subr.mxu0 0.0
    %6107 = vmatpush1.msra.mxu0 %v5789
    %6108 = vmatprep.subr.mxu0 0.0
    %6109 = vmatpush1.msra.mxu0 %v5790
    %6110 = vmatprep.subr.mxu0 0.0
    %6111 = vmatpush1.msra.mxu0 %v5791
    %6112 = vmatprep.mubr.f32.mxu0 %v5675
    %6113 = vmatmul.mubr.f32.gmra.mrb[0].mxu0 %v5674
    %v6114 = vpop.f32.mrb[0].mxu0
    %v6115 = vadd.f32 %v6040, %v6114
    %v6116 = vpop.f32.mrb[0].mxu0
    %6117 = vmatprep.mubr.f32.mxu0 %v5688
    %6118 = vmatmul.mubr.f32.gmra.mrb[0].mxu0 %v5687
    %v6119 = vpop.f32.mrb[0].mxu0
    %v6120 = vadd.f32 %v6045, %v6119
    %v6121 = vpop.f32.mrb[0].mxu0
    %6122 = vdwg.mxu0
    %6123 = vmatprep.subr.mxu0 0.0
    %6124 = vmatpush1.msra.mxu0 %v5792
    %6125 = vmatprep.subr.mxu0 0.0
    %6126 = vmatpush1.msra.mxu0 %v5793
    %6127 = vmatprep.subr.mxu0 0.0
    %6128 = vmatpush1.msra.mxu0 %v5794
    %6129 = vmatprep.subr.mxu0 0.0
    %6130 = vmatpush1.msra.mxu0 %v5795
    %6131 = vmatprep.subr.mxu0 0.0
    %6132 = vmatpush1.msra.mxu0 %v5796
    %6133 = vmatprep.subr.mxu0 0.0
    %6134 = vmatpush1.msra.mxu0 %v5797
    %6135 = vmatprep.subr.mxu0 0.0
    %6136 = vmatpush1.msra.mxu0 %v5798
    %6137 = vmatprep.subr.mxu0 0.0
    %6138 = vmatpush1.msra.mxu0 %v5799
    %6139 = vmatprep.subr.mxu0 0.0
    %6140 = vmatpush1.msra.mxu0 %v5800
    %6141 = vmatprep.subr.mxu0 0.0
    %6142 = vmatpush1.msra.mxu0 %v5801
    %6143 = vmatprep.subr.mxu0 0.0
    %6144 = vmatpush1.msra.mxu0 %v5802
    %6145 = vmatprep.subr.mxu0 0.0
    %6146 = vmatpush1.msra.mxu0 %v5803
    %6147 = vmatprep.subr.mxu0 0.0
    %6148 = vmatpush1.msra.mxu0 %v5804
    %6149 = vmatprep.subr.mxu0 0.0
    %6150 = vmatpush1.msra.mxu0 %v5805
    %6151 = vmatprep.subr.mxu0 0.0
    %6152 = vmatpush1.msra.mxu0 %v5806
    %6153 = vmatprep.subr.mxu0 0.0
    %6154 = vmatpush1.msra.mxu0 %v5807
    %6155 = vmatprep.subr.mxu0 0.0
    %6156 = vmatpush1.msra.mxu0 %v5808
    %6157 = vmatprep.subr.mxu0 0.0
    %6158 = vmatpush1.msra.mxu0 %v5809
    %6159 = vmatprep.subr.mxu0 0.0
    %6160 = vmatpush1.msra.mxu0 %v5810
    %6161 = vmatprep.subr.mxu0 0.0
    %6162 = vmatpush1.msra.mxu0 %v5811
    %6163 = vmatprep.subr.mxu0 0.0
    %6164 = vmatpush1.msra.mxu0 %v5812
    %6165 = vmatprep.subr.mxu0 0.0
    %6166 = vmatpush1.msra.mxu0 %v5813
    %6167 = vmatprep.subr.mxu0 0.0
    %6168 = vmatpush1.msra.mxu0 %v5814
    %6169 = vmatprep.subr.mxu0 0.0
    %6170 = vmatpush1.msra.mxu0 %v5815
    %6171 = vmatprep.subr.mxu0 0.0
    %6172 = vmatpush1.msra.mxu0 %v5816
    %6173 = vmatprep.subr.mxu0 0.0
    %6174 = vmatpush1.msra.mxu0 %v5817
    %6175 = vmatprep.subr.mxu0 0.0
    %6176 = vmatpush1.msra.mxu0 %v5818
    %6177 = vmatprep.subr.mxu0 0.0
    %6178 = vmatpush1.msra.mxu0 %v5819
    %6179 = vmatprep.subr.mxu0 0.0
    %6180 = vmatpush1.msra.mxu0 %v5820
    %6181 = vmatprep.subr.mxu0 0.0
    %6182 = vmatpush1.msra.mxu0 %v5821
    %6183 = vmatprep.subr.mxu0 0.0
    %6184 = vmatpush1.msra.mxu0 %v5822
    %6185 = vmatprep.subr.mxu0 0.0
    %6186 = vmatpush1.msra.mxu0 %v5823
    %6187 = vmatprep.mubr.f32.mxu0 %v5677
    %6188 = vmatmul.mubr.f32.gmra.mrb[0].mxu0 %v5676
    %v6189 = vpop.f32.mrb[0].mxu0
    %v6190 = vadd.f32 %v6115, %v6189
    %v6191 = vpop.f32.mrb[0].mxu0
    %6192 = vmatprep.mubr.f32.mxu0 %v5690
    %6193 = vmatmul.mubr.f32.gmra.mrb[0].mxu0 %v5689
    %v6194 = vpop.f32.mrb[0].mxu0
    %v6195 = vadd.f32 %v6120, %v6194
    %v6196 = vpop.f32.mrb[0].mxu0
    %6197 = vdwg.mxu0
    %6198 = vmatprep.subr.mxu0 0.0
    %6199 = vmatpush1.msra.mxu0 %v5824
    %6200 = vmatprep.subr.mxu0 0.0
    %6201 = vmatpush1.msra.mxu0 %v5825
    %6202 = vmatprep.subr.mxu0 0.0
    %6203 = vmatpush1.msra.mxu0 %v5826
    %6204 = vmatprep.subr.mxu0 0.0
    %6205 = vmatpush1.msra.mxu0 %v5827
    %6206 = vmatprep.subr.mxu0 0.0
    %6207 = vmatpush1.msra.mxu0 %v5828
    %6208 = vmatprep.subr.mxu0 0.0
    %6209 = vmatpush1.msra.mxu0 %v5829
    %6210 = vmatprep.subr.mxu0 0.0
    %6211 = vmatpush1.msra.mxu0 %v5830
    %6212 = vmatprep.subr.mxu0 0.0
    %6213 = vmatpush1.msra.mxu0 %v5831
    %6214 = vmatprep.subr.mxu0 0.0
    %6215 = vmatpush1.msra.mxu0 %v5832
    %6216 = vmatprep.subr.mxu0 0.0
    %6217 = vmatpush1.msra.mxu0 %v5833
    %6218 = vmatprep.subr.mxu0 0.0
    %6219 = vmatpush1.msra.mxu0 %v5834
    %6220 = vmatprep.subr.mxu0 0.0
    %6221 = vmatpush1.msra.mxu0 %v5835
    %6222 = vmatprep.subr.mxu0 0.0
    %6223 = vmatpush1.msra.mxu0 %v5836
    %6224 = vmatprep.subr.mxu0 0.0
    %6225 = vmatpush1.msra.mxu0 %v5837
    %6226 = vmatprep.subr.mxu0 0.0
    %6227 = vmatpush1.msra.mxu0 %v5838
    %6228 = vmatprep.subr.mxu0 0.0
    %6229 = vmatpush1.msra.mxu0 %v5839
    %6230 = vmatprep.subr.mxu0 0.0
    %6231 = vmatpush1.msra.mxu0 %v5840
    %6232 = vmatprep.subr.mxu0 0.0
    %6233 = vmatpush1.msra.mxu0 %v5841
    %6234 = vmatprep.subr.mxu0 0.0
    %6235 = vmatpush1.msra.mxu0 %v5842
    %6236 = vmatprep.subr.mxu0 0.0
    %6237 = vmatpush1.msra.mxu0 %v5843
    %6238 = vmatprep.subr.mxu0 0.0
    %6239 = vmatpush1.msra.mxu0 %v5844
    %6240 = vmatprep.subr.mxu0 0.0
    %6241 = vmatpush1.msra.mxu0 %v5845
    %6242 = vmatprep.subr.mxu0 0.0
    %6243 = vmatpush1.msra.mxu0 %v5846
    %6244 = vmatprep.subr.mxu0 0.0
    %6245 = vmatpush1.msra.mxu0 %v5847
    %6246 = vmatprep.subr.mxu0 0.0
    %6247 = vmatpush1.msra.mxu0 %v5848
    %6248 = vmatprep.subr.mxu0 0.0
    %6249 = vmatpush1.msra.mxu0 %v5849
    %6250 = vmatprep.subr.mxu0 0.0
    %6251 = vmatpush1.msra.mxu0 %v5850
    %6252 = vmatprep.subr.mxu0 0.0
    %6253 = vmatpush1.msra.mxu0 %v5851
    %6254 = vmatprep.subr.mxu0 0.0
    %6255 = vmatpush1.msra.mxu0 %v5852
    %6256 = vmatprep.subr.mxu0 0.0
    %6257 = vmatpush1.msra.mxu0 %v5853
    %6258 = vmatprep.subr.mxu0 0.0
    %6259 = vmatpush1.msra.mxu0 %v5854
    %6260 = vmatprep.subr.mxu0 0.0
    %6261 = vmatpush1.msra.mxu0 %v5855
    %6262 = vmatprep.mubr.f32.mxu0 %v5679
    %6263 = vmatmul.mubr.f32.gmra.mrb[0].mxu0 %v5678
    %v6264 = vpop.f32.mrb[0].mxu0
    %v6265 = vadd.f32 %v6190, %v6264
    %v6266 = vpop.f32.mrb[0].mxu0
    %6267 = vmatprep.mubr.f32.mxu0 %v5692
    %6268 = vmatmul.mubr.f32.gmra.mrb[0].mxu0 %v5691
    %v6269 = vpop.f32.mrb[0].mxu0
    %v6270 = vadd.f32 %v6195, %v6269
    %v6271 = vpop.f32.mrb[0].mxu0
    %6272 = vdwg.mxu0
    %6273 = vmatprep.subr.mxu0 0.0
    %6274 = vmatpush1.msra.mxu0 %v5856
    %6275 = vmatprep.subr.mxu0 0.0
    %6276 = vmatpush1.msra.mxu0 %v5857
    %6277 = vmatprep.subr.mxu0 0.0
    %6278 = vmatpush1.msra.mxu0 %v5858
    %6279 = vmatprep.subr.mxu0 0.0
    %6280 = vmatpush1.msra.mxu0 %v5859
    %6281 = vmatprep.subr.mxu0 0.0
    %6282 = vmatpush1.msra.mxu0 %v5860
    %6283 = vmatprep.subr.mxu0 0.0
    %6284 = vmatpush1.msra.mxu0 %v5861
    %6285 = vmatprep.subr.mxu0 0.0
    %6286 = vmatpush1.msra.mxu0 %v5862
    %6287 = vmatprep.subr.mxu0 0.0
    %6288 = vmatpush1.msra.mxu0 %v5863
    %6289 = vmatprep.subr.mxu0 0.0
    %6290 = vmatpush1.msra.mxu0 %v5864
    %6291 = vmatprep.subr.mxu0 0.0
    %6292 = vmatpush1.msra.mxu0 %v5865
    %6293 = vmatprep.subr.mxu0 0.0
    %6294 = vmatpush1.msra.mxu0 %v5866
    %6295 = vmatprep.subr.mxu0 0.0
    %6296 = vmatpush1.msra.mxu0 %v5867
    %6297 = vmatprep.subr.mxu0 0.0
    %6298 = vmatpush1.msra.mxu0 %v5868
    %6299 = vmatprep.subr.mxu0 0.0
    %6300 = vmatpush1.msra.mxu0 %v5869
    %6301 = vmatprep.subr.mxu0 0.0
    %6302 = vmatpush1.msra.mxu0 %v5870
    %6303 = vmatprep.subr.mxu0 0.0
    %6304 = vmatpush1.msra.mxu0 %v5871
    %6305 = vmatprep.subr.mxu0 0.0
    %6306 = vmatpush1.msra.mxu0 %v5872
    %6307 = vmatprep.subr.mxu0 0.0
    %6308 = vmatpush1.msra.mxu0 %v5873
    %6309 = vmatprep.subr.mxu0 0.0
    %6310 = vmatpush1.msra.mxu0 %v5874
    %6311 = vmatprep.subr.mxu0 0.0
    %6312 = vmatpush1.msra.mxu0 %v5875
    %6313 = vmatprep.subr.mxu0 0.0
    %6314 = vmatpush1.msra.mxu0 %v5876
    %6315 = vmatprep.subr.mxu0 0.0
    %6316 = vmatpush1.msra.mxu0 %v5877
    %6317 = vmatprep.subr.mxu0 0.0
    %6318 = vmatpush1.msra.mxu0 %v5878
    %6319 = vmatprep.subr.mxu0 0.0
    %6320 = vmatpush1.msra.mxu0 %v5879
    %6321 = vmatprep.subr.mxu0 0.0
    %6322 = vmatpush1.msra.mxu0 %v5880
    %6323 = vmatprep.subr.mxu0 0.0
    %6324 = vmatpush1.msra.mxu0 %v5881
    %6325 = vmatprep.subr.mxu0 0.0
    %6326 = vmatpush1.msra.mxu0 %v5882
    %6327 = vmatprep.subr.mxu0 0.0
    %6328 = vmatpush1.msra.mxu0 %v5883
    %6329 = vmatprep.subr.mxu0 0.0
    %6330 = vmatpush1.msra.mxu0 %v5884
    %6331 = vmatprep.subr.mxu0 0.0
    %6332 = vmatpush1.msra.mxu0 %v5885
    %6333 = vmatprep.subr.mxu0 0.0
    %6334 = vmatpush1.msra.mxu0 %v5886
    %6335 = vmatprep.subr.mxu0 0.0
    %6336 = vmatpush1.msra.mxu0 %v5887
    %6337 = vmatprep.mubr.f32.mxu0 %v5681
    %6338 = vmatmul.mubr.f32.gmra.mrb[0].mxu0 %v5680
    %v6339 = vpop.f32.mrb[0].mxu0
    %v6340 = vadd.f32 %v6265, %v6339
    %v6341 = vpop.f32.mrb[0].mxu0
    %6342 = vmatprep.mubr.f32.mxu0 %v5694
    %6343 = vmatmul.mubr.f32.gmra.mrb[0].mxu0 %v5693
    %v6344 = vpop.f32.mrb[0].mxu0
    %v6345 = vadd.f32 %v6270, %v6344
    %v6346 = vpop.f32.mrb[0].mxu0
    %6347 = vdwg.mxu0
    %6348 = vmatprep.subr.mxu0 0.0
    %6349 = vmatpush1.msra.mxu0 %v5888
    %6350 = vmatprep.subr.mxu0 0.0
    %6351 = vmatpush1.msra.mxu0 %v5889
    %6352 = vmatprep.subr.mxu0 0.0
    %6353 = vmatpush1.msra.mxu0 %v5890
    %6354 = vmatprep.subr.mxu0 0.0
    %6355 = vmatpush1.msra.mxu0 %v5891
    %6356 = vmatprep.subr.mxu0 0.0
    %6357 = vmatpush1.msra.mxu0 0.0
    %6358 = vmatprep.subr.mxu0 0.0
    %6359 = vmatpush1.msra.mxu0 0.0
    %6360 = vmatprep.subr.mxu0 0.0
    %6361 = vmatpush1.msra.mxu0 0.0
    %6362 = vmatprep.subr.mxu0 0.0
    %6363 = vmatpush1.msra.mxu0 0.0
    %6364 = vmatprep.subr.mxu0 0.0
    %6365 = vmatpush1.msra.mxu0 0.0
    %6366 = vmatprep.subr.mxu0 0.0
    %6367 = vmatpush1.msra.mxu0 0.0
    %6368 = vmatprep.subr.mxu0 0.0
    %6369 = vmatpush1.msra.mxu0 0.0
    %6370 = vmatprep.subr.mxu0 0.0
    %6371 = vmatpush1.msra.mxu0 0.0
    %6372 = vmatprep.subr.mxu0 0.0
    %6373 = vmatpush1.msra.mxu0 0.0
    %6374 = vmatprep.subr.mxu0 0.0
    %6375 = vmatpush1.msra.mxu0 0.0
    %6376 = vmatprep.subr.mxu0 0.0
    %6377 = vmatpush1.msra.mxu0 0.0
    %6378 = vmatprep.subr.mxu0 0.0
    %6379 = vmatpush1.msra.mxu0 0.0
    %6380 = vmatprep.subr.mxu0 0.0
    %6381 = vmatpush1.msra.mxu0 0.0
    %6382 = vmatprep.subr.mxu0 0.0
    %6383 = vmatpush1.msra.mxu0 0.0
    %6384 = vmatprep.subr.mxu0 0.0
    %6385 = vmatpush1.msra.mxu0 0.0
    %6386 = vmatprep.subr.mxu0 0.0
    %6387 = vmatpush1.msra.mxu0 0.0
    %6388 = vmatprep.subr.mxu0 0.0
    %6389 = vmatpush1.msra.mxu0 0.0
    %6390 = vmatprep.subr.mxu0 0.0
    %6391 = vmatpush1.msra.mxu0 0.0
    %6392 = vmatprep.subr.mxu0 0.0
    %6393 = vmatpush1.msra.mxu0 0.0
    %6394 = vmatprep.subr.mxu0 0.0
    %6395 = vmatpush1.msra.mxu0 0.0
    %6396 = vmatprep.subr.mxu0 0.0
    %6397 = vmatpush1.msra.mxu0 0.0
    %6398 = vmatprep.subr.mxu0 0.0
    %6399 = vmatpush1.msra.mxu0 0.0
    %6400 = vmatprep.subr.mxu0 0.0
    %6401 = vmatpush1.msra.mxu0 0.0
    %6402 = vmatprep.subr.mxu0 0.0
    %6403 = vmatpush1.msra.mxu0 0.0
    %6404 = vmatprep.subr.mxu0 0.0
    %6405 = vmatpush1.msra.mxu0 0.0
    %6406 = vmatprep.subr.mxu0 0.0
    %6407 = vmatpush1.msra.mxu0 0.0
    %6408 = vmatprep.subr.mxu0 0.0
    %6409 = vmatpush1.msra.mxu0 0.0
    %6410 = vmatprep.subr.mxu0 0.0
    %6411 = vmatpush1.msra.mxu0 0.0
    %6412 = vmatprep.mubr.f32.mxu0 0.0
    %6413 = vmatmul.mubr.f32.gmra.mrb[0].mxu0 %v5893
    %v6414 = vpop.f32.mrb[0].mxu0
    %v6415 = vadd.f32 %v6340, %v6414
    %v6416 = vpop.f32.mrb[0].mxu0
    %6417 = vmatprep.mubr.f32.mxu0 0.0
    %6418 = vmatmul.mubr.f32.gmra.mrb[0].mxu0 %v5896
    %v6419 = vpop.f32.mrb[0].mxu0
    %v6420 = vadd.f32 %v6345, %v6419
    %v6421 = vpop.f32.mrb[0].mxu0
    %6422 = vdwg.mxu0
    %v6424 = vrot.slane %v6415, 1
    %6425 = vrot.lane.b32.xlu0 %v6424, 16
    %v6426 = vpop.permute.xlu0 %6425
    %v6428 = vrot.slane %v6415, 2
    %6429 = vrot.lane.b32.xlu0 %v6428, 32
    %v6430 = vpop.permute.xlu0 %6429
    %v6432 = vrot.slane %v6415, 3
    %6433 = vrot.lane.b32.xlu0 %v6432, 48
    %v6434 = vpop.permute.xlu0 %6433
    %v6436 = vrot.slane %v6415, 4
    %6437 = vrot.lane.b32.xlu0 %v6436, 64
    %v6438 = vpop.permute.xlu0 %6437
    %v6440 = vrot.slane %v6415, 5
    %6441 = vrot.lane.b32.xlu0 %v6440, 80
    %v6442 = vpop.permute.xlu0 %6441
    %v6444 = vrot.slane %v6415, 6
    %6445 = vrot.lane.b32.xlu0 %v6444, 96
    %v6446 = vpop.permute.xlu0 %6445
    %v6448 = vrot.slane %v6415, 7
    %6449 = vrot.lane.b32.xlu0 %v6448, 112
    %v6450 = vpop.permute.xlu0 %6449
    %v6453 = vrot.slane %v6420, 1
    %6454 = vrot.lane.b32.xlu0 %v6453, 16
    %v6455 = vpop.permute.xlu0 %6454
    %v6457 = vrot.slane %v6420, 2
    %6458 = vrot.lane.b32.xlu0 %v6457, 32
    %v6459 = vpop.permute.xlu0 %6458
    %v6461 = vrot.slane %v6420, 3
    %6462 = vrot.lane.b32.xlu0 %v6461, 48
    %v6463 = vpop.permute.xlu0 %6462
    %v6465 = vrot.slane %v6420, 4
    %6466 = vrot.lane.b32.xlu0 %v6465, 64
    %v6467 = vpop.permute.xlu0 %6466
    %v6469 = vrot.slane %v6420, 5
    %6470 = vrot.lane.b32.xlu0 %v6469, 80
    %v6471 = vpop.permute.xlu0 %6470
    %v6473 = vrot.slane %v6420, 6
    %6474 = vrot.lane.b32.xlu0 %v6473, 96
    %v6475 = vpop.permute.xlu0 %6474
    %v6477 = vrot.slane %v6420, 7
    %6478 = vrot.lane.b32.xlu0 %v6477, 112
    %v6479 = vpop.permute.xlu0 %6478
    %v6481 = vsel %vm968, %v6415, %v6426
    %v6482 = vsel %vm3704, %v6481, %v6430
    %v6483 = vsel %vm985, %v6482, %v6434
    %v6484 = vsel %vm3203, %v6483, %v6438
    %v6485 = vsel %vm3659, %v6484, %v6442
    %v6486 = vsel %vm474, %v6485, %v6446
    %v6487 = vsel %vm3676, %v6486, %v6450
    %v6488 = vsel %vm968, %v6420, %v6455
    %v6489 = vsel %vm3704, %v6488, %v6459
    %v6490 = vsel %vm985, %v6489, %v6463
    %v6491 = vsel %vm3203, %v6490, %v6467
    %v6492 = vsel %vm3659, %v6491, %v6471
    %v6493 = vsel %vm474, %v6492, %v6475
    %v6494 = vsel %vm3676, %v6493, %v6479
    %6495 = vrot.lane.b32.xlu0 %v6415, 112
    %v6496 = vpop.permute.xlu0 %6495
    %6499 = vrot.lane.b32.xlu0 %v6428, 16
    %v6500 = vpop.permute.xlu0 %6499
    %6502 = vrot.lane.b32.xlu0 %v6432, 32
    %v6503 = vpop.permute.xlu0 %6502
    %6505 = vrot.lane.b32.xlu0 %v6436, 48
    %v6506 = vpop.permute.xlu0 %6505
    %6508 = vrot.lane.b32.xlu0 %v6440, 64
    %v6509 = vpop.permute.xlu0 %6508
    %6511 = vrot.lane.b32.xlu0 %v6444, 80
    %v6512 = vpop.permute.xlu0 %6511
    %6514 = vrot.lane.b32.xlu0 %v6448, 96
    %v6515 = vpop.permute.xlu0 %6514
    %6517 = vrot.lane.b32.xlu0 %v6420, 112
    %v6518 = vpop.permute.xlu0 %6517
    %6521 = vrot.lane.b32.xlu0 %v6457, 16
    %v6522 = vpop.permute.xlu0 %6521
    %6524 = vrot.lane.b32.xlu0 %v6461, 32
    %v6525 = vpop.permute.xlu0 %6524
    %6527 = vrot.lane.b32.xlu0 %v6465, 48
    %v6528 = vpop.permute.xlu0 %6527
    %6530 = vrot.lane.b32.xlu0 %v6469, 64
    %v6531 = vpop.permute.xlu0 %6530
    %6533 = vrot.lane.b32.xlu0 %v6473, 80
    %v6534 = vpop.permute.xlu0 %6533
    %6536 = vrot.lane.b32.xlu0 %v6477, 96
    %v6537 = vpop.permute.xlu0 %6536
    %v6539 = vsel %vm968, %v6496, %v6424
    %v6540 = vsel %vm3704, %v6539, %v6500
    %v6541 = vsel %vm985, %v6540, %v6503
    %v6542 = vsel %vm3203, %v6541, %v6506
    %v6543 = vsel %vm3659, %v6542, %v6509
    %v6544 = vsel %vm474, %v6543, %v6512
    %v6545 = vsel %vm3676, %v6544, %v6515
    %v6546 = vsel %vm968, %v6518, %v6453
    %v6547 = vsel %vm3704, %v6546, %v6522
    %v6548 = vsel %vm985, %v6547, %v6525
    %v6549 = vsel %vm3203, %v6548, %v6528
    %v6550 = vsel %vm3659, %v6549, %v6531
    %v6551 = vsel %vm474, %v6550, %v6534
    %v6552 = vsel %vm3676, %v6551, %v6537
    %v6555 = vrot.slane %v6545, 7
    %v6556 = vrot.slane %v6552, 7
    %v6559 = vsel %vm1575, %v6487, %v6555
    %v6560 = vsel %vm1575, %v6494, %v6556
    %v6561 = vld [vmem:[%s6] sm:$0xff]
    %v6562 = vld [vmem:[%s6 + $0x8] sm:$0xff]
    %v6563 = vld [vmem:[%s6 + $0x10] sm:$0xff]
    %v6564 = vld [vmem:[%s6 + $0x18] sm:$0xff]
    %v6565 = vld [vmem:[%s6 + $0x20] sm:$0xff]
    %v6566 = vld [vmem:[%s6 + $0x28] sm:$0xff]
    %v6567 = vld [vmem:[%s6 + $0x30] sm:$0xff]
    %v6568 = vld [vmem:[%s6 + $0x38] sm:$0xff]
    %v6569 = vld [vmem:[%s6 + $0x40] sm:$0xff]
    %v6570 = vld [vmem:[%s6 + $0x48] sm:$0xff]
    %v6571 = vld [vmem:[%s6 + $0x50] sm:$0xff]
    %v6572 = vld [vmem:[%s6 + $0x58] sm:$0xff]
    %v6573 = vld [vmem:[%s6 + $0x60] sm:$0xff]
    %v6574 = vld [vmem:[%s6 + $0x68] sm:$0xff]
    %v6575 = vld [vmem:[%s6 + $0x70] sm:$0xff]
    %v6576 = vld [vmem:[%s6 + $0x78] sm:$0xff]
    %v6577 = vld [vmem:[%s6 + $0x80] sm:$0xff]
    %v6578 = vld [vmem:[%s6 + $0x88] sm:$0xff]
    %v6579 = vld [vmem:[%s6 + $0x90] sm:$0xff]
    %v6580 = vld [vmem:[%s6 + $0x98] sm:$0xff]
    %v6581 = vld [vmem:[%s6 + $0xa0] sm:$0xff]
    %v6582 = vld [vmem:[%s6 + $0xa8] sm:$0xff]
    %v6583 = vld [vmem:[%s6 + $0xb0] sm:$0xff]
    %v6584 = vld [vmem:[%s6 + $0xb8] sm:$0xff]
    %v6585 = vld [vmem:[%s6 + $0xc0] sm:$0xff]
    %v6586 = vld [vmem:[%s6 + $0xc8] sm:$0xff]
    %v6587 = vld [vmem:[%s6 + $0xd0] sm:$0xff]
    %v6588 = vld [vmem:[%s6 + $0xd8] sm:$0xff]
    %v6589 = vld [vmem:[%s6 + $0xe0] sm:$0xff]
    %v6590 = vld [vmem:[%s6 + $0xe8] sm:$0xff]
    %v6591 = vld [vmem:[%s6 + $0xf0] sm:$0xff]
    %v6592 = vld [vmem:[%s6 + $0xf8] sm:$0xff]
    %v6593 = vld [vmem:[%s7] sm:$0x1]
    %v6595 = vlaneseq
    %v6596 = vshrl.u32 %v6595, 7
    %v6597 = vsub.s32 0, %v6596
    %v6598 = vrot.slane %v6593, %v6597
    %6600 = vmatprep.subr.mxu0 0.0
    %6601 = vmatpush1.msra.mxu0 %v6561
    %6602 = vmatprep.subr.mxu0 0.0
    %6603 = vmatpush1.msra.mxu0 %v6562
    %6604 = vmatprep.subr.mxu0 0.0
    %6605 = vmatpush1.msra.mxu0 %v6563
    %6606 = vmatprep.subr.mxu0 0.0
    %6607 = vmatpush1.msra.mxu0 %v6564
    %6608 = vmatprep.subr.mxu0 0.0
    %6609 = vmatpush1.msra.mxu0 %v6565
    %6610 = vmatprep.subr.mxu0 0.0
    %6611 = vmatpush1.msra.mxu0 %v6566
    %6612 = vmatprep.subr.mxu0 0.0
    %6613 = vmatpush1.msra.mxu0 %v6567
    %6614 = vmatprep.subr.mxu0 0.0
    %6615 = vmatpush1.msra.mxu0 %v6568
    %6616 = vmatprep.subr.mxu0 0.0
    %6617 = vmatpush1.msra.mxu0 %v6569
    %6618 = vmatprep.subr.mxu0 0.0
    %6619 = vmatpush1.msra.mxu0 %v6570
    %6620 = vmatprep.subr.mxu0 0.0
    %6621 = vmatpush1.msra.mxu0 %v6571
    %6622 = vmatprep.subr.mxu0 0.0
    %6623 = vmatpush1.msra.mxu0 %v6572
    %6624 = vmatprep.subr.mxu0 0.0
    %6625 = vmatpush1.msra.mxu0 %v6573
    %6626 = vmatprep.subr.mxu0 0.0
    %6627 = vmatpush1.msra.mxu0 %v6574
    %6628 = vmatprep.subr.mxu0 0.0
    %6629 = vmatpush1.msra.mxu0 %v6575
    %6630 = vmatprep.subr.mxu0 0.0
    %6631 = vmatpush1.msra.mxu0 %v6576
    %6632 = vmatprep.subr.mxu0 0.0
    %6633 = vmatpush1.msra.mxu0 %v6577
    %6634 = vmatprep.subr.mxu0 0.0
    %6635 = vmatpush1.msra.mxu0 %v6578
    %6636 = vmatprep.subr.mxu0 0.0
    %6637 = vmatpush1.msra.mxu0 %v6579
    %6638 = vmatprep.subr.mxu0 0.0
    %6639 = vmatpush1.msra.mxu0 %v6580
    %6640 = vmatprep.subr.mxu0 0.0
    %6641 = vmatpush1.msra.mxu0 %v6581
    %6642 = vmatprep.subr.mxu0 0.0
    %6643 = vmatpush1.msra.mxu0 %v6582
    %6644 = vmatprep.subr.mxu0 0.0
    %6645 = vmatpush1.msra.mxu0 %v6583
    %6646 = vmatprep.subr.mxu0 0.0
    %6647 = vmatpush1.msra.mxu0 %v6584
    %6648 = vmatprep.subr.mxu0 0.0
    %6649 = vmatpush1.msra.mxu0 %v6585
    %6650 = vmatprep.subr.mxu0 0.0
    %6651 = vmatpush1.msra.mxu0 %v6586
    %6652 = vmatprep.subr.mxu0 0.0
    %6653 = vmatpush1.msra.mxu0 %v6587
    %6654 = vmatprep.subr.mxu0 0.0
    %6655 = vmatpush1.msra.mxu0 %v6588
    %6656 = vmatprep.subr.mxu0 0.0
    %6657 = vmatpush1.msra.mxu0 %v6589
    %6658 = vmatprep.subr.mxu0 0.0
    %6659 = vmatpush1.msra.mxu0 %v6590
    %6660 = vmatprep.subr.mxu0 0.0
    %6661 = vmatpush1.msra.mxu0 %v6591
    %6662 = vmatprep.subr.mxu0 0.0
    %6663 = vmatpush1.msra.mxu0 %v6592
    %6664 = vmatprep.mubr.f32.mxu0 %v6560
    %6665 = vmatmul.mubr.f32.gmra.mrb[0].mxu0 %v6559
    %v6666 = vpop.f32.mrb[0].mxu0
    %v6667 = vadd.f32 %v6598, %v6666
    %v6668 = vpop.f32.mrb[0].mxu0
    %6669 = vdwg.mxu0
    %v6670 = vmax.f32 %v6667, 0.0
    %v6671 = vld [vmem:[%s8] sm:$0xff]
    %v6672 = vld [vmem:[%s8 + $0x8] sm:$0xff]
    %v6673 = vld [vmem:[%s8 + $0x10] sm:$0xff]
    %v6674 = vld [vmem:[%s8 + $0x18] sm:$0xff]
    %v6675 = vld [vmem:[%s8 + $0x20] sm:$0xff]
    %v6676 = vld [vmem:[%s8 + $0x28] sm:$0xff]
    %v6677 = vld [vmem:[%s8 + $0x30] sm:$0xff]
    %v6678 = vld [vmem:[%s8 + $0x38] sm:$0xff]
    %v6679 = vld [vmem:[%s8 + $0x40] sm:$0xff]
    %v6680 = vld [vmem:[%s8 + $0x48] sm:$0xff]
    %v6681 = vld [vmem:[%s8 + $0x50] sm:$0xff]
    %v6682 = vld [vmem:[%s8 + $0x58] sm:$0xff]
    %v6683 = vld [vmem:[%s8 + $0x60] sm:$0xff]
    %v6684 = vld [vmem:[%s8 + $0x68] sm:$0xff]
    %v6685 = vld [vmem:[%s8 + $0x70] sm:$0xff]
    %v6686 = vld [vmem:[%s8 + $0x78] sm:$0xff]
    %v6687 = vld [vmem:[%s9] sm:$0x1]
    %v6689 = vlaneseq
    %v6690 = vshrl.u32 %v6689, 7
    %v6691 = vsub.s32 0, %v6690
    %v6692 = vrot.slane %v6687, %v6691
    %6694 = vmatprep.subr.mxu0 0.0
    %6695 = vmatpush1.msra.mxu0 %v6671
    %6696 = vmatprep.subr.mxu0 0.0
    %6697 = vmatpush1.msra.mxu0 %v6672
    %6698 = vmatprep.subr.mxu0 0.0
    %6699 = vmatpush1.msra.mxu0 %v6673
    %6700 = vmatprep.subr.mxu0 0.0
    %6701 = vmatpush1.msra.mxu0 %v6674
    %6702 = vmatprep.subr.mxu0 0.0
    %6703 = vmatpush1.msra.mxu0 %v6675
    %6704 = vmatprep.subr.mxu0 0.0
    %6705 = vmatpush1.msra.mxu0 %v6676
    %6706 = vmatprep.subr.mxu0 0.0
    %6707 = vmatpush1.msra.mxu0 %v6677
    %6708 = vmatprep.subr.mxu0 0.0
    %6709 = vmatpush1.msra.mxu0 %v6678
    %6710 = vmatprep.subr.mxu0 0.0
    %6711 = vmatpush1.msra.mxu0 %v6679
    %6712 = vmatprep.subr.mxu0 0.0
    %6713 = vmatpush1.msra.mxu0 %v6680
    %6714 = vmatprep.subr.mxu0 0.0
    %6715 = vmatpush1.msra.mxu0 %v6681
    %6716 = vmatprep.subr.mxu0 0.0
    %6717 = vmatpush1.msra.mxu0 %v6682
    %6718 = vmatprep.subr.mxu0 0.0
    %6719 = vmatpush1.msra.mxu0 %v6683
    %6720 = vmatprep.subr.mxu0 0.0
    %6721 = vmatpush1.msra.mxu0 %v6684
    %6722 = vmatprep.subr.mxu0 0.0
    %6723 = vmatpush1.msra.mxu0 %v6685
    %6724 = vmatprep.subr.mxu0 0.0
    %6725 = vmatpush1.msra.mxu0 %v6686
    %6726 = vmatprep.subr.mxu0 0.0
    %6727 = vmatpush1.msra.mxu0 0.0
    %6728 = vmatprep.subr.mxu0 0.0
    %6729 = vmatpush1.msra.mxu0 0.0
    %6730 = vmatprep.subr.mxu0 0.0
    %6731 = vmatpush1.msra.mxu0 0.0
    %6732 = vmatprep.subr.mxu0 0.0
    %6733 = vmatpush1.msra.mxu0 0.0
    %6734 = vmatprep.subr.mxu0 0.0
    %6735 = vmatpush1.msra.mxu0 0.0
    %6736 = vmatprep.subr.mxu0 0.0
    %6737 = vmatpush1.msra.mxu0 0.0
    %6738 = vmatprep.subr.mxu0 0.0
    %6739 = vmatpush1.msra.mxu0 0.0
    %6740 = vmatprep.subr.mxu0 0.0
    %6741 = vmatpush1.msra.mxu0 0.0
    %6742 = vmatprep.subr.mxu0 0.0
    %6743 = vmatpush1.msra.mxu0 0.0
    %6744 = vmatprep.subr.mxu0 0.0
    %6745 = vmatpush1.msra.mxu0 0.0
    %6746 = vmatprep.subr.mxu0 0.0
    %6747 = vmatpush1.msra.mxu0 0.0
    %6748 = vmatprep.subr.mxu0 0.0
    %6749 = vmatpush1.msra.mxu0 0.0
    %6750 = vmatprep.subr.mxu0 0.0
    %6751 = vmatpush1.msra.mxu0 0.0
    %6752 = vmatprep.subr.mxu0 0.0
    %6753 = vmatpush1.msra.mxu0 0.0
    %6754 = vmatprep.subr.mxu0 0.0
    %6755 = vmatpush1.msra.mxu0 0.0
    %6756 = vmatprep.subr.mxu0 0.0
    %6757 = vmatpush1.msra.mxu0 0.0
    %6758 = vmatprep.mubr.f32.mxu0 0.0
    %6759 = vmatmul.mubr.f32.gmra.mrb[0].mxu0 %v6670
    %v6760 = vpop.f32.mrb[0].mxu0
    %v6761 = vadd.f32 %v6692, %v6760
    %v6762 = vpop.f32.mrb[0].mxu0
    %6763 = vdwg.mxu0
    %v6764 = vmax.f32 %v6761, 0.0
    %v6765 = vld [vmem:[%s10] sm:$0xff]
    %v6766 = vld [vmem:[%s10 + $0x8] sm:$0xff]
    %v6767 = vld [vmem:[%s10 + $0x10] sm:$0xff]
    %v6768 = vld [vmem:[%s10 + $0x18] sm:$0xff]
    %v6769 = vld [vmem:[%s10 + $0x20] sm:$0xff]
    %v6770 = vld [vmem:[%s10 + $0x28] sm:$0xff]
    %v6771 = vld [vmem:[%s10 + $0x30] sm:$0xff]
    %v6772 = vld [vmem:[%s10 + $0x38] sm:$0xff]
    %v6773 = vld [vmem:[%s10 + $0x40] sm:$0xff]
    %v6774 = vld [vmem:[%s10 + $0x48] sm:$0xff]
    %v6775 = vld [vmem:[%s10 + $0x50] sm:$0xff]
    %v6776 = vld [vmem:[%s10 + $0x58] sm:$0xff]
    %v6777 = vld [vmem:[%s10 + $0x60] sm:$0xff]
    %v6778 = vld [vmem:[%s10 + $0x68] sm:$0xff]
    %v6779 = vld [vmem:[%s10 + $0x70] sm:$0xff]
    %v6780 = vld [vmem:[%s10 + $0x78] sm:$0xff]
    %v6781 = vld [vmem:[%s11] sm:$0x1]
    %v6783 = vlaneseq
    %v6784 = vshrl.u32 %v6783, 7
    %v6785 = vsub.s32 0, %v6784
    %v6786 = vrot.slane %v6781, %v6785
    %6788 = vmatprep.subr.mxu0 0.0
    %6789 = vmatpush1.msra.mxu0 %v6765
    %6790 = vmatprep.subr.mxu0 0.0
    %6791 = vmatpush1.msra.mxu0 %v6766
    %6792 = vmatprep.subr.mxu0 0.0
    %6793 = vmatpush1.msra.mxu0 %v6767
    %6794 = vmatprep.subr.mxu0 0.0
    %6795 = vmatpush1.msra.mxu0 %v6768
    %6796 = vmatprep.subr.mxu0 0.0
    %6797 = vmatpush1.msra.mxu0 %v6769
    %6798 = vmatprep.subr.mxu0 0.0
    %6799 = vmatpush1.msra.mxu0 %v6770
    %6800 = vmatprep.subr.mxu0 0.0
    %6801 = vmatpush1.msra.mxu0 %v6771
    %6802 = vmatprep.subr.mxu0 0.0
    %6803 = vmatpush1.msra.mxu0 %v6772
    %6804 = vmatprep.subr.mxu0 0.0
    %6805 = vmatpush1.msra.mxu0 %v6773
    %6806 = vmatprep.subr.mxu0 0.0
    %6807 = vmatpush1.msra.mxu0 %v6774
    %6808 = vmatprep.subr.mxu0 0.0
    %6809 = vmatpush1.msra.mxu0 %v6775
    %6810 = vmatprep.subr.mxu0 0.0
    %6811 = vmatpush1.msra.mxu0 %v6776
    %6812 = vmatprep.subr.mxu0 0.0
    %6813 = vmatpush1.msra.mxu0 %v6777
    %6814 = vmatprep.subr.mxu0 0.0
    %6815 = vmatpush1.msra.mxu0 %v6778
    %6816 = vmatprep.subr.mxu0 0.0
    %6817 = vmatpush1.msra.mxu0 %v6779
    %6818 = vmatprep.subr.mxu0 0.0
    %6819 = vmatpush1.msra.mxu0 %v6780
    %6820 = vmatprep.subr.mxu0 0.0
    %6821 = vmatpush1.msra.mxu0 0.0
    %6822 = vmatprep.subr.mxu0 0.0
    %6823 = vmatpush1.msra.mxu0 0.0
    %6824 = vmatprep.subr.mxu0 0.0
    %6825 = vmatpush1.msra.mxu0 0.0
    %6826 = vmatprep.subr.mxu0 0.0
    %6827 = vmatpush1.msra.mxu0 0.0
    %6828 = vmatprep.subr.mxu0 0.0
    %6829 = vmatpush1.msra.mxu0 0.0
    %6830 = vmatprep.subr.mxu0 0.0
    %6831 = vmatpush1.msra.mxu0 0.0
    %6832 = vmatprep.subr.mxu0 0.0
    %6833 = vmatpush1.msra.mxu0 0.0
    %6834 = vmatprep.subr.mxu0 0.0
    %6835 = vmatpush1.msra.mxu0 0.0
    %6836 = vmatprep.subr.mxu0 0.0
    %6837 = vmatpush1.msra.mxu0 0.0
    %6838 = vmatprep.subr.mxu0 0.0
    %6839 = vmatpush1.msra.mxu0 0.0
    %6840 = vmatprep.subr.mxu0 0.0
    %6841 = vmatpush1.msra.mxu0 0.0
    %6842 = vmatprep.subr.mxu0 0.0
    %6843 = vmatpush1.msra.mxu0 0.0
    %6844 = vmatprep.subr.mxu0 0.0
    %6845 = vmatpush1.msra.mxu0 0.0
    %6846 = vmatprep.subr.mxu0 0.0
    %6847 = vmatpush1.msra.mxu0 0.0
    %6848 = vmatprep.subr.mxu0 0.0
    %6849 = vmatpush1.msra.mxu0 0.0
    %6850 = vmatprep.subr.mxu0 0.0
    %6851 = vmatpush1.msra.mxu0 0.0
    %6852 = vmatprep.mubr.f32.mxu0 0.0
    %6853 = vmatmul.mubr.f32.gmra.mrb[0].mxu0 %v6764
    %v6854 = vpop.f32.mrb[0].mxu0
    %v6855 = vadd.f32 %v6786, %v6854
    %v6856 = vpop.f32.mrb[0].mxu0
    %6857 = vdwg.mxu0
    %vm6858 = vcmask 74752
    %6859 = vst.msk [vmem:[#allocation5] sm:$0x3] %vm6858, %v6855
    // Predicated region
    $region54: #{forward.1} parent=1 // pred_check
      _
    $region55: #{forward.1} parent=1 // pred_check_branch
      %6861 = sbr.rel (0) target = $region57
    $region56: #{forward.1} parent=1 // pred_region
      %s6863 = ssub.s32 32, 32
      %6864 = vsyncadd [#allocation4], %s6863
      %s6866 = sshll.u32 [#allocation5], 4
      %s6867 = int_to_ptr.vmem [resolvable:$true] %s6866
      %6869 = dma.vmem_to_hbm [thread:$0]  %s6867, 32, %s12, [#allocation4]
    $region57: #{forward.1} parent=1 // pred_fallthru
      _
    // Predicated region
    $region58: #{forward.1} parent=1 // pred_check
      _
    $region59: #{forward.1} parent=1 // pred_check_branch
      %6871 = sbr.rel (0) target = $region61
    $region60: #{forward.1} parent=1 // pred_region
      %6872 = dma.done [#allocation4], 32
    $region61: #{forward.1} parent=1 // pred_fallthru
      _
    %6873 = vsyncpa [#allocation3], 1
    %6874 = vsyncpa [#allocation4], 1

</llo_original>
